<compile_context>
chip_gen: v7x
topology: tpu7x:2x2x1
jax: 0.10.0
libtpu: 0.0.40
codegen_flags: <defaults>
</compile_context>

<pallas_src>
import functools

import jax
import jax.numpy as jnp
from jax.experimental import pallas as pl
from jax.experimental.pallas import tpu as pltpu


_PAD_OFF = 16   # left margin of the padded scratch: bf16 sublane tile is 16
_HALO = 4       # one overlap row per conv layer (3 backbone convs + head)


def _jcnn_kernel(x_ref, w1_ref, b1_ref, w2_ref, b2_ref, w3_ref, b3_ref,
                 wj_ref, bj_ref, o_ref,
                 pad1, pad23, patch1, patch2, patch3,
                 *, HB, RB, W):
    """One (batch, row-block) step; every intermediate stays in VMEM."""
    first_blk = pl.program_id(1) == 0
    last_blk = pl.program_id(1) == pl.num_programs(1) - 1

    def conv_matmul(patch_ref, nrows, w_ref, b_ref, relu):
        # Single im2col matmul per conv: bf16 operands, f32 MXU accumulation.
        acc = jnp.dot(patch_ref[0:nrows * W, :], w_ref[...],
                      preferred_element_type=jnp.float32)
        acc = acc + b_ref[0]
        if relu:
            acc = jnp.maximum(acc, 0.0)
        return acc                                   # (nrows*W, Cout) f32

    def zero_halo(pad_ref):
        # Zero only the halo cells the 3x3 windows read: rows 0 / HB+1 over
        # the read columns and one column either side of the center.  Done
        # every step (cheap) because a program_id==0-only init would never
        # run on a core that doesn't own grid index 0.
        C = pad_ref.shape[-1]
        zrow = jnp.zeros((1, W + 2, C), jnp.bfloat16)
        pad_ref[0:1, _PAD_OFF - 1:_PAD_OFF + W + 1, :] = zrow
        pad_ref[HB + 1:HB + 2, _PAD_OFF - 1:_PAD_OFF + W + 1, :] = zrow
        zcol = jnp.zeros((HB, 1, C), jnp.bfloat16)
        pad_ref[1:HB + 1, _PAD_OFF - 1:_PAD_OFF, :] = zcol
        pad_ref[1:HB + 1, _PAD_OFF + W:_PAD_OFF + W + 1, :] = zcol

    def store_center(pad_ref, feat):
        # One f32->bf16 cast per conv output; the center write starts at a
        # multiple-of-16 sublane offset -> tile aligned for packed bf16.
        C = pad_ref.shape[-1]
        pad_ref[1:HB + 1, _PAD_OFF:_PAD_OFF + W, :] = (
            feat.astype(jnp.bfloat16).reshape(HB, W, C))
        # Rows of this block that fall outside the real image are forced back
        # to zero so they reproduce the per-layer zero padding the reference
        # network applies at the true top/bottom image boundary.
        zz = jnp.zeros((_HALO, W, C), jnp.bfloat16)

        @pl.when(first_blk)
        def _():
            pad_ref[1:1 + _HALO, _PAD_OFF:_PAD_OFF + W, :] = zz

        @pl.when(last_blk)
        def _():
            pad_ref[1 + HB - _HALO:1 + HB, _PAD_OFF:_PAD_OFF + W, :] = zz

    def build_patches(patch_ref, src_ref, r0, nrows, c0):
        # im2col: 9 shifted ref-slices, one lane concat, ONE dense store.
        C = src_ref.shape[-1]
        views = [src_ref[r0 + kh:r0 + kh + nrows,
                         c0 + kw:c0 + kw + W, :].reshape(nrows * W, C)
                 for kh in range(3) for kw in range(3)]
        patch_ref[0:nrows * W, :] = jnp.concatenate(views, axis=-1)

    zero_halo(pad1)
    zero_halo(pad23)

    # ---- backbone (stand-in for ResUnetPlusPlusBackbone) --------------------
    build_patches(patch1, x_ref, 0, HB, 0)               # input window comes
    f1 = conv_matmul(patch1, HB, w1_ref, b1_ref, True)   # pre-padded (zeros)
    store_center(pad1, f1)                               # (HB*W, hid)

    build_patches(patch2, pad1, 0, HB, _PAD_OFF - 1)
    f2 = conv_matmul(patch2, HB, w2_ref, b2_ref, True)   # (HB*W, 2*hid)
    store_center(pad23, f2)

    build_patches(patch3, pad23, 0, HB, _PAD_OFF - 1)    # reads layer-2 acts,
    f3 = conv_matmul(patch3, HB, w3_ref, b3_ref, True)   # then pad23 is reused
    store_center(pad23, f3)                              # for layer-3 acts

    # ---- ConvHeadJ (stand-in): only the RB kept rows are computed -----------
    build_patches(patch3, pad23, _HALO, RB, _PAD_OFF - 1)    # reuse patch3 buf
    j = conv_matmul(patch3, RB, wj_ref, bj_ref, False)       # (RB*W, 128) f32
    o_ref[...] = j.reshape(RB, W, o_ref.shape[-1])           # lane-dense store


def jcnn_forward(x_nchw, params, row_block=8):
    """x_nchw: (B, C, H, W) float32. Returns [J] with J: (B, Cj, H, W)."""
    B, Cin, H, W = x_nchw.shape
    hid = params["w1"].shape[-1]
    Cj = params["wj"].shape[-1]
    CjP = ((Cj + 127) // 128) * 128           # lane-padded head channels

    RB = min(row_block, H)                    # rows of final output per step
    assert H % RB == 0 and RB >= _HALO, "row block must divide H and cover the halo"
    NRB = H // RB
    HB = RB + 2 * _HALO                       # local rows recomputed per block

    # NHWC bf16; rows padded by HALO+1 (overlap halo + layer-1 conv pad),
    # cols padded by 1 (layer-1 conv pad) -- all true zeros.
    x = jnp.transpose(x_nchw, (0, 2, 3, 1)).astype(jnp.bfloat16)
    xp = jnp.pad(x, ((0, 0), (_HALO + 1, _HALO + 1), (1, 1), (0, 0)))
    # Overlapping row windows gathered into an explicit block axis so the
    # BlockSpec indexing stays non-overlapping: (B, NRB, HB+2, W+2, Cin).
    wins = jnp.stack([xp[:, r * RB:r * RB + HB + 2] for r in range(NRB)], axis=1)

    def w2col(w):   # HWIO (3,3,ci,co) -> (9*ci, co); matches t=kh*3+kw, ci order
        return w.reshape(9 * w.shape[2], w.shape[3]).astype(jnp.bfloat16)

    def b2row(b, cout):     # (c,) -> (1, cout) f32, zero padded
        return jnp.zeros((1, cout), jnp.float32).at[0, :b.shape[0]].set(b)

    w1, w2, w3 = (w2col(params[k]) for k in ("w1", "w2", "w3"))
    wj_hwio = params["wj"]
    wj_pad = jnp.zeros((3, 3, wj_hwio.shape[2], CjP),
                       wj_hwio.dtype).at[..., :Cj].set(wj_hwio)
    wj = w2col(wj_pad)                                   # (9*2*hid, 128)
    b1 = b2row(params["b1"], hid)
    b2 = b2row(params["b2"], 2 * hid)
    b3 = b2row(params["b3"], 2 * hid)
    bj = b2row(params["bj"], CjP)

    def full(shape):   # whole-array block (weights / biases), same every step
        n = len(shape)
        return pl.BlockSpec(shape, lambda b, r: (0,) * n)

    kern = functools.partial(_jcnn_kernel, HB=HB, RB=RB, W=W)

    out = pl.pallas_call(
        kern,
        out_shape=jax.ShapeDtypeStruct((B, NRB, RB, W, CjP), jnp.float32),
        grid=(B, NRB),    # two parallel axes -> both v7x TCs busy even at B=1
        in_specs=[
            pl.BlockSpec((None, None, HB + 2, W + 2, Cin),
                         lambda b, r: (b, r, 0, 0, 0)),
            full(w1.shape), full(b1.shape),
            full(w2.shape), full(b2.shape),
            full(w3.shape), full(b3.shape),
            full(wj.shape), full(bj.shape),
        ],
        out_specs=pl.BlockSpec((None, None, RB, W, CjP),
                               lambda b, r: (b, r, 0, 0, 0)),
        scratch_shapes=[
            # bf16 scratch; sizes scale with the row block -> fits v7x 64 MiB
            # once RB is chosen accordingly for big images.
            pltpu.VMEM((HB + 2, W + 2 * _PAD_OFF, hid), jnp.bfloat16),      # pad1
            pltpu.VMEM((HB + 2, W + 2 * _PAD_OFF, 2 * hid), jnp.bfloat16),  # pad2/3
            pltpu.VMEM((HB * W, 9 * Cin), jnp.bfloat16),                     # patch1
            pltpu.VMEM((HB * W, 9 * hid), jnp.bfloat16),                     # patch2
            pltpu.VMEM((HB * W, 9 * 2 * hid), jnp.bfloat16),                 # patch3/j
        ],
        compiler_params=pltpu.CompilerParams(
            dimension_semantics=("parallel", "parallel")),
    )(wins, w1, b1, w2, b2, w3, b3, wj, bj)

    J = out.reshape(B, H, W, CjP)[..., :Cj]               # drop lane padding
    return [jnp.transpose(J, (0, 3, 1, 2))]               # back to NCHW


def jcnn_reference(x_nchw, params):
    """Pure-JAX float32 reference of the same conv stack (validation only)."""
    x = jnp.transpose(x_nchw, (0, 2, 3, 1))

    def conv(h, w, b, relu):
        y = jax.lax.conv_general_dilated(
            h, w, window_strides=(1, 1), padding="SAME",
            dimension_numbers=("NHWC", "HWIO", "NHWC"))
        y = y + b
        return jnp.maximum(y, 0.0) if relu else y

    h = conv(x, params["w1"], params["b1"], True)
    h = conv(h, params["w2"], params["b2"], True)
    h = conv(h, params["w3"], params["b3"], True)
    j = conv(h, params["wj"], params["bj"], False)
    return [jnp.transpose(j, (0, 3, 1, 2))]


def init_params(key, in_ch=3, hidden=16):
    """Stand-in params (HWIO): backbone in_ch->hid->2*hid->2*hid (3x3, ReLU),
    head 2*hid->in_ch (3x3, linear).  PyTorch OIHW weights must be permuted
    to (kh, kw, cin, cout) before use."""
    def conv_init(k, cin, cout):
        kw_, kb_ = jax.random.split(k)
        scale = 1.0 / jnp.sqrt(jnp.float32(9 * cin))
        w = jax.random.normal(kw_, (3, 3, cin, cout), jnp.float32) * scale
        b = jax.random.normal(kb_, (cout,), jnp.float32) * 0.01
        return w, b

    ks = jax.random.split(key, 4)
    p = {}
    p["w1"], p["b1"] = conv_init(ks[0], in_ch, hidden)
    p["w2"], p["b2"] = conv_init(ks[1], hidden, 2 * hidden)
    p["w3"], p["b3"] = conv_init(ks[2], 2 * hidden, 2 * hidden)
    p["wj"], p["bj"] = conv_init(ks[3], 2 * hidden, in_ch)
    return p


if __name__ == "__main__":
    key = jax.random.PRNGKey(0)
    kx, kp = jax.random.split(key)
    x = jax.random.normal(kx, (2, 3, 16, 16), jnp.float32)   # NCHW, inChannels=3
    params = init_params(kp, in_ch=3, hidden=16)

    fwd = jax.jit(jcnn_forward)
    listJ = fwd(x, params)
    assert isinstance(listJ, list) and len(listJ) == 1
    J = listJ[0]
    jax.block_until_ready(J)
    assert J.shape == (2, 3, 16, 16)
    assert bool(jnp.all(jnp.isfinite(J)))

    # bf16 activations drift from the f32 reference; a loose absolute
    # tolerance catches tiling / halo indexing bugs, not bf16 noise.
    J_ref = jcnn_reference(x, params)[0]
    max_err = float(jnp.max(jnp.abs(J - J_ref)))
    assert max_err < 0.15, f"kernel/reference mismatch: max|err|={max_err}"
    print("KERNEL_OK")
</pallas_src>

<mosaic_0001>
module attributes {stable_mosaic.version = 11 : i64} {
  func.func @_jcnn_kernel(%arg0: i32, %arg1: i32, %arg2: memref<1x1x18x18x3xbf16, #tpu.memory_space<vmem>>, %arg3: memref<27x16xbf16, #tpu.memory_space<vmem>>, %arg4: memref<1x16xf32, #tpu.memory_space<vmem>>, %arg5: memref<144x32xbf16, #tpu.memory_space<vmem>>, %arg6: memref<1x32xf32, #tpu.memory_space<vmem>>, %arg7: memref<288x32xbf16, #tpu.memory_space<vmem>>, %arg8: memref<1x32xf32, #tpu.memory_space<vmem>>, %arg9: memref<288x128xbf16, #tpu.memory_space<vmem>>, %arg10: memref<1x128xf32, #tpu.memory_space<vmem>>, %arg11: memref<1x1x8x16x128xf32, #tpu.memory_space<vmem>>, %arg12: memref<18x48x16xbf16, #tpu.memory_space<vmem>>, %arg13: memref<18x48x32xbf16, #tpu.memory_space<vmem>>, %arg14: memref<256x27xbf16, #tpu.memory_space<vmem>>, %arg15: memref<256x144xbf16, #tpu.memory_space<vmem>>, %arg16: memref<256x288xbf16, #tpu.memory_space<vmem>>) attributes {dimension_semantics = [#tpu.dimension_semantics<parallel>, #tpu.dimension_semantics<parallel>], iteration_bounds = array<i64: 2, 2>, scalar_prefetch = 0 : i64, scratch_operands = 5 : i64, tpu.core_type = #tpu.core_type<tc>, window_params = [{transform_indices = @transform_0, window_bounds = array<i64: 1, 1, 18, 18, 3>}, {pipeline_mode = #tpu.pipeline_mode<synchronous>, transform_indices = @transform_1, window_bounds = array<i64: 27, 16>}, {pipeline_mode = #tpu.pipeline_mode<synchronous>, transform_indices = @transform_2, window_bounds = array<i64: 1, 16>}, {pipeline_mode = #tpu.pipeline_mode<synchronous>, transform_indices = @transform_3, window_bounds = array<i64: 144, 32>}, {pipeline_mode = #tpu.pipeline_mode<synchronous>, transform_indices = @transform_4, window_bounds = array<i64: 1, 32>}, {pipeline_mode = #tpu.pipeline_mode<synchronous>, transform_indices = @transform_5, window_bounds = array<i64: 288, 32>}, {pipeline_mode = #tpu.pipeline_mode<synchronous>, transform_indices = @transform_6, window_bounds = array<i64: 1, 32>}, {pipeline_mode = #tpu.pipeline_mode<synchronous>, transform_indices = @transform_7, window_bounds = array<i64: 288, 128>}, {pipeline_mode = #tpu.pipeline_mode<synchronous>, transform_indices = @transform_8, window_bounds = array<i64: 1, 128>}, {transform_indices = @transform_9, window_bounds = array<i64: 1, 1, 8, 16, 128>}]} {
    %c0_i32 = arith.constant 0 : i32
    %0 = arith.cmpi eq, %arg1, %c0_i32 : i32
    %c1_i32 = arith.constant 1 : i32
    %1 = arith.cmpi eq, %arg1, %c1_i32 : i32
    %cst = arith.constant 0.000000e+00 : bf16
    %2 = vector.broadcast %cst : bf16 to vector<1x18x16xbf16>
    %c0 = arith.constant 0 : index
    %c15 = arith.constant 15 : index
    %c0_0 = arith.constant 0 : index
    %3 = vector.load %arg12[%c0, %c15, %c0_0] : memref<18x48x16xbf16, #tpu.memory_space<vmem>>, vector<1x18x16xbf16>
    tpu.vector_store %arg12[%c0, %c15, %c0_0], %2 {strides = array<i32>} : memref<18x48x16xbf16, #tpu.memory_space<vmem>>, vector<1x18x16xbf16>,
    %c17 = arith.constant 17 : index
    %c15_1 = arith.constant 15 : index
    %c0_2 = arith.constant 0 : index
    %4 = vector.load %arg12[%c17, %c15_1, %c0_2] : memref<18x48x16xbf16, #tpu.memory_space<vmem>>, vector<1x18x16xbf16>
    tpu.vector_store %arg12[%c17, %c15_1, %c0_2], %2 {strides = array<i32>} : memref<18x48x16xbf16, #tpu.memory_space<vmem>>, vector<1x18x16xbf16>,
    %cst_3 = arith.constant 0.000000e+00 : bf16
    %5 = vector.broadcast %cst_3 : bf16 to vector<16x1x16xbf16>
    %c1 = arith.constant 1 : index
    %c15_4 = arith.constant 15 : index
    %c0_5 = arith.constant 0 : index
    %6 = vector.load %arg12[%c1, %c15_4, %c0_5] : memref<18x48x16xbf16, #tpu.memory_space<vmem>>, vector<16x1x16xbf16>
    tpu.vector_store %arg12[%c1, %c15_4, %c0_5], %5 {strides = array<i32>} : memref<18x48x16xbf16, #tpu.memory_space<vmem>>, vector<16x1x16xbf16>,
    %c1_6 = arith.constant 1 : index
    %c32 = arith.constant 32 : index
    %c0_7 = arith.constant 0 : index
    %7 = vector.load %arg12[%c1_6, %c32, %c0_7] : memref<18x48x16xbf16, #tpu.memory_space<vmem>>, vector<16x1x16xbf16>
    tpu.vector_store %arg12[%c1_6, %c32, %c0_7], %5 {strides = array<i32>} : memref<18x48x16xbf16, #tpu.memory_space<vmem>>, vector<16x1x16xbf16>,
    %cst_8 = arith.constant 0.000000e+00 : bf16
    %8 = vector.broadcast %cst_8 : bf16 to vector<1x18x32xbf16>
    %c0_9 = arith.constant 0 : index
    %c15_10 = arith.constant 15 : index
    %c0_11 = arith.constant 0 : index
    %9 = vector.load %arg13[%c0_9, %c15_10, %c0_11] : memref<18x48x32xbf16, #tpu.memory_space<vmem>>, vector<1x18x32xbf16>
    tpu.vector_store %arg13[%c0_9, %c15_10, %c0_11], %8 {strides = array<i32>} : memref<18x48x32xbf16, #tpu.memory_space<vmem>>, vector<1x18x32xbf16>,
    %c17_12 = arith.constant 17 : index
    %c15_13 = arith.constant 15 : index
    %c0_14 = arith.constant 0 : index
    %10 = vector.load %arg13[%c17_12, %c15_13, %c0_14] : memref<18x48x32xbf16, #tpu.memory_space<vmem>>, vector<1x18x32xbf16>
    tpu.vector_store %arg13[%c17_12, %c15_13, %c0_14], %8 {strides = array<i32>} : memref<18x48x32xbf16, #tpu.memory_space<vmem>>, vector<1x18x32xbf16>,
    %cst_15 = arith.constant 0.000000e+00 : bf16
    %11 = vector.broadcast %cst_15 : bf16 to vector<16x1x32xbf16>
    %c1_16 = arith.constant 1 : index
    %c15_17 = arith.constant 15 : index
    %c0_18 = arith.constant 0 : index
    %12 = vector.load %arg13[%c1_16, %c15_17, %c0_18] : memref<18x48x32xbf16, #tpu.memory_space<vmem>>, vector<16x1x32xbf16>
    tpu.vector_store %arg13[%c1_16, %c15_17, %c0_18], %11 {strides = array<i32>} : memref<18x48x32xbf16, #tpu.memory_space<vmem>>, vector<16x1x32xbf16>,
    %c1_19 = arith.constant 1 : index
    %c32_20 = arith.constant 32 : index
    %c0_21 = arith.constant 0 : index
    %13 = vector.load %arg13[%c1_19, %c32_20, %c0_21] : memref<18x48x32xbf16, #tpu.memory_space<vmem>>, vector<16x1x32xbf16>
    tpu.vector_store %arg13[%c1_19, %c32_20, %c0_21], %11 {strides = array<i32>} : memref<18x48x32xbf16, #tpu.memory_space<vmem>>, vector<16x1x32xbf16>,
    %c0_22 = arith.constant 0 : index
    %c0_23 = arith.constant 0 : index
    %c0_24 = arith.constant 0 : index
    %c0_25 = arith.constant 0 : index
    %c0_26 = arith.constant 0 : index
    %14 = vector.load %arg2[%c0_22, %c0_23, %c0_24, %c0_25, %c0_26] : memref<1x1x18x18x3xbf16, #tpu.memory_space<vmem>>, vector<1x1x16x16x3xbf16>
    %15 = vector.shape_cast %14 : vector<1x1x16x16x3xbf16> to vector<16x16x3xbf16>
    %16 = vector.shape_cast %15 : vector<16x16x3xbf16> to vector<256x3xbf16>
    %c0_27 = arith.constant 0 : index
    %c0_28 = arith.constant 0 : index
    %c0_29 = arith.constant 0 : index
    %c1_30 = arith.constant 1 : index
    %c0_31 = arith.constant 0 : index
    %17 = vector.load %arg2[%c0_27, %c0_28, %c0_29, %c1_30, %c0_31] : memref<1x1x18x18x3xbf16, #tpu.memory_space<vmem>>, vector<1x1x16x16x3xbf16>
    %18 = vector.shape_cast %17 : vector<1x1x16x16x3xbf16> to vector<16x16x3xbf16>
    %19 = vector.shape_cast %18 : vector<16x16x3xbf16> to vector<256x3xbf16>
    %c0_32 = arith.constant 0 : index
    %c0_33 = arith.constant 0 : index
    %c0_34 = arith.constant 0 : index
    %c2 = arith.constant 2 : index
    %c0_35 = arith.constant 0 : index
    %20 = vector.load %arg2[%c0_32, %c0_33, %c0_34, %c2, %c0_35] : memref<1x1x18x18x3xbf16, #tpu.memory_space<vmem>>, vector<1x1x16x16x3xbf16>
    %21 = vector.shape_cast %20 : vector<1x1x16x16x3xbf16> to vector<16x16x3xbf16>
    %22 = vector.shape_cast %21 : vector<16x16x3xbf16> to vector<256x3xbf16>
    %c0_36 = arith.constant 0 : index
    %c0_37 = arith.constant 0 : index
    %c1_38 = arith.constant 1 : index
    %c0_39 = arith.constant 0 : index
    %c0_40 = arith.constant 0 : index
    %23 = vector.load %arg2[%c0_36, %c0_37, %c1_38, %c0_39, %c0_40] : memref<1x1x18x18x3xbf16, #tpu.memory_space<vmem>>, vector<1x1x16x16x3xbf16>
    %24 = vector.shape_cast %23 : vector<1x1x16x16x3xbf16> to vector<16x16x3xbf16>
    %25 = vector.shape_cast %24 : vector<16x16x3xbf16> to vector<256x3xbf16>
    %c0_41 = arith.constant 0 : index
    %c0_42 = arith.constant 0 : index
    %c1_43 = arith.constant 1 : index
    %c1_44 = arith.constant 1 : index
    %c0_45 = arith.constant 0 : index
    %26 = vector.load %arg2[%c0_41, %c0_42, %c1_43, %c1_44, %c0_45] : memref<1x1x18x18x3xbf16, #tpu.memory_space<vmem>>, vector<1x1x16x16x3xbf16>
    %27 = vector.shape_cast %26 : vector<1x1x16x16x3xbf16> to vector<16x16x3xbf16>
    %28 = vector.shape_cast %27 : vector<16x16x3xbf16> to vector<256x3xbf16>
    %c0_46 = arith.constant 0 : index
    %c0_47 = arith.constant 0 : index
    %c1_48 = arith.constant 1 : index
    %c2_49 = arith.constant 2 : index
    %c0_50 = arith.constant 0 : index
    %29 = vector.load %arg2[%c0_46, %c0_47, %c1_48, %c2_49, %c0_50] : memref<1x1x18x18x3xbf16, #tpu.memory_space<vmem>>, vector<1x1x16x16x3xbf16>
    %30 = vector.shape_cast %29 : vector<1x1x16x16x3xbf16> to vector<16x16x3xbf16>
    %31 = vector.shape_cast %30 : vector<16x16x3xbf16> to vector<256x3xbf16>
    %c0_51 = arith.constant 0 : index
    %c0_52 = arith.constant 0 : index
    %c2_53 = arith.constant 2 : index
    %c0_54 = arith.constant 0 : index
    %c0_55 = arith.constant 0 : index
    %32 = vector.load %arg2[%c0_51, %c0_52, %c2_53, %c0_54, %c0_55] : memref<1x1x18x18x3xbf16, #tpu.memory_space<vmem>>, vector<1x1x16x16x3xbf16>
    %33 = vector.shape_cast %32 : vector<1x1x16x16x3xbf16> to vector<16x16x3xbf16>
    %34 = vector.shape_cast %33 : vector<16x16x3xbf16> to vector<256x3xbf16>
    %c0_56 = arith.constant 0 : index
    %c0_57 = arith.constant 0 : index
    %c2_58 = arith.constant 2 : index
    %c1_59 = arith.constant 1 : index
    %c0_60 = arith.constant 0 : index
    %35 = vector.load %arg2[%c0_56, %c0_57, %c2_58, %c1_59, %c0_60] : memref<1x1x18x18x3xbf16, #tpu.memory_space<vmem>>, vector<1x1x16x16x3xbf16>
    %36 = vector.shape_cast %35 : vector<1x1x16x16x3xbf16> to vector<16x16x3xbf16>
    %37 = vector.shape_cast %36 : vector<16x16x3xbf16> to vector<256x3xbf16>
    %c0_61 = arith.constant 0 : index
    %c0_62 = arith.constant 0 : index
    %c2_63 = arith.constant 2 : index
    %c2_64 = arith.constant 2 : index
    %c0_65 = arith.constant 0 : index
    %38 = vector.load %arg2[%c0_61, %c0_62, %c2_63, %c2_64, %c0_65] : memref<1x1x18x18x3xbf16, #tpu.memory_space<vmem>>, vector<1x1x16x16x3xbf16>
    %39 = vector.shape_cast %38 : vector<1x1x16x16x3xbf16> to vector<16x16x3xbf16>
    %40 = vector.shape_cast %39 : vector<16x16x3xbf16> to vector<256x3xbf16>
    %41 = tpu.concatenate %16, %19, %22, %25, %28, %31, %34, %37, %40 in 1 : vector<256x3xbf16>, vector<256x3xbf16>, vector<256x3xbf16>, vector<256x3xbf16>, vector<256x3xbf16>, vector<256x3xbf16>, vector<256x3xbf16>, vector<256x3xbf16>, vector<256x3xbf16> -> vector<256x27xbf16>
    %c0_66 = arith.constant 0 : index
    %c0_67 = arith.constant 0 : index
    %42 = vector.load %arg14[%c0_66, %c0_67] : memref<256x27xbf16, #tpu.memory_space<vmem>>, vector<256x27xbf16>
    tpu.vector_store %arg14[%c0_66, %c0_67], %41 {strides = array<i32>} : memref<256x27xbf16, #tpu.memory_space<vmem>>, vector<256x27xbf16>,
    %c0_68 = arith.constant 0 : index
    %c0_69 = arith.constant 0 : index
    %43 = vector.load %arg14[%c0_68, %c0_69] : memref<256x27xbf16, #tpu.memory_space<vmem>>, vector<256x27xbf16>
    %c0_70 = arith.constant 0 : index
    %c0_71 = arith.constant 0 : index
    %44 = vector.load %arg3[%c0_70, %c0_71] : memref<27x16xbf16, #tpu.memory_space<vmem>>, vector<27x16xbf16>
    %cst_72 = arith.constant dense<0.000000e+00> : vector<256x16xf32>
    %45 = tpu.matmul %43, %44, %cst_72 {dimension_numbers = #tpu.dot_dimension_numbers<[1], [0], [0], [1], [0, 0, 1, 1], [], []>} : vector<256x27xbf16>, vector<27x16xbf16>, vector<256x16xf32> -> vector<256x16xf32>
    %c0_73 = arith.constant 0 : index
    %c0_74 = arith.constant 0 : index
    %46 = vector.load %arg4[%c0_73, %c0_74] : memref<1x16xf32, #tpu.memory_space<vmem>>, vector<1x16xf32>
    %47 = vector.shape_cast %46 : vector<1x16xf32> to vector<16xf32>
    %48 = vector.shape_cast %47 : vector<16xf32> to vector<1x16xf32>
    %49 = vector.broadcast %48 : vector<1x16xf32> to vector<256x16xf32>
    %50 = arith.addf %45, %49 : vector<256x16xf32>
    %cst_75 = arith.constant 0.000000e+00 : f32
    %51 = vector.broadcast %cst_75 : f32 to vector<256x16xf32>
    %52 = arith.maximumf %50, %51 : vector<256x16xf32>
    %53 = arith.truncf %52 : vector<256x16xf32> to vector<256x16xbf16>
    %54 = vector.shape_cast %53 : vector<256x16xbf16> to vector<16x16x16xbf16>
    %c1_76 = arith.constant 1 : index
    %c16 = arith.constant 16 : index
    %c0_77 = arith.constant 0 : index
    %55 = vector.load %arg12[%c1_76, %c16, %c0_77] : memref<18x48x16xbf16, #tpu.memory_space<vmem>>, vector<16x16x16xbf16>
    tpu.vector_store %arg12[%c1_76, %c16, %c0_77], %54 {strides = array<i32>} : memref<18x48x16xbf16, #tpu.memory_space<vmem>>, vector<16x16x16xbf16>,
    %cst_78 = arith.constant 0.000000e+00 : bf16
    %56 = vector.broadcast %cst_78 : bf16 to vector<4x16x16xbf16>
    %57 = arith.extui %0 : i1 to i32
    %c0_i32_79 = arith.constant 0 : i32
    %58 = arith.cmpi ne, %57, %c0_i32_79 : i32
    scf.if %58 {
      %c1_205 = arith.constant 1 : index
      %c16_206 = arith.constant 16 : index
      %c0_207 = arith.constant 0 : index
      %169 = vector.load %arg12[%c1_205, %c16_206, %c0_207] : memref<18x48x16xbf16, #tpu.memory_space<vmem>>, vector<4x16x16xbf16>
      tpu.vector_store %arg12[%c1_205, %c16_206, %c0_207], %56 {strides = array<i32>} : memref<18x48x16xbf16, #tpu.memory_space<vmem>>, vector<4x16x16xbf16>,
    } else {
    }
    %59 = arith.extui %1 : i1 to i32
    %c0_i32_80 = arith.constant 0 : i32
    %60 = arith.cmpi ne, %59, %c0_i32_80 : i32
    scf.if %60 {
      %c13 = arith.constant 13 : index
      %c16_205 = arith.constant 16 : index
      %c0_206 = arith.constant 0 : index
      %169 = vector.load %arg12[%c13, %c16_205, %c0_206] : memref<18x48x16xbf16, #tpu.memory_space<vmem>>, vector<4x16x16xbf16>
      tpu.vector_store %arg12[%c13, %c16_205, %c0_206], %56 {strides = array<i32>} : memref<18x48x16xbf16, #tpu.memory_space<vmem>>, vector<4x16x16xbf16>,
    } else {
    }
    %c0_81 = arith.constant 0 : index
    %c15_82 = arith.constant 15 : index
    %c0_83 = arith.constant 0 : index
    %61 = vector.load %arg12[%c0_81, %c15_82, %c0_83] : memref<18x48x16xbf16, #tpu.memory_space<vmem>>, vector<16x16x16xbf16>
    %62 = vector.shape_cast %61 : vector<16x16x16xbf16> to vector<256x16xbf16>
    %c0_84 = arith.constant 0 : index
    %c16_85 = arith.constant 16 : index
    %c0_86 = arith.constant 0 : index
    %63 = vector.load %arg12[%c0_84, %c16_85, %c0_86] : memref<18x48x16xbf16, #tpu.memory_space<vmem>>, vector<16x16x16xbf16>
    %64 = vector.shape_cast %63 : vector<16x16x16xbf16> to vector<256x16xbf16>
    %c0_87 = arith.constant 0 : index
    %c17_88 = arith.constant 17 : index
    %c0_89 = arith.constant 0 : index
    %65 = vector.load %arg12[%c0_87, %c17_88, %c0_89] : memref<18x48x16xbf16, #tpu.memory_space<vmem>>, vector<16x16x16xbf16>
    %66 = vector.shape_cast %65 : vector<16x16x16xbf16> to vector<256x16xbf16>
    %c1_90 = arith.constant 1 : index
    %c15_91 = arith.constant 15 : index
    %c0_92 = arith.constant 0 : index
    %67 = vector.load %arg12[%c1_90, %c15_91, %c0_92] : memref<18x48x16xbf16, #tpu.memory_space<vmem>>, vector<16x16x16xbf16>
    %68 = vector.shape_cast %67 : vector<16x16x16xbf16> to vector<256x16xbf16>
    %c1_93 = arith.constant 1 : index
    %c16_94 = arith.constant 16 : index
    %c0_95 = arith.constant 0 : index
    %69 = vector.load %arg12[%c1_93, %c16_94, %c0_95] : memref<18x48x16xbf16, #tpu.memory_space<vmem>>, vector<16x16x16xbf16>
    %70 = vector.shape_cast %69 : vector<16x16x16xbf16> to vector<256x16xbf16>
    %c1_96 = arith.constant 1 : index
    %c17_97 = arith.constant 17 : index
    %c0_98 = arith.constant 0 : index
    %71 = vector.load %arg12[%c1_96, %c17_97, %c0_98] : memref<18x48x16xbf16, #tpu.memory_space<vmem>>, vector<16x16x16xbf16>
    %72 = vector.shape_cast %71 : vector<16x16x16xbf16> to vector<256x16xbf16>
    %c2_99 = arith.constant 2 : index
    %c15_100 = arith.constant 15 : index
    %c0_101 = arith.constant 0 : index
    %73 = vector.load %arg12[%c2_99, %c15_100, %c0_101] : memref<18x48x16xbf16, #tpu.memory_space<vmem>>, vector<16x16x16xbf16>
    %74 = vector.shape_cast %73 : vector<16x16x16xbf16> to vector<256x16xbf16>
    %c2_102 = arith.constant 2 : index
    %c16_103 = arith.constant 16 : index
    %c0_104 = arith.constant 0 : index
    %75 = vector.load %arg12[%c2_102, %c16_103, %c0_104] : memref<18x48x16xbf16, #tpu.memory_space<vmem>>, vector<16x16x16xbf16>
    %76 = vector.shape_cast %75 : vector<16x16x16xbf16> to vector<256x16xbf16>
    %c2_105 = arith.constant 2 : index
    %c17_106 = arith.constant 17 : index
    %c0_107 = arith.constant 0 : index
    %77 = vector.load %arg12[%c2_105, %c17_106, %c0_107] : memref<18x48x16xbf16, #tpu.memory_space<vmem>>, vector<16x16x16xbf16>
    %78 = vector.shape_cast %77 : vector<16x16x16xbf16> to vector<256x16xbf16>
    %79 = tpu.concatenate %62, %64, %66, %68, %70, %72, %74, %76, %78 in 1 : vector<256x16xbf16>, vector<256x16xbf16>, vector<256x16xbf16>, vector<256x16xbf16>, vector<256x16xbf16>, vector<256x16xbf16>, vector<256x16xbf16>, vector<256x16xbf16>, vector<256x16xbf16> -> vector<256x144xbf16>
    %c0_108 = arith.constant 0 : index
    %c0_109 = arith.constant 0 : index
    %80 = vector.load %arg15[%c0_108, %c0_109] : memref<256x144xbf16, #tpu.memory_space<vmem>>, vector<256x144xbf16>
    tpu.vector_store %arg15[%c0_108, %c0_109], %79 {strides = array<i32>} : memref<256x144xbf16, #tpu.memory_space<vmem>>, vector<256x144xbf16>,
    %c0_110 = arith.constant 0 : index
    %c0_111 = arith.constant 0 : index
    %81 = vector.load %arg15[%c0_110, %c0_111] : memref<256x144xbf16, #tpu.memory_space<vmem>>, vector<256x144xbf16>
    %c0_112 = arith.constant 0 : index
    %c0_113 = arith.constant 0 : index
    %82 = vector.load %arg5[%c0_112, %c0_113] : memref<144x32xbf16, #tpu.memory_space<vmem>>, vector<144x32xbf16>
    %cst_114 = arith.constant dense<0.000000e+00> : vector<256x32xf32>
    %83 = tpu.matmul %81, %82, %cst_114 {dimension_numbers = #tpu.dot_dimension_numbers<[1], [0], [0], [1], [0, 0, 1, 1], [], []>} : vector<256x144xbf16>, vector<144x32xbf16>, vector<256x32xf32> -> vector<256x32xf32>
    %c0_115 = arith.constant 0 : index
    %c0_116 = arith.constant 0 : index
    %84 = vector.load %arg6[%c0_115, %c0_116] : memref<1x32xf32, #tpu.memory_space<vmem>>, vector<1x32xf32>
    %85 = vector.shape_cast %84 : vector<1x32xf32> to vector<32xf32>
    %86 = vector.shape_cast %85 : vector<32xf32> to vector<1x32xf32>
    %87 = vector.broadcast %86 : vector<1x32xf32> to vector<256x32xf32>
    %88 = arith.addf %83, %87 : vector<256x32xf32>
    %cst_117 = arith.constant 0.000000e+00 : f32
    %89 = vector.broadcast %cst_117 : f32 to vector<256x32xf32>
    %90 = arith.maximumf %88, %89 : vector<256x32xf32>
    %91 = arith.truncf %90 : vector<256x32xf32> to vector<256x32xbf16>
    %92 = vector.shape_cast %91 : vector<256x32xbf16> to vector<16x16x32xbf16>
    %c1_118 = arith.constant 1 : index
    %c16_119 = arith.constant 16 : index
    %c0_120 = arith.constant 0 : index
    %93 = vector.load %arg13[%c1_118, %c16_119, %c0_120] : memref<18x48x32xbf16, #tpu.memory_space<vmem>>, vector<16x16x32xbf16>
    tpu.vector_store %arg13[%c1_118, %c16_119, %c0_120], %92 {strides = array<i32>} : memref<18x48x32xbf16, #tpu.memory_space<vmem>>, vector<16x16x32xbf16>,
    %cst_121 = arith.constant 0.000000e+00 : bf16
    %94 = vector.broadcast %cst_121 : bf16 to vector<4x16x32xbf16>
    %95 = arith.extui %0 : i1 to i32
    %c0_i32_122 = arith.constant 0 : i32
    %96 = arith.cmpi ne, %95, %c0_i32_122 : i32
    scf.if %96 {
      %c1_205 = arith.constant 1 : index
      %c16_206 = arith.constant 16 : index
      %c0_207 = arith.constant 0 : index
      %169 = vector.load %arg13[%c1_205, %c16_206, %c0_207] : memref<18x48x32xbf16, #tpu.memory_space<vmem>>, vector<4x16x32xbf16>
      tpu.vector_store %arg13[%c1_205, %c16_206, %c0_207], %94 {strides = array<i32>} : memref<18x48x32xbf16, #tpu.memory_space<vmem>>, vector<4x16x32xbf16>,
    } else {
    }
    %97 = arith.extui %1 : i1 to i32
    %c0_i32_123 = arith.constant 0 : i32
    %98 = arith.cmpi ne, %97, %c0_i32_123 : i32
    scf.if %98 {
      %c13 = arith.constant 13 : index
      %c16_205 = arith.constant 16 : index
      %c0_206 = arith.constant 0 : index
      %169 = vector.load %arg13[%c13, %c16_205, %c0_206] : memref<18x48x32xbf16, #tpu.memory_space<vmem>>, vector<4x16x32xbf16>
      tpu.vector_store %arg13[%c13, %c16_205, %c0_206], %94 {strides = array<i32>} : memref<18x48x32xbf16, #tpu.memory_space<vmem>>, vector<4x16x32xbf16>,
    } else {
    }
    %c0_124 = arith.constant 0 : index
    %c15_125 = arith.constant 15 : index
    %c0_126 = arith.constant 0 : index
    %99 = vector.load %arg13[%c0_124, %c15_125, %c0_126] : memref<18x48x32xbf16, #tpu.memory_space<vmem>>, vector<16x16x32xbf16>
    %100 = vector.shape_cast %99 : vector<16x16x32xbf16> to vector<256x32xbf16>
    %c0_127 = arith.constant 0 : index
    %c16_128 = arith.constant 16 : index
    %c0_129 = arith.constant 0 : index
    %101 = vector.load %arg13[%c0_127, %c16_128, %c0_129] : memref<18x48x32xbf16, #tpu.memory_space<vmem>>, vector<16x16x32xbf16>
    %102 = vector.shape_cast %101 : vector<16x16x32xbf16> to vector<256x32xbf16>
    %c0_130 = arith.constant 0 : index
    %c17_131 = arith.constant 17 : index
    %c0_132 = arith.constant 0 : index
    %103 = vector.load %arg13[%c0_130, %c17_131, %c0_132] : memref<18x48x32xbf16, #tpu.memory_space<vmem>>, vector<16x16x32xbf16>
    %104 = vector.shape_cast %103 : vector<16x16x32xbf16> to vector<256x32xbf16>
    %c1_133 = arith.constant 1 : index
    %c15_134 = arith.constant 15 : index
    %c0_135 = arith.constant 0 : index
    %105 = vector.load %arg13[%c1_133, %c15_134, %c0_135] : memref<18x48x32xbf16, #tpu.memory_space<vmem>>, vector<16x16x32xbf16>
    %106 = vector.shape_cast %105 : vector<16x16x32xbf16> to vector<256x32xbf16>
    %c1_136 = arith.constant 1 : index
    %c16_137 = arith.constant 16 : index
    %c0_138 = arith.constant 0 : index
    %107 = vector.load %arg13[%c1_136, %c16_137, %c0_138] : memref<18x48x32xbf16, #tpu.memory_space<vmem>>, vector<16x16x32xbf16>
    %108 = vector.shape_cast %107 : vector<16x16x32xbf16> to vector<256x32xbf16>
    %c1_139 = arith.constant 1 : index
    %c17_140 = arith.constant 17 : index
    %c0_141 = arith.constant 0 : index
    %109 = vector.load %arg13[%c1_139, %c17_140, %c0_141] : memref<18x48x32xbf16, #tpu.memory_space<vmem>>, vector<16x16x32xbf16>
    %110 = vector.shape_cast %109 : vector<16x16x32xbf16> to vector<256x32xbf16>
    %c2_142 = arith.constant 2 : index
    %c15_143 = arith.constant 15 : index
    %c0_144 = arith.constant 0 : index
    %111 = vector.load %arg13[%c2_142, %c15_143, %c0_144] : memref<18x48x32xbf16, #tpu.memory_space<vmem>>, vector<16x16x32xbf16>
    %112 = vector.shape_cast %111 : vector<16x16x32xbf16> to vector<256x32xbf16>
    %c2_145 = arith.constant 2 : index
    %c16_146 = arith.constant 16 : index
    %c0_147 = arith.constant 0 : index
    %113 = vector.load %arg13[%c2_145, %c16_146, %c0_147] : memref<18x48x32xbf16, #tpu.memory_space<vmem>>, vector<16x16x32xbf16>
    %114 = vector.shape_cast %113 : vector<16x16x32xbf16> to vector<256x32xbf16>
    %c2_148 = arith.constant 2 : index
    %c17_149 = arith.constant 17 : index
    %c0_150 = arith.constant 0 : index
    %115 = vector.load %arg13[%c2_148, %c17_149, %c0_150] : memref<18x48x32xbf16, #tpu.memory_space<vmem>>, vector<16x16x32xbf16>
    %116 = vector.shape_cast %115 : vector<16x16x32xbf16> to vector<256x32xbf16>
    %117 = tpu.concatenate %100, %102, %104, %106, %108, %110, %112, %114, %116 in 1 : vector<256x32xbf16>, vector<256x32xbf16>, vector<256x32xbf16>, vector<256x32xbf16>, vector<256x32xbf16>, vector<256x32xbf16>, vector<256x32xbf16>, vector<256x32xbf16>, vector<256x32xbf16> -> vector<256x288xbf16>
    %c0_151 = arith.constant 0 : index
    %c0_152 = arith.constant 0 : index
    %118 = vector.load %arg16[%c0_151, %c0_152] : memref<256x288xbf16, #tpu.memory_space<vmem>>, vector<256x288xbf16>
    tpu.vector_store %arg16[%c0_151, %c0_152], %117 {strides = array<i32>} : memref<256x288xbf16, #tpu.memory_space<vmem>>, vector<256x288xbf16>,
    %c0_153 = arith.constant 0 : index
    %c0_154 = arith.constant 0 : index
    %119 = vector.load %arg16[%c0_153, %c0_154] : memref<256x288xbf16, #tpu.memory_space<vmem>>, vector<256x288xbf16>
    %c0_155 = arith.constant 0 : index
    %c0_156 = arith.constant 0 : index
    %120 = vector.load %arg7[%c0_155, %c0_156] : memref<288x32xbf16, #tpu.memory_space<vmem>>, vector<288x32xbf16>
    %cst_157 = arith.constant dense<0.000000e+00> : vector<256x32xf32>
    %121 = tpu.matmul %119, %120, %cst_157 {dimension_numbers = #tpu.dot_dimension_numbers<[1], [0], [0], [1], [0, 0, 1, 1], [], []>} : vector<256x288xbf16>, vector<288x32xbf16>, vector<256x32xf32> -> vector<256x32xf32>
    %c0_158 = arith.constant 0 : index
    %c0_159 = arith.constant 0 : index
    %122 = vector.load %arg8[%c0_158, %c0_159] : memref<1x32xf32, #tpu.memory_space<vmem>>, vector<1x32xf32>
    %123 = vector.shape_cast %122 : vector<1x32xf32> to vector<32xf32>
    %124 = vector.shape_cast %123 : vector<32xf32> to vector<1x32xf32>
    %125 = vector.broadcast %124 : vector<1x32xf32> to vector<256x32xf32>
    %126 = arith.addf %121, %125 : vector<256x32xf32>
    %cst_160 = arith.constant 0.000000e+00 : f32
    %127 = vector.broadcast %cst_160 : f32 to vector<256x32xf32>
    %128 = arith.maximumf %126, %127 : vector<256x32xf32>
    %129 = arith.truncf %128 : vector<256x32xf32> to vector<256x32xbf16>
    %130 = vector.shape_cast %129 : vector<256x32xbf16> to vector<16x16x32xbf16>
    %c1_161 = arith.constant 1 : index
    %c16_162 = arith.constant 16 : index
    %c0_163 = arith.constant 0 : index
    %131 = vector.load %arg13[%c1_161, %c16_162, %c0_163] : memref<18x48x32xbf16, #tpu.memory_space<vmem>>, vector<16x16x32xbf16>
    tpu.vector_store %arg13[%c1_161, %c16_162, %c0_163], %130 {strides = array<i32>} : memref<18x48x32xbf16, #tpu.memory_space<vmem>>, vector<16x16x32xbf16>,
    %cst_164 = arith.constant 0.000000e+00 : bf16
    %132 = vector.broadcast %cst_164 : bf16 to vector<4x16x32xbf16>
    %133 = arith.extui %0 : i1 to i32
    %c0_i32_165 = arith.constant 0 : i32
    %134 = arith.cmpi ne, %133, %c0_i32_165 : i32
    scf.if %134 {
      %c1_205 = arith.constant 1 : index
      %c16_206 = arith.constant 16 : index
      %c0_207 = arith.constant 0 : index
      %169 = vector.load %arg13[%c1_205, %c16_206, %c0_207] : memref<18x48x32xbf16, #tpu.memory_space<vmem>>, vector<4x16x32xbf16>
      tpu.vector_store %arg13[%c1_205, %c16_206, %c0_207], %132 {strides = array<i32>} : memref<18x48x32xbf16, #tpu.memory_space<vmem>>, vector<4x16x32xbf16>,
    } else {
    }
    %135 = arith.extui %1 : i1 to i32
    %c0_i32_166 = arith.constant 0 : i32
    %136 = arith.cmpi ne, %135, %c0_i32_166 : i32
    scf.if %136 {
      %c13 = arith.constant 13 : index
      %c16_205 = arith.constant 16 : index
      %c0_206 = arith.constant 0 : index
      %169 = vector.load %arg13[%c13, %c16_205, %c0_206] : memref<18x48x32xbf16, #tpu.memory_space<vmem>>, vector<4x16x32xbf16>
      tpu.vector_store %arg13[%c13, %c16_205, %c0_206], %132 {strides = array<i32>} : memref<18x48x32xbf16, #tpu.memory_space<vmem>>, vector<4x16x32xbf16>,
    } else {
    }
    %c4 = arith.constant 4 : index
    %c15_167 = arith.constant 15 : index
    %c0_168 = arith.constant 0 : index
    %137 = vector.load %arg13[%c4, %c15_167, %c0_168] : memref<18x48x32xbf16, #tpu.memory_space<vmem>>, vector<8x16x32xbf16>
    %138 = vector.shape_cast %137 : vector<8x16x32xbf16> to vector<128x32xbf16>
    %c4_169 = arith.constant 4 : index
    %c16_170 = arith.constant 16 : index
    %c0_171 = arith.constant 0 : index
    %139 = vector.load %arg13[%c4_169, %c16_170, %c0_171] : memref<18x48x32xbf16, #tpu.memory_space<vmem>>, vector<8x16x32xbf16>
    %140 = vector.shape_cast %139 : vector<8x16x32xbf16> to vector<128x32xbf16>
    %c4_172 = arith.constant 4 : index
    %c17_173 = arith.constant 17 : index
    %c0_174 = arith.constant 0 : index
    %141 = vector.load %arg13[%c4_172, %c17_173, %c0_174] : memref<18x48x32xbf16, #tpu.memory_space<vmem>>, vector<8x16x32xbf16>
    %142 = vector.shape_cast %141 : vector<8x16x32xbf16> to vector<128x32xbf16>
    %c5 = arith.constant 5 : index
    %c15_175 = arith.constant 15 : index
    %c0_176 = arith.constant 0 : index
    %143 = vector.load %arg13[%c5, %c15_175, %c0_176] : memref<18x48x32xbf16, #tpu.memory_space<vmem>>, vector<8x16x32xbf16>
    %144 = vector.shape_cast %143 : vector<8x16x32xbf16> to vector<128x32xbf16>
    %c5_177 = arith.constant 5 : index
    %c16_178 = arith.constant 16 : index
    %c0_179 = arith.constant 0 : index
    %145 = vector.load %arg13[%c5_177, %c16_178, %c0_179] : memref<18x48x32xbf16, #tpu.memory_space<vmem>>, vector<8x16x32xbf16>
    %146 = vector.shape_cast %145 : vector<8x16x32xbf16> to vector<128x32xbf16>
    %c5_180 = arith.constant 5 : index
    %c17_181 = arith.constant 17 : index
    %c0_182 = arith.constant 0 : index
    %147 = vector.load %arg13[%c5_180, %c17_181, %c0_182] : memref<18x48x32xbf16, #tpu.memory_space<vmem>>, vector<8x16x32xbf16>
    %148 = vector.shape_cast %147 : vector<8x16x32xbf16> to vector<128x32xbf16>
    %c6 = arith.constant 6 : index
    %c15_183 = arith.constant 15 : index
    %c0_184 = arith.constant 0 : index
    %149 = vector.load %arg13[%c6, %c15_183, %c0_184] : memref<18x48x32xbf16, #tpu.memory_space<vmem>>, vector<8x16x32xbf16>
    %150 = vector.shape_cast %149 : vector<8x16x32xbf16> to vector<128x32xbf16>
    %c6_185 = arith.constant 6 : index
    %c16_186 = arith.constant 16 : index
    %c0_187 = arith.constant 0 : index
    %151 = vector.load %arg13[%c6_185, %c16_186, %c0_187] : memref<18x48x32xbf16, #tpu.memory_space<vmem>>, vector<8x16x32xbf16>
    %152 = vector.shape_cast %151 : vector<8x16x32xbf16> to vector<128x32xbf16>
    %c6_188 = arith.constant 6 : index
    %c17_189 = arith.constant 17 : index
    %c0_190 = arith.constant 0 : index
    %153 = vector.load %arg13[%c6_188, %c17_189, %c0_190] : memref<18x48x32xbf16, #tpu.memory_space<vmem>>, vector<8x16x32xbf16>
    %154 = vector.shape_cast %153 : vector<8x16x32xbf16> to vector<128x32xbf16>
    %155 = tpu.concatenate %138, %140, %142, %144, %146, %148, %150, %152, %154 in 1 : vector<128x32xbf16>, vector<128x32xbf16>, vector<128x32xbf16>, vector<128x32xbf16>, vector<128x32xbf16>, vector<128x32xbf16>, vector<128x32xbf16>, vector<128x32xbf16>, vector<128x32xbf16> -> vector<128x288xbf16>
    %c0_191 = arith.constant 0 : index
    %c0_192 = arith.constant 0 : index
    %156 = vector.load %arg16[%c0_191, %c0_192] : memref<256x288xbf16, #tpu.memory_space<vmem>>, vector<128x288xbf16>
    tpu.vector_store %arg16[%c0_191, %c0_192], %155 {strides = array<i32>} : memref<256x288xbf16, #tpu.memory_space<vmem>>, vector<128x288xbf16>,
    %c0_193 = arith.constant 0 : index
    %c0_194 = arith.constant 0 : index
    %157 = vector.load %arg16[%c0_193, %c0_194] : memref<256x288xbf16, #tpu.memory_space<vmem>>, vector<128x288xbf16>
    %c0_195 = arith.constant 0 : index
    %c0_196 = arith.constant 0 : index
    %158 = vector.load %arg9[%c0_195, %c0_196] : memref<288x128xbf16, #tpu.memory_space<vmem>>, vector<288x128xbf16>
    %cst_197 = arith.constant dense<0.000000e+00> : vector<128x128xf32>
    %159 = tpu.matmul %157, %158, %cst_197 {dimension_numbers = #tpu.dot_dimension_numbers<[1], [0], [0], [1], [0, 0, 1, 1], [], []>} : vector<128x288xbf16>, vector<288x128xbf16>, vector<128x128xf32> -> vector<128x128xf32>
    %c0_198 = arith.constant 0 : index
    %c0_199 = arith.constant 0 : index
    %160 = vector.load %arg10[%c0_198, %c0_199] : memref<1x128xf32, #tpu.memory_space<vmem>>, vector<1x128xf32>
    %161 = vector.shape_cast %160 : vector<1x128xf32> to vector<128xf32>
    %162 = vector.shape_cast %161 : vector<128xf32> to vector<1x128xf32>
    %163 = vector.broadcast %162 : vector<1x128xf32> to vector<128x128xf32>
    %164 = arith.addf %159, %163 : vector<128x128xf32>
    %165 = vector.shape_cast %164 : vector<128x128xf32> to vector<8x16x128xf32>
    %c0_200 = arith.constant 0 : index
    %c0_201 = arith.constant 0 : index
    %c0_202 = arith.constant 0 : index
    %c0_203 = arith.constant 0 : index
    %c0_204 = arith.constant 0 : index
    %166 = vector.load %arg11[%c0_200, %c0_201, %c0_202, %c0_203, %c0_204] : memref<1x1x8x16x128xf32, #tpu.memory_space<vmem>>, vector<1x1x8x16x128xf32>
    %167 = vector.shape_cast %166 : vector<1x1x8x16x128xf32> to vector<8x16x128xf32>
    %168 = vector.shape_cast %165 : vector<8x16x128xf32> to vector<1x1x8x16x128xf32>
    tpu.vector_store %arg11[%c0_200, %c0_201, %c0_202, %c0_203, %c0_204], %168 {strides = array<i32>} : memref<1x1x8x16x128xf32, #tpu.memory_space<vmem>>, vector<1x1x8x16x128xf32>,
    return
  }
  func.func @transform_0(%arg0: i32, %arg1: i32) -> (i32, i32, i32, i32, i32) {
    %c0_i32 = arith.constant 0 : i32
    %c0_i32_0 = arith.constant 0 : i32
    %c0_i32_1 = arith.constant 0 : i32
    %c0_i32_2 = arith.constant 0 : i32
    return %arg0, %arg1, %c0_i32, %c0_i32_0, %c0_i32_1 : i32, i32, i32, i32, i32
  }
  func.func @transform_1(%arg0: i32, %arg1: i32) -> (i32, i32) {
    %c0_i32 = arith.constant 0 : i32
    %c0_i32_0 = arith.constant 0 : i32
    %c0_i32_1 = arith.constant 0 : i32
    return %c0_i32, %c0_i32_0 : i32, i32
  }
  func.func @transform_2(%arg0: i32, %arg1: i32) -> (i32, i32) {
    %c0_i32 = arith.constant 0 : i32
    %c0_i32_0 = arith.constant 0 : i32
    %c0_i32_1 = arith.constant 0 : i32
    return %c0_i32, %c0_i32_0 : i32, i32
  }
  func.func @transform_3(%arg0: i32, %arg1: i32) -> (i32, i32) {
    %c0_i32 = arith.constant 0 : i32
    %c0_i32_0 = arith.constant 0 : i32
    %c0_i32_1 = arith.constant 0 : i32
    return %c0_i32, %c0_i32_0 : i32, i32
  }
  func.func @transform_4(%arg0: i32, %arg1: i32) -> (i32, i32) {
    %c0_i32 = arith.constant 0 : i32
    %c0_i32_0 = arith.constant 0 : i32
    %c0_i32_1 = arith.constant 0 : i32
    return %c0_i32, %c0_i32_0 : i32, i32
  }
  func.func @transform_5(%arg0: i32, %arg1: i32) -> (i32, i32) {
    %c0_i32 = arith.constant 0 : i32
    %c0_i32_0 = arith.constant 0 : i32
    %c0_i32_1 = arith.constant 0 : i32
    return %c0_i32, %c0_i32_0 : i32, i32
  }
  func.func @transform_6(%arg0: i32, %arg1: i32) -> (i32, i32) {
    %c0_i32 = arith.constant 0 : i32
    %c0_i32_0 = arith.constant 0 : i32
    %c0_i32_1 = arith.constant 0 : i32
    return %c0_i32, %c0_i32_0 : i32, i32
  }
  func.func @transform_7(%arg0: i32, %arg1: i32) -> (i32, i32) {
    %c0_i32 = arith.constant 0 : i32
    %c0_i32_0 = arith.constant 0 : i32
    %c0_i32_1 = arith.constant 0 : i32
    return %c0_i32, %c0_i32_0 : i32, i32
  }
  func.func @transform_8(%arg0: i32, %arg1: i32) -> (i32, i32) {
    %c0_i32 = arith.constant 0 : i32
    %c0_i32_0 = arith.constant 0 : i32
    %c0_i32_1 = arith.constant 0 : i32
    return %c0_i32, %c0_i32_0 : i32, i32
  }
  func.func @transform_9(%arg0: i32, %arg1: i32) -> (i32, i32, i32, i32, i32) {
    %c0_i32 = arith.constant 0 : i32
    %c0_i32_0 = arith.constant 0 : i32
    %c0_i32_1 = arith.constant 0 : i32
    %c0_i32_2 = arith.constant 0 : i32
    return %arg0, %arg1, %c0_i32, %c0_i32_0, %c0_i32_1 : i32, i32, i32, i32, i32
  }
}

</mosaic_0001>

<llo_original>
// kernel: jcnn_forward.1
$region0: #{jcnn_forward.1}
  #allocation0 [shape = 'u32[]', space=smem, size = 0x4, offset = 0x4, fixed_abs, tag = 'smem constant byte address 0x4 - core index']
  #allocation1 [shape = 'u32[144,128]{1,0:T(1,128)}', space=vmem, size = 0x12000, scoped, tag = 'internal scratch']
  #allocation2 [shape = 'bf16[18,48,16]{2,1,0:T(16,128)(2,1)}', space=vmem, size = 0x36000, scoped, tag = 'scratch operand']
  #allocation3 [shape = 'bf16[18,48,32]{2,1,0:T(16,128)(2,1)}', space=vmem, size = 0x36000, scoped, tag = 'scratch operand']
  #allocation4 [shape = 'bf16[256,27]{1,0:T(16,128)(2,1)}', space=vmem, size = 0x10000, scoped, tag = 'scratch operand']
  #allocation5 [shape = 'bf16[256,144]{1,0:T(16,128)(2,1)}', space=vmem, size = 0x20000, scoped, tag = 'scratch operand']
  #allocation6 [shape = 'bf16[256,288]{1,0:T(16,128)(2,1)}', space=vmem, size = 0x30000, scoped, tag = 'scratch operand']
  %s0 = inlined_call_operand.vmem [shape: bf16[2,2,18,18,3], index: 0, kind: input, shape index: {}]
  %s1 = inlined_call_operand.vmem [shape: bf16[27,16], index: 1, kind: input, shape index: {}]
  %s2 = inlined_call_operand.vmem [shape: f32[1,16], index: 2, kind: input, shape index: {}]
  %s3 = inlined_call_operand.vmem [shape: bf16[144,32], index: 3, kind: input, shape index: {}]
  %s4 = inlined_call_operand.vmem [shape: f32[1,32], index: 4, kind: input, shape index: {}]
  %s5 = inlined_call_operand.vmem [shape: bf16[288,32], index: 5, kind: input, shape index: {}]
  %s6 = inlined_call_operand.vmem [shape: f32[1,32], index: 6, kind: input, shape index: {}]
  %s7 = inlined_call_operand.vmem [shape: bf16[288,128], index: 7, kind: input, shape index: {}]
  %s8 = inlined_call_operand.vmem [shape: f32[1,128], index: 8, kind: input, shape index: {}]
  %s9 = inlined_call_operand.vmem [shape: f32[2,2,8,16,128], index: 9, kind: output, shape index: {}]
  %s10 = sld [smem:[#allocation0]]
  $region93: #{jcnn_forward.1} parent=0
    _
  %s12 = ssub.s32 1, %s10
  %s13 = scalar_select 0, %s12, %s10
  loop: start=0, step=1, limit=6
  $region2: #{jcnn_forward.1} parent=0 // loop_pre_header
    _
  $region3: #{jcnn_forward.1} parent=0 // loop_header
    %s15 = sphi 0, %s19
    %p16 = scmp.ge.s32.totalorder %s15, 6
    %s22 = sphi 0, %s34
    %s23 = sphi 0, %s30
    %s24 = sphi 0, %s22
    %s25 = sphi 0, %s23
    %s26 = sphi 0, %s24
    %s27 = sphi 0, %s25
    %s39 = sphi 0, %s41
    %s42 = sphi 0, %s39
    %s43 = sphi 0, %s42
    %s59 = sphi 0, %s43
    %s63 = sphi 0, %s63
    %s65 = sphi 0, %s63
    %s66 = sphi 0, %s65
    %s80 = sphi 0, %s66
    %s84 = sphi 0, %s84
    %s86 = sphi 0, %s84
    %s87 = sphi 0, %s86
    %s101 = sphi 0, %s87
    %s105 = sphi 0, %s105
    %s107 = sphi 0, %s105
    %s108 = sphi 0, %s107
    %s122 = sphi 0, %s108
    %s126 = sphi 0, %s126
    %s128 = sphi 0, %s126
    %s129 = sphi 0, %s128
    %s143 = sphi 0, %s129
    %s147 = sphi 0, %s147
    %s149 = sphi 0, %s147
    %s150 = sphi 0, %s149
    %s164 = sphi 0, %s150
    %s168 = sphi 0, %s168
    %s170 = sphi 0, %s168
    %s171 = sphi 0, %s170
    %s185 = sphi 0, %s171
    %s189 = sphi 0, %s189
    %s191 = sphi 0, %s189
    %s192 = sphi 0, %s191
    %s206 = sphi 0, %s192
    %s210 = sphi 0, %s210
    %s212 = sphi 0, %s210
    %s213 = sphi 0, %s212
    %s227 = sphi 0, %s213
    %s235 = sphi 0, %s237
    %s238 = sphi 0, %s235
    %s239 = sphi 0, %s238
    %s255 = sphi 0, %s239
  $region4: #{jcnn_forward.1} parent=0 // loop_header_branch
    %18 = sbr.rel (%p16) target = $region8
  $region5: #{jcnn_forward.1} parent=0 // loop_body
    %s20 = ssub.s32 %s15, 1
    %s21 = ssub.s32 %s15, 2
    %s28 = sadd.s32 1, %s23
    %p29 = scmp.ge.s32.totalorder %s28, 2
    %s30 = scalar_select %p29, 0, %s28
    %s31 = sadd.s32 1, %s22
    %s32 = scalar_select %p29, %s31, %s22
    %p33 = scmp.ge.s32.totalorder %s32, 2
    %s34 = scalar_select %p33, 0, %s32
    %s35 = ssub.s32 %s22, %s34
    %s36 = ssub.s32 %s23, %s30
    %s37 = sor.u32 %s35, %s36
    %p38 = scmp.eq.s32.totalorder %s37, 0
    %s40 = sadd.s32 %s39, 1
    %s41 = scalar_select %p38, %s39, %s40
    %p44 = pneg %p38
    %p45 = scmp.eq.s32.totalorder %s15, 3
    %p46 = por %p44, %p45
    %p47 = scmp.ne.s32.totalorder %s39, %s42
    %p48 = scmp.eq.s32.totalorder %s15, 0
    %p49 = por %p47, %p48
    %p50 = scmp.ne.s32.totalorder %s39, %s42
    %p51 = scmp.eq.s32.totalorder %s20, 3
    %p52 = por %p50, %p51
    %p53 = scmp.ne.s32.totalorder %s42, %s43
    %p54 = scmp.eq.s32.totalorder %s20, 0
    %p55 = por %p53, %p54
    %p56 = scmp.ne.s32.totalorder %s42, %s43
    %p57 = scmp.eq.s32.totalorder %s21, 3
    %p58 = por %p56, %p57
    %p60 = scmp.ne.s32.totalorder %s43, %s59
    %p61 = scmp.eq.s32.totalorder %s21, 0
    %p62 = por %p60, %p61
    %s64 = sadd.s32 %s63, 1
    %p67 = scmp.eq.s32.totalorder %s15, 3
    %p68 = scmp.ne.s32.totalorder %s63, %s65
    %p69 = scmp.eq.s32.totalorder %s15, 0
    %p70 = por %p68, %p69
    %p71 = scmp.ne.s32.totalorder %s63, %s65
    %p72 = scmp.eq.s32.totalorder %s20, 3
    %p73 = por %p71, %p72
    %p74 = scmp.ne.s32.totalorder %s65, %s66
    %p75 = scmp.eq.s32.totalorder %s20, 0
    %p76 = por %p74, %p75
    %p77 = scmp.ne.s32.totalorder %s65, %s66
    %p78 = scmp.eq.s32.totalorder %s21, 3
    %p79 = por %p77, %p78
    %p81 = scmp.ne.s32.totalorder %s66, %s80
    %p82 = scmp.eq.s32.totalorder %s21, 0
    %p83 = por %p81, %p82
    %s85 = sadd.s32 %s84, 1
    %p88 = scmp.eq.s32.totalorder %s15, 3
    %p89 = scmp.ne.s32.totalorder %s84, %s86
    %p90 = scmp.eq.s32.totalorder %s15, 0
    %p91 = por %p89, %p90
    %p92 = scmp.ne.s32.totalorder %s84, %s86
    %p93 = scmp.eq.s32.totalorder %s20, 3
    %p94 = por %p92, %p93
    %p95 = scmp.ne.s32.totalorder %s86, %s87
    %p96 = scmp.eq.s32.totalorder %s20, 0
    %p97 = por %p95, %p96
    %p98 = scmp.ne.s32.totalorder %s86, %s87
    %p99 = scmp.eq.s32.totalorder %s21, 3
    %p100 = por %p98, %p99
    %p102 = scmp.ne.s32.totalorder %s87, %s101
    %p103 = scmp.eq.s32.totalorder %s21, 0
    %p104 = por %p102, %p103
    %s106 = sadd.s32 %s105, 1
    %p109 = scmp.eq.s32.totalorder %s15, 3
    %p110 = scmp.ne.s32.totalorder %s105, %s107
    %p111 = scmp.eq.s32.totalorder %s15, 0
    %p112 = por %p110, %p111
    %p113 = scmp.ne.s32.totalorder %s105, %s107
    %p114 = scmp.eq.s32.totalorder %s20, 3
    %p115 = por %p113, %p114
    %p116 = scmp.ne.s32.totalorder %s107, %s108
    %p117 = scmp.eq.s32.totalorder %s20, 0
    %p118 = por %p116, %p117
    %p119 = scmp.ne.s32.totalorder %s107, %s108
    %p120 = scmp.eq.s32.totalorder %s21, 3
    %p121 = por %p119, %p120
    %p123 = scmp.ne.s32.totalorder %s108, %s122
    %p124 = scmp.eq.s32.totalorder %s21, 0
    %p125 = por %p123, %p124
    %s127 = sadd.s32 %s126, 1
    %p130 = scmp.eq.s32.totalorder %s15, 3
    %p131 = scmp.ne.s32.totalorder %s126, %s128
    %p132 = scmp.eq.s32.totalorder %s15, 0
    %p133 = por %p131, %p132
    %p134 = scmp.ne.s32.totalorder %s126, %s128
    %p135 = scmp.eq.s32.totalorder %s20, 3
    %p136 = por %p134, %p135
    %p137 = scmp.ne.s32.totalorder %s128, %s129
    %p138 = scmp.eq.s32.totalorder %s20, 0
    %p139 = por %p137, %p138
    %p140 = scmp.ne.s32.totalorder %s128, %s129
    %p141 = scmp.eq.s32.totalorder %s21, 3
    %p142 = por %p140, %p141
    %p144 = scmp.ne.s32.totalorder %s129, %s143
    %p145 = scmp.eq.s32.totalorder %s21, 0
    %p146 = por %p144, %p145
    %s148 = sadd.s32 %s147, 1
    %p151 = scmp.eq.s32.totalorder %s15, 3
    %p152 = scmp.ne.s32.totalorder %s147, %s149
    %p153 = scmp.eq.s32.totalorder %s15, 0
    %p154 = por %p152, %p153
    %p155 = scmp.ne.s32.totalorder %s147, %s149
    %p156 = scmp.eq.s32.totalorder %s20, 3
    %p157 = por %p155, %p156
    %p158 = scmp.ne.s32.totalorder %s149, %s150
    %p159 = scmp.eq.s32.totalorder %s20, 0
    %p160 = por %p158, %p159
    %p161 = scmp.ne.s32.totalorder %s149, %s150
    %p162 = scmp.eq.s32.totalorder %s21, 3
    %p163 = por %p161, %p162
    %p165 = scmp.ne.s32.totalorder %s150, %s164
    %p166 = scmp.eq.s32.totalorder %s21, 0
    %p167 = por %p165, %p166
    %s169 = sadd.s32 %s168, 1
    %p172 = scmp.eq.s32.totalorder %s15, 3
    %p173 = scmp.ne.s32.totalorder %s168, %s170
    %p174 = scmp.eq.s32.totalorder %s15, 0
    %p175 = por %p173, %p174
    %p176 = scmp.ne.s32.totalorder %s168, %s170
    %p177 = scmp.eq.s32.totalorder %s20, 3
    %p178 = por %p176, %p177
    %p179 = scmp.ne.s32.totalorder %s170, %s171
    %p180 = scmp.eq.s32.totalorder %s20, 0
    %p181 = por %p179, %p180
    %p182 = scmp.ne.s32.totalorder %s170, %s171
    %p183 = scmp.eq.s32.totalorder %s21, 3
    %p184 = por %p182, %p183
    %p186 = scmp.ne.s32.totalorder %s171, %s185
    %p187 = scmp.eq.s32.totalorder %s21, 0
    %p188 = por %p186, %p187
    %s190 = sadd.s32 %s189, 1
    %p193 = scmp.eq.s32.totalorder %s15, 3
    %p194 = scmp.ne.s32.totalorder %s189, %s191
    %p195 = scmp.eq.s32.totalorder %s15, 0
    %p196 = por %p194, %p195
    %p197 = scmp.ne.s32.totalorder %s189, %s191
    %p198 = scmp.eq.s32.totalorder %s20, 3
    %p199 = por %p197, %p198
    %p200 = scmp.ne.s32.totalorder %s191, %s192
    %p201 = scmp.eq.s32.totalorder %s20, 0
    %p202 = por %p200, %p201
    %p203 = scmp.ne.s32.totalorder %s191, %s192
    %p204 = scmp.eq.s32.totalorder %s21, 3
    %p205 = por %p203, %p204
    %p207 = scmp.ne.s32.totalorder %s192, %s206
    %p208 = scmp.eq.s32.totalorder %s21, 0
    %p209 = por %p207, %p208
    %s211 = sadd.s32 %s210, 1
    %p214 = scmp.eq.s32.totalorder %s15, 3
    %p215 = scmp.ne.s32.totalorder %s210, %s212
    %p216 = scmp.eq.s32.totalorder %s15, 0
    %p217 = por %p215, %p216
    %p218 = scmp.ne.s32.totalorder %s210, %s212
    %p219 = scmp.eq.s32.totalorder %s20, 3
    %p220 = por %p218, %p219
    %p221 = scmp.ne.s32.totalorder %s212, %s213
    %p222 = scmp.eq.s32.totalorder %s20, 0
    %p223 = por %p221, %p222
    %p224 = scmp.ne.s32.totalorder %s212, %s213
    %p225 = scmp.eq.s32.totalorder %s21, 3
    %p226 = por %p224, %p225
    %p228 = scmp.ne.s32.totalorder %s213, %s227
    %p229 = scmp.eq.s32.totalorder %s21, 0
    %p230 = por %p228, %p229
    %s231 = ssub.s32 %s22, %s34
    %s232 = ssub.s32 %s23, %s30
    %s233 = sor.u32 %s231, %s232
    %p234 = scmp.eq.s32.totalorder %s233, 0
    %s236 = sadd.s32 %s235, 1
    %s237 = scalar_select %p234, %s235, %s236
    %p240 = pneg %p234
    %p241 = scmp.eq.s32.totalorder %s15, 3
    %p242 = por %p240, %p241
    %p243 = scmp.ne.s32.totalorder %s235, %s238
    %p244 = scmp.eq.s32.totalorder %s15, 0
    %p245 = por %p243, %p244
    %p246 = scmp.ne.s32.totalorder %s235, %s238
    %p247 = scmp.eq.s32.totalorder %s20, 3
    %p248 = por %p246, %p247
    %p249 = scmp.ne.s32.totalorder %s238, %s239
    %p250 = scmp.eq.s32.totalorder %s20, 0
    %p251 = por %p249, %p250
    %p252 = scmp.ne.s32.totalorder %s238, %s239
    %p253 = scmp.eq.s32.totalorder %s21, 3
    %p254 = por %p252, %p253
    %p256 = scmp.ne.s32.totalorder %s239, %s255
    %p257 = scmp.eq.s32.totalorder %s21, 0
    %p258 = por %p256, %p257
    %p259 = scmp.le.s32.totalorder 1, %s15
    %p260 = scmp.lt.s32.totalorder %s15, 5
    %p261 = pnand %p259, %p260
    %p262 = pneg %p261
    // Predicated region
    $region9: #{jcnn_forward.1} parent=5 // pred_check
      _
    $region10: #{jcnn_forward.1} parent=5 // pred_check_branch
      %264 = sbr.rel (%p261) target = $region12
    $region11: #{jcnn_forward.1} parent=5 // pred_region
      %s265 = ssub.s32 %s15, 1
      // Predicated region
      $region13: #{jcnn_forward.1} parent=11 // pred_check
        %p266 = pneg %p76
      $region14: #{jcnn_forward.1} parent=11 // pred_check_branch
        %268 = sbr.rel (%p266) target = $region16
      $region15: #{jcnn_forward.1} parent=11 // pred_region
        _
      $region16: #{jcnn_forward.1} parent=11 // pred_fallthru
        _
      // Predicated region
      $region17: #{jcnn_forward.1} parent=11 // pred_check
        %p269 = pneg %p97
      $region18: #{jcnn_forward.1} parent=11 // pred_check_branch
        %271 = sbr.rel (%p269) target = $region20
      $region19: #{jcnn_forward.1} parent=11 // pred_region
        _
      $region20: #{jcnn_forward.1} parent=11 // pred_fallthru
        _
      // Predicated region
      $region21: #{jcnn_forward.1} parent=11 // pred_check
        %p272 = pneg %p118
      $region22: #{jcnn_forward.1} parent=11 // pred_check_branch
        %274 = sbr.rel (%p272) target = $region24
      $region23: #{jcnn_forward.1} parent=11 // pred_region
        _
      $region24: #{jcnn_forward.1} parent=11 // pred_fallthru
        _
      // Predicated region
      $region25: #{jcnn_forward.1} parent=11 // pred_check
        %p275 = pneg %p139
      $region26: #{jcnn_forward.1} parent=11 // pred_check_branch
        %277 = sbr.rel (%p275) target = $region28
      $region27: #{jcnn_forward.1} parent=11 // pred_region
        _
      $region28: #{jcnn_forward.1} parent=11 // pred_fallthru
        _
      // Predicated region
      $region29: #{jcnn_forward.1} parent=11 // pred_check
        %p278 = pneg %p160
      $region30: #{jcnn_forward.1} parent=11 // pred_check_branch
        %280 = sbr.rel (%p278) target = $region32
      $region31: #{jcnn_forward.1} parent=11 // pred_region
        _
      $region32: #{jcnn_forward.1} parent=11 // pred_fallthru
        _
      // Predicated region
      $region33: #{jcnn_forward.1} parent=11 // pred_check
        %p281 = pneg %p181
      $region34: #{jcnn_forward.1} parent=11 // pred_check_branch
        %283 = sbr.rel (%p281) target = $region36
      $region35: #{jcnn_forward.1} parent=11 // pred_region
        _
      $region36: #{jcnn_forward.1} parent=11 // pred_fallthru
        _
      // Predicated region
      $region37: #{jcnn_forward.1} parent=11 // pred_check
        %p284 = pneg %p202
      $region38: #{jcnn_forward.1} parent=11 // pred_check_branch
        %286 = sbr.rel (%p284) target = $region40
      $region39: #{jcnn_forward.1} parent=11 // pred_region
        _
      $region40: #{jcnn_forward.1} parent=11 // pred_fallthru
        _
      // Predicated region
      $region41: #{jcnn_forward.1} parent=11 // pred_check
        %p287 = pneg %p223
      $region42: #{jcnn_forward.1} parent=11 // pred_check_branch
        %289 = sbr.rel (%p287) target = $region44
      $region43: #{jcnn_forward.1} parent=11 // pred_region
        _
      $region44: #{jcnn_forward.1} parent=11 // pred_fallthru
        _
    $region12: #{jcnn_forward.1} parent=5 // pred_fallthru
      _
    %p290 = scmp.lt.s32.totalorder %s15, 4
    // Predicated region
    $region45: #{jcnn_forward.1} parent=5 // pred_check
      %p291 = pneg %p290
    $region46: #{jcnn_forward.1} parent=5 // pred_check_branch
      %293 = sbr.rel (%p291) target = $region48
    $region47: #{jcnn_forward.1} parent=5 // pred_region
      // Predicated region
      $region49: #{jcnn_forward.1} parent=47 // pred_check
        %p294 = pneg %p49
      $region50: #{jcnn_forward.1} parent=47 // pred_check_branch
        %296 = sbr.rel (%p294) target = $region52
      $region51: #{jcnn_forward.1} parent=47 // pred_region
        %p297 = scmp.lt.s32.totalorder %s22, 1
        %s298 = scalar_select %p297, %s22, 1
        %p299 = scmp.lt.s32.totalorder %s23, 1
        %s300 = scalar_select %p299, %s23, 1
        %s301 = smul.addr %s300, 54
        %s302 = smul.addr %s298, 108
        %s303 = sadd.s32 %s301, %s302
        %s304 = smul.addr %s303, 4
        %s305 = scalar_lea.vmem %s0, %s304
      $region52: #{jcnn_forward.1} parent=47 // pred_fallthru
        _
    $region48: #{jcnn_forward.1} parent=5 // pred_fallthru
      _
    %p306 = scmp.le.s32.totalorder 1, %s15
    %p307 = scmp.lt.s32.totalorder %s15, 5
    %p308 = pnand %p306, %p307
    %p309 = pneg %p308
    // Predicated region
    $region53: #{jcnn_forward.1} parent=5 // pred_check
      _
    $region54: #{jcnn_forward.1} parent=5 // pred_check_branch
      %311 = sbr.rel (%p308) target = $region56
    $region55: #{jcnn_forward.1} parent=5 // pred_region
      %s312 = ssub.s32 %s15, 1
      %p313 = scmp.lt.s32.totalorder %s24, 1
      %s314 = scalar_select %p313, %s24, 1
      %p315 = scmp.lt.s32.totalorder %s25, 1
      %s316 = scalar_select %p315, %s25, 1
      %s317 = smul.addr %s316, 54
      %s318 = smul.addr %s314, 108
      %s319 = sadd.s32 %s317, %s318
      %s320 = smul.addr %s319, 4
      %s321 = scalar_lea.vmem %s0, %s320
      %p322 = pneg %p55
      %p323 = pneg %p52
      %p324 = pneg %p76
      %p325 = pneg %p73
      %p326 = pneg %p97
      %p327 = pneg %p94
      %p328 = pneg %p118
      %p329 = pneg %p115
      %p330 = pneg %p139
      %p331 = pneg %p136
      %p332 = pneg %p160
      %p333 = pneg %p157
      %p334 = pneg %p181
      %p335 = pneg %p178
      %p336 = pneg %p202
      %p337 = pneg %p199
      %p338 = pneg %p223
      %p339 = pneg %p220
      %p340 = pneg %p251
      %p341 = pneg %p248
      %p342 = scmp.lt.s32.totalorder %s24, 1
      %s343 = scalar_select %p342, %s24, 1
      %p344 = scmp.lt.s32.totalorder %s25, 1
      %s345 = scalar_select %p344, %s25, 1
      %s346 = smul.addr %s345, 16
      %s347 = smul.addr %s343, 32
      %s348 = sadd.s32 %s346, %s347
      %s349 = smul.addr %s348, 8
      %s350 = scalar_lea.vmem %s9, %s349
      %p351 = scmp.lt.s32.totalorder %s24, 1
      %s352 = scalar_select %p351, %s24, 1
      %p353 = scmp.lt.s32.totalorder %s25, 1
      %s354 = scalar_select %p353, %s25, 1
      %s355 = smul.addr %s354, 54
      %s356 = smul.addr %s352, 108
      %s357 = sadd.s32 %s355, %s356
      %s358 = smul.addr %s357, 4
      %s359 = scalar_lea.vmem %s0, %s358
      %p360 = scmp.lt.s32.totalorder %s24, 1
      %s361 = scalar_select %p360, %s24, 1
      %p362 = scmp.lt.s32.totalorder %s25, 1
      %s363 = scalar_select %p362, %s25, 1
      %s364 = smul.addr %s363, 16
      %s365 = smul.addr %s361, 32
      %s366 = sadd.s32 %s364, %s365
      %s367 = smul.addr %s366, 8
      %s368 = scalar_lea.vmem %s9, %s367
      %p370 = scmp.eq.s32.totalorder %s25, 0
      %p371 = scmp.eq.s32.totalorder %s25, 1
      %vm372 = vcmask 130055
      %vm373 = vsmask.f32 7966
      %vm374 = vmand %vm372, %vm373
      %v375 = vld [vmem:[#allocation2] sm:$0x80]
      %v376 = vsel %vm374, 0, %v375
      %377 = vst [vmem:[#allocation2] sm:$0x80] %v376
      %vm378 = vcmask 130048
      %379 = vst.msk [vmem:[#allocation2 + $0x8] sm:$0xff] %vm378, 0
      %vm380 = vcmask 122880
      %vm381 = vsmask.f32 256
      %vm382 = vmand %vm380, %vm381
      %v383 = vld [vmem:[#allocation2 + $0x10] sm:$0x1]
      %v384 = vsel %vm382, 0, %v383
      %385 = vst [vmem:[#allocation2 + $0x10] sm:$0x1] %v384
      %s386 = scalar_lea.vmem [#allocation2], 408
      %v387 = vld [vmem:[%s386] sm:$0x80]
      %v388 = vsel %vm374, 0, %v387
      %389 = vst [vmem:[%s386] sm:$0x80] %v388
      %390 = vst.msk [vmem:[%s386 + $0x8] sm:$0xff] %vm378, 0
      %v391 = vld [vmem:[%s386 + $0x10] sm:$0x1]
      %v392 = vsel %vm382, 0, %v391
      %393 = vst [vmem:[%s386 + $0x10] sm:$0x1] %v392
      %s394 = scalar_lea.vmem [#allocation2], 24
      %v395 = vld [vmem:[%s394] sm:$0x80]
      %v396 = vsel %vm374, 0, %v395
      %397 = vst [vmem:[%s394] sm:$0x80] %v396
      %v398 = vld [vmem:[%s394 + $0x18] sm:$0x80]
      %v399 = vsel %vm374, 0, %v398
      %400 = vst [vmem:[%s394 + $0x18] sm:$0x80] %v399
      %v401 = vld [vmem:[%s394 + $0x30] sm:$0x80]
      %v402 = vsel %vm374, 0, %v401
      %403 = vst [vmem:[%s394 + $0x30] sm:$0x80] %v402
      %v404 = vld [vmem:[%s394 + $0x48] sm:$0x80]
      %v405 = vsel %vm374, 0, %v404
      %406 = vst [vmem:[%s394 + $0x48] sm:$0x80] %v405
      %v407 = vld [vmem:[%s394 + $0x60] sm:$0x80]
      %v408 = vsel %vm374, 0, %v407
      %409 = vst [vmem:[%s394 + $0x60] sm:$0x80] %v408
      %v410 = vld [vmem:[%s394 + $0x78] sm:$0x80]
      %v411 = vsel %vm374, 0, %v410
      %412 = vst [vmem:[%s394 + $0x78] sm:$0x80] %v411
      %v413 = vld [vmem:[%s394 + $0x90] sm:$0x80]
      %v414 = vsel %vm374, 0, %v413
      %415 = vst [vmem:[%s394 + $0x90] sm:$0x80] %v414
      %v416 = vld [vmem:[%s394 + $0xa8] sm:$0x80]
      %v417 = vsel %vm374, 0, %v416
      %418 = vst [vmem:[%s394 + $0xa8] sm:$0x80] %v417
      %v419 = vld [vmem:[%s394 + $0xc0] sm:$0x80]
      %v420 = vsel %vm374, 0, %v419
      %421 = vst [vmem:[%s394 + $0xc0] sm:$0x80] %v420
      %v422 = vld [vmem:[%s394 + $0xd8] sm:$0x80]
      %v423 = vsel %vm374, 0, %v422
      %424 = vst [vmem:[%s394 + $0xd8] sm:$0x80] %v423
      %v425 = vld [vmem:[%s394 + $0xf0] sm:$0x80]
      %v426 = vsel %vm374, 0, %v425
      %427 = vst [vmem:[%s394 + $0xf0] sm:$0x80] %v426
      %v428 = vld [vmem:[%s394 + $0x108] sm:$0x80]
      %v429 = vsel %vm374, 0, %v428
      %430 = vst [vmem:[%s394 + $0x108] sm:$0x80] %v429
      %v431 = vld [vmem:[%s394 + $0x120] sm:$0x80]
      %v432 = vsel %vm374, 0, %v431
      %433 = vst [vmem:[%s394 + $0x120] sm:$0x80] %v432
      %v434 = vld [vmem:[%s394 + $0x138] sm:$0x80]
      %v435 = vsel %vm374, 0, %v434
      %436 = vst [vmem:[%s394 + $0x138] sm:$0x80] %v435
      %v437 = vld [vmem:[%s394 + $0x150] sm:$0x80]
      %v438 = vsel %vm374, 0, %v437
      %439 = vst [vmem:[%s394 + $0x150] sm:$0x80] %v438
      %v440 = vld [vmem:[%s394 + $0x168] sm:$0x80]
      %v441 = vsel %vm374, 0, %v440
      %442 = vst [vmem:[%s394 + $0x168] sm:$0x80] %v441
      %v443 = vld [vmem:[%s394 + $0x10] sm:$0x1]
      %v444 = vsel %vm382, 0, %v443
      %445 = vst [vmem:[%s394 + $0x10] sm:$0x1] %v444
      %v446 = vld [vmem:[%s394 + $0x28] sm:$0x1]
      %v447 = vsel %vm382, 0, %v446
      %448 = vst [vmem:[%s394 + $0x28] sm:$0x1] %v447
      %v449 = vld [vmem:[%s394 + $0x40] sm:$0x1]
      %v450 = vsel %vm382, 0, %v449
      %451 = vst [vmem:[%s394 + $0x40] sm:$0x1] %v450
      %v452 = vld [vmem:[%s394 + $0x58] sm:$0x1]
      %v453 = vsel %vm382, 0, %v452
      %454 = vst [vmem:[%s394 + $0x58] sm:$0x1] %v453
      %v455 = vld [vmem:[%s394 + $0x70] sm:$0x1]
      %v456 = vsel %vm382, 0, %v455
      %457 = vst [vmem:[%s394 + $0x70] sm:$0x1] %v456
      %v458 = vld [vmem:[%s394 + $0x88] sm:$0x1]
      %v459 = vsel %vm382, 0, %v458
      %460 = vst [vmem:[%s394 + $0x88] sm:$0x1] %v459
      %v461 = vld [vmem:[%s394 + $0xa0] sm:$0x1]
      %v462 = vsel %vm382, 0, %v461
      %463 = vst [vmem:[%s394 + $0xa0] sm:$0x1] %v462
      %v464 = vld [vmem:[%s394 + $0xb8] sm:$0x1]
      %v465 = vsel %vm382, 0, %v464
      %466 = vst [vmem:[%s394 + $0xb8] sm:$0x1] %v465
      %v467 = vld [vmem:[%s394 + $0xd0] sm:$0x1]
      %v468 = vsel %vm382, 0, %v467
      %469 = vst [vmem:[%s394 + $0xd0] sm:$0x1] %v468
      %v470 = vld [vmem:[%s394 + $0xe8] sm:$0x1]
      %v471 = vsel %vm382, 0, %v470
      %472 = vst [vmem:[%s394 + $0xe8] sm:$0x1] %v471
      %v473 = vld [vmem:[%s394 + $0x100] sm:$0x1]
      %v474 = vsel %vm382, 0, %v473
      %475 = vst [vmem:[%s394 + $0x100] sm:$0x1] %v474
      %v476 = vld [vmem:[%s394 + $0x118] sm:$0x1]
      %v477 = vsel %vm382, 0, %v476
      %478 = vst [vmem:[%s394 + $0x118] sm:$0x1] %v477
      %v479 = vld [vmem:[%s394 + $0x130] sm:$0x1]
      %v480 = vsel %vm382, 0, %v479
      %481 = vst [vmem:[%s394 + $0x130] sm:$0x1] %v480
      %v482 = vld [vmem:[%s394 + $0x148] sm:$0x1]
      %v483 = vsel %vm382, 0, %v482
      %484 = vst [vmem:[%s394 + $0x148] sm:$0x1] %v483
      %v485 = vld [vmem:[%s394 + $0x160] sm:$0x1]
      %v486 = vsel %vm382, 0, %v485
      %487 = vst [vmem:[%s394 + $0x160] sm:$0x1] %v486
      %v488 = vld [vmem:[%s394 + $0x178] sm:$0x1]
      %v489 = vsel %vm382, 0, %v488
      %490 = vst [vmem:[%s394 + $0x178] sm:$0x1] %v489
      %vm491 = vcmask 261127
      %vm492 = vmand %vm491, %vm373
      %v493 = vld [vmem:[#allocation3] sm:$0x80]
      %v494 = vsel %vm492, 0, %v493
      %495 = vst [vmem:[#allocation3] sm:$0x80] %v494
      %vm496 = vcmask 261120
      %497 = vst.msk [vmem:[#allocation3 + $0x8] sm:$0xff] %vm496, 0
      %vm498 = vcmask 253952
      %vm499 = vmand %vm498, %vm381
      %v500 = vld [vmem:[#allocation3 + $0x10] sm:$0x1]
      %v501 = vsel %vm499, 0, %v500
      %502 = vst [vmem:[#allocation3 + $0x10] sm:$0x1] %v501
      %s503 = scalar_lea.vmem [#allocation3], 408
      %v504 = vld [vmem:[%s503] sm:$0x80]
      %v505 = vsel %vm492, 0, %v504
      %506 = vst [vmem:[%s503] sm:$0x80] %v505
      %507 = vst.msk [vmem:[%s503 + $0x8] sm:$0xff] %vm496, 0
      %v508 = vld [vmem:[%s503 + $0x10] sm:$0x1]
      %v509 = vsel %vm499, 0, %v508
      %510 = vst [vmem:[%s503 + $0x10] sm:$0x1] %v509
      %s511 = scalar_lea.vmem [#allocation3], 24
      %v512 = vld [vmem:[%s511] sm:$0x80]
      %v513 = vsel %vm492, 0, %v512
      %514 = vst [vmem:[%s511] sm:$0x80] %v513
      %v515 = vld [vmem:[%s511 + $0x18] sm:$0x80]
      %v516 = vsel %vm492, 0, %v515
      %517 = vst [vmem:[%s511 + $0x18] sm:$0x80] %v516
      %v518 = vld [vmem:[%s511 + $0x30] sm:$0x80]
      %v519 = vsel %vm492, 0, %v518
      %520 = vst [vmem:[%s511 + $0x30] sm:$0x80] %v519
      %v521 = vld [vmem:[%s511 + $0x48] sm:$0x80]
      %v522 = vsel %vm492, 0, %v521
      %523 = vst [vmem:[%s511 + $0x48] sm:$0x80] %v522
      %v524 = vld [vmem:[%s511 + $0x60] sm:$0x80]
      %v525 = vsel %vm492, 0, %v524
      %526 = vst [vmem:[%s511 + $0x60] sm:$0x80] %v525
      %v527 = vld [vmem:[%s511 + $0x78] sm:$0x80]
      %v528 = vsel %vm492, 0, %v527
      %529 = vst [vmem:[%s511 + $0x78] sm:$0x80] %v528
      %v530 = vld [vmem:[%s511 + $0x90] sm:$0x80]
      %v531 = vsel %vm492, 0, %v530
      %532 = vst [vmem:[%s511 + $0x90] sm:$0x80] %v531
      %v533 = vld [vmem:[%s511 + $0xa8] sm:$0x80]
      %v534 = vsel %vm492, 0, %v533
      %535 = vst [vmem:[%s511 + $0xa8] sm:$0x80] %v534
      %v536 = vld [vmem:[%s511 + $0xc0] sm:$0x80]
      %v537 = vsel %vm492, 0, %v536
      %538 = vst [vmem:[%s511 + $0xc0] sm:$0x80] %v537
      %v539 = vld [vmem:[%s511 + $0xd8] sm:$0x80]
      %v540 = vsel %vm492, 0, %v539
      %541 = vst [vmem:[%s511 + $0xd8] sm:$0x80] %v540
      %v542 = vld [vmem:[%s511 + $0xf0] sm:$0x80]
      %v543 = vsel %vm492, 0, %v542
      %544 = vst [vmem:[%s511 + $0xf0] sm:$0x80] %v543
      %v545 = vld [vmem:[%s511 + $0x108] sm:$0x80]
      %v546 = vsel %vm492, 0, %v545
      %547 = vst [vmem:[%s511 + $0x108] sm:$0x80] %v546
      %v548 = vld [vmem:[%s511 + $0x120] sm:$0x80]
      %v549 = vsel %vm492, 0, %v548
      %550 = vst [vmem:[%s511 + $0x120] sm:$0x80] %v549
      %v551 = vld [vmem:[%s511 + $0x138] sm:$0x80]
      %v552 = vsel %vm492, 0, %v551
      %553 = vst [vmem:[%s511 + $0x138] sm:$0x80] %v552
      %v554 = vld [vmem:[%s511 + $0x150] sm:$0x80]
      %v555 = vsel %vm492, 0, %v554
      %556 = vst [vmem:[%s511 + $0x150] sm:$0x80] %v555
      %v557 = vld [vmem:[%s511 + $0x168] sm:$0x80]
      %v558 = vsel %vm492, 0, %v557
      %559 = vst [vmem:[%s511 + $0x168] sm:$0x80] %v558
      %v560 = vld [vmem:[%s511 + $0x10] sm:$0x1]
      %v561 = vsel %vm499, 0, %v560
      %562 = vst [vmem:[%s511 + $0x10] sm:$0x1] %v561
      %v563 = vld [vmem:[%s511 + $0x28] sm:$0x1]
      %v564 = vsel %vm499, 0, %v563
      %565 = vst [vmem:[%s511 + $0x28] sm:$0x1] %v564
      %v566 = vld [vmem:[%s511 + $0x40] sm:$0x1]
      %v567 = vsel %vm499, 0, %v566
      %568 = vst [vmem:[%s511 + $0x40] sm:$0x1] %v567
      %v569 = vld [vmem:[%s511 + $0x58] sm:$0x1]
      %v570 = vsel %vm499, 0, %v569
      %571 = vst [vmem:[%s511 + $0x58] sm:$0x1] %v570
      %v572 = vld [vmem:[%s511 + $0x70] sm:$0x1]
      %v573 = vsel %vm499, 0, %v572
      %574 = vst [vmem:[%s511 + $0x70] sm:$0x1] %v573
      %v575 = vld [vmem:[%s511 + $0x88] sm:$0x1]
      %v576 = vsel %vm499, 0, %v575
      %577 = vst [vmem:[%s511 + $0x88] sm:$0x1] %v576
      %v578 = vld [vmem:[%s511 + $0xa0] sm:$0x1]
      %v579 = vsel %vm499, 0, %v578
      %580 = vst [vmem:[%s511 + $0xa0] sm:$0x1] %v579
      %v581 = vld [vmem:[%s511 + $0xb8] sm:$0x1]
      %v582 = vsel %vm499, 0, %v581
      %583 = vst [vmem:[%s511 + $0xb8] sm:$0x1] %v582
      %v584 = vld [vmem:[%s511 + $0xd0] sm:$0x1]
      %v585 = vsel %vm499, 0, %v584
      %586 = vst [vmem:[%s511 + $0xd0] sm:$0x1] %v585
      %v587 = vld [vmem:[%s511 + $0xe8] sm:$0x1]
      %v588 = vsel %vm499, 0, %v587
      %589 = vst [vmem:[%s511 + $0xe8] sm:$0x1] %v588
      %v590 = vld [vmem:[%s511 + $0x100] sm:$0x1]
      %v591 = vsel %vm499, 0, %v590
      %592 = vst [vmem:[%s511 + $0x100] sm:$0x1] %v591
      %v593 = vld [vmem:[%s511 + $0x118] sm:$0x1]
      %v594 = vsel %vm499, 0, %v593
      %595 = vst [vmem:[%s511 + $0x118] sm:$0x1] %v594
      %v596 = vld [vmem:[%s511 + $0x130] sm:$0x1]
      %v597 = vsel %vm499, 0, %v596
      %598 = vst [vmem:[%s511 + $0x130] sm:$0x1] %v597
      %v599 = vld [vmem:[%s511 + $0x148] sm:$0x1]
      %v600 = vsel %vm499, 0, %v599
      %601 = vst [vmem:[%s511 + $0x148] sm:$0x1] %v600
      %v602 = vld [vmem:[%s511 + $0x160] sm:$0x1]
      %v603 = vsel %vm499, 0, %v602
      %604 = vst [vmem:[%s511 + $0x160] sm:$0x1] %v603
      %v605 = vld [vmem:[%s511 + $0x178] sm:$0x1]
      %v606 = vsel %vm499, 0, %v605
      %607 = vst [vmem:[%s511 + $0x178] sm:$0x1] %v606
      %v608 = vld [vmem:[%s359] sm:$0xf]
      %v609 = vld [vmem:[%s359 + $0x4] sm:$0xf]
      %v610 = vld [vmem:[%s359 + $0xc] sm:$0xf]
      %v611 = vld [vmem:[%s359 + $0x10] sm:$0xf]
      %v612 = vld [vmem:[%s359 + $0x18] sm:$0xf]
      %v613 = vld [vmem:[%s359 + $0x1c] sm:$0xf]
      %v614 = vld [vmem:[%s359 + $0x24] sm:$0xf]
      %v615 = vld [vmem:[%s359 + $0x28] sm:$0xf]
      %v616 = vld [vmem:[%s359 + $0x30] sm:$0xf]
      %v617 = vld [vmem:[%s359 + $0x34] sm:$0xf]
      %v618 = vld [vmem:[%s359 + $0x3c] sm:$0xf]
      %v619 = vld [vmem:[%s359 + $0x40] sm:$0xf]
      %v620 = vld [vmem:[%s359 + $0x48] sm:$0xf]
      %v621 = vld [vmem:[%s359 + $0x4c] sm:$0xf]
      %v622 = vld [vmem:[%s359 + $0x54] sm:$0xf]
      %v623 = vld [vmem:[%s359 + $0x58] sm:$0xf]
      %v624 = vld [vmem:[%s359 + $0x60] sm:$0xf]
      %v625 = vld [vmem:[%s359 + $0x64] sm:$0xf]
      %v626 = vld [vmem:[%s359 + $0x6c] sm:$0xf]
      %v627 = vld [vmem:[%s359 + $0x70] sm:$0xf]
      %v628 = vld [vmem:[%s359 + $0x78] sm:$0xf]
      %v629 = vld [vmem:[%s359 + $0x7c] sm:$0xf]
      %v630 = vld [vmem:[%s359 + $0x84] sm:$0xf]
      %v631 = vld [vmem:[%s359 + $0x88] sm:$0xf]
      %v632 = vld [vmem:[%s359 + $0x90] sm:$0xf]
      %v633 = vld [vmem:[%s359 + $0x94] sm:$0xf]
      %v634 = vld [vmem:[%s359 + $0x9c] sm:$0xf]
      %v635 = vld [vmem:[%s359 + $0xa0] sm:$0xf]
      %v636 = vld [vmem:[%s359 + $0xa8] sm:$0xf]
      %v637 = vld [vmem:[%s359 + $0xac] sm:$0xf]
      %v638 = vld [vmem:[%s359 + $0xb4] sm:$0xf]
      %v639 = vld [vmem:[%s359 + $0xb8] sm:$0xf]
      %v640 = vld [vmem:[%s359 + $0x8] sm:$0x1]
      %v641 = vld [vmem:[%s359 + $0x14] sm:$0x1]
      %v642 = vld [vmem:[%s359 + $0x20] sm:$0x1]
      %v643 = vld [vmem:[%s359 + $0x2c] sm:$0x1]
      %v644 = vld [vmem:[%s359 + $0x38] sm:$0x1]
      %v645 = vld [vmem:[%s359 + $0x44] sm:$0x1]
      %v646 = vld [vmem:[%s359 + $0x50] sm:$0x1]
      %v647 = vld [vmem:[%s359 + $0x5c] sm:$0x1]
      %v648 = vld [vmem:[%s359 + $0x68] sm:$0x1]
      %v649 = vld [vmem:[%s359 + $0x74] sm:$0x1]
      %v650 = vld [vmem:[%s359 + $0x80] sm:$0x1]
      %v651 = vld [vmem:[%s359 + $0x8c] sm:$0x1]
      %v652 = vld [vmem:[%s359 + $0x98] sm:$0x1]
      %v653 = vld [vmem:[%s359 + $0xa4] sm:$0x1]
      %v654 = vld [vmem:[%s359 + $0xb0] sm:$0x1]
      %v655 = vld [vmem:[%s359 + $0xbc] sm:$0x1]
      %vm656 = vsmask.f32 3328
      %vm657 = vsmask.f32 7440
      %vm658 = vmor %vm656, %vm657
      %v660 = vshrl.u32 %v608, 16
      %v662 = vrot.slane %v660, 4
      %v663 = vshll.u32 %v608, 16
      %v665 = vrot.slane %v663, 5
      %v666 = vor.u32 %v662, %v665
      %v667 = vrot.slane %v666, 4
      %v669 = vshll.u32 %v609, 16
      %v671 = vrot.slane %v669, 5
      %v672 = vsel %vm658, %v667, %v671
      %v673 = vshrl.u32 %v609, 16
      %v675 = vrot.slane %v673, 4
      %v676 = vor.u32 %v675, %v671
      %v677 = vrot.slane %v676, 4
      %v679 = vshll.u32 %v640, 16
      %v681 = vrot.slane %v679, 5
      %v682 = vsel %vm658, %v677, %v681
      %v684 = vshrl.u32 %v610, 16
      %v686 = vrot.slane %v684, 4
      %v687 = vshll.u32 %v610, 16
      %v689 = vrot.slane %v687, 5
      %v690 = vor.u32 %v686, %v689
      %v691 = vrot.slane %v690, 4
      %v693 = vshll.u32 %v611, 16
      %v695 = vrot.slane %v693, 5
      %v696 = vsel %vm658, %v691, %v695
      %v697 = vshrl.u32 %v611, 16
      %v699 = vrot.slane %v697, 4
      %v700 = vor.u32 %v699, %v695
      %v701 = vrot.slane %v700, 4
      %v703 = vshll.u32 %v641, 16
      %v705 = vrot.slane %v703, 5
      %v706 = vsel %vm658, %v701, %v705
      %v708 = vshrl.u32 %v612, 16
      %v710 = vrot.slane %v708, 4
      %v711 = vshll.u32 %v612, 16
      %v713 = vrot.slane %v711, 5
      %v714 = vor.u32 %v710, %v713
      %v715 = vrot.slane %v714, 4
      %v717 = vshll.u32 %v613, 16
      %v719 = vrot.slane %v717, 5
      %v720 = vsel %vm658, %v715, %v719
      %v721 = vshrl.u32 %v613, 16
      %v723 = vrot.slane %v721, 4
      %v724 = vor.u32 %v723, %v719
      %v725 = vrot.slane %v724, 4
      %v727 = vshll.u32 %v642, 16
      %v729 = vrot.slane %v727, 5
      %v730 = vsel %vm658, %v725, %v729
      %v732 = vshrl.u32 %v614, 16
      %v734 = vrot.slane %v732, 4
      %v735 = vshll.u32 %v614, 16
      %v737 = vrot.slane %v735, 5
      %v738 = vor.u32 %v734, %v737
      %v739 = vrot.slane %v738, 4
      %v741 = vshll.u32 %v615, 16
      %v743 = vrot.slane %v741, 5
      %v744 = vsel %vm658, %v739, %v743
      %v745 = vshrl.u32 %v615, 16
      %v747 = vrot.slane %v745, 4
      %v748 = vor.u32 %v747, %v743
      %v749 = vrot.slane %v748, 4
      %v751 = vshll.u32 %v643, 16
      %v753 = vrot.slane %v751, 5
      %v754 = vsel %vm658, %v749, %v753
      %v756 = vshrl.u32 %v616, 16
      %v758 = vrot.slane %v756, 4
      %v759 = vshll.u32 %v616, 16
      %v761 = vrot.slane %v759, 5
      %v762 = vor.u32 %v758, %v761
      %v763 = vrot.slane %v762, 4
      %v765 = vshll.u32 %v617, 16
      %v767 = vrot.slane %v765, 5
      %v768 = vsel %vm658, %v763, %v767
      %v769 = vshrl.u32 %v617, 16
      %v771 = vrot.slane %v769, 4
      %v772 = vor.u32 %v771, %v767
      %v773 = vrot.slane %v772, 4
      %v775 = vshll.u32 %v644, 16
      %v777 = vrot.slane %v775, 5
      %v778 = vsel %vm658, %v773, %v777
      %v780 = vshrl.u32 %v618, 16
      %v782 = vrot.slane %v780, 4
      %v783 = vshll.u32 %v618, 16
      %v785 = vrot.slane %v783, 5
      %v786 = vor.u32 %v782, %v785
      %v787 = vrot.slane %v786, 4
      %v789 = vshll.u32 %v619, 16
      %v791 = vrot.slane %v789, 5
      %v792 = vsel %vm658, %v787, %v791
      %v793 = vshrl.u32 %v619, 16
      %v795 = vrot.slane %v793, 4
      %v796 = vor.u32 %v795, %v791
      %v797 = vrot.slane %v796, 4
      %v799 = vshll.u32 %v645, 16
      %v801 = vrot.slane %v799, 5
      %v802 = vsel %vm658, %v797, %v801
      %v804 = vshrl.u32 %v620, 16
      %v806 = vrot.slane %v804, 4
      %v807 = vshll.u32 %v620, 16
      %v809 = vrot.slane %v807, 5
      %v810 = vor.u32 %v806, %v809
      %v811 = vrot.slane %v810, 4
      %v813 = vshll.u32 %v621, 16
      %v815 = vrot.slane %v813, 5
      %v816 = vsel %vm658, %v811, %v815
      %v817 = vshrl.u32 %v621, 16
      %v819 = vrot.slane %v817, 4
      %v820 = vor.u32 %v819, %v815
      %v821 = vrot.slane %v820, 4
      %v823 = vshll.u32 %v646, 16
      %v825 = vrot.slane %v823, 5
      %v826 = vsel %vm658, %v821, %v825
      %v828 = vshrl.u32 %v622, 16
      %v830 = vrot.slane %v828, 4
      %v831 = vshll.u32 %v622, 16
      %v833 = vrot.slane %v831, 5
      %v834 = vor.u32 %v830, %v833
      %v835 = vrot.slane %v834, 4
      %v837 = vshll.u32 %v623, 16
      %v839 = vrot.slane %v837, 5
      %v840 = vsel %vm658, %v835, %v839
      %v841 = vshrl.u32 %v623, 16
      %v843 = vrot.slane %v841, 4
      %v844 = vor.u32 %v843, %v839
      %v845 = vrot.slane %v844, 4
      %v847 = vshll.u32 %v647, 16
      %v849 = vrot.slane %v847, 5
      %v850 = vsel %vm658, %v845, %v849
      %v852 = vshrl.u32 %v624, 16
      %v854 = vrot.slane %v852, 4
      %v855 = vshll.u32 %v624, 16
      %v857 = vrot.slane %v855, 5
      %v858 = vor.u32 %v854, %v857
      %v859 = vrot.slane %v858, 4
      %v861 = vshll.u32 %v625, 16
      %v863 = vrot.slane %v861, 5
      %v864 = vsel %vm658, %v859, %v863
      %v865 = vshrl.u32 %v625, 16
      %v867 = vrot.slane %v865, 4
      %v868 = vor.u32 %v867, %v863
      %v869 = vrot.slane %v868, 4
      %v871 = vshll.u32 %v648, 16
      %v873 = vrot.slane %v871, 5
      %v874 = vsel %vm658, %v869, %v873
      %v876 = vshrl.u32 %v626, 16
      %v878 = vrot.slane %v876, 4
      %v879 = vshll.u32 %v626, 16
      %v881 = vrot.slane %v879, 5
      %v882 = vor.u32 %v878, %v881
      %v883 = vrot.slane %v882, 4
      %v885 = vshll.u32 %v627, 16
      %v887 = vrot.slane %v885, 5
      %v888 = vsel %vm658, %v883, %v887
      %v889 = vshrl.u32 %v627, 16
      %v891 = vrot.slane %v889, 4
      %v892 = vor.u32 %v891, %v887
      %v893 = vrot.slane %v892, 4
      %v895 = vshll.u32 %v649, 16
      %v897 = vrot.slane %v895, 5
      %v898 = vsel %vm658, %v893, %v897
      %v900 = vshrl.u32 %v628, 16
      %v902 = vrot.slane %v900, 4
      %v903 = vshll.u32 %v628, 16
      %v905 = vrot.slane %v903, 5
      %v906 = vor.u32 %v902, %v905
      %v907 = vrot.slane %v906, 4
      %v909 = vshll.u32 %v629, 16
      %v911 = vrot.slane %v909, 5
      %v912 = vsel %vm658, %v907, %v911
      %v913 = vshrl.u32 %v629, 16
      %v915 = vrot.slane %v913, 4
      %v916 = vor.u32 %v915, %v911
      %v917 = vrot.slane %v916, 4
      %v919 = vshll.u32 %v650, 16
      %v921 = vrot.slane %v919, 5
      %v922 = vsel %vm658, %v917, %v921
      %v924 = vshrl.u32 %v630, 16
      %v926 = vrot.slane %v924, 4
      %v927 = vshll.u32 %v630, 16
      %v929 = vrot.slane %v927, 5
      %v930 = vor.u32 %v926, %v929
      %v931 = vrot.slane %v930, 4
      %v933 = vshll.u32 %v631, 16
      %v935 = vrot.slane %v933, 5
      %v936 = vsel %vm658, %v931, %v935
      %v937 = vshrl.u32 %v631, 16
      %v939 = vrot.slane %v937, 4
      %v940 = vor.u32 %v939, %v935
      %v941 = vrot.slane %v940, 4
      %v943 = vshll.u32 %v651, 16
      %v945 = vrot.slane %v943, 5
      %v946 = vsel %vm658, %v941, %v945
      %v948 = vshrl.u32 %v632, 16
      %v950 = vrot.slane %v948, 4
      %v951 = vshll.u32 %v632, 16
      %v953 = vrot.slane %v951, 5
      %v954 = vor.u32 %v950, %v953
      %v955 = vrot.slane %v954, 4
      %v957 = vshll.u32 %v633, 16
      %v959 = vrot.slane %v957, 5
      %v960 = vsel %vm658, %v955, %v959
      %v961 = vshrl.u32 %v633, 16
      %v963 = vrot.slane %v961, 4
      %v964 = vor.u32 %v963, %v959
      %v965 = vrot.slane %v964, 4
      %v967 = vshll.u32 %v652, 16
      %v969 = vrot.slane %v967, 5
      %v970 = vsel %vm658, %v965, %v969
      %v972 = vshrl.u32 %v634, 16
      %v974 = vrot.slane %v972, 4
      %v975 = vshll.u32 %v634, 16
      %v977 = vrot.slane %v975, 5
      %v978 = vor.u32 %v974, %v977
      %v979 = vrot.slane %v978, 4
      %v981 = vshll.u32 %v635, 16
      %v983 = vrot.slane %v981, 5
      %v984 = vsel %vm658, %v979, %v983
      %v985 = vshrl.u32 %v635, 16
      %v987 = vrot.slane %v985, 4
      %v988 = vor.u32 %v987, %v983
      %v989 = vrot.slane %v988, 4
      %v991 = vshll.u32 %v653, 16
      %v993 = vrot.slane %v991, 5
      %v994 = vsel %vm658, %v989, %v993
      %v996 = vshrl.u32 %v636, 16
      %v998 = vrot.slane %v996, 4
      %v999 = vshll.u32 %v636, 16
      %v1001 = vrot.slane %v999, 5
      %v1002 = vor.u32 %v998, %v1001
      %v1003 = vrot.slane %v1002, 4
      %v1005 = vshll.u32 %v637, 16
      %v1007 = vrot.slane %v1005, 5
      %v1008 = vsel %vm658, %v1003, %v1007
      %v1009 = vshrl.u32 %v637, 16
      %v1011 = vrot.slane %v1009, 4
      %v1012 = vor.u32 %v1011, %v1007
      %v1013 = vrot.slane %v1012, 4
      %v1015 = vshll.u32 %v654, 16
      %v1017 = vrot.slane %v1015, 5
      %v1018 = vsel %vm658, %v1013, %v1017
      %v1020 = vshrl.u32 %v638, 16
      %v1022 = vrot.slane %v1020, 4
      %v1023 = vshll.u32 %v638, 16
      %v1025 = vrot.slane %v1023, 5
      %v1026 = vor.u32 %v1022, %v1025
      %v1027 = vrot.slane %v1026, 4
      %v1029 = vshll.u32 %v639, 16
      %v1031 = vrot.slane %v1029, 5
      %v1032 = vsel %vm658, %v1027, %v1031
      %v1033 = vshrl.u32 %v639, 16
      %v1035 = vrot.slane %v1033, 4
      %v1036 = vor.u32 %v1035, %v1031
      %v1037 = vrot.slane %v1036, 4
      %v1039 = vshll.u32 %v655, 16
      %v1041 = vrot.slane %v1039, 5
      %v1042 = vsel %vm658, %v1037, %v1041
      %v1043 = vld [vmem:[%s359] sm:$0xe]
      %v1044 = vld [vmem:[%s359 + $0xc] sm:$0xe]
      %v1045 = vld [vmem:[%s359 + $0x18] sm:$0xe]
      %v1046 = vld [vmem:[%s359 + $0x24] sm:$0xe]
      %v1047 = vld [vmem:[%s359 + $0x30] sm:$0xe]
      %v1048 = vld [vmem:[%s359 + $0x3c] sm:$0xe]
      %v1049 = vld [vmem:[%s359 + $0x48] sm:$0xe]
      %v1050 = vld [vmem:[%s359 + $0x54] sm:$0xe]
      %v1051 = vld [vmem:[%s359 + $0x60] sm:$0xe]
      %v1052 = vld [vmem:[%s359 + $0x6c] sm:$0xe]
      %v1053 = vld [vmem:[%s359 + $0x78] sm:$0xe]
      %v1054 = vld [vmem:[%s359 + $0x84] sm:$0xe]
      %v1055 = vld [vmem:[%s359 + $0x90] sm:$0xe]
      %v1056 = vld [vmem:[%s359 + $0x9c] sm:$0xe]
      %v1057 = vld [vmem:[%s359 + $0xa8] sm:$0xe]
      %v1058 = vld [vmem:[%s359 + $0xb4] sm:$0xe]
      %vm1107 = vcmask 1042432
      %vm1108 = vcmask 1046532
      %vm1109 = vmor %vm1107, %vm1108
      %v1110 = vrot.slane %v1043, 5
      %v1111 = vrot.slane %v1110, 4
      %v1112 = vrot.slane %v609, 5
      %v1113 = vsel %vm1109, %v1111, %v1112
      %v1114 = vrot.slane %v1112, 4
      %v1115 = vrot.slane %v640, 5
      %v1116 = vsel %vm1109, %v1114, %v1115
      %v1117 = vrot.slane %v1044, 5
      %v1118 = vrot.slane %v1117, 4
      %v1119 = vrot.slane %v611, 5
      %v1120 = vsel %vm1109, %v1118, %v1119
      %v1121 = vrot.slane %v1119, 4
      %v1122 = vrot.slane %v641, 5
      %v1123 = vsel %vm1109, %v1121, %v1122
      %v1124 = vrot.slane %v1045, 5
      %v1125 = vrot.slane %v1124, 4
      %v1126 = vrot.slane %v613, 5
      %v1127 = vsel %vm1109, %v1125, %v1126
      %v1128 = vrot.slane %v1126, 4
      %v1129 = vrot.slane %v642, 5
      %v1130 = vsel %vm1109, %v1128, %v1129
      %v1131 = vrot.slane %v1046, 5
      %v1132 = vrot.slane %v1131, 4
      %v1133 = vrot.slane %v615, 5
      %v1134 = vsel %vm1109, %v1132, %v1133
      %v1135 = vrot.slane %v1133, 4
      %v1136 = vrot.slane %v643, 5
      %v1137 = vsel %vm1109, %v1135, %v1136
      %v1138 = vrot.slane %v1047, 5
      %v1139 = vrot.slane %v1138, 4
      %v1140 = vrot.slane %v617, 5
      %v1141 = vsel %vm1109, %v1139, %v1140
      %v1142 = vrot.slane %v1140, 4
      %v1143 = vrot.slane %v644, 5
      %v1144 = vsel %vm1109, %v1142, %v1143
      %v1145 = vrot.slane %v1048, 5
      %v1146 = vrot.slane %v1145, 4
      %v1147 = vrot.slane %v619, 5
      %v1148 = vsel %vm1109, %v1146, %v1147
      %v1149 = vrot.slane %v1147, 4
      %v1150 = vrot.slane %v645, 5
      %v1151 = vsel %vm1109, %v1149, %v1150
      %v1152 = vrot.slane %v1049, 5
      %v1153 = vrot.slane %v1152, 4
      %v1154 = vrot.slane %v621, 5
      %v1155 = vsel %vm1109, %v1153, %v1154
      %v1156 = vrot.slane %v1154, 4
      %v1157 = vrot.slane %v646, 5
      %v1158 = vsel %vm1109, %v1156, %v1157
      %v1159 = vrot.slane %v1050, 5
      %v1160 = vrot.slane %v1159, 4
      %v1161 = vrot.slane %v623, 5
      %v1162 = vsel %vm1109, %v1160, %v1161
      %v1163 = vrot.slane %v1161, 4
      %v1164 = vrot.slane %v647, 5
      %v1165 = vsel %vm1109, %v1163, %v1164
      %v1166 = vrot.slane %v1051, 5
      %v1167 = vrot.slane %v1166, 4
      %v1168 = vrot.slane %v625, 5
      %v1169 = vsel %vm1109, %v1167, %v1168
      %v1170 = vrot.slane %v1168, 4
      %v1171 = vrot.slane %v648, 5
      %v1172 = vsel %vm1109, %v1170, %v1171
      %v1173 = vrot.slane %v1052, 5
      %v1174 = vrot.slane %v1173, 4
      %v1175 = vrot.slane %v627, 5
      %v1176 = vsel %vm1109, %v1174, %v1175
      %v1177 = vrot.slane %v1175, 4
      %v1178 = vrot.slane %v649, 5
      %v1179 = vsel %vm1109, %v1177, %v1178
      %v1180 = vrot.slane %v1053, 5
      %v1181 = vrot.slane %v1180, 4
      %v1182 = vrot.slane %v629, 5
      %v1183 = vsel %vm1109, %v1181, %v1182
      %v1184 = vrot.slane %v1182, 4
      %v1185 = vrot.slane %v650, 5
      %v1186 = vsel %vm1109, %v1184, %v1185
      %v1187 = vrot.slane %v1054, 5
      %v1188 = vrot.slane %v1187, 4
      %v1189 = vrot.slane %v631, 5
      %v1190 = vsel %vm1109, %v1188, %v1189
      %v1191 = vrot.slane %v1189, 4
      %v1192 = vrot.slane %v651, 5
      %v1193 = vsel %vm1109, %v1191, %v1192
      %v1194 = vrot.slane %v1055, 5
      %v1195 = vrot.slane %v1194, 4
      %v1196 = vrot.slane %v633, 5
      %v1197 = vsel %vm1109, %v1195, %v1196
      %v1198 = vrot.slane %v1196, 4
      %v1199 = vrot.slane %v652, 5
      %v1200 = vsel %vm1109, %v1198, %v1199
      %v1201 = vrot.slane %v1056, 5
      %v1202 = vrot.slane %v1201, 4
      %v1203 = vrot.slane %v635, 5
      %v1204 = vsel %vm1109, %v1202, %v1203
      %v1205 = vrot.slane %v1203, 4
      %v1206 = vrot.slane %v653, 5
      %v1207 = vsel %vm1109, %v1205, %v1206
      %v1208 = vrot.slane %v1057, 5
      %v1209 = vrot.slane %v1208, 4
      %v1210 = vrot.slane %v637, 5
      %v1211 = vsel %vm1109, %v1209, %v1210
      %v1212 = vrot.slane %v1210, 4
      %v1213 = vrot.slane %v654, 5
      %v1214 = vsel %vm1109, %v1212, %v1213
      %v1215 = vrot.slane %v1058, 5
      %v1216 = vrot.slane %v1215, 4
      %v1217 = vrot.slane %v639, 5
      %v1218 = vsel %vm1109, %v1216, %v1217
      %v1219 = vrot.slane %v1217, 4
      %v1220 = vrot.slane %v655, 5
      %v1221 = vsel %vm1109, %v1219, %v1220
      %s1222 = scalar_lea.vmem %s359, 12
      %v1223 = vld [vmem:[%s1222] sm:$0xf]
      %v1224 = vld [vmem:[%s1222 + $0x4] sm:$0xf]
      %v1225 = vld [vmem:[%s1222 + $0xc] sm:$0xf]
      %v1226 = vld [vmem:[%s1222 + $0x10] sm:$0xf]
      %v1227 = vld [vmem:[%s1222 + $0x18] sm:$0xf]
      %v1228 = vld [vmem:[%s1222 + $0x1c] sm:$0xf]
      %v1229 = vld [vmem:[%s1222 + $0x24] sm:$0xf]
      %v1230 = vld [vmem:[%s1222 + $0x28] sm:$0xf]
      %v1231 = vld [vmem:[%s1222 + $0x30] sm:$0xf]
      %v1232 = vld [vmem:[%s1222 + $0x34] sm:$0xf]
      %v1233 = vld [vmem:[%s1222 + $0x3c] sm:$0xf]
      %v1234 = vld [vmem:[%s1222 + $0x40] sm:$0xf]
      %v1235 = vld [vmem:[%s1222 + $0x48] sm:$0xf]
      %v1236 = vld [vmem:[%s1222 + $0x4c] sm:$0xf]
      %v1237 = vld [vmem:[%s1222 + $0x54] sm:$0xf]
      %v1238 = vld [vmem:[%s1222 + $0x58] sm:$0xf]
      %v1239 = vld [vmem:[%s1222 + $0x60] sm:$0xf]
      %v1240 = vld [vmem:[%s1222 + $0x64] sm:$0xf]
      %v1241 = vld [vmem:[%s1222 + $0x6c] sm:$0xf]
      %v1242 = vld [vmem:[%s1222 + $0x70] sm:$0xf]
      %v1243 = vld [vmem:[%s1222 + $0x78] sm:$0xf]
      %v1244 = vld [vmem:[%s1222 + $0x7c] sm:$0xf]
      %v1245 = vld [vmem:[%s1222 + $0x84] sm:$0xf]
      %v1246 = vld [vmem:[%s1222 + $0x88] sm:$0xf]
      %v1247 = vld [vmem:[%s1222 + $0x90] sm:$0xf]
      %v1248 = vld [vmem:[%s1222 + $0x94] sm:$0xf]
      %v1249 = vld [vmem:[%s1222 + $0x9c] sm:$0xf]
      %v1250 = vld [vmem:[%s1222 + $0xa0] sm:$0xf]
      %v1251 = vld [vmem:[%s1222 + $0xa8] sm:$0xf]
      %v1252 = vld [vmem:[%s1222 + $0xac] sm:$0xf]
      %v1253 = vld [vmem:[%s1222 + $0xb4] sm:$0xf]
      %v1254 = vld [vmem:[%s1222 + $0xb8] sm:$0xf]
      %v1255 = vld [vmem:[%s1222 + $0x8] sm:$0x1]
      %v1256 = vld [vmem:[%s1222 + $0x14] sm:$0x1]
      %v1257 = vld [vmem:[%s1222 + $0x20] sm:$0x1]
      %v1258 = vld [vmem:[%s1222 + $0x2c] sm:$0x1]
      %v1259 = vld [vmem:[%s1222 + $0x38] sm:$0x1]
      %v1260 = vld [vmem:[%s1222 + $0x44] sm:$0x1]
      %v1261 = vld [vmem:[%s1222 + $0x50] sm:$0x1]
      %v1262 = vld [vmem:[%s1222 + $0x5c] sm:$0x1]
      %v1263 = vld [vmem:[%s1222 + $0x68] sm:$0x1]
      %v1264 = vld [vmem:[%s1222 + $0x74] sm:$0x1]
      %v1265 = vld [vmem:[%s1222 + $0x80] sm:$0x1]
      %v1266 = vld [vmem:[%s1222 + $0x8c] sm:$0x1]
      %v1267 = vld [vmem:[%s1222 + $0x98] sm:$0x1]
      %v1268 = vld [vmem:[%s1222 + $0xa4] sm:$0x1]
      %v1269 = vld [vmem:[%s1222 + $0xb0] sm:$0x1]
      %v1270 = vld [vmem:[%s1222 + $0xbc] sm:$0x1]
      %v1272 = vshrl.u32 %v1223, 16
      %v1274 = vrot.slane %v1272, 4
      %v1275 = vshll.u32 %v1223, 16
      %v1277 = vrot.slane %v1275, 5
      %v1278 = vor.u32 %v1274, %v1277
      %v1279 = vrot.slane %v1278, 4
      %v1281 = vshll.u32 %v1224, 16
      %v1283 = vrot.slane %v1281, 5
      %v1284 = vsel %vm658, %v1279, %v1283
      %v1285 = vshrl.u32 %v1224, 16
      %v1287 = vrot.slane %v1285, 4
      %v1288 = vor.u32 %v1287, %v1283
      %v1289 = vrot.slane %v1288, 4
      %v1291 = vshll.u32 %v1255, 16
      %v1293 = vrot.slane %v1291, 5
      %v1294 = vsel %vm658, %v1289, %v1293
      %v1296 = vshrl.u32 %v1225, 16
      %v1298 = vrot.slane %v1296, 4
      %v1299 = vshll.u32 %v1225, 16
      %v1301 = vrot.slane %v1299, 5
      %v1302 = vor.u32 %v1298, %v1301
      %v1303 = vrot.slane %v1302, 4
      %v1305 = vshll.u32 %v1226, 16
      %v1307 = vrot.slane %v1305, 5
      %v1308 = vsel %vm658, %v1303, %v1307
      %v1309 = vshrl.u32 %v1226, 16
      %v1311 = vrot.slane %v1309, 4
      %v1312 = vor.u32 %v1311, %v1307
      %v1313 = vrot.slane %v1312, 4
      %v1315 = vshll.u32 %v1256, 16
      %v1317 = vrot.slane %v1315, 5
      %v1318 = vsel %vm658, %v1313, %v1317
      %v1320 = vshrl.u32 %v1227, 16
      %v1322 = vrot.slane %v1320, 4
      %v1323 = vshll.u32 %v1227, 16
      %v1325 = vrot.slane %v1323, 5
      %v1326 = vor.u32 %v1322, %v1325
      %v1327 = vrot.slane %v1326, 4
      %v1329 = vshll.u32 %v1228, 16
      %v1331 = vrot.slane %v1329, 5
      %v1332 = vsel %vm658, %v1327, %v1331
      %v1333 = vshrl.u32 %v1228, 16
      %v1335 = vrot.slane %v1333, 4
      %v1336 = vor.u32 %v1335, %v1331
      %v1337 = vrot.slane %v1336, 4
      %v1339 = vshll.u32 %v1257, 16
      %v1341 = vrot.slane %v1339, 5
      %v1342 = vsel %vm658, %v1337, %v1341
      %v1344 = vshrl.u32 %v1229, 16
      %v1346 = vrot.slane %v1344, 4
      %v1347 = vshll.u32 %v1229, 16
      %v1349 = vrot.slane %v1347, 5
      %v1350 = vor.u32 %v1346, %v1349
      %v1351 = vrot.slane %v1350, 4
      %v1353 = vshll.u32 %v1230, 16
      %v1355 = vrot.slane %v1353, 5
      %v1356 = vsel %vm658, %v1351, %v1355
      %v1357 = vshrl.u32 %v1230, 16
      %v1359 = vrot.slane %v1357, 4
      %v1360 = vor.u32 %v1359, %v1355
      %v1361 = vrot.slane %v1360, 4
      %v1363 = vshll.u32 %v1258, 16
      %v1365 = vrot.slane %v1363, 5
      %v1366 = vsel %vm658, %v1361, %v1365
      %v1368 = vshrl.u32 %v1231, 16
      %v1370 = vrot.slane %v1368, 4
      %v1371 = vshll.u32 %v1231, 16
      %v1373 = vrot.slane %v1371, 5
      %v1374 = vor.u32 %v1370, %v1373
      %v1375 = vrot.slane %v1374, 4
      %v1377 = vshll.u32 %v1232, 16
      %v1379 = vrot.slane %v1377, 5
      %v1380 = vsel %vm658, %v1375, %v1379
      %v1381 = vshrl.u32 %v1232, 16
      %v1383 = vrot.slane %v1381, 4
      %v1384 = vor.u32 %v1383, %v1379
      %v1385 = vrot.slane %v1384, 4
      %v1387 = vshll.u32 %v1259, 16
      %v1389 = vrot.slane %v1387, 5
      %v1390 = vsel %vm658, %v1385, %v1389
      %v1392 = vshrl.u32 %v1233, 16
      %v1394 = vrot.slane %v1392, 4
      %v1395 = vshll.u32 %v1233, 16
      %v1397 = vrot.slane %v1395, 5
      %v1398 = vor.u32 %v1394, %v1397
      %v1399 = vrot.slane %v1398, 4
      %v1401 = vshll.u32 %v1234, 16
      %v1403 = vrot.slane %v1401, 5
      %v1404 = vsel %vm658, %v1399, %v1403
      %v1405 = vshrl.u32 %v1234, 16
      %v1407 = vrot.slane %v1405, 4
      %v1408 = vor.u32 %v1407, %v1403
      %v1409 = vrot.slane %v1408, 4
      %v1411 = vshll.u32 %v1260, 16
      %v1413 = vrot.slane %v1411, 5
      %v1414 = vsel %vm658, %v1409, %v1413
      %v1416 = vshrl.u32 %v1235, 16
      %v1418 = vrot.slane %v1416, 4
      %v1419 = vshll.u32 %v1235, 16
      %v1421 = vrot.slane %v1419, 5
      %v1422 = vor.u32 %v1418, %v1421
      %v1423 = vrot.slane %v1422, 4
      %v1425 = vshll.u32 %v1236, 16
      %v1427 = vrot.slane %v1425, 5
      %v1428 = vsel %vm658, %v1423, %v1427
      %v1429 = vshrl.u32 %v1236, 16
      %v1431 = vrot.slane %v1429, 4
      %v1432 = vor.u32 %v1431, %v1427
      %v1433 = vrot.slane %v1432, 4
      %v1435 = vshll.u32 %v1261, 16
      %v1437 = vrot.slane %v1435, 5
      %v1438 = vsel %vm658, %v1433, %v1437
      %v1440 = vshrl.u32 %v1237, 16
      %v1442 = vrot.slane %v1440, 4
      %v1443 = vshll.u32 %v1237, 16
      %v1445 = vrot.slane %v1443, 5
      %v1446 = vor.u32 %v1442, %v1445
      %v1447 = vrot.slane %v1446, 4
      %v1449 = vshll.u32 %v1238, 16
      %v1451 = vrot.slane %v1449, 5
      %v1452 = vsel %vm658, %v1447, %v1451
      %v1453 = vshrl.u32 %v1238, 16
      %v1455 = vrot.slane %v1453, 4
      %v1456 = vor.u32 %v1455, %v1451
      %v1457 = vrot.slane %v1456, 4
      %v1459 = vshll.u32 %v1262, 16
      %v1461 = vrot.slane %v1459, 5
      %v1462 = vsel %vm658, %v1457, %v1461
      %v1464 = vshrl.u32 %v1239, 16
      %v1466 = vrot.slane %v1464, 4
      %v1467 = vshll.u32 %v1239, 16
      %v1469 = vrot.slane %v1467, 5
      %v1470 = vor.u32 %v1466, %v1469
      %v1471 = vrot.slane %v1470, 4
      %v1473 = vshll.u32 %v1240, 16
      %v1475 = vrot.slane %v1473, 5
      %v1476 = vsel %vm658, %v1471, %v1475
      %v1477 = vshrl.u32 %v1240, 16
      %v1479 = vrot.slane %v1477, 4
      %v1480 = vor.u32 %v1479, %v1475
      %v1481 = vrot.slane %v1480, 4
      %v1483 = vshll.u32 %v1263, 16
      %v1485 = vrot.slane %v1483, 5
      %v1486 = vsel %vm658, %v1481, %v1485
      %v1488 = vshrl.u32 %v1241, 16
      %v1490 = vrot.slane %v1488, 4
      %v1491 = vshll.u32 %v1241, 16
      %v1493 = vrot.slane %v1491, 5
      %v1494 = vor.u32 %v1490, %v1493
      %v1495 = vrot.slane %v1494, 4
      %v1497 = vshll.u32 %v1242, 16
      %v1499 = vrot.slane %v1497, 5
      %v1500 = vsel %vm658, %v1495, %v1499
      %v1501 = vshrl.u32 %v1242, 16
      %v1503 = vrot.slane %v1501, 4
      %v1504 = vor.u32 %v1503, %v1499
      %v1505 = vrot.slane %v1504, 4
      %v1507 = vshll.u32 %v1264, 16
      %v1509 = vrot.slane %v1507, 5
      %v1510 = vsel %vm658, %v1505, %v1509
      %v1512 = vshrl.u32 %v1243, 16
      %v1514 = vrot.slane %v1512, 4
      %v1515 = vshll.u32 %v1243, 16
      %v1517 = vrot.slane %v1515, 5
      %v1518 = vor.u32 %v1514, %v1517
      %v1519 = vrot.slane %v1518, 4
      %v1521 = vshll.u32 %v1244, 16
      %v1523 = vrot.slane %v1521, 5
      %v1524 = vsel %vm658, %v1519, %v1523
      %v1525 = vshrl.u32 %v1244, 16
      %v1527 = vrot.slane %v1525, 4
      %v1528 = vor.u32 %v1527, %v1523
      %v1529 = vrot.slane %v1528, 4
      %v1531 = vshll.u32 %v1265, 16
      %v1533 = vrot.slane %v1531, 5
      %v1534 = vsel %vm658, %v1529, %v1533
      %v1536 = vshrl.u32 %v1245, 16
      %v1538 = vrot.slane %v1536, 4
      %v1539 = vshll.u32 %v1245, 16
      %v1541 = vrot.slane %v1539, 5
      %v1542 = vor.u32 %v1538, %v1541
      %v1543 = vrot.slane %v1542, 4
      %v1545 = vshll.u32 %v1246, 16
      %v1547 = vrot.slane %v1545, 5
      %v1548 = vsel %vm658, %v1543, %v1547
      %v1549 = vshrl.u32 %v1246, 16
      %v1551 = vrot.slane %v1549, 4
      %v1552 = vor.u32 %v1551, %v1547
      %v1553 = vrot.slane %v1552, 4
      %v1555 = vshll.u32 %v1266, 16
      %v1557 = vrot.slane %v1555, 5
      %v1558 = vsel %vm658, %v1553, %v1557
      %v1560 = vshrl.u32 %v1247, 16
      %v1562 = vrot.slane %v1560, 4
      %v1563 = vshll.u32 %v1247, 16
      %v1565 = vrot.slane %v1563, 5
      %v1566 = vor.u32 %v1562, %v1565
      %v1567 = vrot.slane %v1566, 4
      %v1569 = vshll.u32 %v1248, 16
      %v1571 = vrot.slane %v1569, 5
      %v1572 = vsel %vm658, %v1567, %v1571
      %v1573 = vshrl.u32 %v1248, 16
      %v1575 = vrot.slane %v1573, 4
      %v1576 = vor.u32 %v1575, %v1571
      %v1577 = vrot.slane %v1576, 4
      %v1579 = vshll.u32 %v1267, 16
      %v1581 = vrot.slane %v1579, 5
      %v1582 = vsel %vm658, %v1577, %v1581
      %v1584 = vshrl.u32 %v1249, 16
      %v1586 = vrot.slane %v1584, 4
      %v1587 = vshll.u32 %v1249, 16
      %v1589 = vrot.slane %v1587, 5
      %v1590 = vor.u32 %v1586, %v1589
      %v1591 = vrot.slane %v1590, 4
      %v1593 = vshll.u32 %v1250, 16
      %v1595 = vrot.slane %v1593, 5
      %v1596 = vsel %vm658, %v1591, %v1595
      %v1597 = vshrl.u32 %v1250, 16
      %v1599 = vrot.slane %v1597, 4
      %v1600 = vor.u32 %v1599, %v1595
      %v1601 = vrot.slane %v1600, 4
      %v1603 = vshll.u32 %v1268, 16
      %v1605 = vrot.slane %v1603, 5
      %v1606 = vsel %vm658, %v1601, %v1605
      %v1608 = vshrl.u32 %v1251, 16
      %v1610 = vrot.slane %v1608, 4
      %v1611 = vshll.u32 %v1251, 16
      %v1613 = vrot.slane %v1611, 5
      %v1614 = vor.u32 %v1610, %v1613
      %v1615 = vrot.slane %v1614, 4
      %v1617 = vshll.u32 %v1252, 16
      %v1619 = vrot.slane %v1617, 5
      %v1620 = vsel %vm658, %v1615, %v1619
      %v1621 = vshrl.u32 %v1252, 16
      %v1623 = vrot.slane %v1621, 4
      %v1624 = vor.u32 %v1623, %v1619
      %v1625 = vrot.slane %v1624, 4
      %v1627 = vshll.u32 %v1269, 16
      %v1629 = vrot.slane %v1627, 5
      %v1630 = vsel %vm658, %v1625, %v1629
      %v1632 = vshrl.u32 %v1253, 16
      %v1634 = vrot.slane %v1632, 4
      %v1635 = vshll.u32 %v1253, 16
      %v1637 = vrot.slane %v1635, 5
      %v1638 = vor.u32 %v1634, %v1637
      %v1639 = vrot.slane %v1638, 4
      %v1641 = vshll.u32 %v1254, 16
      %v1643 = vrot.slane %v1641, 5
      %v1644 = vsel %vm658, %v1639, %v1643
      %v1645 = vshrl.u32 %v1254, 16
      %v1647 = vrot.slane %v1645, 4
      %v1648 = vor.u32 %v1647, %v1643
      %v1649 = vrot.slane %v1648, 4
      %v1651 = vshll.u32 %v1270, 16
      %v1653 = vrot.slane %v1651, 5
      %v1654 = vsel %vm658, %v1649, %v1653
      %v1655 = vld [vmem:[%s1222] sm:$0xe]
      %v1656 = vld [vmem:[%s1222 + $0xc] sm:$0xe]
      %v1657 = vld [vmem:[%s1222 + $0x18] sm:$0xe]
      %v1658 = vld [vmem:[%s1222 + $0x24] sm:$0xe]
      %v1659 = vld [vmem:[%s1222 + $0x30] sm:$0xe]
      %v1660 = vld [vmem:[%s1222 + $0x3c] sm:$0xe]
      %v1661 = vld [vmem:[%s1222 + $0x48] sm:$0xe]
      %v1662 = vld [vmem:[%s1222 + $0x54] sm:$0xe]
      %v1663 = vld [vmem:[%s1222 + $0x60] sm:$0xe]
      %v1664 = vld [vmem:[%s1222 + $0x6c] sm:$0xe]
      %v1665 = vld [vmem:[%s1222 + $0x78] sm:$0xe]
      %v1666 = vld [vmem:[%s1222 + $0x84] sm:$0xe]
      %v1667 = vld [vmem:[%s1222 + $0x90] sm:$0xe]
      %v1668 = vld [vmem:[%s1222 + $0x9c] sm:$0xe]
      %v1669 = vld [vmem:[%s1222 + $0xa8] sm:$0xe]
      %v1670 = vld [vmem:[%s1222 + $0xb4] sm:$0xe]
      %v1719 = vrot.slane %v1655, 5
      %v1720 = vrot.slane %v1719, 4
      %v1721 = vrot.slane %v1224, 5
      %v1722 = vsel %vm1109, %v1720, %v1721
      %v1723 = vrot.slane %v1721, 4
      %v1724 = vrot.slane %v1255, 5
      %v1725 = vsel %vm1109, %v1723, %v1724
      %v1726 = vrot.slane %v1656, 5
      %v1727 = vrot.slane %v1726, 4
      %v1728 = vrot.slane %v1226, 5
      %v1729 = vsel %vm1109, %v1727, %v1728
      %v1730 = vrot.slane %v1728, 4
      %v1731 = vrot.slane %v1256, 5
      %v1732 = vsel %vm1109, %v1730, %v1731
      %v1733 = vrot.slane %v1657, 5
      %v1734 = vrot.slane %v1733, 4
      %v1735 = vrot.slane %v1228, 5
      %v1736 = vsel %vm1109, %v1734, %v1735
      %v1737 = vrot.slane %v1735, 4
      %v1738 = vrot.slane %v1257, 5
      %v1739 = vsel %vm1109, %v1737, %v1738
      %v1740 = vrot.slane %v1658, 5
      %v1741 = vrot.slane %v1740, 4
      %v1742 = vrot.slane %v1230, 5
      %v1743 = vsel %vm1109, %v1741, %v1742
      %v1744 = vrot.slane %v1742, 4
      %v1745 = vrot.slane %v1258, 5
      %v1746 = vsel %vm1109, %v1744, %v1745
      %v1747 = vrot.slane %v1659, 5
      %v1748 = vrot.slane %v1747, 4
      %v1749 = vrot.slane %v1232, 5
      %v1750 = vsel %vm1109, %v1748, %v1749
      %v1751 = vrot.slane %v1749, 4
      %v1752 = vrot.slane %v1259, 5
      %v1753 = vsel %vm1109, %v1751, %v1752
      %v1754 = vrot.slane %v1660, 5
      %v1755 = vrot.slane %v1754, 4
      %v1756 = vrot.slane %v1234, 5
      %v1757 = vsel %vm1109, %v1755, %v1756
      %v1758 = vrot.slane %v1756, 4
      %v1759 = vrot.slane %v1260, 5
      %v1760 = vsel %vm1109, %v1758, %v1759
      %v1761 = vrot.slane %v1661, 5
      %v1762 = vrot.slane %v1761, 4
      %v1763 = vrot.slane %v1236, 5
      %v1764 = vsel %vm1109, %v1762, %v1763
      %v1765 = vrot.slane %v1763, 4
      %v1766 = vrot.slane %v1261, 5
      %v1767 = vsel %vm1109, %v1765, %v1766
      %v1768 = vrot.slane %v1662, 5
      %v1769 = vrot.slane %v1768, 4
      %v1770 = vrot.slane %v1238, 5
      %v1771 = vsel %vm1109, %v1769, %v1770
      %v1772 = vrot.slane %v1770, 4
      %v1773 = vrot.slane %v1262, 5
      %v1774 = vsel %vm1109, %v1772, %v1773
      %v1775 = vrot.slane %v1663, 5
      %v1776 = vrot.slane %v1775, 4
      %v1777 = vrot.slane %v1240, 5
      %v1778 = vsel %vm1109, %v1776, %v1777
      %v1779 = vrot.slane %v1777, 4
      %v1780 = vrot.slane %v1263, 5
      %v1781 = vsel %vm1109, %v1779, %v1780
      %v1782 = vrot.slane %v1664, 5
      %v1783 = vrot.slane %v1782, 4
      %v1784 = vrot.slane %v1242, 5
      %v1785 = vsel %vm1109, %v1783, %v1784
      %v1786 = vrot.slane %v1784, 4
      %v1787 = vrot.slane %v1264, 5
      %v1788 = vsel %vm1109, %v1786, %v1787
      %v1789 = vrot.slane %v1665, 5
      %v1790 = vrot.slane %v1789, 4
      %v1791 = vrot.slane %v1244, 5
      %v1792 = vsel %vm1109, %v1790, %v1791
      %v1793 = vrot.slane %v1791, 4
      %v1794 = vrot.slane %v1265, 5
      %v1795 = vsel %vm1109, %v1793, %v1794
      %v1796 = vrot.slane %v1666, 5
      %v1797 = vrot.slane %v1796, 4
      %v1798 = vrot.slane %v1246, 5
      %v1799 = vsel %vm1109, %v1797, %v1798
      %v1800 = vrot.slane %v1798, 4
      %v1801 = vrot.slane %v1266, 5
      %v1802 = vsel %vm1109, %v1800, %v1801
      %v1803 = vrot.slane %v1667, 5
      %v1804 = vrot.slane %v1803, 4
      %v1805 = vrot.slane %v1248, 5
      %v1806 = vsel %vm1109, %v1804, %v1805
      %v1807 = vrot.slane %v1805, 4
      %v1808 = vrot.slane %v1267, 5
      %v1809 = vsel %vm1109, %v1807, %v1808
      %v1810 = vrot.slane %v1668, 5
      %v1811 = vrot.slane %v1810, 4
      %v1812 = vrot.slane %v1250, 5
      %v1813 = vsel %vm1109, %v1811, %v1812
      %v1814 = vrot.slane %v1812, 4
      %v1815 = vrot.slane %v1268, 5
      %v1816 = vsel %vm1109, %v1814, %v1815
      %v1817 = vrot.slane %v1669, 5
      %v1818 = vrot.slane %v1817, 4
      %v1819 = vrot.slane %v1252, 5
      %v1820 = vsel %vm1109, %v1818, %v1819
      %v1821 = vrot.slane %v1819, 4
      %v1822 = vrot.slane %v1269, 5
      %v1823 = vsel %vm1109, %v1821, %v1822
      %v1824 = vrot.slane %v1670, 5
      %v1825 = vrot.slane %v1824, 4
      %v1826 = vrot.slane %v1254, 5
      %v1827 = vsel %vm1109, %v1825, %v1826
      %v1828 = vrot.slane %v1826, 4
      %v1829 = vrot.slane %v1270, 5
      %v1830 = vsel %vm1109, %v1828, %v1829
      %s1831 = scalar_lea.vmem %s359, 24
      %v1832 = vld [vmem:[%s1831] sm:$0xf]
      %v1833 = vld [vmem:[%s1831 + $0x4] sm:$0xf]
      %v1834 = vld [vmem:[%s1831 + $0xc] sm:$0xf]
      %v1835 = vld [vmem:[%s1831 + $0x10] sm:$0xf]
      %v1836 = vld [vmem:[%s1831 + $0x18] sm:$0xf]
      %v1837 = vld [vmem:[%s1831 + $0x1c] sm:$0xf]
      %v1838 = vld [vmem:[%s1831 + $0x24] sm:$0xf]
      %v1839 = vld [vmem:[%s1831 + $0x28] sm:$0xf]
      %v1840 = vld [vmem:[%s1831 + $0x30] sm:$0xf]
      %v1841 = vld [vmem:[%s1831 + $0x34] sm:$0xf]
      %v1842 = vld [vmem:[%s1831 + $0x3c] sm:$0xf]
      %v1843 = vld [vmem:[%s1831 + $0x40] sm:$0xf]
      %v1844 = vld [vmem:[%s1831 + $0x48] sm:$0xf]
      %v1845 = vld [vmem:[%s1831 + $0x4c] sm:$0xf]
      %v1846 = vld [vmem:[%s1831 + $0x54] sm:$0xf]
      %v1847 = vld [vmem:[%s1831 + $0x58] sm:$0xf]
      %v1848 = vld [vmem:[%s1831 + $0x60] sm:$0xf]
      %v1849 = vld [vmem:[%s1831 + $0x64] sm:$0xf]
      %v1850 = vld [vmem:[%s1831 + $0x6c] sm:$0xf]
      %v1851 = vld [vmem:[%s1831 + $0x70] sm:$0xf]
      %v1852 = vld [vmem:[%s1831 + $0x78] sm:$0xf]
      %v1853 = vld [vmem:[%s1831 + $0x7c] sm:$0xf]
      %v1854 = vld [vmem:[%s1831 + $0x84] sm:$0xf]
      %v1855 = vld [vmem:[%s1831 + $0x88] sm:$0xf]
      %v1856 = vld [vmem:[%s1831 + $0x90] sm:$0xf]
      %v1857 = vld [vmem:[%s1831 + $0x94] sm:$0xf]
      %v1858 = vld [vmem:[%s1831 + $0x9c] sm:$0xf]
      %v1859 = vld [vmem:[%s1831 + $0xa0] sm:$0xf]
      %v1860 = vld [vmem:[%s1831 + $0xa8] sm:$0xf]
      %v1861 = vld [vmem:[%s1831 + $0xac] sm:$0xf]
      %v1862 = vld [vmem:[%s1831 + $0xb4] sm:$0xf]
      %v1863 = vld [vmem:[%s1831 + $0xb8] sm:$0xf]
      %v1864 = vld [vmem:[%s1831 + $0x8] sm:$0x1]
      %v1865 = vld [vmem:[%s1831 + $0x14] sm:$0x1]
      %v1866 = vld [vmem:[%s1831 + $0x20] sm:$0x1]
      %v1867 = vld [vmem:[%s1831 + $0x2c] sm:$0x1]
      %v1868 = vld [vmem:[%s1831 + $0x38] sm:$0x1]
      %v1869 = vld [vmem:[%s1831 + $0x44] sm:$0x1]
      %v1870 = vld [vmem:[%s1831 + $0x50] sm:$0x1]
      %v1871 = vld [vmem:[%s1831 + $0x5c] sm:$0x1]
      %v1872 = vld [vmem:[%s1831 + $0x68] sm:$0x1]
      %v1873 = vld [vmem:[%s1831 + $0x74] sm:$0x1]
      %v1874 = vld [vmem:[%s1831 + $0x80] sm:$0x1]
      %v1875 = vld [vmem:[%s1831 + $0x8c] sm:$0x1]
      %v1876 = vld [vmem:[%s1831 + $0x98] sm:$0x1]
      %v1877 = vld [vmem:[%s1831 + $0xa4] sm:$0x1]
      %v1878 = vld [vmem:[%s1831 + $0xb0] sm:$0x1]
      %v1879 = vld [vmem:[%s1831 + $0xbc] sm:$0x1]
      %v1881 = vshrl.u32 %v1832, 16
      %v1883 = vrot.slane %v1881, 4
      %v1884 = vshll.u32 %v1832, 16
      %v1886 = vrot.slane %v1884, 5
      %v1887 = vor.u32 %v1883, %v1886
      %v1888 = vrot.slane %v1887, 4
      %v1890 = vshll.u32 %v1833, 16
      %v1892 = vrot.slane %v1890, 5
      %v1893 = vsel %vm658, %v1888, %v1892
      %v1894 = vshrl.u32 %v1833, 16
      %v1896 = vrot.slane %v1894, 4
      %v1897 = vor.u32 %v1896, %v1892
      %v1898 = vrot.slane %v1897, 4
      %v1900 = vshll.u32 %v1864, 16
      %v1902 = vrot.slane %v1900, 5
      %v1903 = vsel %vm658, %v1898, %v1902
      %v1905 = vshrl.u32 %v1834, 16
      %v1907 = vrot.slane %v1905, 4
      %v1908 = vshll.u32 %v1834, 16
      %v1910 = vrot.slane %v1908, 5
      %v1911 = vor.u32 %v1907, %v1910
      %v1912 = vrot.slane %v1911, 4
      %v1914 = vshll.u32 %v1835, 16
      %v1916 = vrot.slane %v1914, 5
      %v1917 = vsel %vm658, %v1912, %v1916
      %v1918 = vshrl.u32 %v1835, 16
      %v1920 = vrot.slane %v1918, 4
      %v1921 = vor.u32 %v1920, %v1916
      %v1922 = vrot.slane %v1921, 4
      %v1924 = vshll.u32 %v1865, 16
      %v1926 = vrot.slane %v1924, 5
      %v1927 = vsel %vm658, %v1922, %v1926
      %v1929 = vshrl.u32 %v1836, 16
      %v1931 = vrot.slane %v1929, 4
      %v1932 = vshll.u32 %v1836, 16
      %v1934 = vrot.slane %v1932, 5
      %v1935 = vor.u32 %v1931, %v1934
      %v1936 = vrot.slane %v1935, 4
      %v1938 = vshll.u32 %v1837, 16
      %v1940 = vrot.slane %v1938, 5
      %v1941 = vsel %vm658, %v1936, %v1940
      %v1942 = vshrl.u32 %v1837, 16
      %v1944 = vrot.slane %v1942, 4
      %v1945 = vor.u32 %v1944, %v1940
      %v1946 = vrot.slane %v1945, 4
      %v1948 = vshll.u32 %v1866, 16
      %v1950 = vrot.slane %v1948, 5
      %v1951 = vsel %vm658, %v1946, %v1950
      %v1953 = vshrl.u32 %v1838, 16
      %v1955 = vrot.slane %v1953, 4
      %v1956 = vshll.u32 %v1838, 16
      %v1958 = vrot.slane %v1956, 5
      %v1959 = vor.u32 %v1955, %v1958
      %v1960 = vrot.slane %v1959, 4
      %v1962 = vshll.u32 %v1839, 16
      %v1964 = vrot.slane %v1962, 5
      %v1965 = vsel %vm658, %v1960, %v1964
      %v1966 = vshrl.u32 %v1839, 16
      %v1968 = vrot.slane %v1966, 4
      %v1969 = vor.u32 %v1968, %v1964
      %v1970 = vrot.slane %v1969, 4
      %v1972 = vshll.u32 %v1867, 16
      %v1974 = vrot.slane %v1972, 5
      %v1975 = vsel %vm658, %v1970, %v1974
      %v1977 = vshrl.u32 %v1840, 16
      %v1979 = vrot.slane %v1977, 4
      %v1980 = vshll.u32 %v1840, 16
      %v1982 = vrot.slane %v1980, 5
      %v1983 = vor.u32 %v1979, %v1982
      %v1984 = vrot.slane %v1983, 4
      %v1986 = vshll.u32 %v1841, 16
      %v1988 = vrot.slane %v1986, 5
      %v1989 = vsel %vm658, %v1984, %v1988
      %v1990 = vshrl.u32 %v1841, 16
      %v1992 = vrot.slane %v1990, 4
      %v1993 = vor.u32 %v1992, %v1988
      %v1994 = vrot.slane %v1993, 4
      %v1996 = vshll.u32 %v1868, 16
      %v1998 = vrot.slane %v1996, 5
      %v1999 = vsel %vm658, %v1994, %v1998
      %v2001 = vshrl.u32 %v1842, 16
      %v2003 = vrot.slane %v2001, 4
      %v2004 = vshll.u32 %v1842, 16
      %v2006 = vrot.slane %v2004, 5
      %v2007 = vor.u32 %v2003, %v2006
      %v2008 = vrot.slane %v2007, 4
      %v2010 = vshll.u32 %v1843, 16
      %v2012 = vrot.slane %v2010, 5
      %v2013 = vsel %vm658, %v2008, %v2012
      %v2014 = vshrl.u32 %v1843, 16
      %v2016 = vrot.slane %v2014, 4
      %v2017 = vor.u32 %v2016, %v2012
      %v2018 = vrot.slane %v2017, 4
      %v2020 = vshll.u32 %v1869, 16
      %v2022 = vrot.slane %v2020, 5
      %v2023 = vsel %vm658, %v2018, %v2022
      %v2025 = vshrl.u32 %v1844, 16
      %v2027 = vrot.slane %v2025, 4
      %v2028 = vshll.u32 %v1844, 16
      %v2030 = vrot.slane %v2028, 5
      %v2031 = vor.u32 %v2027, %v2030
      %v2032 = vrot.slane %v2031, 4
      %v2034 = vshll.u32 %v1845, 16
      %v2036 = vrot.slane %v2034, 5
      %v2037 = vsel %vm658, %v2032, %v2036
      %v2038 = vshrl.u32 %v1845, 16
      %v2040 = vrot.slane %v2038, 4
      %v2041 = vor.u32 %v2040, %v2036
      %v2042 = vrot.slane %v2041, 4
      %v2044 = vshll.u32 %v1870, 16
      %v2046 = vrot.slane %v2044, 5
      %v2047 = vsel %vm658, %v2042, %v2046
      %v2049 = vshrl.u32 %v1846, 16
      %v2051 = vrot.slane %v2049, 4
      %v2052 = vshll.u32 %v1846, 16
      %v2054 = vrot.slane %v2052, 5
      %v2055 = vor.u32 %v2051, %v2054
      %v2056 = vrot.slane %v2055, 4
      %v2058 = vshll.u32 %v1847, 16
      %v2060 = vrot.slane %v2058, 5
      %v2061 = vsel %vm658, %v2056, %v2060
      %v2062 = vshrl.u32 %v1847, 16
      %v2064 = vrot.slane %v2062, 4
      %v2065 = vor.u32 %v2064, %v2060
      %v2066 = vrot.slane %v2065, 4
      %v2068 = vshll.u32 %v1871, 16
      %v2070 = vrot.slane %v2068, 5
      %v2071 = vsel %vm658, %v2066, %v2070
      %v2073 = vshrl.u32 %v1848, 16
      %v2075 = vrot.slane %v2073, 4
      %v2076 = vshll.u32 %v1848, 16
      %v2078 = vrot.slane %v2076, 5
      %v2079 = vor.u32 %v2075, %v2078
      %v2080 = vrot.slane %v2079, 4
      %v2082 = vshll.u32 %v1849, 16
      %v2084 = vrot.slane %v2082, 5
      %v2085 = vsel %vm658, %v2080, %v2084
      %v2086 = vshrl.u32 %v1849, 16
      %v2088 = vrot.slane %v2086, 4
      %v2089 = vor.u32 %v2088, %v2084
      %v2090 = vrot.slane %v2089, 4
      %v2092 = vshll.u32 %v1872, 16
      %v2094 = vrot.slane %v2092, 5
      %v2095 = vsel %vm658, %v2090, %v2094
      %v2097 = vshrl.u32 %v1850, 16
      %v2099 = vrot.slane %v2097, 4
      %v2100 = vshll.u32 %v1850, 16
      %v2102 = vrot.slane %v2100, 5
      %v2103 = vor.u32 %v2099, %v2102
      %v2104 = vrot.slane %v2103, 4
      %v2106 = vshll.u32 %v1851, 16
      %v2108 = vrot.slane %v2106, 5
      %v2109 = vsel %vm658, %v2104, %v2108
      %v2110 = vshrl.u32 %v1851, 16
      %v2112 = vrot.slane %v2110, 4
      %v2113 = vor.u32 %v2112, %v2108
      %v2114 = vrot.slane %v2113, 4
      %v2116 = vshll.u32 %v1873, 16
      %v2118 = vrot.slane %v2116, 5
      %v2119 = vsel %vm658, %v2114, %v2118
      %v2121 = vshrl.u32 %v1852, 16
      %v2123 = vrot.slane %v2121, 4
      %v2124 = vshll.u32 %v1852, 16
      %v2126 = vrot.slane %v2124, 5
      %v2127 = vor.u32 %v2123, %v2126
      %v2128 = vrot.slane %v2127, 4
      %v2130 = vshll.u32 %v1853, 16
      %v2132 = vrot.slane %v2130, 5
      %v2133 = vsel %vm658, %v2128, %v2132
      %v2134 = vshrl.u32 %v1853, 16
      %v2136 = vrot.slane %v2134, 4
      %v2137 = vor.u32 %v2136, %v2132
      %v2138 = vrot.slane %v2137, 4
      %v2140 = vshll.u32 %v1874, 16
      %v2142 = vrot.slane %v2140, 5
      %v2143 = vsel %vm658, %v2138, %v2142
      %v2145 = vshrl.u32 %v1854, 16
      %v2147 = vrot.slane %v2145, 4
      %v2148 = vshll.u32 %v1854, 16
      %v2150 = vrot.slane %v2148, 5
      %v2151 = vor.u32 %v2147, %v2150
      %v2152 = vrot.slane %v2151, 4
      %v2154 = vshll.u32 %v1855, 16
      %v2156 = vrot.slane %v2154, 5
      %v2157 = vsel %vm658, %v2152, %v2156
      %v2158 = vshrl.u32 %v1855, 16
      %v2160 = vrot.slane %v2158, 4
      %v2161 = vor.u32 %v2160, %v2156
      %v2162 = vrot.slane %v2161, 4
      %v2164 = vshll.u32 %v1875, 16
      %v2166 = vrot.slane %v2164, 5
      %v2167 = vsel %vm658, %v2162, %v2166
      %v2169 = vshrl.u32 %v1856, 16
      %v2171 = vrot.slane %v2169, 4
      %v2172 = vshll.u32 %v1856, 16
      %v2174 = vrot.slane %v2172, 5
      %v2175 = vor.u32 %v2171, %v2174
      %v2176 = vrot.slane %v2175, 4
      %v2178 = vshll.u32 %v1857, 16
      %v2180 = vrot.slane %v2178, 5
      %v2181 = vsel %vm658, %v2176, %v2180
      %v2182 = vshrl.u32 %v1857, 16
      %v2184 = vrot.slane %v2182, 4
      %v2185 = vor.u32 %v2184, %v2180
      %v2186 = vrot.slane %v2185, 4
      %v2188 = vshll.u32 %v1876, 16
      %v2190 = vrot.slane %v2188, 5
      %v2191 = vsel %vm658, %v2186, %v2190
      %v2193 = vshrl.u32 %v1858, 16
      %v2195 = vrot.slane %v2193, 4
      %v2196 = vshll.u32 %v1858, 16
      %v2198 = vrot.slane %v2196, 5
      %v2199 = vor.u32 %v2195, %v2198
      %v2200 = vrot.slane %v2199, 4
      %v2202 = vshll.u32 %v1859, 16
      %v2204 = vrot.slane %v2202, 5
      %v2205 = vsel %vm658, %v2200, %v2204
      %v2206 = vshrl.u32 %v1859, 16
      %v2208 = vrot.slane %v2206, 4
      %v2209 = vor.u32 %v2208, %v2204
      %v2210 = vrot.slane %v2209, 4
      %v2212 = vshll.u32 %v1877, 16
      %v2214 = vrot.slane %v2212, 5
      %v2215 = vsel %vm658, %v2210, %v2214
      %v2217 = vshrl.u32 %v1860, 16
      %v2219 = vrot.slane %v2217, 4
      %v2220 = vshll.u32 %v1860, 16
      %v2222 = vrot.slane %v2220, 5
      %v2223 = vor.u32 %v2219, %v2222
      %v2224 = vrot.slane %v2223, 4
      %v2226 = vshll.u32 %v1861, 16
      %v2228 = vrot.slane %v2226, 5
      %v2229 = vsel %vm658, %v2224, %v2228
      %v2230 = vshrl.u32 %v1861, 16
      %v2232 = vrot.slane %v2230, 4
      %v2233 = vor.u32 %v2232, %v2228
      %v2234 = vrot.slane %v2233, 4
      %v2236 = vshll.u32 %v1878, 16
      %v2238 = vrot.slane %v2236, 5
      %v2239 = vsel %vm658, %v2234, %v2238
      %v2241 = vshrl.u32 %v1862, 16
      %v2243 = vrot.slane %v2241, 4
      %v2244 = vshll.u32 %v1862, 16
      %v2246 = vrot.slane %v2244, 5
      %v2247 = vor.u32 %v2243, %v2246
      %v2248 = vrot.slane %v2247, 4
      %v2250 = vshll.u32 %v1863, 16
      %v2252 = vrot.slane %v2250, 5
      %v2253 = vsel %vm658, %v2248, %v2252
      %v2254 = vshrl.u32 %v1863, 16
      %v2256 = vrot.slane %v2254, 4
      %v2257 = vor.u32 %v2256, %v2252
      %v2258 = vrot.slane %v2257, 4
      %v2260 = vshll.u32 %v1879, 16
      %v2262 = vrot.slane %v2260, 5
      %v2263 = vsel %vm658, %v2258, %v2262
      %v2264 = vld [vmem:[%s1831] sm:$0xe]
      %v2265 = vld [vmem:[%s1831 + $0xc] sm:$0xe]
      %v2266 = vld [vmem:[%s1831 + $0x18] sm:$0xe]
      %v2267 = vld [vmem:[%s1831 + $0x24] sm:$0xe]
      %v2268 = vld [vmem:[%s1831 + $0x30] sm:$0xe]
      %v2269 = vld [vmem:[%s1831 + $0x3c] sm:$0xe]
      %v2270 = vld [vmem:[%s1831 + $0x48] sm:$0xe]
      %v2271 = vld [vmem:[%s1831 + $0x54] sm:$0xe]
      %v2272 = vld [vmem:[%s1831 + $0x60] sm:$0xe]
      %v2273 = vld [vmem:[%s1831 + $0x6c] sm:$0xe]
      %v2274 = vld [vmem:[%s1831 + $0x78] sm:$0xe]
      %v2275 = vld [vmem:[%s1831 + $0x84] sm:$0xe]
      %v2276 = vld [vmem:[%s1831 + $0x90] sm:$0xe]
      %v2277 = vld [vmem:[%s1831 + $0x9c] sm:$0xe]
      %v2278 = vld [vmem:[%s1831 + $0xa8] sm:$0xe]
      %v2279 = vld [vmem:[%s1831 + $0xb4] sm:$0xe]
      %v2328 = vrot.slane %v2264, 5
      %v2329 = vrot.slane %v2328, 4
      %v2330 = vrot.slane %v1833, 5
      %v2331 = vsel %vm1109, %v2329, %v2330
      %v2332 = vrot.slane %v2330, 4
      %v2333 = vrot.slane %v1864, 5
      %v2334 = vsel %vm1109, %v2332, %v2333
      %v2335 = vrot.slane %v2265, 5
      %v2336 = vrot.slane %v2335, 4
      %v2337 = vrot.slane %v1835, 5
      %v2338 = vsel %vm1109, %v2336, %v2337
      %v2339 = vrot.slane %v2337, 4
      %v2340 = vrot.slane %v1865, 5
      %v2341 = vsel %vm1109, %v2339, %v2340
      %v2342 = vrot.slane %v2266, 5
      %v2343 = vrot.slane %v2342, 4
      %v2344 = vrot.slane %v1837, 5
      %v2345 = vsel %vm1109, %v2343, %v2344
      %v2346 = vrot.slane %v2344, 4
      %v2347 = vrot.slane %v1866, 5
      %v2348 = vsel %vm1109, %v2346, %v2347
      %v2349 = vrot.slane %v2267, 5
      %v2350 = vrot.slane %v2349, 4
      %v2351 = vrot.slane %v1839, 5
      %v2352 = vsel %vm1109, %v2350, %v2351
      %v2353 = vrot.slane %v2351, 4
      %v2354 = vrot.slane %v1867, 5
      %v2355 = vsel %vm1109, %v2353, %v2354
      %v2356 = vrot.slane %v2268, 5
      %v2357 = vrot.slane %v2356, 4
      %v2358 = vrot.slane %v1841, 5
      %v2359 = vsel %vm1109, %v2357, %v2358
      %v2360 = vrot.slane %v2358, 4
      %v2361 = vrot.slane %v1868, 5
      %v2362 = vsel %vm1109, %v2360, %v2361
      %v2363 = vrot.slane %v2269, 5
      %v2364 = vrot.slane %v2363, 4
      %v2365 = vrot.slane %v1843, 5
      %v2366 = vsel %vm1109, %v2364, %v2365
      %v2367 = vrot.slane %v2365, 4
      %v2368 = vrot.slane %v1869, 5
      %v2369 = vsel %vm1109, %v2367, %v2368
      %v2370 = vrot.slane %v2270, 5
      %v2371 = vrot.slane %v2370, 4
      %v2372 = vrot.slane %v1845, 5
      %v2373 = vsel %vm1109, %v2371, %v2372
      %v2374 = vrot.slane %v2372, 4
      %v2375 = vrot.slane %v1870, 5
      %v2376 = vsel %vm1109, %v2374, %v2375
      %v2377 = vrot.slane %v2271, 5
      %v2378 = vrot.slane %v2377, 4
      %v2379 = vrot.slane %v1847, 5
      %v2380 = vsel %vm1109, %v2378, %v2379
      %v2381 = vrot.slane %v2379, 4
      %v2382 = vrot.slane %v1871, 5
      %v2383 = vsel %vm1109, %v2381, %v2382
      %v2384 = vrot.slane %v2272, 5
      %v2385 = vrot.slane %v2384, 4
      %v2386 = vrot.slane %v1849, 5
      %v2387 = vsel %vm1109, %v2385, %v2386
      %v2388 = vrot.slane %v2386, 4
      %v2389 = vrot.slane %v1872, 5
      %v2390 = vsel %vm1109, %v2388, %v2389
      %v2391 = vrot.slane %v2273, 5
      %v2392 = vrot.slane %v2391, 4
      %v2393 = vrot.slane %v1851, 5
      %v2394 = vsel %vm1109, %v2392, %v2393
      %v2395 = vrot.slane %v2393, 4
      %v2396 = vrot.slane %v1873, 5
      %v2397 = vsel %vm1109, %v2395, %v2396
      %v2398 = vrot.slane %v2274, 5
      %v2399 = vrot.slane %v2398, 4
      %v2400 = vrot.slane %v1853, 5
      %v2401 = vsel %vm1109, %v2399, %v2400
      %v2402 = vrot.slane %v2400, 4
      %v2403 = vrot.slane %v1874, 5
      %v2404 = vsel %vm1109, %v2402, %v2403
      %v2405 = vrot.slane %v2275, 5
      %v2406 = vrot.slane %v2405, 4
      %v2407 = vrot.slane %v1855, 5
      %v2408 = vsel %vm1109, %v2406, %v2407
      %v2409 = vrot.slane %v2407, 4
      %v2410 = vrot.slane %v1875, 5
      %v2411 = vsel %vm1109, %v2409, %v2410
      %v2412 = vrot.slane %v2276, 5
      %v2413 = vrot.slane %v2412, 4
      %v2414 = vrot.slane %v1857, 5
      %v2415 = vsel %vm1109, %v2413, %v2414
      %v2416 = vrot.slane %v2414, 4
      %v2417 = vrot.slane %v1876, 5
      %v2418 = vsel %vm1109, %v2416, %v2417
      %v2419 = vrot.slane %v2277, 5
      %v2420 = vrot.slane %v2419, 4
      %v2421 = vrot.slane %v1859, 5
      %v2422 = vsel %vm1109, %v2420, %v2421
      %v2423 = vrot.slane %v2421, 4
      %v2424 = vrot.slane %v1877, 5
      %v2425 = vsel %vm1109, %v2423, %v2424
      %v2426 = vrot.slane %v2278, 5
      %v2427 = vrot.slane %v2426, 4
      %v2428 = vrot.slane %v1861, 5
      %v2429 = vsel %vm1109, %v2427, %v2428
      %v2430 = vrot.slane %v2428, 4
      %v2431 = vrot.slane %v1878, 5
      %v2432 = vsel %vm1109, %v2430, %v2431
      %v2433 = vrot.slane %v2279, 5
      %v2434 = vrot.slane %v2433, 4
      %v2435 = vrot.slane %v1863, 5
      %v2436 = vsel %vm1109, %v2434, %v2435
      %v2437 = vrot.slane %v2435, 4
      %v2438 = vrot.slane %v1879, 5
      %v2439 = vsel %vm1109, %v2437, %v2438
      %v2456 = vunpack.c.l.b16 %v608
      %v2457 = vunpack.c.l.b16 %v609
      %v2458 = vunpack.c.l.b16 %v610
      %v2459 = vunpack.c.l.b16 %v611
      %v2460 = vunpack.c.l.b16 %v612
      %v2461 = vunpack.c.l.b16 %v613
      %v2462 = vunpack.c.l.b16 %v614
      %v2463 = vunpack.c.l.b16 %v615
      %v2464 = vunpack.c.l.b16 %v616
      %v2465 = vunpack.c.l.b16 %v617
      %v2466 = vunpack.c.l.b16 %v618
      %v2467 = vunpack.c.l.b16 %v619
      %v2468 = vunpack.c.l.b16 %v620
      %v2469 = vunpack.c.l.b16 %v621
      %v2470 = vunpack.c.l.b16 %v622
      %v2471 = vunpack.c.l.b16 %v623
      %v2472 = vunpack.c.l.b16 %v624
      %v2473 = vunpack.c.l.b16 %v625
      %v2474 = vunpack.c.l.b16 %v626
      %v2475 = vunpack.c.l.b16 %v627
      %v2476 = vunpack.c.l.b16 %v628
      %v2477 = vunpack.c.l.b16 %v629
      %v2478 = vunpack.c.l.b16 %v630
      %v2479 = vunpack.c.l.b16 %v631
      %v2480 = vunpack.c.l.b16 %v632
      %v2481 = vunpack.c.l.b16 %v633
      %v2482 = vunpack.c.l.b16 %v634
      %v2483 = vunpack.c.l.b16 %v635
      %v2484 = vunpack.c.l.b16 %v636
      %v2485 = vunpack.c.l.b16 %v637
      %v2486 = vunpack.c.l.b16 %v638
      %v2487 = vunpack.c.l.b16 %v639
      %v2488 = vpack.c.b16 %v2457, %v2456
      %v2489 = vpack.c.b16 %v2459, %v2458
      %v2490 = vpack.c.b16 %v2461, %v2460
      %v2491 = vpack.c.b16 %v2463, %v2462
      %v2492 = vpack.c.b16 %v2465, %v2464
      %v2493 = vpack.c.b16 %v2467, %v2466
      %v2494 = vpack.c.b16 %v2469, %v2468
      %v2495 = vpack.c.b16 %v2471, %v2470
      %v2496 = vpack.c.b16 %v2473, %v2472
      %v2497 = vpack.c.b16 %v2475, %v2474
      %v2498 = vpack.c.b16 %v2477, %v2476
      %v2499 = vpack.c.b16 %v2479, %v2478
      %v2500 = vpack.c.b16 %v2481, %v2480
      %v2501 = vpack.c.b16 %v2483, %v2482
      %v2502 = vpack.c.b16 %v2485, %v2484
      %v2503 = vpack.c.b16 %v2487, %v2486
      %v2504 = vunpack.c.l.b16 %v672
      %v2505 = vunpack.c.l.b16 %v682
      %v2506 = vunpack.c.l.b16 %v696
      %v2507 = vunpack.c.l.b16 %v706
      %v2508 = vunpack.c.l.b16 %v720
      %v2509 = vunpack.c.l.b16 %v730
      %v2510 = vunpack.c.l.b16 %v744
      %v2511 = vunpack.c.l.b16 %v754
      %v2512 = vunpack.c.l.b16 %v768
      %v2513 = vunpack.c.l.b16 %v778
      %v2514 = vunpack.c.l.b16 %v792
      %v2515 = vunpack.c.l.b16 %v802
      %v2516 = vunpack.c.l.b16 %v816
      %v2517 = vunpack.c.l.b16 %v826
      %v2518 = vunpack.c.l.b16 %v840
      %v2519 = vunpack.c.l.b16 %v850
      %v2520 = vunpack.c.l.b16 %v864
      %v2521 = vunpack.c.l.b16 %v874
      %v2522 = vunpack.c.l.b16 %v888
      %v2523 = vunpack.c.l.b16 %v898
      %v2524 = vunpack.c.l.b16 %v912
      %v2525 = vunpack.c.l.b16 %v922
      %v2526 = vunpack.c.l.b16 %v936
      %v2527 = vunpack.c.l.b16 %v946
      %v2528 = vunpack.c.l.b16 %v960
      %v2529 = vunpack.c.l.b16 %v970
      %v2530 = vunpack.c.l.b16 %v984
      %v2531 = vunpack.c.l.b16 %v994
      %v2532 = vunpack.c.l.b16 %v1008
      %v2533 = vunpack.c.l.b16 %v1018
      %v2534 = vunpack.c.l.b16 %v1032
      %v2535 = vunpack.c.l.b16 %v1042
      %v2536 = vpack.c.b16 %v2505, %v2504
      %v2537 = vpack.c.b16 %v2507, %v2506
      %v2538 = vpack.c.b16 %v2509, %v2508
      %v2539 = vpack.c.b16 %v2511, %v2510
      %v2540 = vpack.c.b16 %v2513, %v2512
      %v2541 = vpack.c.b16 %v2515, %v2514
      %v2542 = vpack.c.b16 %v2517, %v2516
      %v2543 = vpack.c.b16 %v2519, %v2518
      %v2544 = vpack.c.b16 %v2521, %v2520
      %v2545 = vpack.c.b16 %v2523, %v2522
      %v2546 = vpack.c.b16 %v2525, %v2524
      %v2547 = vpack.c.b16 %v2527, %v2526
      %v2548 = vpack.c.b16 %v2529, %v2528
      %v2549 = vpack.c.b16 %v2531, %v2530
      %v2550 = vpack.c.b16 %v2533, %v2532
      %v2551 = vpack.c.b16 %v2535, %v2534
      %2552 = vrot.lane.b32.xlu0 %v2536, 3
      %v2553 = vpop.permute.xlu0 %2552
      %2554 = vrot.lane.b32.xlu0 %v2537, 3
      %v2555 = vpop.permute.xlu0 %2554
      %2556 = vrot.lane.b32.xlu0 %v2538, 3
      %v2557 = vpop.permute.xlu0 %2556
      %2558 = vrot.lane.b32.xlu0 %v2539, 3
      %v2559 = vpop.permute.xlu0 %2558
      %2560 = vrot.lane.b32.xlu0 %v2540, 3
      %v2561 = vpop.permute.xlu0 %2560
      %2562 = vrot.lane.b32.xlu0 %v2541, 3
      %v2563 = vpop.permute.xlu0 %2562
      %2564 = vrot.lane.b32.xlu0 %v2542, 3
      %v2565 = vpop.permute.xlu0 %2564
      %2566 = vrot.lane.b32.xlu0 %v2543, 3
      %v2567 = vpop.permute.xlu0 %2566
      %2568 = vrot.lane.b32.xlu0 %v2544, 3
      %v2569 = vpop.permute.xlu0 %2568
      %2570 = vrot.lane.b32.xlu0 %v2545, 3
      %v2571 = vpop.permute.xlu0 %2570
      %2572 = vrot.lane.b32.xlu0 %v2546, 3
      %v2573 = vpop.permute.xlu0 %2572
      %2574 = vrot.lane.b32.xlu0 %v2547, 3
      %v2575 = vpop.permute.xlu0 %2574
      %2576 = vrot.lane.b32.xlu0 %v2548, 3
      %v2577 = vpop.permute.xlu0 %2576
      %2578 = vrot.lane.b32.xlu0 %v2549, 3
      %v2579 = vpop.permute.xlu0 %2578
      %2580 = vrot.lane.b32.xlu0 %v2550, 3
      %v2581 = vpop.permute.xlu0 %2580
      %2582 = vrot.lane.b32.xlu0 %v2551, 3
      %v2583 = vpop.permute.xlu0 %2582
      %v2584 = vunpack.c.l.b16 %v1113
      %v2585 = vunpack.c.l.b16 %v1116
      %v2586 = vunpack.c.l.b16 %v1120
      %v2587 = vunpack.c.l.b16 %v1123
      %v2588 = vunpack.c.l.b16 %v1127
      %v2589 = vunpack.c.l.b16 %v1130
      %v2590 = vunpack.c.l.b16 %v1134
      %v2591 = vunpack.c.l.b16 %v1137
      %v2592 = vunpack.c.l.b16 %v1141
      %v2593 = vunpack.c.l.b16 %v1144
      %v2594 = vunpack.c.l.b16 %v1148
      %v2595 = vunpack.c.l.b16 %v1151
      %v2596 = vunpack.c.l.b16 %v1155
      %v2597 = vunpack.c.l.b16 %v1158
      %v2598 = vunpack.c.l.b16 %v1162
      %v2599 = vunpack.c.l.b16 %v1165
      %v2600 = vunpack.c.l.b16 %v1169
      %v2601 = vunpack.c.l.b16 %v1172
      %v2602 = vunpack.c.l.b16 %v1176
      %v2603 = vunpack.c.l.b16 %v1179
      %v2604 = vunpack.c.l.b16 %v1183
      %v2605 = vunpack.c.l.b16 %v1186
      %v2606 = vunpack.c.l.b16 %v1190
      %v2607 = vunpack.c.l.b16 %v1193
      %v2608 = vunpack.c.l.b16 %v1197
      %v2609 = vunpack.c.l.b16 %v1200
      %v2610 = vunpack.c.l.b16 %v1204
      %v2611 = vunpack.c.l.b16 %v1207
      %v2612 = vunpack.c.l.b16 %v1211
      %v2613 = vunpack.c.l.b16 %v1214
      %v2614 = vunpack.c.l.b16 %v1218
      %v2615 = vunpack.c.l.b16 %v1221
      %v2616 = vpack.c.b16 %v2585, %v2584
      %v2617 = vpack.c.b16 %v2587, %v2586
      %v2618 = vpack.c.b16 %v2589, %v2588
      %v2619 = vpack.c.b16 %v2591, %v2590
      %v2620 = vpack.c.b16 %v2593, %v2592
      %v2621 = vpack.c.b16 %v2595, %v2594
      %v2622 = vpack.c.b16 %v2597, %v2596
      %v2623 = vpack.c.b16 %v2599, %v2598
      %v2624 = vpack.c.b16 %v2601, %v2600
      %v2625 = vpack.c.b16 %v2603, %v2602
      %v2626 = vpack.c.b16 %v2605, %v2604
      %v2627 = vpack.c.b16 %v2607, %v2606
      %v2628 = vpack.c.b16 %v2609, %v2608
      %v2629 = vpack.c.b16 %v2611, %v2610
      %v2630 = vpack.c.b16 %v2613, %v2612
      %v2631 = vpack.c.b16 %v2615, %v2614
      %2632 = vrot.lane.b32.xlu0 %v2616, 6
      %v2633 = vpop.permute.xlu0 %2632
      %2634 = vrot.lane.b32.xlu0 %v2617, 6
      %v2635 = vpop.permute.xlu0 %2634
      %2636 = vrot.lane.b32.xlu0 %v2618, 6
      %v2637 = vpop.permute.xlu0 %2636
      %2638 = vrot.lane.b32.xlu0 %v2619, 6
      %v2639 = vpop.permute.xlu0 %2638
      %2640 = vrot.lane.b32.xlu0 %v2620, 6
      %v2641 = vpop.permute.xlu0 %2640
      %2642 = vrot.lane.b32.xlu0 %v2621, 6
      %v2643 = vpop.permute.xlu0 %2642
      %2644 = vrot.lane.b32.xlu0 %v2622, 6
      %v2645 = vpop.permute.xlu0 %2644
      %2646 = vrot.lane.b32.xlu0 %v2623, 6
      %v2647 = vpop.permute.xlu0 %2646
      %2648 = vrot.lane.b32.xlu0 %v2624, 6
      %v2649 = vpop.permute.xlu0 %2648
      %2650 = vrot.lane.b32.xlu0 %v2625, 6
      %v2651 = vpop.permute.xlu0 %2650
      %2652 = vrot.lane.b32.xlu0 %v2626, 6
      %v2653 = vpop.permute.xlu0 %2652
      %2654 = vrot.lane.b32.xlu0 %v2627, 6
      %v2655 = vpop.permute.xlu0 %2654
      %2656 = vrot.lane.b32.xlu0 %v2628, 6
      %v2657 = vpop.permute.xlu0 %2656
      %2658 = vrot.lane.b32.xlu0 %v2629, 6
      %v2659 = vpop.permute.xlu0 %2658
      %2660 = vrot.lane.b32.xlu0 %v2630, 6
      %v2661 = vpop.permute.xlu0 %2660
      %2662 = vrot.lane.b32.xlu0 %v2631, 6
      %v2663 = vpop.permute.xlu0 %2662
      %v2680 = vunpack.c.l.b16 %v1223
      %v2681 = vunpack.c.l.b16 %v1224
      %v2682 = vunpack.c.l.b16 %v1225
      %v2683 = vunpack.c.l.b16 %v1226
      %v2684 = vunpack.c.l.b16 %v1227
      %v2685 = vunpack.c.l.b16 %v1228
      %v2686 = vunpack.c.l.b16 %v1229
      %v2687 = vunpack.c.l.b16 %v1230
      %v2688 = vunpack.c.l.b16 %v1231
      %v2689 = vunpack.c.l.b16 %v1232
      %v2690 = vunpack.c.l.b16 %v1233
      %v2691 = vunpack.c.l.b16 %v1234
      %v2692 = vunpack.c.l.b16 %v1235
      %v2693 = vunpack.c.l.b16 %v1236
      %v2694 = vunpack.c.l.b16 %v1237
      %v2695 = vunpack.c.l.b16 %v1238
      %v2696 = vunpack.c.l.b16 %v1239
      %v2697 = vunpack.c.l.b16 %v1240
      %v2698 = vunpack.c.l.b16 %v1241
      %v2699 = vunpack.c.l.b16 %v1242
      %v2700 = vunpack.c.l.b16 %v1243
      %v2701 = vunpack.c.l.b16 %v1244
      %v2702 = vunpack.c.l.b16 %v1245
      %v2703 = vunpack.c.l.b16 %v1246
      %v2704 = vunpack.c.l.b16 %v1247
      %v2705 = vunpack.c.l.b16 %v1248
      %v2706 = vunpack.c.l.b16 %v1249
      %v2707 = vunpack.c.l.b16 %v1250
      %v2708 = vunpack.c.l.b16 %v1251
      %v2709 = vunpack.c.l.b16 %v1252
      %v2710 = vunpack.c.l.b16 %v1253
      %v2711 = vunpack.c.l.b16 %v1254
      %v2712 = vpack.c.b16 %v2681, %v2680
      %v2713 = vpack.c.b16 %v2683, %v2682
      %v2714 = vpack.c.b16 %v2685, %v2684
      %v2715 = vpack.c.b16 %v2687, %v2686
      %v2716 = vpack.c.b16 %v2689, %v2688
      %v2717 = vpack.c.b16 %v2691, %v2690
      %v2718 = vpack.c.b16 %v2693, %v2692
      %v2719 = vpack.c.b16 %v2695, %v2694
      %v2720 = vpack.c.b16 %v2697, %v2696
      %v2721 = vpack.c.b16 %v2699, %v2698
      %v2722 = vpack.c.b16 %v2701, %v2700
      %v2723 = vpack.c.b16 %v2703, %v2702
      %v2724 = vpack.c.b16 %v2705, %v2704
      %v2725 = vpack.c.b16 %v2707, %v2706
      %v2726 = vpack.c.b16 %v2709, %v2708
      %v2727 = vpack.c.b16 %v2711, %v2710
      %2728 = vrot.lane.b32.xlu0 %v2712, 9
      %v2729 = vpop.permute.xlu0 %2728
      %2730 = vrot.lane.b32.xlu0 %v2713, 9
      %v2731 = vpop.permute.xlu0 %2730
      %2732 = vrot.lane.b32.xlu0 %v2714, 9
      %v2733 = vpop.permute.xlu0 %2732
      %2734 = vrot.lane.b32.xlu0 %v2715, 9
      %v2735 = vpop.permute.xlu0 %2734
      %2736 = vrot.lane.b32.xlu0 %v2716, 9
      %v2737 = vpop.permute.xlu0 %2736
      %2738 = vrot.lane.b32.xlu0 %v2717, 9
      %v2739 = vpop.permute.xlu0 %2738
      %2740 = vrot.lane.b32.xlu0 %v2718, 9
      %v2741 = vpop.permute.xlu0 %2740
      %2742 = vrot.lane.b32.xlu0 %v2719, 9
      %v2743 = vpop.permute.xlu0 %2742
      %2744 = vrot.lane.b32.xlu0 %v2720, 9
      %v2745 = vpop.permute.xlu0 %2744
      %2746 = vrot.lane.b32.xlu0 %v2721, 9
      %v2747 = vpop.permute.xlu0 %2746
      %2748 = vrot.lane.b32.xlu0 %v2722, 9
      %v2749 = vpop.permute.xlu0 %2748
      %2750 = vrot.lane.b32.xlu0 %v2723, 9
      %v2751 = vpop.permute.xlu0 %2750
      %2752 = vrot.lane.b32.xlu0 %v2724, 9
      %v2753 = vpop.permute.xlu0 %2752
      %2754 = vrot.lane.b32.xlu0 %v2725, 9
      %v2755 = vpop.permute.xlu0 %2754
      %2756 = vrot.lane.b32.xlu0 %v2726, 9
      %v2757 = vpop.permute.xlu0 %2756
      %2758 = vrot.lane.b32.xlu0 %v2727, 9
      %v2759 = vpop.permute.xlu0 %2758
      %v2760 = vunpack.c.l.b16 %v1284
      %v2761 = vunpack.c.l.b16 %v1294
      %v2762 = vunpack.c.l.b16 %v1308
      %v2763 = vunpack.c.l.b16 %v1318
      %v2764 = vunpack.c.l.b16 %v1332
      %v2765 = vunpack.c.l.b16 %v1342
      %v2766 = vunpack.c.l.b16 %v1356
      %v2767 = vunpack.c.l.b16 %v1366
      %v2768 = vunpack.c.l.b16 %v1380
      %v2769 = vunpack.c.l.b16 %v1390
      %v2770 = vunpack.c.l.b16 %v1404
      %v2771 = vunpack.c.l.b16 %v1414
      %v2772 = vunpack.c.l.b16 %v1428
      %v2773 = vunpack.c.l.b16 %v1438
      %v2774 = vunpack.c.l.b16 %v1452
      %v2775 = vunpack.c.l.b16 %v1462
      %v2776 = vunpack.c.l.b16 %v1476
      %v2777 = vunpack.c.l.b16 %v1486
      %v2778 = vunpack.c.l.b16 %v1500
      %v2779 = vunpack.c.l.b16 %v1510
      %v2780 = vunpack.c.l.b16 %v1524
      %v2781 = vunpack.c.l.b16 %v1534
      %v2782 = vunpack.c.l.b16 %v1548
      %v2783 = vunpack.c.l.b16 %v1558
      %v2784 = vunpack.c.l.b16 %v1572
      %v2785 = vunpack.c.l.b16 %v1582
      %v2786 = vunpack.c.l.b16 %v1596
      %v2787 = vunpack.c.l.b16 %v1606
      %v2788 = vunpack.c.l.b16 %v1620
      %v2789 = vunpack.c.l.b16 %v1630
      %v2790 = vunpack.c.l.b16 %v1644
      %v2791 = vunpack.c.l.b16 %v1654
      %v2792 = vpack.c.b16 %v2761, %v2760
      %v2793 = vpack.c.b16 %v2763, %v2762
      %v2794 = vpack.c.b16 %v2765, %v2764
      %v2795 = vpack.c.b16 %v2767, %v2766
      %v2796 = vpack.c.b16 %v2769, %v2768
      %v2797 = vpack.c.b16 %v2771, %v2770
      %v2798 = vpack.c.b16 %v2773, %v2772
      %v2799 = vpack.c.b16 %v2775, %v2774
      %v2800 = vpack.c.b16 %v2777, %v2776
      %v2801 = vpack.c.b16 %v2779, %v2778
      %v2802 = vpack.c.b16 %v2781, %v2780
      %v2803 = vpack.c.b16 %v2783, %v2782
      %v2804 = vpack.c.b16 %v2785, %v2784
      %v2805 = vpack.c.b16 %v2787, %v2786
      %v2806 = vpack.c.b16 %v2789, %v2788
      %v2807 = vpack.c.b16 %v2791, %v2790
      %2808 = vrot.lane.b32.xlu0 %v2792, 12
      %v2809 = vpop.permute.xlu0 %2808
      %2810 = vrot.lane.b32.xlu0 %v2793, 12
      %v2811 = vpop.permute.xlu0 %2810
      %2812 = vrot.lane.b32.xlu0 %v2794, 12
      %v2813 = vpop.permute.xlu0 %2812
      %2814 = vrot.lane.b32.xlu0 %v2795, 12
      %v2815 = vpop.permute.xlu0 %2814
      %2816 = vrot.lane.b32.xlu0 %v2796, 12
      %v2817 = vpop.permute.xlu0 %2816
      %2818 = vrot.lane.b32.xlu0 %v2797, 12
      %v2819 = vpop.permute.xlu0 %2818
      %2820 = vrot.lane.b32.xlu0 %v2798, 12
      %v2821 = vpop.permute.xlu0 %2820
      %2822 = vrot.lane.b32.xlu0 %v2799, 12
      %v2823 = vpop.permute.xlu0 %2822
      %2824 = vrot.lane.b32.xlu0 %v2800, 12
      %v2825 = vpop.permute.xlu0 %2824
      %2826 = vrot.lane.b32.xlu0 %v2801, 12
      %v2827 = vpop.permute.xlu0 %2826
      %2828 = vrot.lane.b32.xlu0 %v2802, 12
      %v2829 = vpop.permute.xlu0 %2828
      %2830 = vrot.lane.b32.xlu0 %v2803, 12
      %v2831 = vpop.permute.xlu0 %2830
      %2832 = vrot.lane.b32.xlu0 %v2804, 12
      %v2833 = vpop.permute.xlu0 %2832
      %2834 = vrot.lane.b32.xlu0 %v2805, 12
      %v2835 = vpop.permute.xlu0 %2834
      %2836 = vrot.lane.b32.xlu0 %v2806, 12
      %v2837 = vpop.permute.xlu0 %2836
      %2838 = vrot.lane.b32.xlu0 %v2807, 12
      %v2839 = vpop.permute.xlu0 %2838
      %v2840 = vunpack.c.l.b16 %v1722
      %v2841 = vunpack.c.l.b16 %v1725
      %v2842 = vunpack.c.l.b16 %v1729
      %v2843 = vunpack.c.l.b16 %v1732
      %v2844 = vunpack.c.l.b16 %v1736
      %v2845 = vunpack.c.l.b16 %v1739
      %v2846 = vunpack.c.l.b16 %v1743
      %v2847 = vunpack.c.l.b16 %v1746
      %v2848 = vunpack.c.l.b16 %v1750
      %v2849 = vunpack.c.l.b16 %v1753
      %v2850 = vunpack.c.l.b16 %v1757
      %v2851 = vunpack.c.l.b16 %v1760
      %v2852 = vunpack.c.l.b16 %v1764
      %v2853 = vunpack.c.l.b16 %v1767
      %v2854 = vunpack.c.l.b16 %v1771
      %v2855 = vunpack.c.l.b16 %v1774
      %v2856 = vunpack.c.l.b16 %v1778
      %v2857 = vunpack.c.l.b16 %v1781
      %v2858 = vunpack.c.l.b16 %v1785
      %v2859 = vunpack.c.l.b16 %v1788
      %v2860 = vunpack.c.l.b16 %v1792
      %v2861 = vunpack.c.l.b16 %v1795
      %v2862 = vunpack.c.l.b16 %v1799
      %v2863 = vunpack.c.l.b16 %v1802
      %v2864 = vunpack.c.l.b16 %v1806
      %v2865 = vunpack.c.l.b16 %v1809
      %v2866 = vunpack.c.l.b16 %v1813
      %v2867 = vunpack.c.l.b16 %v1816
      %v2868 = vunpack.c.l.b16 %v1820
      %v2869 = vunpack.c.l.b16 %v1823
      %v2870 = vunpack.c.l.b16 %v1827
      %v2871 = vunpack.c.l.b16 %v1830
      %v2872 = vpack.c.b16 %v2841, %v2840
      %v2873 = vpack.c.b16 %v2843, %v2842
      %v2874 = vpack.c.b16 %v2845, %v2844
      %v2875 = vpack.c.b16 %v2847, %v2846
      %v2876 = vpack.c.b16 %v2849, %v2848
      %v2877 = vpack.c.b16 %v2851, %v2850
      %v2878 = vpack.c.b16 %v2853, %v2852
      %v2879 = vpack.c.b16 %v2855, %v2854
      %v2880 = vpack.c.b16 %v2857, %v2856
      %v2881 = vpack.c.b16 %v2859, %v2858
      %v2882 = vpack.c.b16 %v2861, %v2860
      %v2883 = vpack.c.b16 %v2863, %v2862
      %v2884 = vpack.c.b16 %v2865, %v2864
      %v2885 = vpack.c.b16 %v2867, %v2866
      %v2886 = vpack.c.b16 %v2869, %v2868
      %v2887 = vpack.c.b16 %v2871, %v2870
      %2888 = vrot.lane.b32.xlu0 %v2872, 15
      %v2889 = vpop.permute.xlu0 %2888
      %2890 = vrot.lane.b32.xlu0 %v2873, 15
      %v2891 = vpop.permute.xlu0 %2890
      %2892 = vrot.lane.b32.xlu0 %v2874, 15
      %v2893 = vpop.permute.xlu0 %2892
      %2894 = vrot.lane.b32.xlu0 %v2875, 15
      %v2895 = vpop.permute.xlu0 %2894
      %2896 = vrot.lane.b32.xlu0 %v2876, 15
      %v2897 = vpop.permute.xlu0 %2896
      %2898 = vrot.lane.b32.xlu0 %v2877, 15
      %v2899 = vpop.permute.xlu0 %2898
      %2900 = vrot.lane.b32.xlu0 %v2878, 15
      %v2901 = vpop.permute.xlu0 %2900
      %2902 = vrot.lane.b32.xlu0 %v2879, 15
      %v2903 = vpop.permute.xlu0 %2902
      %2904 = vrot.lane.b32.xlu0 %v2880, 15
      %v2905 = vpop.permute.xlu0 %2904
      %2906 = vrot.lane.b32.xlu0 %v2881, 15
      %v2907 = vpop.permute.xlu0 %2906
      %2908 = vrot.lane.b32.xlu0 %v2882, 15
      %v2909 = vpop.permute.xlu0 %2908
      %2910 = vrot.lane.b32.xlu0 %v2883, 15
      %v2911 = vpop.permute.xlu0 %2910
      %2912 = vrot.lane.b32.xlu0 %v2884, 15
      %v2913 = vpop.permute.xlu0 %2912
      %2914 = vrot.lane.b32.xlu0 %v2885, 15
      %v2915 = vpop.permute.xlu0 %2914
      %2916 = vrot.lane.b32.xlu0 %v2886, 15
      %v2917 = vpop.permute.xlu0 %2916
      %2918 = vrot.lane.b32.xlu0 %v2887, 15
      %v2919 = vpop.permute.xlu0 %2918
      %v2936 = vunpack.c.l.b16 %v1832
      %v2937 = vunpack.c.l.b16 %v1833
      %v2938 = vunpack.c.l.b16 %v1834
      %v2939 = vunpack.c.l.b16 %v1835
      %v2940 = vunpack.c.l.b16 %v1836
      %v2941 = vunpack.c.l.b16 %v1837
      %v2942 = vunpack.c.l.b16 %v1838
      %v2943 = vunpack.c.l.b16 %v1839
      %v2944 = vunpack.c.l.b16 %v1840
      %v2945 = vunpack.c.l.b16 %v1841
      %v2946 = vunpack.c.l.b16 %v1842
      %v2947 = vunpack.c.l.b16 %v1843
      %v2948 = vunpack.c.l.b16 %v1844
      %v2949 = vunpack.c.l.b16 %v1845
      %v2950 = vunpack.c.l.b16 %v1846
      %v2951 = vunpack.c.l.b16 %v1847
      %v2952 = vunpack.c.l.b16 %v1848
      %v2953 = vunpack.c.l.b16 %v1849
      %v2954 = vunpack.c.l.b16 %v1850
      %v2955 = vunpack.c.l.b16 %v1851
      %v2956 = vunpack.c.l.b16 %v1852
      %v2957 = vunpack.c.l.b16 %v1853
      %v2958 = vunpack.c.l.b16 %v1854
      %v2959 = vunpack.c.l.b16 %v1855
      %v2960 = vunpack.c.l.b16 %v1856
      %v2961 = vunpack.c.l.b16 %v1857
      %v2962 = vunpack.c.l.b16 %v1858
      %v2963 = vunpack.c.l.b16 %v1859
      %v2964 = vunpack.c.l.b16 %v1860
      %v2965 = vunpack.c.l.b16 %v1861
      %v2966 = vunpack.c.l.b16 %v1862
      %v2967 = vunpack.c.l.b16 %v1863
      %v2968 = vpack.c.b16 %v2937, %v2936
      %v2969 = vpack.c.b16 %v2939, %v2938
      %v2970 = vpack.c.b16 %v2941, %v2940
      %v2971 = vpack.c.b16 %v2943, %v2942
      %v2972 = vpack.c.b16 %v2945, %v2944
      %v2973 = vpack.c.b16 %v2947, %v2946
      %v2974 = vpack.c.b16 %v2949, %v2948
      %v2975 = vpack.c.b16 %v2951, %v2950
      %v2976 = vpack.c.b16 %v2953, %v2952
      %v2977 = vpack.c.b16 %v2955, %v2954
      %v2978 = vpack.c.b16 %v2957, %v2956
      %v2979 = vpack.c.b16 %v2959, %v2958
      %v2980 = vpack.c.b16 %v2961, %v2960
      %v2981 = vpack.c.b16 %v2963, %v2962
      %v2982 = vpack.c.b16 %v2965, %v2964
      %v2983 = vpack.c.b16 %v2967, %v2966
      %2984 = vrot.lane.b32.xlu0 %v2968, 18
      %v2985 = vpop.permute.xlu0 %2984
      %2986 = vrot.lane.b32.xlu0 %v2969, 18
      %v2987 = vpop.permute.xlu0 %2986
      %2988 = vrot.lane.b32.xlu0 %v2970, 18
      %v2989 = vpop.permute.xlu0 %2988
      %2990 = vrot.lane.b32.xlu0 %v2971, 18
      %v2991 = vpop.permute.xlu0 %2990
      %2992 = vrot.lane.b32.xlu0 %v2972, 18
      %v2993 = vpop.permute.xlu0 %2992
      %2994 = vrot.lane.b32.xlu0 %v2973, 18
      %v2995 = vpop.permute.xlu0 %2994
      %2996 = vrot.lane.b32.xlu0 %v2974, 18
      %v2997 = vpop.permute.xlu0 %2996
      %2998 = vrot.lane.b32.xlu0 %v2975, 18
      %v2999 = vpop.permute.xlu0 %2998
      %3000 = vrot.lane.b32.xlu0 %v2976, 18
      %v3001 = vpop.permute.xlu0 %3000
      %3002 = vrot.lane.b32.xlu0 %v2977, 18
      %v3003 = vpop.permute.xlu0 %3002
      %3004 = vrot.lane.b32.xlu0 %v2978, 18
      %v3005 = vpop.permute.xlu0 %3004
      %3006 = vrot.lane.b32.xlu0 %v2979, 18
      %v3007 = vpop.permute.xlu0 %3006
      %3008 = vrot.lane.b32.xlu0 %v2980, 18
      %v3009 = vpop.permute.xlu0 %3008
      %3010 = vrot.lane.b32.xlu0 %v2981, 18
      %v3011 = vpop.permute.xlu0 %3010
      %3012 = vrot.lane.b32.xlu0 %v2982, 18
      %v3013 = vpop.permute.xlu0 %3012
      %3014 = vrot.lane.b32.xlu0 %v2983, 18
      %v3015 = vpop.permute.xlu0 %3014
      %v3016 = vunpack.c.l.b16 %v1893
      %v3017 = vunpack.c.l.b16 %v1903
      %v3018 = vunpack.c.l.b16 %v1917
      %v3019 = vunpack.c.l.b16 %v1927
      %v3020 = vunpack.c.l.b16 %v1941
      %v3021 = vunpack.c.l.b16 %v1951
      %v3022 = vunpack.c.l.b16 %v1965
      %v3023 = vunpack.c.l.b16 %v1975
      %v3024 = vunpack.c.l.b16 %v1989
      %v3025 = vunpack.c.l.b16 %v1999
      %v3026 = vunpack.c.l.b16 %v2013
      %v3027 = vunpack.c.l.b16 %v2023
      %v3028 = vunpack.c.l.b16 %v2037
      %v3029 = vunpack.c.l.b16 %v2047
      %v3030 = vunpack.c.l.b16 %v2061
      %v3031 = vunpack.c.l.b16 %v2071
      %v3032 = vunpack.c.l.b16 %v2085
      %v3033 = vunpack.c.l.b16 %v2095
      %v3034 = vunpack.c.l.b16 %v2109
      %v3035 = vunpack.c.l.b16 %v2119
      %v3036 = vunpack.c.l.b16 %v2133
      %v3037 = vunpack.c.l.b16 %v2143
      %v3038 = vunpack.c.l.b16 %v2157
      %v3039 = vunpack.c.l.b16 %v2167
      %v3040 = vunpack.c.l.b16 %v2181
      %v3041 = vunpack.c.l.b16 %v2191
      %v3042 = vunpack.c.l.b16 %v2205
      %v3043 = vunpack.c.l.b16 %v2215
      %v3044 = vunpack.c.l.b16 %v2229
      %v3045 = vunpack.c.l.b16 %v2239
      %v3046 = vunpack.c.l.b16 %v2253
      %v3047 = vunpack.c.l.b16 %v2263
      %v3048 = vpack.c.b16 %v3017, %v3016
      %v3049 = vpack.c.b16 %v3019, %v3018
      %v3050 = vpack.c.b16 %v3021, %v3020
      %v3051 = vpack.c.b16 %v3023, %v3022
      %v3052 = vpack.c.b16 %v3025, %v3024
      %v3053 = vpack.c.b16 %v3027, %v3026
      %v3054 = vpack.c.b16 %v3029, %v3028
      %v3055 = vpack.c.b16 %v3031, %v3030
      %v3056 = vpack.c.b16 %v3033, %v3032
      %v3057 = vpack.c.b16 %v3035, %v3034
      %v3058 = vpack.c.b16 %v3037, %v3036
      %v3059 = vpack.c.b16 %v3039, %v3038
      %v3060 = vpack.c.b16 %v3041, %v3040
      %v3061 = vpack.c.b16 %v3043, %v3042
      %v3062 = vpack.c.b16 %v3045, %v3044
      %v3063 = vpack.c.b16 %v3047, %v3046
      %3064 = vrot.lane.b32.xlu0 %v3048, 21
      %v3065 = vpop.permute.xlu0 %3064
      %3066 = vrot.lane.b32.xlu0 %v3049, 21
      %v3067 = vpop.permute.xlu0 %3066
      %3068 = vrot.lane.b32.xlu0 %v3050, 21
      %v3069 = vpop.permute.xlu0 %3068
      %3070 = vrot.lane.b32.xlu0 %v3051, 21
      %v3071 = vpop.permute.xlu0 %3070
      %3072 = vrot.lane.b32.xlu0 %v3052, 21
      %v3073 = vpop.permute.xlu0 %3072
      %3074 = vrot.lane.b32.xlu0 %v3053, 21
      %v3075 = vpop.permute.xlu0 %3074
      %3076 = vrot.lane.b32.xlu0 %v3054, 21
      %v3077 = vpop.permute.xlu0 %3076
      %3078 = vrot.lane.b32.xlu0 %v3055, 21
      %v3079 = vpop.permute.xlu0 %3078
      %3080 = vrot.lane.b32.xlu0 %v3056, 21
      %v3081 = vpop.permute.xlu0 %3080
      %3082 = vrot.lane.b32.xlu0 %v3057, 21
      %v3083 = vpop.permute.xlu0 %3082
      %3084 = vrot.lane.b32.xlu0 %v3058, 21
      %v3085 = vpop.permute.xlu0 %3084
      %3086 = vrot.lane.b32.xlu0 %v3059, 21
      %v3087 = vpop.permute.xlu0 %3086
      %3088 = vrot.lane.b32.xlu0 %v3060, 21
      %v3089 = vpop.permute.xlu0 %3088
      %3090 = vrot.lane.b32.xlu0 %v3061, 21
      %v3091 = vpop.permute.xlu0 %3090
      %3092 = vrot.lane.b32.xlu0 %v3062, 21
      %v3093 = vpop.permute.xlu0 %3092
      %3094 = vrot.lane.b32.xlu0 %v3063, 21
      %v3095 = vpop.permute.xlu0 %3094
      %v3096 = vunpack.c.l.b16 %v2331
      %v3097 = vunpack.c.l.b16 %v2334
      %v3098 = vunpack.c.l.b16 %v2338
      %v3099 = vunpack.c.l.b16 %v2341
      %v3100 = vunpack.c.l.b16 %v2345
      %v3101 = vunpack.c.l.b16 %v2348
      %v3102 = vunpack.c.l.b16 %v2352
      %v3103 = vunpack.c.l.b16 %v2355
      %v3104 = vunpack.c.l.b16 %v2359
      %v3105 = vunpack.c.l.b16 %v2362
      %v3106 = vunpack.c.l.b16 %v2366
      %v3107 = vunpack.c.l.b16 %v2369
      %v3108 = vunpack.c.l.b16 %v2373
      %v3109 = vunpack.c.l.b16 %v2376
      %v3110 = vunpack.c.l.b16 %v2380
      %v3111 = vunpack.c.l.b16 %v2383
      %v3112 = vunpack.c.l.b16 %v2387
      %v3113 = vunpack.c.l.b16 %v2390
      %v3114 = vunpack.c.l.b16 %v2394
      %v3115 = vunpack.c.l.b16 %v2397
      %v3116 = vunpack.c.l.b16 %v2401
      %v3117 = vunpack.c.l.b16 %v2404
      %v3118 = vunpack.c.l.b16 %v2408
      %v3119 = vunpack.c.l.b16 %v2411
      %v3120 = vunpack.c.l.b16 %v2415
      %v3121 = vunpack.c.l.b16 %v2418
      %v3122 = vunpack.c.l.b16 %v2422
      %v3123 = vunpack.c.l.b16 %v2425
      %v3124 = vunpack.c.l.b16 %v2429
      %v3125 = vunpack.c.l.b16 %v2432
      %v3126 = vunpack.c.l.b16 %v2436
      %v3127 = vunpack.c.l.b16 %v2439
      %v3128 = vpack.c.b16 %v3097, %v3096
      %v3129 = vpack.c.b16 %v3099, %v3098
      %v3130 = vpack.c.b16 %v3101, %v3100
      %v3131 = vpack.c.b16 %v3103, %v3102
      %v3132 = vpack.c.b16 %v3105, %v3104
      %v3133 = vpack.c.b16 %v3107, %v3106
      %v3134 = vpack.c.b16 %v3109, %v3108
      %v3135 = vpack.c.b16 %v3111, %v3110
      %v3136 = vpack.c.b16 %v3113, %v3112
      %v3137 = vpack.c.b16 %v3115, %v3114
      %v3138 = vpack.c.b16 %v3117, %v3116
      %v3139 = vpack.c.b16 %v3119, %v3118
      %v3140 = vpack.c.b16 %v3121, %v3120
      %v3141 = vpack.c.b16 %v3123, %v3122
      %v3142 = vpack.c.b16 %v3125, %v3124
      %v3143 = vpack.c.b16 %v3127, %v3126
      %3144 = vrot.lane.b32.xlu0 %v3128, 24
      %v3145 = vpop.permute.xlu0 %3144
      %3146 = vrot.lane.b32.xlu0 %v3129, 24
      %v3147 = vpop.permute.xlu0 %3146
      %3148 = vrot.lane.b32.xlu0 %v3130, 24
      %v3149 = vpop.permute.xlu0 %3148
      %3150 = vrot.lane.b32.xlu0 %v3131, 24
      %v3151 = vpop.permute.xlu0 %3150
      %3152 = vrot.lane.b32.xlu0 %v3132, 24
      %v3153 = vpop.permute.xlu0 %3152
      %3154 = vrot.lane.b32.xlu0 %v3133, 24
      %v3155 = vpop.permute.xlu0 %3154
      %3156 = vrot.lane.b32.xlu0 %v3134, 24
      %v3157 = vpop.permute.xlu0 %3156
      %3158 = vrot.lane.b32.xlu0 %v3135, 24
      %v3159 = vpop.permute.xlu0 %3158
      %3160 = vrot.lane.b32.xlu0 %v3136, 24
      %v3161 = vpop.permute.xlu0 %3160
      %3162 = vrot.lane.b32.xlu0 %v3137, 24
      %v3163 = vpop.permute.xlu0 %3162
      %3164 = vrot.lane.b32.xlu0 %v3138, 24
      %v3165 = vpop.permute.xlu0 %3164
      %3166 = vrot.lane.b32.xlu0 %v3139, 24
      %v3167 = vpop.permute.xlu0 %3166
      %3168 = vrot.lane.b32.xlu0 %v3140, 24
      %v3169 = vpop.permute.xlu0 %3168
      %3170 = vrot.lane.b32.xlu0 %v3141, 24
      %v3171 = vpop.permute.xlu0 %3170
      %3172 = vrot.lane.b32.xlu0 %v3142, 24
      %v3173 = vpop.permute.xlu0 %3172
      %3174 = vrot.lane.b32.xlu0 %v3143, 24
      %v3175 = vpop.permute.xlu0 %3174
      %vm3176 = vcmask 23552
      %v3179 = vsel %vm3176, %v2488, %v2553
      %v3182 = vsel %vm3176, %v2489, %v2555
      %v3185 = vsel %vm3176, %v2490, %v2557
      %v3188 = vsel %vm3176, %v2491, %v2559
      %v3191 = vsel %vm3176, %v2492, %v2561
      %v3194 = vsel %vm3176, %v2493, %v2563
      %v3197 = vsel %vm3176, %v2494, %v2565
      %v3200 = vsel %vm3176, %v2495, %v2567
      %v3203 = vsel %vm3176, %v2496, %v2569
      %v3206 = vsel %vm3176, %v2497, %v2571
      %v3209 = vsel %vm3176, %v2498, %v2573
      %v3212 = vsel %vm3176, %v2499, %v2575
      %v3215 = vsel %vm3176, %v2500, %v2577
      %v3218 = vsel %vm3176, %v2501, %v2579
      %v3221 = vsel %vm3176, %v2502, %v2581
      %v3224 = vsel %vm3176, %v2503, %v2583
      %vm3225 = vcmask 48128
      %v3227 = vsel %vm3225, %v3179, %v2633
      %v3229 = vsel %vm3225, %v3182, %v2635
      %v3231 = vsel %vm3225, %v3185, %v2637
      %v3233 = vsel %vm3225, %v3188, %v2639
      %v3235 = vsel %vm3225, %v3191, %v2641
      %v3237 = vsel %vm3225, %v3194, %v2643
      %v3239 = vsel %vm3225, %v3197, %v2645
      %v3241 = vsel %vm3225, %v3200, %v2647
      %v3243 = vsel %vm3225, %v3203, %v2649
      %v3245 = vsel %vm3225, %v3206, %v2651
      %v3247 = vsel %vm3225, %v3209, %v2653
      %v3249 = vsel %vm3225, %v3212, %v2655
      %v3251 = vsel %vm3225, %v3215, %v2657
      %v3253 = vsel %vm3225, %v3218, %v2659
      %v3255 = vsel %vm3225, %v3221, %v2661
      %v3257 = vsel %vm3225, %v3224, %v2663
      %vm3258 = vcmask 72704
      %v3260 = vsel %vm3258, %v3227, %v2729
      %v3262 = vsel %vm3258, %v3229, %v2731
      %v3264 = vsel %vm3258, %v3231, %v2733
      %v3266 = vsel %vm3258, %v3233, %v2735
      %v3268 = vsel %vm3258, %v3235, %v2737
      %v3270 = vsel %vm3258, %v3237, %v2739
      %v3272 = vsel %vm3258, %v3239, %v2741
      %v3274 = vsel %vm3258, %v3241, %v2743
      %v3276 = vsel %vm3258, %v3243, %v2745
      %v3278 = vsel %vm3258, %v3245, %v2747
      %v3280 = vsel %vm3258, %v3247, %v2749
      %v3282 = vsel %vm3258, %v3249, %v2751
      %v3284 = vsel %vm3258, %v3251, %v2753
      %v3286 = vsel %vm3258, %v3253, %v2755
      %v3288 = vsel %vm3258, %v3255, %v2757
      %v3290 = vsel %vm3258, %v3257, %v2759
      %vm3291 = vcmask 97280
      %v3293 = vsel %vm3291, %v3260, %v2809
      %v3295 = vsel %vm3291, %v3262, %v2811
      %v3297 = vsel %vm3291, %v3264, %v2813
      %v3299 = vsel %vm3291, %v3266, %v2815
      %v3301 = vsel %vm3291, %v3268, %v2817
      %v3303 = vsel %vm3291, %v3270, %v2819
      %v3305 = vsel %vm3291, %v3272, %v2821
      %v3307 = vsel %vm3291, %v3274, %v2823
      %v3309 = vsel %vm3291, %v3276, %v2825
      %v3311 = vsel %vm3291, %v3278, %v2827
      %v3313 = vsel %vm3291, %v3280, %v2829
      %v3315 = vsel %vm3291, %v3282, %v2831
      %v3317 = vsel %vm3291, %v3284, %v2833
      %v3319 = vsel %vm3291, %v3286, %v2835
      %v3321 = vsel %vm3291, %v3288, %v2837
      %v3323 = vsel %vm3291, %v3290, %v2839
      %vm3324 = vcmask 121856
      %v3326 = vsel %vm3324, %v3293, %v2889
      %v3328 = vsel %vm3324, %v3295, %v2891
      %v3330 = vsel %vm3324, %v3297, %v2893
      %v3332 = vsel %vm3324, %v3299, %v2895
      %v3334 = vsel %vm3324, %v3301, %v2897
      %v3336 = vsel %vm3324, %v3303, %v2899
      %v3338 = vsel %vm3324, %v3305, %v2901
      %v3340 = vsel %vm3324, %v3307, %v2903
      %v3342 = vsel %vm3324, %v3309, %v2905
      %v3344 = vsel %vm3324, %v3311, %v2907
      %v3346 = vsel %vm3324, %v3313, %v2909
      %v3348 = vsel %vm3324, %v3315, %v2911
      %v3350 = vsel %vm3324, %v3317, %v2913
      %v3352 = vsel %vm3324, %v3319, %v2915
      %v3354 = vsel %vm3324, %v3321, %v2917
      %v3356 = vsel %vm3324, %v3323, %v2919
      %vm3357 = vcmask 146432
      %v3359 = vsel %vm3357, %v3326, %v2985
      %v3361 = vsel %vm3357, %v3328, %v2987
      %v3363 = vsel %vm3357, %v3330, %v2989
      %v3365 = vsel %vm3357, %v3332, %v2991
      %v3367 = vsel %vm3357, %v3334, %v2993
      %v3369 = vsel %vm3357, %v3336, %v2995
      %v3371 = vsel %vm3357, %v3338, %v2997
      %v3373 = vsel %vm3357, %v3340, %v2999
      %v3375 = vsel %vm3357, %v3342, %v3001
      %v3377 = vsel %vm3357, %v3344, %v3003
      %v3379 = vsel %vm3357, %v3346, %v3005
      %v3381 = vsel %vm3357, %v3348, %v3007
      %v3383 = vsel %vm3357, %v3350, %v3009
      %v3385 = vsel %vm3357, %v3352, %v3011
      %v3387 = vsel %vm3357, %v3354, %v3013
      %v3389 = vsel %vm3357, %v3356, %v3015
      %vm3390 = vcmask 171008
      %v3392 = vsel %vm3390, %v3359, %v3065
      %v3394 = vsel %vm3390, %v3361, %v3067
      %v3396 = vsel %vm3390, %v3363, %v3069
      %v3398 = vsel %vm3390, %v3365, %v3071
      %v3400 = vsel %vm3390, %v3367, %v3073
      %v3402 = vsel %vm3390, %v3369, %v3075
      %v3404 = vsel %vm3390, %v3371, %v3077
      %v3406 = vsel %vm3390, %v3373, %v3079
      %v3408 = vsel %vm3390, %v3375, %v3081
      %v3410 = vsel %vm3390, %v3377, %v3083
      %v3412 = vsel %vm3390, %v3379, %v3085
      %v3414 = vsel %vm3390, %v3381, %v3087
      %v3416 = vsel %vm3390, %v3383, %v3089
      %v3418 = vsel %vm3390, %v3385, %v3091
      %v3420 = vsel %vm3390, %v3387, %v3093
      %v3422 = vsel %vm3390, %v3389, %v3095
      %vm3423 = vcmask 195584
      %v3425 = vsel %vm3423, %v3392, %v3145
      %v3428 = vsel %vm3423, %v3394, %v3147
      %v3431 = vsel %vm3423, %v3396, %v3149
      %v3434 = vsel %vm3423, %v3398, %v3151
      %v3437 = vsel %vm3423, %v3400, %v3153
      %v3440 = vsel %vm3423, %v3402, %v3155
      %v3443 = vsel %vm3423, %v3404, %v3157
      %v3446 = vsel %vm3423, %v3406, %v3159
      %v3449 = vsel %vm3423, %v3408, %v3161
      %v3452 = vsel %vm3423, %v3410, %v3163
      %v3455 = vsel %vm3423, %v3412, %v3165
      %v3458 = vsel %vm3423, %v3414, %v3167
      %v3461 = vsel %vm3423, %v3416, %v3169
      %v3464 = vsel %vm3423, %v3418, %v3171
      %v3467 = vsel %vm3423, %v3420, %v3173
      %v3470 = vsel %vm3423, %v3422, %v3175
      %vm3472 = vcmask 220160
      %3473 = vst.msk [vmem:[#allocation4] sm:$0xff] %vm3472, %v3425
      %3474 = vst.msk [vmem:[#allocation4 + $0x8] sm:$0xff] %vm3472, %v3428
      %3475 = vst.msk [vmem:[#allocation4 + $0x10] sm:$0xff] %vm3472, %v3431
      %3476 = vst.msk [vmem:[#allocation4 + $0x18] sm:$0xff] %vm3472, %v3434
      %3477 = vst.msk [vmem:[#allocation4 + $0x20] sm:$0xff] %vm3472, %v3437
      %3478 = vst.msk [vmem:[#allocation4 + $0x28] sm:$0xff] %vm3472, %v3440
      %3479 = vst.msk [vmem:[#allocation4 + $0x30] sm:$0xff] %vm3472, %v3443
      %3480 = vst.msk [vmem:[#allocation4 + $0x38] sm:$0xff] %vm3472, %v3446
      %3481 = vst.msk [vmem:[#allocation4 + $0x40] sm:$0xff] %vm3472, %v3449
      %3482 = vst.msk [vmem:[#allocation4 + $0x48] sm:$0xff] %vm3472, %v3452
      %3483 = vst.msk [vmem:[#allocation4 + $0x50] sm:$0xff] %vm3472, %v3455
      %3484 = vst.msk [vmem:[#allocation4 + $0x58] sm:$0xff] %vm3472, %v3458
      %3485 = vst.msk [vmem:[#allocation4 + $0x60] sm:$0xff] %vm3472, %v3461
      %3486 = vst.msk [vmem:[#allocation4 + $0x68] sm:$0xff] %vm3472, %v3464
      %3487 = vst.msk [vmem:[#allocation4 + $0x70] sm:$0xff] %vm3472, %v3467
      %3488 = vst.msk [vmem:[#allocation4 + $0x78] sm:$0xff] %vm3472, %v3470
      %v3489 = vld [vmem:[#allocation4] sm:$0xff]
      %v3490 = vld [vmem:[#allocation4 + $0x8] sm:$0xff]
      %v3491 = vld [vmem:[#allocation4 + $0x10] sm:$0xff]
      %v3492 = vld [vmem:[#allocation4 + $0x18] sm:$0xff]
      %v3493 = vld [vmem:[#allocation4 + $0x20] sm:$0xff]
      %v3494 = vld [vmem:[#allocation4 + $0x28] sm:$0xff]
      %v3495 = vld [vmem:[#allocation4 + $0x30] sm:$0xff]
      %v3496 = vld [vmem:[#allocation4 + $0x38] sm:$0xff]
      %v3497 = vld [vmem:[#allocation4 + $0x40] sm:$0xff]
      %v3498 = vld [vmem:[#allocation4 + $0x48] sm:$0xff]
      %v3499 = vld [vmem:[#allocation4 + $0x50] sm:$0xff]
      %v3500 = vld [vmem:[#allocation4 + $0x58] sm:$0xff]
      %v3501 = vld [vmem:[#allocation4 + $0x60] sm:$0xff]
      %v3502 = vld [vmem:[#allocation4 + $0x68] sm:$0xff]
      %v3503 = vld [vmem:[#allocation4 + $0x70] sm:$0xff]
      %v3504 = vld [vmem:[#allocation4 + $0x78] sm:$0xff]
      %v3505 = vld [vmem:[%s1] sm:$0xf]
      %v3506 = vld [vmem:[%s1 + $0x4] sm:$0xf]
      %v3507 = vld [vmem:[%s1 + $0x8] sm:$0xf]
      %v3508 = vld [vmem:[%s1 + $0xc] sm:$0x3]
      %v3509 = vld [vmem:[%s2] sm:$0x1]
      %v3511 = vlaneseq
      %v3512 = vshrl.u32 %v3511, 7
      %v3513 = vsub.s32 0, %v3512
      %v3514 = vrot.slane %v3509, %v3513
      %v3520 = vunpack.c.l.b16 %v3505
      %v3521 = vunpack.c.l.b16 %v3506
      %v3522 = vunpack.c.l.b16 %v3507
      %v3523 = vunpack.c.l.b16 %v3508
      %v3524 = vpack.c.b16 %v3521, %v3520
      %v3525 = vpack.c.b16 %v3523, %v3522
      %v3528 = vsel %vm3472, %v3489, 0
      %v3531 = vsel %vm3472, %v3490, 0
      %v3534 = vsel %vm3472, %v3491, 0
      %v3537 = vsel %vm3472, %v3492, 0
      %v3540 = vsel %vm3472, %v3493, 0
      %v3543 = vsel %vm3472, %v3494, 0
      %v3546 = vsel %vm3472, %v3495, 0
      %v3549 = vsel %vm3472, %v3496, 0
      %v3552 = vsel %vm3472, %v3497, 0
      %v3555 = vsel %vm3472, %v3498, 0
      %v3558 = vsel %vm3472, %v3499, 0
      %v3561 = vsel %vm3472, %v3500, 0
      %v3564 = vsel %vm3472, %v3501, 0
      %v3567 = vsel %vm3472, %v3502, 0
      %v3570 = vsel %vm3472, %v3503, 0
      %v3573 = vsel %vm3472, %v3504, 0
      %vm3575 = vcmask 1044480
      %vm3576 = vcmask 1045504
      %v3577 = vsel %vm3575, 4294967295, 65535
      %v3578 = vsel %vm3576, %v3577, 0
      %v3580 = vand.u32 %v3525, %v3578
      %3582 = vmatprep.subr.bf16.mxu0 0
      %3583 = vmatpush1.bf16.msra.mxu0 %v3524
      %3584 = vmatprep.subr.bf16.mxu0 0
      %3585 = vmatpush1.bf16.msra.mxu0 %v3580
      %3586 = vmatprep.subr.bf16.mxu0 0
      %3587 = vmatpush1.bf16.msra.mxu0 0
      %3588 = vmatprep.subr.bf16.mxu0 0
      %3589 = vmatpush1.bf16.msra.mxu0 0
      %3590 = vmatprep.subr.bf16.mxu0 0
      %3591 = vmatpush1.bf16.msra.mxu0 0
      %3592 = vmatprep.subr.bf16.mxu0 0
      %3593 = vmatpush1.bf16.msra.mxu0 0
      %3594 = vmatprep.subr.bf16.mxu0 0
      %3595 = vmatpush1.bf16.msra.mxu0 0
      %3596 = vmatprep.subr.bf16.mxu0 0
      %3597 = vmatpush1.bf16.msra.mxu0 0
      %3598 = vmatprep.subr.bf16.mxu0 0
      %3599 = vmatpush1.bf16.msra.mxu0 0
      %3600 = vmatprep.subr.bf16.mxu0 0
      %3601 = vmatpush1.bf16.msra.mxu0 0
      %3602 = vmatprep.subr.bf16.mxu0 0
      %3603 = vmatpush1.bf16.msra.mxu0 0
      %3604 = vmatprep.subr.bf16.mxu0 0
      %3605 = vmatpush1.bf16.msra.mxu0 0
      %3606 = vmatprep.subr.bf16.mxu0 0
      %3607 = vmatpush1.bf16.msra.mxu0 0
      %3608 = vmatprep.subr.bf16.mxu0 0
      %3609 = vmatpush1.bf16.msra.mxu0 0
      %3610 = vmatprep.subr.bf16.mxu0 0
      %3611 = vmatpush1.bf16.msra.mxu0 0
      %3612 = vmatprep.subr.bf16.mxu0 0
      %3613 = vmatpush1.bf16.msra.mxu0 0
      %3614 = vmatprep.mubr.bf16.mxu0 0
      %3615 = vmatmul.mubr.bf16.gmra.mrb[0].mxu0 %v3528
      %v3616 = vpop.f32.mrb[0].mxu0
      %v3617 = vadd.f32 %v3514, %v3616
      %v3618 = vpop.f32.mrb[0].mxu0
      %v3619 = vpop.f32.mrb[0].mxu0
      %v3620 = vadd.f32 %v3514, %v3619
      %v3621 = vpop.f32.mrb[0].mxu0
      %3622 = vmatprep.mubr.bf16.mxu0 0
      %3623 = vmatmul.mubr.bf16.gmra.mrb[0].mxu0 %v3531
      %v3624 = vpop.f32.mrb[0].mxu0
      %v3625 = vadd.f32 %v3514, %v3624
      %v3626 = vpop.f32.mrb[0].mxu0
      %v3627 = vpop.f32.mrb[0].mxu0
      %v3628 = vadd.f32 %v3514, %v3627
      %v3629 = vpop.f32.mrb[0].mxu0
      %3630 = vmatprep.mubr.bf16.mxu0 0
      %3631 = vmatmul.mubr.bf16.gmra.mrb[0].mxu0 %v3534
      %v3632 = vpop.f32.mrb[0].mxu0
      %v3633 = vadd.f32 %v3514, %v3632
      %v3634 = vpop.f32.mrb[0].mxu0
      %v3635 = vpop.f32.mrb[0].mxu0
      %v3636 = vadd.f32 %v3514, %v3635
      %v3637 = vpop.f32.mrb[0].mxu0
      %3638 = vmatprep.mubr.bf16.mxu0 0
      %3639 = vmatmul.mubr.bf16.gmra.mrb[0].mxu0 %v3537
      %v3640 = vpop.f32.mrb[0].mxu0
      %v3641 = vadd.f32 %v3514, %v3640
      %v3642 = vpop.f32.mrb[0].mxu0
      %v3643 = vpop.f32.mrb[0].mxu0
      %v3644 = vadd.f32 %v3514, %v3643
      %v3645 = vpop.f32.mrb[0].mxu0
      %3646 = vmatprep.mubr.bf16.mxu0 0
      %3647 = vmatmul.mubr.bf16.gmra.mrb[0].mxu0 %v3540
      %v3648 = vpop.f32.mrb[0].mxu0
      %v3649 = vadd.f32 %v3514, %v3648
      %v3650 = vpop.f32.mrb[0].mxu0
      %v3651 = vpop.f32.mrb[0].mxu0
      %v3652 = vadd.f32 %v3514, %v3651
      %v3653 = vpop.f32.mrb[0].mxu0
      %3654 = vmatprep.mubr.bf16.mxu0 0
      %3655 = vmatmul.mubr.bf16.gmra.mrb[0].mxu0 %v3543
      %v3656 = vpop.f32.mrb[0].mxu0
      %v3657 = vadd.f32 %v3514, %v3656
      %v3658 = vpop.f32.mrb[0].mxu0
      %v3659 = vpop.f32.mrb[0].mxu0
      %v3660 = vadd.f32 %v3514, %v3659
      %v3661 = vpop.f32.mrb[0].mxu0
      %3662 = vmatprep.mubr.bf16.mxu0 0
      %3663 = vmatmul.mubr.bf16.gmra.mrb[0].mxu0 %v3546
      %v3664 = vpop.f32.mrb[0].mxu0
      %v3665 = vadd.f32 %v3514, %v3664
      %v3666 = vpop.f32.mrb[0].mxu0
      %v3667 = vpop.f32.mrb[0].mxu0
      %v3668 = vadd.f32 %v3514, %v3667
      %v3669 = vpop.f32.mrb[0].mxu0
      %3670 = vmatprep.mubr.bf16.mxu0 0
      %3671 = vmatmul.mubr.bf16.gmra.mrb[0].mxu0 %v3549
      %v3672 = vpop.f32.mrb[0].mxu0
      %v3673 = vadd.f32 %v3514, %v3672
      %v3674 = vpop.f32.mrb[0].mxu0
      %v3675 = vpop.f32.mrb[0].mxu0
      %v3676 = vadd.f32 %v3514, %v3675
      %v3677 = vpop.f32.mrb[0].mxu0
      %3678 = vmatprep.mubr.bf16.mxu0 0
      %3679 = vmatmul.mubr.bf16.gmra.mrb[0].mxu0 %v3552
      %v3680 = vpop.f32.mrb[0].mxu0
      %v3681 = vadd.f32 %v3514, %v3680
      %v3682 = vpop.f32.mrb[0].mxu0
      %v3683 = vpop.f32.mrb[0].mxu0
      %v3684 = vadd.f32 %v3514, %v3683
      %v3685 = vpop.f32.mrb[0].mxu0
      %3686 = vmatprep.mubr.bf16.mxu0 0
      %3687 = vmatmul.mubr.bf16.gmra.mrb[0].mxu0 %v3555
      %v3688 = vpop.f32.mrb[0].mxu0
      %v3689 = vadd.f32 %v3514, %v3688
      %v3690 = vpop.f32.mrb[0].mxu0
      %v3691 = vpop.f32.mrb[0].mxu0
      %v3692 = vadd.f32 %v3514, %v3691
      %v3693 = vpop.f32.mrb[0].mxu0
      %3694 = vmatprep.mubr.bf16.mxu0 0
      %3695 = vmatmul.mubr.bf16.gmra.mrb[0].mxu0 %v3558
      %v3696 = vpop.f32.mrb[0].mxu0
      %v3697 = vadd.f32 %v3514, %v3696
      %v3698 = vpop.f32.mrb[0].mxu0
      %v3699 = vpop.f32.mrb[0].mxu0
      %v3700 = vadd.f32 %v3514, %v3699
      %v3701 = vpop.f32.mrb[0].mxu0
      %3702 = vmatprep.mubr.bf16.mxu0 0
      %3703 = vmatmul.mubr.bf16.gmra.mrb[0].mxu0 %v3561
      %v3704 = vpop.f32.mrb[0].mxu0
      %v3705 = vadd.f32 %v3514, %v3704
      %v3706 = vpop.f32.mrb[0].mxu0
      %v3707 = vpop.f32.mrb[0].mxu0
      %v3708 = vadd.f32 %v3514, %v3707
      %v3709 = vpop.f32.mrb[0].mxu0
      %3710 = vmatprep.mubr.bf16.mxu0 0
      %3711 = vmatmul.mubr.bf16.gmra.mrb[0].mxu0 %v3564
      %v3712 = vpop.f32.mrb[0].mxu0
      %v3713 = vadd.f32 %v3514, %v3712
      %v3714 = vpop.f32.mrb[0].mxu0
      %v3715 = vpop.f32.mrb[0].mxu0
      %v3716 = vadd.f32 %v3514, %v3715
      %v3717 = vpop.f32.mrb[0].mxu0
      %3718 = vmatprep.mubr.bf16.mxu0 0
      %3719 = vmatmul.mubr.bf16.gmra.mrb[0].mxu0 %v3567
      %v3720 = vpop.f32.mrb[0].mxu0
      %v3721 = vadd.f32 %v3514, %v3720
      %v3722 = vpop.f32.mrb[0].mxu0
      %v3723 = vpop.f32.mrb[0].mxu0
      %v3724 = vadd.f32 %v3514, %v3723
      %v3725 = vpop.f32.mrb[0].mxu0
      %3726 = vmatprep.mubr.bf16.mxu0 0
      %3727 = vmatmul.mubr.bf16.gmra.mrb[0].mxu0 %v3570
      %v3728 = vpop.f32.mrb[0].mxu0
      %v3729 = vadd.f32 %v3514, %v3728
      %v3730 = vpop.f32.mrb[0].mxu0
      %v3731 = vpop.f32.mrb[0].mxu0
      %v3732 = vadd.f32 %v3514, %v3731
      %v3733 = vpop.f32.mrb[0].mxu0
      %3734 = vmatprep.mubr.bf16.mxu0 0
      %3735 = vmatmul.mubr.bf16.gmra.mrb[0].mxu0 %v3573
      %v3736 = vpop.f32.mrb[0].mxu0
      %v3737 = vadd.f32 %v3514, %v3736
      %v3738 = vpop.f32.mrb[0].mxu0
      %v3739 = vpop.f32.mrb[0].mxu0
      %v3740 = vadd.f32 %v3514, %v3739
      %v3741 = vpop.f32.mrb[0].mxu0
      %3742 = vdwg.mxu0
      %v3743 = vmax.f32 %v3617, 0.0
      %v3744 = vmax.f32 %v3620, 0.0
      %v3745 = vmax.f32 %v3625, 0.0
      %v3746 = vmax.f32 %v3628, 0.0
      %v3747 = vmax.f32 %v3633, 0.0
      %v3748 = vmax.f32 %v3636, 0.0
      %v3749 = vmax.f32 %v3641, 0.0
      %v3750 = vmax.f32 %v3644, 0.0
      %v3751 = vmax.f32 %v3649, 0.0
      %v3752 = vmax.f32 %v3652, 0.0
      %v3753 = vmax.f32 %v3657, 0.0
      %v3754 = vmax.f32 %v3660, 0.0
      %v3755 = vmax.f32 %v3665, 0.0
      %v3756 = vmax.f32 %v3668, 0.0
      %v3757 = vmax.f32 %v3673, 0.0
      %v3758 = vmax.f32 %v3676, 0.0
      %v3759 = vmax.f32 %v3681, 0.0
      %v3760 = vmax.f32 %v3684, 0.0
      %v3761 = vmax.f32 %v3689, 0.0
      %v3762 = vmax.f32 %v3692, 0.0
      %v3763 = vmax.f32 %v3697, 0.0
      %v3764 = vmax.f32 %v3700, 0.0
      %v3765 = vmax.f32 %v3705, 0.0
      %v3766 = vmax.f32 %v3708, 0.0
      %v3767 = vmax.f32 %v3713, 0.0
      %v3768 = vmax.f32 %v3716, 0.0
      %v3769 = vmax.f32 %v3721, 0.0
      %v3770 = vmax.f32 %v3724, 0.0
      %v3771 = vmax.f32 %v3729, 0.0
      %v3772 = vmax.f32 %v3732, 0.0
      %v3773 = vmax.f32 %v3737, 0.0
      %v3774 = vmax.f32 %v3740, 0.0
      %v3775 = vpack.c.bf16 %v3744, %v3743
      %v3776 = vpack.c.bf16 %v3746, %v3745
      %v3777 = vpack.c.bf16 %v3748, %v3747
      %v3778 = vpack.c.bf16 %v3750, %v3749
      %v3779 = vpack.c.bf16 %v3752, %v3751
      %v3780 = vpack.c.bf16 %v3754, %v3753
      %v3781 = vpack.c.bf16 %v3756, %v3755
      %v3782 = vpack.c.bf16 %v3758, %v3757
      %v3783 = vpack.c.bf16 %v3760, %v3759
      %v3784 = vpack.c.bf16 %v3762, %v3761
      %v3785 = vpack.c.bf16 %v3764, %v3763
      %v3786 = vpack.c.bf16 %v3766, %v3765
      %v3787 = vpack.c.bf16 %v3768, %v3767
      %v3788 = vpack.c.bf16 %v3770, %v3769
      %v3789 = vpack.c.bf16 %v3772, %v3771
      %v3790 = vpack.c.bf16 %v3774, %v3773
      %3791 = vst.msk [vmem:[%s394 + $0x8] sm:$0xff] %vm378, %v3775
      %3792 = vst.msk [vmem:[%s394 + $0x20] sm:$0xff] %vm378, %v3776
      %3793 = vst.msk [vmem:[%s394 + $0x38] sm:$0xff] %vm378, %v3777
      %3794 = vst.msk [vmem:[%s394 + $0x50] sm:$0xff] %vm378, %v3778
      %3795 = vst.msk [vmem:[%s394 + $0x68] sm:$0xff] %vm378, %v3779
      %3796 = vst.msk [vmem:[%s394 + $0x80] sm:$0xff] %vm378, %v3780
      %3797 = vst.msk [vmem:[%s394 + $0x98] sm:$0xff] %vm378, %v3781
      %3798 = vst.msk [vmem:[%s394 + $0xb0] sm:$0xff] %vm378, %v3782
      %3799 = vst.msk [vmem:[%s394 + $0xc8] sm:$0xff] %vm378, %v3783
      %3800 = vst.msk [vmem:[%s394 + $0xe0] sm:$0xff] %vm378, %v3784
      %3801 = vst.msk [vmem:[%s394 + $0xf8] sm:$0xff] %vm378, %v3785
      %3802 = vst.msk [vmem:[%s394 + $0x110] sm:$0xff] %vm378, %v3786
      %3803 = vst.msk [vmem:[%s394 + $0x128] sm:$0xff] %vm378, %v3787
      %3804 = vst.msk [vmem:[%s394 + $0x140] sm:$0xff] %vm378, %v3788
      %3805 = vst.msk [vmem:[%s394 + $0x158] sm:$0xff] %vm378, %v3789
      %3806 = vst.msk [vmem:[%s394 + $0x170] sm:$0xff] %vm378, %v3790
      // Predicated region
      $region57: #{jcnn_forward.1} parent=55 // pred_check
        %p3807 = pneg %p370
      $region58: #{jcnn_forward.1} parent=55 // pred_check_branch
        %3809 = sbr.rel (%p3807) target = $region60
      $region59: #{jcnn_forward.1} parent=55 // pred_region
        %3810 = vst.msk [vmem:[%s394 + $0x8] sm:$0xff] %vm378, 0
        %3811 = vst.msk [vmem:[%s394 + $0x20] sm:$0xff] %vm378, 0
        %3812 = vst.msk [vmem:[%s394 + $0x38] sm:$0xff] %vm378, 0
        %3813 = vst.msk [vmem:[%s394 + $0x50] sm:$0xff] %vm378, 0
      $region60: #{jcnn_forward.1} parent=55 // pred_fallthru
        _
      // Predicated region
      $region61: #{jcnn_forward.1} parent=55 // pred_check
        %p3814 = pneg %p371
      $region62: #{jcnn_forward.1} parent=55 // pred_check_branch
        %3816 = sbr.rel (%p3814) target = $region64
      $region63: #{jcnn_forward.1} parent=55 // pred_region
        %s3817 = scalar_lea.vmem [#allocation2], 312
        %3818 = vst.msk [vmem:[%s3817 + $0x8] sm:$0xff] %vm378, 0
        %3819 = vst.msk [vmem:[%s3817 + $0x20] sm:$0xff] %vm378, 0
        %3820 = vst.msk [vmem:[%s3817 + $0x38] sm:$0xff] %vm378, 0
        %3821 = vst.msk [vmem:[%s3817 + $0x50] sm:$0xff] %vm378, 0
      $region64: #{jcnn_forward.1} parent=55 // pred_fallthru
        _
      %v3822 = vld [vmem:[#allocation2] sm:$0x80]
      %v3823 = vld [vmem:[#allocation2 + $0x8] sm:$0xff]
      %v3824 = vld [vmem:[#allocation2 + $0x18] sm:$0x80]
      %v3825 = vld [vmem:[#allocation2 + $0x20] sm:$0xff]
      %v3826 = vld [vmem:[#allocation2 + $0x30] sm:$0x80]
      %v3827 = vld [vmem:[#allocation2 + $0x38] sm:$0xff]
      %v3828 = vld [vmem:[#allocation2 + $0x48] sm:$0x80]
      %v3829 = vld [vmem:[#allocation2 + $0x50] sm:$0xff]
      %v3830 = vld [vmem:[#allocation2 + $0x60] sm:$0x80]
      %v3831 = vld [vmem:[#allocation2 + $0x68] sm:$0xff]
      %v3832 = vld [vmem:[#allocation2 + $0x78] sm:$0x80]
      %v3833 = vld [vmem:[#allocation2 + $0x80] sm:$0xff]
      %v3834 = vld [vmem:[#allocation2 + $0x90] sm:$0x80]
      %v3835 = vld [vmem:[#allocation2 + $0x98] sm:$0xff]
      %v3836 = vld [vmem:[#allocation2 + $0xa8] sm:$0x80]
      %v3837 = vld [vmem:[#allocation2 + $0xb0] sm:$0xff]
      %v3838 = vld [vmem:[#allocation2 + $0xc0] sm:$0x80]
      %v3839 = vld [vmem:[#allocation2 + $0xc8] sm:$0xff]
      %v3840 = vld [vmem:[#allocation2 + $0xd8] sm:$0x80]
      %v3841 = vld [vmem:[#allocation2 + $0xe0] sm:$0xff]
      %v3842 = vld [vmem:[#allocation2 + $0xf0] sm:$0x80]
      %v3843 = vld [vmem:[#allocation2 + $0xf8] sm:$0xff]
      %v3844 = vld [vmem:[#allocation2 + $0x108] sm:$0x80]
      %v3845 = vld [vmem:[#allocation2 + $0x110] sm:$0xff]
      %v3846 = vld [vmem:[#allocation2 + $0x120] sm:$0x80]
      %v3847 = vld [vmem:[#allocation2 + $0x128] sm:$0xff]
      %v3848 = vld [vmem:[#allocation2 + $0x138] sm:$0x80]
      %v3849 = vld [vmem:[#allocation2 + $0x140] sm:$0xff]
      %v3850 = vld [vmem:[#allocation2 + $0x150] sm:$0x80]
      %v3851 = vld [vmem:[#allocation2 + $0x158] sm:$0xff]
      %v3852 = vld [vmem:[#allocation2 + $0x168] sm:$0x80]
      %v3853 = vld [vmem:[#allocation2 + $0x170] sm:$0xff]
      %v3855 = vshrl.u32 %v3822, 16
      %v3857 = vrot.slane %v3855, 7
      %v3859 = vshrl.u32 %v3823, 16
      %v3861 = vrot.slane %v3859, 7
      %v3862 = vshll.u32 %v3823, 16
      %v3864 = vor.u32 %v3861, %v3862
      %v3865 = vsel %vm381, %v3857, %v3864
      %v3867 = vshrl.u32 %v3824, 16
      %v3869 = vrot.slane %v3867, 7
      %v3871 = vshrl.u32 %v3825, 16
      %v3873 = vrot.slane %v3871, 7
      %v3874 = vshll.u32 %v3825, 16
      %v3876 = vor.u32 %v3873, %v3874
      %v3877 = vsel %vm381, %v3869, %v3876
      %v3879 = vshrl.u32 %v3826, 16
      %v3881 = vrot.slane %v3879, 7
      %v3883 = vshrl.u32 %v3827, 16
      %v3885 = vrot.slane %v3883, 7
      %v3886 = vshll.u32 %v3827, 16
      %v3888 = vor.u32 %v3885, %v3886
      %v3889 = vsel %vm381, %v3881, %v3888
      %v3891 = vshrl.u32 %v3828, 16
      %v3893 = vrot.slane %v3891, 7
      %v3895 = vshrl.u32 %v3829, 16
      %v3897 = vrot.slane %v3895, 7
      %v3898 = vshll.u32 %v3829, 16
      %v3900 = vor.u32 %v3897, %v3898
      %v3901 = vsel %vm381, %v3893, %v3900
      %v3903 = vshrl.u32 %v3830, 16
      %v3905 = vrot.slane %v3903, 7
      %v3907 = vshrl.u32 %v3831, 16
      %v3909 = vrot.slane %v3907, 7
      %v3910 = vshll.u32 %v3831, 16
      %v3912 = vor.u32 %v3909, %v3910
      %v3913 = vsel %vm381, %v3905, %v3912
      %v3915 = vshrl.u32 %v3832, 16
      %v3917 = vrot.slane %v3915, 7
      %v3919 = vshrl.u32 %v3833, 16
      %v3921 = vrot.slane %v3919, 7
      %v3922 = vshll.u32 %v3833, 16
      %v3924 = vor.u32 %v3921, %v3922
      %v3925 = vsel %vm381, %v3917, %v3924
      %v3927 = vshrl.u32 %v3834, 16
      %v3929 = vrot.slane %v3927, 7
      %v3931 = vshrl.u32 %v3835, 16
      %v3933 = vrot.slane %v3931, 7
      %v3934 = vshll.u32 %v3835, 16
      %v3936 = vor.u32 %v3933, %v3934
      %v3937 = vsel %vm381, %v3929, %v3936
      %v3939 = vshrl.u32 %v3836, 16
      %v3941 = vrot.slane %v3939, 7
      %v3943 = vshrl.u32 %v3837, 16
      %v3945 = vrot.slane %v3943, 7
      %v3946 = vshll.u32 %v3837, 16
      %v3948 = vor.u32 %v3945, %v3946
      %v3949 = vsel %vm381, %v3941, %v3948
      %v3951 = vshrl.u32 %v3838, 16
      %v3953 = vrot.slane %v3951, 7
      %v3955 = vshrl.u32 %v3839, 16
      %v3957 = vrot.slane %v3955, 7
      %v3958 = vshll.u32 %v3839, 16
      %v3960 = vor.u32 %v3957, %v3958
      %v3961 = vsel %vm381, %v3953, %v3960
      %v3963 = vshrl.u32 %v3840, 16
      %v3965 = vrot.slane %v3963, 7
      %v3967 = vshrl.u32 %v3841, 16
      %v3969 = vrot.slane %v3967, 7
      %v3970 = vshll.u32 %v3841, 16
      %v3972 = vor.u32 %v3969, %v3970
      %v3973 = vsel %vm381, %v3965, %v3972
      %v3975 = vshrl.u32 %v3842, 16
      %v3977 = vrot.slane %v3975, 7
      %v3979 = vshrl.u32 %v3843, 16
      %v3981 = vrot.slane %v3979, 7
      %v3982 = vshll.u32 %v3843, 16
      %v3984 = vor.u32 %v3981, %v3982
      %v3985 = vsel %vm381, %v3977, %v3984
      %v3987 = vshrl.u32 %v3844, 16
      %v3989 = vrot.slane %v3987, 7
      %v3991 = vshrl.u32 %v3845, 16
      %v3993 = vrot.slane %v3991, 7
      %v3994 = vshll.u32 %v3845, 16
      %v3996 = vor.u32 %v3993, %v3994
      %v3997 = vsel %vm381, %v3989, %v3996
      %v3999 = vshrl.u32 %v3846, 16
      %v4001 = vrot.slane %v3999, 7
      %v4003 = vshrl.u32 %v3847, 16
      %v4005 = vrot.slane %v4003, 7
      %v4006 = vshll.u32 %v3847, 16
      %v4008 = vor.u32 %v4005, %v4006
      %v4009 = vsel %vm381, %v4001, %v4008
      %v4011 = vshrl.u32 %v3848, 16
      %v4013 = vrot.slane %v4011, 7
      %v4015 = vshrl.u32 %v3849, 16
      %v4017 = vrot.slane %v4015, 7
      %v4018 = vshll.u32 %v3849, 16
      %v4020 = vor.u32 %v4017, %v4018
      %v4021 = vsel %vm381, %v4013, %v4020
      %v4023 = vshrl.u32 %v3850, 16
      %v4025 = vrot.slane %v4023, 7
      %v4027 = vshrl.u32 %v3851, 16
      %v4029 = vrot.slane %v4027, 7
      %v4030 = vshll.u32 %v3851, 16
      %v4032 = vor.u32 %v4029, %v4030
      %v4033 = vsel %vm381, %v4025, %v4032
      %v4035 = vshrl.u32 %v3852, 16
      %v4037 = vrot.slane %v4035, 7
      %v4039 = vshrl.u32 %v3853, 16
      %v4041 = vrot.slane %v4039, 7
      %v4042 = vshll.u32 %v3853, 16
      %v4044 = vor.u32 %v4041, %v4042
      %v4045 = vsel %vm381, %v4037, %v4044
      %v4046 = vld [vmem:[#allocation2 + $0x10] sm:$0x1]
      %v4047 = vld [vmem:[#allocation2 + $0x28] sm:$0x1]
      %v4048 = vld [vmem:[#allocation2 + $0x40] sm:$0x1]
      %v4049 = vld [vmem:[#allocation2 + $0x58] sm:$0x1]
      %v4050 = vld [vmem:[#allocation2 + $0x70] sm:$0x1]
      %v4051 = vld [vmem:[#allocation2 + $0x88] sm:$0x1]
      %v4052 = vld [vmem:[#allocation2 + $0xa0] sm:$0x1]
      %v4053 = vld [vmem:[#allocation2 + $0xb8] sm:$0x1]
      %v4054 = vld [vmem:[#allocation2 + $0xd0] sm:$0x1]
      %v4055 = vld [vmem:[#allocation2 + $0xe8] sm:$0x1]
      %v4056 = vld [vmem:[#allocation2 + $0x100] sm:$0x1]
      %v4057 = vld [vmem:[#allocation2 + $0x118] sm:$0x1]
      %v4058 = vld [vmem:[#allocation2 + $0x130] sm:$0x1]
      %v4059 = vld [vmem:[#allocation2 + $0x148] sm:$0x1]
      %v4060 = vld [vmem:[#allocation2 + $0x160] sm:$0x1]
      %v4061 = vld [vmem:[#allocation2 + $0x178] sm:$0x1]
      %vm4062 = vsmask.f32 7424
      %v4063 = vrot.slane %v3862, 1
      %v4064 = vor.u32 %v3859, %v4063
      %v4066 = vshll.u32 %v4046, 16
      %v4068 = vrot.slane %v4066, 1
      %v4069 = vsel %vm4062, %v4064, %v4068
      %v4070 = vrot.slane %v3874, 1
      %v4071 = vor.u32 %v3871, %v4070
      %v4073 = vshll.u32 %v4047, 16
      %v4075 = vrot.slane %v4073, 1
      %v4076 = vsel %vm4062, %v4071, %v4075
      %v4077 = vrot.slane %v3886, 1
      %v4078 = vor.u32 %v3883, %v4077
      %v4080 = vshll.u32 %v4048, 16
      %v4082 = vrot.slane %v4080, 1
      %v4083 = vsel %vm4062, %v4078, %v4082
      %v4084 = vrot.slane %v3898, 1
      %v4085 = vor.u32 %v3895, %v4084
      %v4087 = vshll.u32 %v4049, 16
      %v4089 = vrot.slane %v4087, 1
      %v4090 = vsel %vm4062, %v4085, %v4089
      %v4091 = vrot.slane %v3910, 1
      %v4092 = vor.u32 %v3907, %v4091
      %v4094 = vshll.u32 %v4050, 16
      %v4096 = vrot.slane %v4094, 1
      %v4097 = vsel %vm4062, %v4092, %v4096
      %v4098 = vrot.slane %v3922, 1
      %v4099 = vor.u32 %v3919, %v4098
      %v4101 = vshll.u32 %v4051, 16
      %v4103 = vrot.slane %v4101, 1
      %v4104 = vsel %vm4062, %v4099, %v4103
      %v4105 = vrot.slane %v3934, 1
      %v4106 = vor.u32 %v3931, %v4105
      %v4108 = vshll.u32 %v4052, 16
      %v4110 = vrot.slane %v4108, 1
      %v4111 = vsel %vm4062, %v4106, %v4110
      %v4112 = vrot.slane %v3946, 1
      %v4113 = vor.u32 %v3943, %v4112
      %v4115 = vshll.u32 %v4053, 16
      %v4117 = vrot.slane %v4115, 1
      %v4118 = vsel %vm4062, %v4113, %v4117
      %v4119 = vrot.slane %v3958, 1
      %v4120 = vor.u32 %v3955, %v4119
      %v4122 = vshll.u32 %v4054, 16
      %v4124 = vrot.slane %v4122, 1
      %v4125 = vsel %vm4062, %v4120, %v4124
      %v4126 = vrot.slane %v3970, 1
      %v4127 = vor.u32 %v3967, %v4126
      %v4129 = vshll.u32 %v4055, 16
      %v4131 = vrot.slane %v4129, 1
      %v4132 = vsel %vm4062, %v4127, %v4131
      %v4133 = vrot.slane %v3982, 1
      %v4134 = vor.u32 %v3979, %v4133
      %v4136 = vshll.u32 %v4056, 16
      %v4138 = vrot.slane %v4136, 1
      %v4139 = vsel %vm4062, %v4134, %v4138
      %v4140 = vrot.slane %v3994, 1
      %v4141 = vor.u32 %v3991, %v4140
      %v4143 = vshll.u32 %v4057, 16
      %v4145 = vrot.slane %v4143, 1
      %v4146 = vsel %vm4062, %v4141, %v4145
      %v4147 = vrot.slane %v4006, 1
      %v4148 = vor.u32 %v4003, %v4147
      %v4150 = vshll.u32 %v4058, 16
      %v4152 = vrot.slane %v4150, 1
      %v4153 = vsel %vm4062, %v4148, %v4152
      %v4154 = vrot.slane %v4018, 1
      %v4155 = vor.u32 %v4015, %v4154
      %v4157 = vshll.u32 %v4059, 16
      %v4159 = vrot.slane %v4157, 1
      %v4160 = vsel %vm4062, %v4155, %v4159
      %v4161 = vrot.slane %v4030, 1
      %v4162 = vor.u32 %v4027, %v4161
      %v4164 = vshll.u32 %v4060, 16
      %v4166 = vrot.slane %v4164, 1
      %v4167 = vsel %vm4062, %v4162, %v4166
      %v4168 = vrot.slane %v4042, 1
      %v4169 = vor.u32 %v4039, %v4168
      %v4171 = vshll.u32 %v4061, 16
      %v4173 = vrot.slane %v4171, 1
      %v4174 = vsel %vm4062, %v4169, %v4173
      %v4175 = vld [vmem:[%s394] sm:$0x80]
      %v4176 = vld [vmem:[%s394 + $0x8] sm:$0xff]
      %v4177 = vld [vmem:[%s394 + $0x18] sm:$0x80]
      %v4178 = vld [vmem:[%s394 + $0x20] sm:$0xff]
      %v4179 = vld [vmem:[%s394 + $0x30] sm:$0x80]
      %v4180 = vld [vmem:[%s394 + $0x38] sm:$0xff]
      %v4181 = vld [vmem:[%s394 + $0x48] sm:$0x80]
      %v4182 = vld [vmem:[%s394 + $0x50] sm:$0xff]
      %v4183 = vld [vmem:[%s394 + $0x60] sm:$0x80]
      %v4184 = vld [vmem:[%s394 + $0x68] sm:$0xff]
      %v4185 = vld [vmem:[%s394 + $0x78] sm:$0x80]
      %v4186 = vld [vmem:[%s394 + $0x80] sm:$0xff]
      %v4187 = vld [vmem:[%s394 + $0x90] sm:$0x80]
      %v4188 = vld [vmem:[%s394 + $0x98] sm:$0xff]
      %v4189 = vld [vmem:[%s394 + $0xa8] sm:$0x80]
      %v4190 = vld [vmem:[%s394 + $0xb0] sm:$0xff]
      %v4191 = vld [vmem:[%s394 + $0xc0] sm:$0x80]
      %v4192 = vld [vmem:[%s394 + $0xc8] sm:$0xff]
      %v4193 = vld [vmem:[%s394 + $0xd8] sm:$0x80]
      %v4194 = vld [vmem:[%s394 + $0xe0] sm:$0xff]
      %v4195 = vld [vmem:[%s394 + $0xf0] sm:$0x80]
      %v4196 = vld [vmem:[%s394 + $0xf8] sm:$0xff]
      %v4197 = vld [vmem:[%s394 + $0x108] sm:$0x80]
      %v4198 = vld [vmem:[%s394 + $0x110] sm:$0xff]
      %v4199 = vld [vmem:[%s394 + $0x120] sm:$0x80]
      %v4200 = vld [vmem:[%s394 + $0x128] sm:$0xff]
      %v4201 = vld [vmem:[%s394 + $0x138] sm:$0x80]
      %v4202 = vld [vmem:[%s394 + $0x140] sm:$0xff]
      %v4203 = vld [vmem:[%s394 + $0x150] sm:$0x80]
      %v4204 = vld [vmem:[%s394 + $0x158] sm:$0xff]
      %v4205 = vld [vmem:[%s394 + $0x168] sm:$0x80]
      %v4206 = vld [vmem:[%s394 + $0x170] sm:$0xff]
      %v4208 = vshrl.u32 %v4175, 16
      %v4210 = vrot.slane %v4208, 7
      %v4212 = vshrl.u32 %v4176, 16
      %v4214 = vrot.slane %v4212, 7
      %v4215 = vshll.u32 %v4176, 16
      %v4217 = vor.u32 %v4214, %v4215
      %v4218 = vsel %vm381, %v4210, %v4217
      %v4220 = vshrl.u32 %v4177, 16
      %v4222 = vrot.slane %v4220, 7
      %v4224 = vshrl.u32 %v4178, 16
      %v4226 = vrot.slane %v4224, 7
      %v4227 = vshll.u32 %v4178, 16
      %v4229 = vor.u32 %v4226, %v4227
      %v4230 = vsel %vm381, %v4222, %v4229
      %v4232 = vshrl.u32 %v4179, 16
      %v4234 = vrot.slane %v4232, 7
      %v4236 = vshrl.u32 %v4180, 16
      %v4238 = vrot.slane %v4236, 7
      %v4239 = vshll.u32 %v4180, 16
      %v4241 = vor.u32 %v4238, %v4239
      %v4242 = vsel %vm381, %v4234, %v4241
      %v4244 = vshrl.u32 %v4181, 16
      %v4246 = vrot.slane %v4244, 7
      %v4248 = vshrl.u32 %v4182, 16
      %v4250 = vrot.slane %v4248, 7
      %v4251 = vshll.u32 %v4182, 16
      %v4253 = vor.u32 %v4250, %v4251
      %v4254 = vsel %vm381, %v4246, %v4253
      %v4256 = vshrl.u32 %v4183, 16
      %v4258 = vrot.slane %v4256, 7
      %v4260 = vshrl.u32 %v4184, 16
      %v4262 = vrot.slane %v4260, 7
      %v4263 = vshll.u32 %v4184, 16
      %v4265 = vor.u32 %v4262, %v4263
      %v4266 = vsel %vm381, %v4258, %v4265
      %v4268 = vshrl.u32 %v4185, 16
      %v4270 = vrot.slane %v4268, 7
      %v4272 = vshrl.u32 %v4186, 16
      %v4274 = vrot.slane %v4272, 7
      %v4275 = vshll.u32 %v4186, 16
      %v4277 = vor.u32 %v4274, %v4275
      %v4278 = vsel %vm381, %v4270, %v4277
      %v4280 = vshrl.u32 %v4187, 16
      %v4282 = vrot.slane %v4280, 7
      %v4284 = vshrl.u32 %v4188, 16
      %v4286 = vrot.slane %v4284, 7
      %v4287 = vshll.u32 %v4188, 16
      %v4289 = vor.u32 %v4286, %v4287
      %v4290 = vsel %vm381, %v4282, %v4289
      %v4292 = vshrl.u32 %v4189, 16
      %v4294 = vrot.slane %v4292, 7
      %v4296 = vshrl.u32 %v4190, 16
      %v4298 = vrot.slane %v4296, 7
      %v4299 = vshll.u32 %v4190, 16
      %v4301 = vor.u32 %v4298, %v4299
      %v4302 = vsel %vm381, %v4294, %v4301
      %v4304 = vshrl.u32 %v4191, 16
      %v4306 = vrot.slane %v4304, 7
      %v4308 = vshrl.u32 %v4192, 16
      %v4310 = vrot.slane %v4308, 7
      %v4311 = vshll.u32 %v4192, 16
      %v4313 = vor.u32 %v4310, %v4311
      %v4314 = vsel %vm381, %v4306, %v4313
      %v4316 = vshrl.u32 %v4193, 16
      %v4318 = vrot.slane %v4316, 7
      %v4320 = vshrl.u32 %v4194, 16
      %v4322 = vrot.slane %v4320, 7
      %v4323 = vshll.u32 %v4194, 16
      %v4325 = vor.u32 %v4322, %v4323
      %v4326 = vsel %vm381, %v4318, %v4325
      %v4328 = vshrl.u32 %v4195, 16
      %v4330 = vrot.slane %v4328, 7
      %v4332 = vshrl.u32 %v4196, 16
      %v4334 = vrot.slane %v4332, 7
      %v4335 = vshll.u32 %v4196, 16
      %v4337 = vor.u32 %v4334, %v4335
      %v4338 = vsel %vm381, %v4330, %v4337
      %v4340 = vshrl.u32 %v4197, 16
      %v4342 = vrot.slane %v4340, 7
      %v4344 = vshrl.u32 %v4198, 16
      %v4346 = vrot.slane %v4344, 7
      %v4347 = vshll.u32 %v4198, 16
      %v4349 = vor.u32 %v4346, %v4347
      %v4350 = vsel %vm381, %v4342, %v4349
      %v4352 = vshrl.u32 %v4199, 16
      %v4354 = vrot.slane %v4352, 7
      %v4356 = vshrl.u32 %v4200, 16
      %v4358 = vrot.slane %v4356, 7
      %v4359 = vshll.u32 %v4200, 16
      %v4361 = vor.u32 %v4358, %v4359
      %v4362 = vsel %vm381, %v4354, %v4361
      %v4364 = vshrl.u32 %v4201, 16
      %v4366 = vrot.slane %v4364, 7
      %v4368 = vshrl.u32 %v4202, 16
      %v4370 = vrot.slane %v4368, 7
      %v4371 = vshll.u32 %v4202, 16
      %v4373 = vor.u32 %v4370, %v4371
      %v4374 = vsel %vm381, %v4366, %v4373
      %v4376 = vshrl.u32 %v4203, 16
      %v4378 = vrot.slane %v4376, 7
      %v4380 = vshrl.u32 %v4204, 16
      %v4382 = vrot.slane %v4380, 7
      %v4383 = vshll.u32 %v4204, 16
      %v4385 = vor.u32 %v4382, %v4383
      %v4386 = vsel %vm381, %v4378, %v4385
      %v4388 = vshrl.u32 %v4205, 16
      %v4390 = vrot.slane %v4388, 7
      %v4392 = vshrl.u32 %v4206, 16
      %v4394 = vrot.slane %v4392, 7
      %v4395 = vshll.u32 %v4206, 16
      %v4397 = vor.u32 %v4394, %v4395
      %v4398 = vsel %vm381, %v4390, %v4397
      %v4399 = vld [vmem:[%s394 + $0x10] sm:$0x1]
      %v4400 = vld [vmem:[%s394 + $0x28] sm:$0x1]
      %v4401 = vld [vmem:[%s394 + $0x40] sm:$0x1]
      %v4402 = vld [vmem:[%s394 + $0x58] sm:$0x1]
      %v4403 = vld [vmem:[%s394 + $0x70] sm:$0x1]
      %v4404 = vld [vmem:[%s394 + $0x88] sm:$0x1]
      %v4405 = vld [vmem:[%s394 + $0xa0] sm:$0x1]
      %v4406 = vld [vmem:[%s394 + $0xb8] sm:$0x1]
      %v4407 = vld [vmem:[%s394 + $0xd0] sm:$0x1]
      %v4408 = vld [vmem:[%s394 + $0xe8] sm:$0x1]
      %v4409 = vld [vmem:[%s394 + $0x100] sm:$0x1]
      %v4410 = vld [vmem:[%s394 + $0x118] sm:$0x1]
      %v4411 = vld [vmem:[%s394 + $0x130] sm:$0x1]
      %v4412 = vld [vmem:[%s394 + $0x148] sm:$0x1]
      %v4413 = vld [vmem:[%s394 + $0x160] sm:$0x1]
      %v4414 = vld [vmem:[%s394 + $0x178] sm:$0x1]
      %v4415 = vrot.slane %v4215, 1
      %v4416 = vor.u32 %v4212, %v4415
      %v4418 = vshll.u32 %v4399, 16
      %v4420 = vrot.slane %v4418, 1
      %v4421 = vsel %vm4062, %v4416, %v4420
      %v4422 = vrot.slane %v4227, 1
      %v4423 = vor.u32 %v4224, %v4422
      %v4425 = vshll.u32 %v4400, 16
      %v4427 = vrot.slane %v4425, 1
      %v4428 = vsel %vm4062, %v4423, %v4427
      %v4429 = vrot.slane %v4239, 1
      %v4430 = vor.u32 %v4236, %v4429
      %v4432 = vshll.u32 %v4401, 16
      %v4434 = vrot.slane %v4432, 1
      %v4435 = vsel %vm4062, %v4430, %v4434
      %v4436 = vrot.slane %v4251, 1
      %v4437 = vor.u32 %v4248, %v4436
      %v4439 = vshll.u32 %v4402, 16
      %v4441 = vrot.slane %v4439, 1
      %v4442 = vsel %vm4062, %v4437, %v4441
      %v4443 = vrot.slane %v4263, 1
      %v4444 = vor.u32 %v4260, %v4443
      %v4446 = vshll.u32 %v4403, 16
      %v4448 = vrot.slane %v4446, 1
      %v4449 = vsel %vm4062, %v4444, %v4448
      %v4450 = vrot.slane %v4275, 1
      %v4451 = vor.u32 %v4272, %v4450
      %v4453 = vshll.u32 %v4404, 16
      %v4455 = vrot.slane %v4453, 1
      %v4456 = vsel %vm4062, %v4451, %v4455
      %v4457 = vrot.slane %v4287, 1
      %v4458 = vor.u32 %v4284, %v4457
      %v4460 = vshll.u32 %v4405, 16
      %v4462 = vrot.slane %v4460, 1
      %v4463 = vsel %vm4062, %v4458, %v4462
      %v4464 = vrot.slane %v4299, 1
      %v4465 = vor.u32 %v4296, %v4464
      %v4467 = vshll.u32 %v4406, 16
      %v4469 = vrot.slane %v4467, 1
      %v4470 = vsel %vm4062, %v4465, %v4469
      %v4471 = vrot.slane %v4311, 1
      %v4472 = vor.u32 %v4308, %v4471
      %v4474 = vshll.u32 %v4407, 16
      %v4476 = vrot.slane %v4474, 1
      %v4477 = vsel %vm4062, %v4472, %v4476
      %v4478 = vrot.slane %v4323, 1
      %v4479 = vor.u32 %v4320, %v4478
      %v4481 = vshll.u32 %v4408, 16
      %v4483 = vrot.slane %v4481, 1
      %v4484 = vsel %vm4062, %v4479, %v4483
      %v4485 = vrot.slane %v4335, 1
      %v4486 = vor.u32 %v4332, %v4485
      %v4488 = vshll.u32 %v4409, 16
      %v4490 = vrot.slane %v4488, 1
      %v4491 = vsel %vm4062, %v4486, %v4490
      %v4492 = vrot.slane %v4347, 1
      %v4493 = vor.u32 %v4344, %v4492
      %v4495 = vshll.u32 %v4410, 16
      %v4497 = vrot.slane %v4495, 1
      %v4498 = vsel %vm4062, %v4493, %v4497
      %v4499 = vrot.slane %v4359, 1
      %v4500 = vor.u32 %v4356, %v4499
      %v4502 = vshll.u32 %v4411, 16
      %v4504 = vrot.slane %v4502, 1
      %v4505 = vsel %vm4062, %v4500, %v4504
      %v4506 = vrot.slane %v4371, 1
      %v4507 = vor.u32 %v4368, %v4506
      %v4509 = vshll.u32 %v4412, 16
      %v4511 = vrot.slane %v4509, 1
      %v4512 = vsel %vm4062, %v4507, %v4511
      %v4513 = vrot.slane %v4383, 1
      %v4514 = vor.u32 %v4380, %v4513
      %v4516 = vshll.u32 %v4413, 16
      %v4518 = vrot.slane %v4516, 1
      %v4519 = vsel %vm4062, %v4514, %v4518
      %v4520 = vrot.slane %v4395, 1
      %v4521 = vor.u32 %v4392, %v4520
      %v4523 = vshll.u32 %v4414, 16
      %v4525 = vrot.slane %v4523, 1
      %v4526 = vsel %vm4062, %v4521, %v4525
      %s4527 = scalar_lea.vmem [#allocation2], 48
      %v4528 = vld [vmem:[%s4527] sm:$0x80]
      %v4529 = vld [vmem:[%s4527 + $0x8] sm:$0xff]
      %v4530 = vld [vmem:[%s4527 + $0x18] sm:$0x80]
      %v4531 = vld [vmem:[%s4527 + $0x20] sm:$0xff]
      %v4532 = vld [vmem:[%s4527 + $0x30] sm:$0x80]
      %v4533 = vld [vmem:[%s4527 + $0x38] sm:$0xff]
      %v4534 = vld [vmem:[%s4527 + $0x48] sm:$0x80]
      %v4535 = vld [vmem:[%s4527 + $0x50] sm:$0xff]
      %v4536 = vld [vmem:[%s4527 + $0x60] sm:$0x80]
      %v4537 = vld [vmem:[%s4527 + $0x68] sm:$0xff]
      %v4538 = vld [vmem:[%s4527 + $0x78] sm:$0x80]
      %v4539 = vld [vmem:[%s4527 + $0x80] sm:$0xff]
      %v4540 = vld [vmem:[%s4527 + $0x90] sm:$0x80]
      %v4541 = vld [vmem:[%s4527 + $0x98] sm:$0xff]
      %v4542 = vld [vmem:[%s4527 + $0xa8] sm:$0x80]
      %v4543 = vld [vmem:[%s4527 + $0xb0] sm:$0xff]
      %v4544 = vld [vmem:[%s4527 + $0xc0] sm:$0x80]
      %v4545 = vld [vmem:[%s4527 + $0xc8] sm:$0xff]
      %v4546 = vld [vmem:[%s4527 + $0xd8] sm:$0x80]
      %v4547 = vld [vmem:[%s4527 + $0xe0] sm:$0xff]
      %v4548 = vld [vmem:[%s4527 + $0xf0] sm:$0x80]
      %v4549 = vld [vmem:[%s4527 + $0xf8] sm:$0xff]
      %v4550 = vld [vmem:[%s4527 + $0x108] sm:$0x80]
      %v4551 = vld [vmem:[%s4527 + $0x110] sm:$0xff]
      %v4552 = vld [vmem:[%s4527 + $0x120] sm:$0x80]
      %v4553 = vld [vmem:[%s4527 + $0x128] sm:$0xff]
      %v4554 = vld [vmem:[%s4527 + $0x138] sm:$0x80]
      %v4555 = vld [vmem:[%s4527 + $0x140] sm:$0xff]
      %v4556 = vld [vmem:[%s4527 + $0x150] sm:$0x80]
      %v4557 = vld [vmem:[%s4527 + $0x158] sm:$0xff]
      %v4558 = vld [vmem:[%s4527 + $0x168] sm:$0x80]
      %v4559 = vld [vmem:[%s4527 + $0x170] sm:$0xff]
      %v4561 = vshrl.u32 %v4528, 16
      %v4563 = vrot.slane %v4561, 7
      %v4565 = vshrl.u32 %v4529, 16
      %v4567 = vrot.slane %v4565, 7
      %v4568 = vshll.u32 %v4529, 16
      %v4570 = vor.u32 %v4567, %v4568
      %v4571 = vsel %vm381, %v4563, %v4570
      %v4573 = vshrl.u32 %v4530, 16
      %v4575 = vrot.slane %v4573, 7
      %v4577 = vshrl.u32 %v4531, 16
      %v4579 = vrot.slane %v4577, 7
      %v4580 = vshll.u32 %v4531, 16
      %v4582 = vor.u32 %v4579, %v4580
      %v4583 = vsel %vm381, %v4575, %v4582
      %v4585 = vshrl.u32 %v4532, 16
      %v4587 = vrot.slane %v4585, 7
      %v4589 = vshrl.u32 %v4533, 16
      %v4591 = vrot.slane %v4589, 7
      %v4592 = vshll.u32 %v4533, 16
      %v4594 = vor.u32 %v4591, %v4592
      %v4595 = vsel %vm381, %v4587, %v4594
      %v4597 = vshrl.u32 %v4534, 16
      %v4599 = vrot.slane %v4597, 7
      %v4601 = vshrl.u32 %v4535, 16
      %v4603 = vrot.slane %v4601, 7
      %v4604 = vshll.u32 %v4535, 16
      %v4606 = vor.u32 %v4603, %v4604
      %v4607 = vsel %vm381, %v4599, %v4606
      %v4609 = vshrl.u32 %v4536, 16
      %v4611 = vrot.slane %v4609, 7
      %v4613 = vshrl.u32 %v4537, 16
      %v4615 = vrot.slane %v4613, 7
      %v4616 = vshll.u32 %v4537, 16
      %v4618 = vor.u32 %v4615, %v4616
      %v4619 = vsel %vm381, %v4611, %v4618
      %v4621 = vshrl.u32 %v4538, 16
      %v4623 = vrot.slane %v4621, 7
      %v4625 = vshrl.u32 %v4539, 16
      %v4627 = vrot.slane %v4625, 7
      %v4628 = vshll.u32 %v4539, 16
      %v4630 = vor.u32 %v4627, %v4628
      %v4631 = vsel %vm381, %v4623, %v4630
      %v4633 = vshrl.u32 %v4540, 16
      %v4635 = vrot.slane %v4633, 7
      %v4637 = vshrl.u32 %v4541, 16
      %v4639 = vrot.slane %v4637, 7
      %v4640 = vshll.u32 %v4541, 16
      %v4642 = vor.u32 %v4639, %v4640
      %v4643 = vsel %vm381, %v4635, %v4642
      %v4645 = vshrl.u32 %v4542, 16
      %v4647 = vrot.slane %v4645, 7
      %v4649 = vshrl.u32 %v4543, 16
      %v4651 = vrot.slane %v4649, 7
      %v4652 = vshll.u32 %v4543, 16
      %v4654 = vor.u32 %v4651, %v4652
      %v4655 = vsel %vm381, %v4647, %v4654
      %v4657 = vshrl.u32 %v4544, 16
      %v4659 = vrot.slane %v4657, 7
      %v4661 = vshrl.u32 %v4545, 16
      %v4663 = vrot.slane %v4661, 7
      %v4664 = vshll.u32 %v4545, 16
      %v4666 = vor.u32 %v4663, %v4664
      %v4667 = vsel %vm381, %v4659, %v4666
      %v4669 = vshrl.u32 %v4546, 16
      %v4671 = vrot.slane %v4669, 7
      %v4673 = vshrl.u32 %v4547, 16
      %v4675 = vrot.slane %v4673, 7
      %v4676 = vshll.u32 %v4547, 16
      %v4678 = vor.u32 %v4675, %v4676
      %v4679 = vsel %vm381, %v4671, %v4678
      %v4681 = vshrl.u32 %v4548, 16
      %v4683 = vrot.slane %v4681, 7
      %v4685 = vshrl.u32 %v4549, 16
      %v4687 = vrot.slane %v4685, 7
      %v4688 = vshll.u32 %v4549, 16
      %v4690 = vor.u32 %v4687, %v4688
      %v4691 = vsel %vm381, %v4683, %v4690
      %v4693 = vshrl.u32 %v4550, 16
      %v4695 = vrot.slane %v4693, 7
      %v4697 = vshrl.u32 %v4551, 16
      %v4699 = vrot.slane %v4697, 7
      %v4700 = vshll.u32 %v4551, 16
      %v4702 = vor.u32 %v4699, %v4700
      %v4703 = vsel %vm381, %v4695, %v4702
      %v4705 = vshrl.u32 %v4552, 16
      %v4707 = vrot.slane %v4705, 7
      %v4709 = vshrl.u32 %v4553, 16
      %v4711 = vrot.slane %v4709, 7
      %v4712 = vshll.u32 %v4553, 16
      %v4714 = vor.u32 %v4711, %v4712
      %v4715 = vsel %vm381, %v4707, %v4714
      %v4717 = vshrl.u32 %v4554, 16
      %v4719 = vrot.slane %v4717, 7
      %v4721 = vshrl.u32 %v4555, 16
      %v4723 = vrot.slane %v4721, 7
      %v4724 = vshll.u32 %v4555, 16
      %v4726 = vor.u32 %v4723, %v4724
      %v4727 = vsel %vm381, %v4719, %v4726
      %v4729 = vshrl.u32 %v4556, 16
      %v4731 = vrot.slane %v4729, 7
      %v4733 = vshrl.u32 %v4557, 16
      %v4735 = vrot.slane %v4733, 7
      %v4736 = vshll.u32 %v4557, 16
      %v4738 = vor.u32 %v4735, %v4736
      %v4739 = vsel %vm381, %v4731, %v4738
      %v4741 = vshrl.u32 %v4558, 16
      %v4743 = vrot.slane %v4741, 7
      %v4745 = vshrl.u32 %v4559, 16
      %v4747 = vrot.slane %v4745, 7
      %v4748 = vshll.u32 %v4559, 16
      %v4750 = vor.u32 %v4747, %v4748
      %v4751 = vsel %vm381, %v4743, %v4750
      %v4752 = vld [vmem:[%s4527 + $0x10] sm:$0x1]
      %v4753 = vld [vmem:[%s4527 + $0x28] sm:$0x1]
      %v4754 = vld [vmem:[%s4527 + $0x40] sm:$0x1]
      %v4755 = vld [vmem:[%s4527 + $0x58] sm:$0x1]
      %v4756 = vld [vmem:[%s4527 + $0x70] sm:$0x1]
      %v4757 = vld [vmem:[%s4527 + $0x88] sm:$0x1]
      %v4758 = vld [vmem:[%s4527 + $0xa0] sm:$0x1]
      %v4759 = vld [vmem:[%s4527 + $0xb8] sm:$0x1]
      %v4760 = vld [vmem:[%s4527 + $0xd0] sm:$0x1]
      %v4761 = vld [vmem:[%s4527 + $0xe8] sm:$0x1]
      %v4762 = vld [vmem:[%s4527 + $0x100] sm:$0x1]
      %v4763 = vld [vmem:[%s4527 + $0x118] sm:$0x1]
      %v4764 = vld [vmem:[%s4527 + $0x130] sm:$0x1]
      %v4765 = vld [vmem:[%s4527 + $0x148] sm:$0x1]
      %v4766 = vld [vmem:[%s4527 + $0x160] sm:$0x1]
      %v4767 = vld [vmem:[%s4527 + $0x178] sm:$0x1]
      %v4768 = vrot.slane %v4568, 1
      %v4769 = vor.u32 %v4565, %v4768
      %v4771 = vshll.u32 %v4752, 16
      %v4773 = vrot.slane %v4771, 1
      %v4774 = vsel %vm4062, %v4769, %v4773
      %v4775 = vrot.slane %v4580, 1
      %v4776 = vor.u32 %v4577, %v4775
      %v4778 = vshll.u32 %v4753, 16
      %v4780 = vrot.slane %v4778, 1
      %v4781 = vsel %vm4062, %v4776, %v4780
      %v4782 = vrot.slane %v4592, 1
      %v4783 = vor.u32 %v4589, %v4782
      %v4785 = vshll.u32 %v4754, 16
      %v4787 = vrot.slane %v4785, 1
      %v4788 = vsel %vm4062, %v4783, %v4787
      %v4789 = vrot.slane %v4604, 1
      %v4790 = vor.u32 %v4601, %v4789
      %v4792 = vshll.u32 %v4755, 16
      %v4794 = vrot.slane %v4792, 1
      %v4795 = vsel %vm4062, %v4790, %v4794
      %v4796 = vrot.slane %v4616, 1
      %v4797 = vor.u32 %v4613, %v4796
      %v4799 = vshll.u32 %v4756, 16
      %v4801 = vrot.slane %v4799, 1
      %v4802 = vsel %vm4062, %v4797, %v4801
      %v4803 = vrot.slane %v4628, 1
      %v4804 = vor.u32 %v4625, %v4803
      %v4806 = vshll.u32 %v4757, 16
      %v4808 = vrot.slane %v4806, 1
      %v4809 = vsel %vm4062, %v4804, %v4808
      %v4810 = vrot.slane %v4640, 1
      %v4811 = vor.u32 %v4637, %v4810
      %v4813 = vshll.u32 %v4758, 16
      %v4815 = vrot.slane %v4813, 1
      %v4816 = vsel %vm4062, %v4811, %v4815
      %v4817 = vrot.slane %v4652, 1
      %v4818 = vor.u32 %v4649, %v4817
      %v4820 = vshll.u32 %v4759, 16
      %v4822 = vrot.slane %v4820, 1
      %v4823 = vsel %vm4062, %v4818, %v4822
      %v4824 = vrot.slane %v4664, 1
      %v4825 = vor.u32 %v4661, %v4824
      %v4827 = vshll.u32 %v4760, 16
      %v4829 = vrot.slane %v4827, 1
      %v4830 = vsel %vm4062, %v4825, %v4829
      %v4831 = vrot.slane %v4676, 1
      %v4832 = vor.u32 %v4673, %v4831
      %v4834 = vshll.u32 %v4761, 16
      %v4836 = vrot.slane %v4834, 1
      %v4837 = vsel %vm4062, %v4832, %v4836
      %v4838 = vrot.slane %v4688, 1
      %v4839 = vor.u32 %v4685, %v4838
      %v4841 = vshll.u32 %v4762, 16
      %v4843 = vrot.slane %v4841, 1
      %v4844 = vsel %vm4062, %v4839, %v4843
      %v4845 = vrot.slane %v4700, 1
      %v4846 = vor.u32 %v4697, %v4845
      %v4848 = vshll.u32 %v4763, 16
      %v4850 = vrot.slane %v4848, 1
      %v4851 = vsel %vm4062, %v4846, %v4850
      %v4852 = vrot.slane %v4712, 1
      %v4853 = vor.u32 %v4709, %v4852
      %v4855 = vshll.u32 %v4764, 16
      %v4857 = vrot.slane %v4855, 1
      %v4858 = vsel %vm4062, %v4853, %v4857
      %v4859 = vrot.slane %v4724, 1
      %v4860 = vor.u32 %v4721, %v4859
      %v4862 = vshll.u32 %v4765, 16
      %v4864 = vrot.slane %v4862, 1
      %v4865 = vsel %vm4062, %v4860, %v4864
      %v4866 = vrot.slane %v4736, 1
      %v4867 = vor.u32 %v4733, %v4866
      %v4869 = vshll.u32 %v4766, 16
      %v4871 = vrot.slane %v4869, 1
      %v4872 = vsel %vm4062, %v4867, %v4871
      %v4873 = vrot.slane %v4748, 1
      %v4874 = vor.u32 %v4745, %v4873
      %v4876 = vshll.u32 %v4767, 16
      %v4878 = vrot.slane %v4876, 1
      %v4879 = vsel %vm4062, %v4874, %v4878
      %4912 = vrot.lane.b32.xlu0 %v3823, 16
      %v4913 = vpop.permute.xlu0 %4912
      %4914 = vrot.lane.b32.xlu0 %v3825, 16
      %v4915 = vpop.permute.xlu0 %4914
      %4916 = vrot.lane.b32.xlu0 %v3827, 16
      %v4917 = vpop.permute.xlu0 %4916
      %4918 = vrot.lane.b32.xlu0 %v3829, 16
      %v4919 = vpop.permute.xlu0 %4918
      %4920 = vrot.lane.b32.xlu0 %v3831, 16
      %v4921 = vpop.permute.xlu0 %4920
      %4922 = vrot.lane.b32.xlu0 %v3833, 16
      %v4923 = vpop.permute.xlu0 %4922
      %4924 = vrot.lane.b32.xlu0 %v3835, 16
      %v4925 = vpop.permute.xlu0 %4924
      %4926 = vrot.lane.b32.xlu0 %v3837, 16
      %v4927 = vpop.permute.xlu0 %4926
      %4928 = vrot.lane.b32.xlu0 %v3839, 16
      %v4929 = vpop.permute.xlu0 %4928
      %4930 = vrot.lane.b32.xlu0 %v3841, 16
      %v4931 = vpop.permute.xlu0 %4930
      %4932 = vrot.lane.b32.xlu0 %v3843, 16
      %v4933 = vpop.permute.xlu0 %4932
      %4934 = vrot.lane.b32.xlu0 %v3845, 16
      %v4935 = vpop.permute.xlu0 %4934
      %4936 = vrot.lane.b32.xlu0 %v3847, 16
      %v4937 = vpop.permute.xlu0 %4936
      %4938 = vrot.lane.b32.xlu0 %v3849, 16
      %v4939 = vpop.permute.xlu0 %4938
      %4940 = vrot.lane.b32.xlu0 %v3851, 16
      %v4941 = vpop.permute.xlu0 %4940
      %4942 = vrot.lane.b32.xlu0 %v3853, 16
      %v4943 = vpop.permute.xlu0 %4942
      %4944 = vrot.lane.b32.xlu0 %v4069, 32
      %v4945 = vpop.permute.xlu0 %4944
      %4946 = vrot.lane.b32.xlu0 %v4076, 32
      %v4947 = vpop.permute.xlu0 %4946
      %4948 = vrot.lane.b32.xlu0 %v4083, 32
      %v4949 = vpop.permute.xlu0 %4948
      %4950 = vrot.lane.b32.xlu0 %v4090, 32
      %v4951 = vpop.permute.xlu0 %4950
      %4952 = vrot.lane.b32.xlu0 %v4097, 32
      %v4953 = vpop.permute.xlu0 %4952
      %4954 = vrot.lane.b32.xlu0 %v4104, 32
      %v4955 = vpop.permute.xlu0 %4954
      %4956 = vrot.lane.b32.xlu0 %v4111, 32
      %v4957 = vpop.permute.xlu0 %4956
      %4958 = vrot.lane.b32.xlu0 %v4118, 32
      %v4959 = vpop.permute.xlu0 %4958
      %4960 = vrot.lane.b32.xlu0 %v4125, 32
      %v4961 = vpop.permute.xlu0 %4960
      %4962 = vrot.lane.b32.xlu0 %v4132, 32
      %v4963 = vpop.permute.xlu0 %4962
      %4964 = vrot.lane.b32.xlu0 %v4139, 32
      %v4965 = vpop.permute.xlu0 %4964
      %4966 = vrot.lane.b32.xlu0 %v4146, 32
      %v4967 = vpop.permute.xlu0 %4966
      %4968 = vrot.lane.b32.xlu0 %v4153, 32
      %v4969 = vpop.permute.xlu0 %4968
      %4970 = vrot.lane.b32.xlu0 %v4160, 32
      %v4971 = vpop.permute.xlu0 %4970
      %4972 = vrot.lane.b32.xlu0 %v4167, 32
      %v4973 = vpop.permute.xlu0 %4972
      %4974 = vrot.lane.b32.xlu0 %v4174, 32
      %v4975 = vpop.permute.xlu0 %4974
      %4976 = vrot.lane.b32.xlu0 %v4218, 48
      %v4977 = vpop.permute.xlu0 %4976
      %4978 = vrot.lane.b32.xlu0 %v4230, 48
      %v4979 = vpop.permute.xlu0 %4978
      %4980 = vrot.lane.b32.xlu0 %v4242, 48
      %v4981 = vpop.permute.xlu0 %4980
      %4982 = vrot.lane.b32.xlu0 %v4254, 48
      %v4983 = vpop.permute.xlu0 %4982
      %4984 = vrot.lane.b32.xlu0 %v4266, 48
      %v4985 = vpop.permute.xlu0 %4984
      %4986 = vrot.lane.b32.xlu0 %v4278, 48
      %v4987 = vpop.permute.xlu0 %4986
      %4988 = vrot.lane.b32.xlu0 %v4290, 48
      %v4989 = vpop.permute.xlu0 %4988
      %4990 = vrot.lane.b32.xlu0 %v4302, 48
      %v4991 = vpop.permute.xlu0 %4990
      %4992 = vrot.lane.b32.xlu0 %v4314, 48
      %v4993 = vpop.permute.xlu0 %4992
      %4994 = vrot.lane.b32.xlu0 %v4326, 48
      %v4995 = vpop.permute.xlu0 %4994
      %4996 = vrot.lane.b32.xlu0 %v4338, 48
      %v4997 = vpop.permute.xlu0 %4996
      %4998 = vrot.lane.b32.xlu0 %v4350, 48
      %v4999 = vpop.permute.xlu0 %4998
      %5000 = vrot.lane.b32.xlu0 %v4362, 48
      %v5001 = vpop.permute.xlu0 %5000
      %5002 = vrot.lane.b32.xlu0 %v4374, 48
      %v5003 = vpop.permute.xlu0 %5002
      %5004 = vrot.lane.b32.xlu0 %v4386, 48
      %v5005 = vpop.permute.xlu0 %5004
      %5006 = vrot.lane.b32.xlu0 %v4398, 48
      %v5007 = vpop.permute.xlu0 %5006
      %5024 = vrot.lane.b32.xlu0 %v4176, 64
      %v5025 = vpop.permute.xlu0 %5024
      %5026 = vrot.lane.b32.xlu0 %v4178, 64
      %v5027 = vpop.permute.xlu0 %5026
      %5028 = vrot.lane.b32.xlu0 %v4180, 64
      %v5029 = vpop.permute.xlu0 %5028
      %5030 = vrot.lane.b32.xlu0 %v4182, 64
      %v5031 = vpop.permute.xlu0 %5030
      %5032 = vrot.lane.b32.xlu0 %v4184, 64
      %v5033 = vpop.permute.xlu0 %5032
      %5034 = vrot.lane.b32.xlu0 %v4186, 64
      %v5035 = vpop.permute.xlu0 %5034
      %5036 = vrot.lane.b32.xlu0 %v4188, 64
      %v5037 = vpop.permute.xlu0 %5036
      %5038 = vrot.lane.b32.xlu0 %v4190, 64
      %v5039 = vpop.permute.xlu0 %5038
      %5040 = vrot.lane.b32.xlu0 %v4192, 64
      %v5041 = vpop.permute.xlu0 %5040
      %5042 = vrot.lane.b32.xlu0 %v4194, 64
      %v5043 = vpop.permute.xlu0 %5042
      %5044 = vrot.lane.b32.xlu0 %v4196, 64
      %v5045 = vpop.permute.xlu0 %5044
      %5046 = vrot.lane.b32.xlu0 %v4198, 64
      %v5047 = vpop.permute.xlu0 %5046
      %5048 = vrot.lane.b32.xlu0 %v4200, 64
      %v5049 = vpop.permute.xlu0 %5048
      %5050 = vrot.lane.b32.xlu0 %v4202, 64
      %v5051 = vpop.permute.xlu0 %5050
      %5052 = vrot.lane.b32.xlu0 %v4204, 64
      %v5053 = vpop.permute.xlu0 %5052
      %5054 = vrot.lane.b32.xlu0 %v4206, 64
      %v5055 = vpop.permute.xlu0 %5054
      %5056 = vrot.lane.b32.xlu0 %v4421, 80
      %v5057 = vpop.permute.xlu0 %5056
      %5058 = vrot.lane.b32.xlu0 %v4428, 80
      %v5059 = vpop.permute.xlu0 %5058
      %5060 = vrot.lane.b32.xlu0 %v4435, 80
      %v5061 = vpop.permute.xlu0 %5060
      %5062 = vrot.lane.b32.xlu0 %v4442, 80
      %v5063 = vpop.permute.xlu0 %5062
      %5064 = vrot.lane.b32.xlu0 %v4449, 80
      %v5065 = vpop.permute.xlu0 %5064
      %5066 = vrot.lane.b32.xlu0 %v4456, 80
      %v5067 = vpop.permute.xlu0 %5066
      %5068 = vrot.lane.b32.xlu0 %v4463, 80
      %v5069 = vpop.permute.xlu0 %5068
      %5070 = vrot.lane.b32.xlu0 %v4470, 80
      %v5071 = vpop.permute.xlu0 %5070
      %5072 = vrot.lane.b32.xlu0 %v4477, 80
      %v5073 = vpop.permute.xlu0 %5072
      %5074 = vrot.lane.b32.xlu0 %v4484, 80
      %v5075 = vpop.permute.xlu0 %5074
      %5076 = vrot.lane.b32.xlu0 %v4491, 80
      %v5077 = vpop.permute.xlu0 %5076
      %5078 = vrot.lane.b32.xlu0 %v4498, 80
      %v5079 = vpop.permute.xlu0 %5078
      %5080 = vrot.lane.b32.xlu0 %v4505, 80
      %v5081 = vpop.permute.xlu0 %5080
      %5082 = vrot.lane.b32.xlu0 %v4512, 80
      %v5083 = vpop.permute.xlu0 %5082
      %5084 = vrot.lane.b32.xlu0 %v4519, 80
      %v5085 = vpop.permute.xlu0 %5084
      %5086 = vrot.lane.b32.xlu0 %v4526, 80
      %v5087 = vpop.permute.xlu0 %5086
      %5088 = vrot.lane.b32.xlu0 %v4571, 96
      %v5089 = vpop.permute.xlu0 %5088
      %5090 = vrot.lane.b32.xlu0 %v4583, 96
      %v5091 = vpop.permute.xlu0 %5090
      %5092 = vrot.lane.b32.xlu0 %v4595, 96
      %v5093 = vpop.permute.xlu0 %5092
      %5094 = vrot.lane.b32.xlu0 %v4607, 96
      %v5095 = vpop.permute.xlu0 %5094
      %5096 = vrot.lane.b32.xlu0 %v4619, 96
      %v5097 = vpop.permute.xlu0 %5096
      %5098 = vrot.lane.b32.xlu0 %v4631, 96
      %v5099 = vpop.permute.xlu0 %5098
      %5100 = vrot.lane.b32.xlu0 %v4643, 96
      %v5101 = vpop.permute.xlu0 %5100
      %5102 = vrot.lane.b32.xlu0 %v4655, 96
      %v5103 = vpop.permute.xlu0 %5102
      %5104 = vrot.lane.b32.xlu0 %v4667, 96
      %v5105 = vpop.permute.xlu0 %5104
      %5106 = vrot.lane.b32.xlu0 %v4679, 96
      %v5107 = vpop.permute.xlu0 %5106
      %5108 = vrot.lane.b32.xlu0 %v4691, 96
      %v5109 = vpop.permute.xlu0 %5108
      %5110 = vrot.lane.b32.xlu0 %v4703, 96
      %v5111 = vpop.permute.xlu0 %5110
      %5112 = vrot.lane.b32.xlu0 %v4715, 96
      %v5113 = vpop.permute.xlu0 %5112
      %5114 = vrot.lane.b32.xlu0 %v4727, 96
      %v5115 = vpop.permute.xlu0 %5114
      %5116 = vrot.lane.b32.xlu0 %v4739, 96
      %v5117 = vpop.permute.xlu0 %5116
      %5118 = vrot.lane.b32.xlu0 %v4751, 96
      %v5119 = vpop.permute.xlu0 %5118
      %5136 = vrot.lane.b32.xlu0 %v4529, 112
      %v5137 = vpop.permute.xlu0 %5136
      %5138 = vrot.lane.b32.xlu0 %v4531, 112
      %v5139 = vpop.permute.xlu0 %5138
      %5140 = vrot.lane.b32.xlu0 %v4533, 112
      %v5141 = vpop.permute.xlu0 %5140
      %5142 = vrot.lane.b32.xlu0 %v4535, 112
      %v5143 = vpop.permute.xlu0 %5142
      %5144 = vrot.lane.b32.xlu0 %v4537, 112
      %v5145 = vpop.permute.xlu0 %5144
      %5146 = vrot.lane.b32.xlu0 %v4539, 112
      %v5147 = vpop.permute.xlu0 %5146
      %5148 = vrot.lane.b32.xlu0 %v4541, 112
      %v5149 = vpop.permute.xlu0 %5148
      %5150 = vrot.lane.b32.xlu0 %v4543, 112
      %v5151 = vpop.permute.xlu0 %5150
      %5152 = vrot.lane.b32.xlu0 %v4545, 112
      %v5153 = vpop.permute.xlu0 %5152
      %5154 = vrot.lane.b32.xlu0 %v4547, 112
      %v5155 = vpop.permute.xlu0 %5154
      %5156 = vrot.lane.b32.xlu0 %v4549, 112
      %v5157 = vpop.permute.xlu0 %5156
      %5158 = vrot.lane.b32.xlu0 %v4551, 112
      %v5159 = vpop.permute.xlu0 %5158
      %5160 = vrot.lane.b32.xlu0 %v4553, 112
      %v5161 = vpop.permute.xlu0 %5160
      %5162 = vrot.lane.b32.xlu0 %v4555, 112
      %v5163 = vpop.permute.xlu0 %5162
      %5164 = vrot.lane.b32.xlu0 %v4557, 112
      %v5165 = vpop.permute.xlu0 %5164
      %5166 = vrot.lane.b32.xlu0 %v4559, 112
      %v5167 = vpop.permute.xlu0 %5166
      %v5170 = vsel %vm378, %v3865, %v4913
      %v5173 = vsel %vm378, %v3877, %v4915
      %v5176 = vsel %vm378, %v3889, %v4917
      %v5179 = vsel %vm378, %v3901, %v4919
      %v5182 = vsel %vm378, %v3913, %v4921
      %v5185 = vsel %vm378, %v3925, %v4923
      %v5188 = vsel %vm378, %v3937, %v4925
      %v5191 = vsel %vm378, %v3949, %v4927
      %v5194 = vsel %vm378, %v3961, %v4929
      %v5197 = vsel %vm378, %v3973, %v4931
      %v5200 = vsel %vm378, %v3985, %v4933
      %v5203 = vsel %vm378, %v3997, %v4935
      %v5206 = vsel %vm378, %v4009, %v4937
      %v5209 = vsel %vm378, %v4021, %v4939
      %v5212 = vsel %vm378, %v4033, %v4941
      %v5215 = vsel %vm378, %v4045, %v4943
      %v5217 = vsel %vm496, %v5170, %v4945
      %v5219 = vsel %vm496, %v5173, %v4947
      %v5221 = vsel %vm496, %v5176, %v4949
      %v5223 = vsel %vm496, %v5179, %v4951
      %v5225 = vsel %vm496, %v5182, %v4953
      %v5227 = vsel %vm496, %v5185, %v4955
      %v5229 = vsel %vm496, %v5188, %v4957
      %v5231 = vsel %vm496, %v5191, %v4959
      %v5233 = vsel %vm496, %v5194, %v4961
      %v5235 = vsel %vm496, %v5197, %v4963
      %v5237 = vsel %vm496, %v5200, %v4965
      %v5239 = vsel %vm496, %v5203, %v4967
      %v5241 = vsel %vm496, %v5206, %v4969
      %v5243 = vsel %vm496, %v5209, %v4971
      %v5245 = vsel %vm496, %v5212, %v4973
      %v5247 = vsel %vm496, %v5215, %v4975
      %vm5248 = vcmask 392192
      %v5250 = vsel %vm5248, %v5217, %v4977
      %v5252 = vsel %vm5248, %v5219, %v4979
      %v5254 = vsel %vm5248, %v5221, %v4981
      %v5256 = vsel %vm5248, %v5223, %v4983
      %v5258 = vsel %vm5248, %v5225, %v4985
      %v5260 = vsel %vm5248, %v5227, %v4987
      %v5262 = vsel %vm5248, %v5229, %v4989
      %v5264 = vsel %vm5248, %v5231, %v4991
      %v5266 = vsel %vm5248, %v5233, %v4993
      %v5268 = vsel %vm5248, %v5235, %v4995
      %v5270 = vsel %vm5248, %v5237, %v4997
      %v5272 = vsel %vm5248, %v5239, %v4999
      %v5274 = vsel %vm5248, %v5241, %v5001
      %v5276 = vsel %vm5248, %v5243, %v5003
      %v5278 = vsel %vm5248, %v5245, %v5005
      %v5280 = vsel %vm5248, %v5247, %v5007
      %vm5281 = vcmask 523264
      %v5283 = vsel %vm5281, %v5250, %v5025
      %v5285 = vsel %vm5281, %v5252, %v5027
      %v5287 = vsel %vm5281, %v5254, %v5029
      %v5289 = vsel %vm5281, %v5256, %v5031
      %v5291 = vsel %vm5281, %v5258, %v5033
      %v5293 = vsel %vm5281, %v5260, %v5035
      %v5295 = vsel %vm5281, %v5262, %v5037
      %v5297 = vsel %vm5281, %v5264, %v5039
      %v5299 = vsel %vm5281, %v5266, %v5041
      %v5301 = vsel %vm5281, %v5268, %v5043
      %v5303 = vsel %vm5281, %v5270, %v5045
      %v5305 = vsel %vm5281, %v5272, %v5047
      %v5307 = vsel %vm5281, %v5274, %v5049
      %v5309 = vsel %vm5281, %v5276, %v5051
      %v5311 = vsel %vm5281, %v5278, %v5053
      %v5313 = vsel %vm5281, %v5280, %v5055
      %vm5314 = vcmask 654336
      %v5316 = vsel %vm5314, %v5283, %v5057
      %v5318 = vsel %vm5314, %v5285, %v5059
      %v5320 = vsel %vm5314, %v5287, %v5061
      %v5322 = vsel %vm5314, %v5289, %v5063
      %v5324 = vsel %vm5314, %v5291, %v5065
      %v5326 = vsel %vm5314, %v5293, %v5067
      %v5328 = vsel %vm5314, %v5295, %v5069
      %v5330 = vsel %vm5314, %v5297, %v5071
      %v5332 = vsel %vm5314, %v5299, %v5073
      %v5334 = vsel %vm5314, %v5301, %v5075
      %v5336 = vsel %vm5314, %v5303, %v5077
      %v5338 = vsel %vm5314, %v5305, %v5079
      %v5340 = vsel %vm5314, %v5307, %v5081
      %v5342 = vsel %vm5314, %v5309, %v5083
      %v5344 = vsel %vm5314, %v5311, %v5085
      %v5346 = vsel %vm5314, %v5313, %v5087
      %vm5347 = vcmask 785408
      %v5349 = vsel %vm5347, %v5316, %v5089
      %v5351 = vsel %vm5347, %v5318, %v5091
      %v5353 = vsel %vm5347, %v5320, %v5093
      %v5355 = vsel %vm5347, %v5322, %v5095
      %v5357 = vsel %vm5347, %v5324, %v5097
      %v5359 = vsel %vm5347, %v5326, %v5099
      %v5361 = vsel %vm5347, %v5328, %v5101
      %v5363 = vsel %vm5347, %v5330, %v5103
      %v5365 = vsel %vm5347, %v5332, %v5105
      %v5367 = vsel %vm5347, %v5334, %v5107
      %v5369 = vsel %vm5347, %v5336, %v5109
      %v5371 = vsel %vm5347, %v5338, %v5111
      %v5373 = vsel %vm5347, %v5340, %v5113
      %v5375 = vsel %vm5347, %v5342, %v5115
      %v5377 = vsel %vm5347, %v5344, %v5117
      %v5379 = vsel %vm5347, %v5346, %v5119
      %vm5380 = vcmask 916480
      %v5382 = vsel %vm5380, %v5349, %v5137
      %v5385 = vsel %vm5380, %v5351, %v5139
      %v5388 = vsel %vm5380, %v5353, %v5141
      %v5391 = vsel %vm5380, %v5355, %v5143
      %v5394 = vsel %vm5380, %v5357, %v5145
      %v5397 = vsel %vm5380, %v5359, %v5147
      %v5400 = vsel %vm5380, %v5361, %v5149
      %v5403 = vsel %vm5380, %v5363, %v5151
      %v5406 = vsel %vm5380, %v5365, %v5153
      %v5409 = vsel %vm5380, %v5367, %v5155
      %v5412 = vsel %vm5380, %v5369, %v5157
      %v5415 = vsel %vm5380, %v5371, %v5159
      %v5418 = vsel %vm5380, %v5373, %v5161
      %v5421 = vsel %vm5380, %v5375, %v5163
      %v5424 = vsel %vm5380, %v5377, %v5165
      %v5427 = vsel %vm5380, %v5379, %v5167
      %5429 = vst [vmem:[#allocation5] sm:$0xff] %v5382
      %5430 = vst.msk [vmem:[#allocation5 + $0x8] sm:$0xff] %vm378, %v4774
      %5431 = vst [vmem:[#allocation5 + $0x10] sm:$0xff] %v5385
      %5432 = vst.msk [vmem:[#allocation5 + $0x18] sm:$0xff] %vm378, %v4781
      %5433 = vst [vmem:[#allocation5 + $0x20] sm:$0xff] %v5388
      %5434 = vst.msk [vmem:[#allocation5 + $0x28] sm:$0xff] %vm378, %v4788
      %5435 = vst [vmem:[#allocation5 + $0x30] sm:$0xff] %v5391
      %5436 = vst.msk [vmem:[#allocation5 + $0x38] sm:$0xff] %vm378, %v4795
      %5437 = vst [vmem:[#allocation5 + $0x40] sm:$0xff] %v5394
      %5438 = vst.msk [vmem:[#allocation5 + $0x48] sm:$0xff] %vm378, %v4802
      %5439 = vst [vmem:[#allocation5 + $0x50] sm:$0xff] %v5397
      %5440 = vst.msk [vmem:[#allocation5 + $0x58] sm:$0xff] %vm378, %v4809
      %5441 = vst [vmem:[#allocation5 + $0x60] sm:$0xff] %v5400
      %5442 = vst.msk [vmem:[#allocation5 + $0x68] sm:$0xff] %vm378, %v4816
      %5443 = vst [vmem:[#allocation5 + $0x70] sm:$0xff] %v5403
      %5444 = vst.msk [vmem:[#allocation5 + $0x78] sm:$0xff] %vm378, %v4823
      %5445 = vst [vmem:[#allocation5 + $0x80] sm:$0xff] %v5406
      %5446 = vst.msk [vmem:[#allocation5 + $0x88] sm:$0xff] %vm378, %v4830
      %5447 = vst [vmem:[#allocation5 + $0x90] sm:$0xff] %v5409
      %5448 = vst.msk [vmem:[#allocation5 + $0x98] sm:$0xff] %vm378, %v4837
      %5449 = vst [vmem:[#allocation5 + $0xa0] sm:$0xff] %v5412
      %5450 = vst.msk [vmem:[#allocation5 + $0xa8] sm:$0xff] %vm378, %v4844
      %5451 = vst [vmem:[#allocation5 + $0xb0] sm:$0xff] %v5415
      %5452 = vst.msk [vmem:[#allocation5 + $0xb8] sm:$0xff] %vm378, %v4851
      %5453 = vst [vmem:[#allocation5 + $0xc0] sm:$0xff] %v5418
      %5454 = vst.msk [vmem:[#allocation5 + $0xc8] sm:$0xff] %vm378, %v4858
      %5455 = vst [vmem:[#allocation5 + $0xd0] sm:$0xff] %v5421
      %5456 = vst.msk [vmem:[#allocation5 + $0xd8] sm:$0xff] %vm378, %v4865
      %5457 = vst [vmem:[#allocation5 + $0xe0] sm:$0xff] %v5424
      %5458 = vst.msk [vmem:[#allocation5 + $0xe8] sm:$0xff] %vm378, %v4872
      %5459 = vst [vmem:[#allocation5 + $0xf0] sm:$0xff] %v5427
      %5460 = vst.msk [vmem:[#allocation5 + $0xf8] sm:$0xff] %vm378, %v4879
      %v5461 = vld [vmem:[#allocation5] sm:$0xff]
      %v5462 = vld [vmem:[#allocation5 + $0x8] sm:$0xff]
      %v5463 = vld [vmem:[#allocation5 + $0x10] sm:$0xff]
      %v5464 = vld [vmem:[#allocation5 + $0x18] sm:$0xff]
      %v5465 = vld [vmem:[#allocation5 + $0x20] sm:$0xff]
      %v5466 = vld [vmem:[#allocation5 + $0x28] sm:$0xff]
      %v5467 = vld [vmem:[#allocation5 + $0x30] sm:$0xff]
      %v5468 = vld [vmem:[#allocation5 + $0x38] sm:$0xff]
      %v5469 = vld [vmem:[#allocation5 + $0x40] sm:$0xff]
      %v5470 = vld [vmem:[#allocation5 + $0x48] sm:$0xff]
      %v5471 = vld [vmem:[#allocation5 + $0x50] sm:$0xff]
      %v5472 = vld [vmem:[#allocation5 + $0x58] sm:$0xff]
      %v5473 = vld [vmem:[#allocation5 + $0x60] sm:$0xff]
      %v5474 = vld [vmem:[#allocation5 + $0x68] sm:$0xff]
      %v5475 = vld [vmem:[#allocation5 + $0x70] sm:$0xff]
      %v5476 = vld [vmem:[#allocation5 + $0x78] sm:$0xff]
      %v5477 = vld [vmem:[#allocation5 + $0x80] sm:$0xff]
      %v5478 = vld [vmem:[#allocation5 + $0x88] sm:$0xff]
      %v5479 = vld [vmem:[#allocation5 + $0x90] sm:$0xff]
      %v5480 = vld [vmem:[#allocation5 + $0x98] sm:$0xff]
      %v5481 = vld [vmem:[#allocation5 + $0xa0] sm:$0xff]
      %v5482 = vld [vmem:[#allocation5 + $0xa8] sm:$0xff]
      %v5483 = vld [vmem:[#allocation5 + $0xb0] sm:$0xff]
      %v5484 = vld [vmem:[#allocation5 + $0xb8] sm:$0xff]
      %v5485 = vld [vmem:[#allocation5 + $0xc0] sm:$0xff]
      %v5486 = vld [vmem:[#allocation5 + $0xc8] sm:$0xff]
      %v5487 = vld [vmem:[#allocation5 + $0xd0] sm:$0xff]
      %v5488 = vld [vmem:[#allocation5 + $0xd8] sm:$0xff]
      %v5489 = vld [vmem:[#allocation5 + $0xe0] sm:$0xff]
      %v5490 = vld [vmem:[#allocation5 + $0xe8] sm:$0xff]
      %v5491 = vld [vmem:[#allocation5 + $0xf0] sm:$0xff]
      %v5492 = vld [vmem:[#allocation5 + $0xf8] sm:$0xff]
      %v5493 = vld [vmem:[%s3] sm:$0xf]
      %v5494 = vld [vmem:[%s3 + $0x4] sm:$0xf]
      %v5495 = vld [vmem:[%s3 + $0x8] sm:$0xf]
      %v5496 = vld [vmem:[%s3 + $0xc] sm:$0xf]
      %v5497 = vld [vmem:[%s3 + $0x10] sm:$0xf]
      %v5498 = vld [vmem:[%s3 + $0x14] sm:$0xf]
      %v5499 = vld [vmem:[%s3 + $0x18] sm:$0xf]
      %v5500 = vld [vmem:[%s3 + $0x1c] sm:$0xf]
      %v5501 = vld [vmem:[%s3 + $0x20] sm:$0xf]
      %v5502 = vld [vmem:[%s3 + $0x24] sm:$0xf]
      %v5503 = vld [vmem:[%s3 + $0x28] sm:$0xf]
      %v5504 = vld [vmem:[%s3 + $0x2c] sm:$0xf]
      %v5505 = vld [vmem:[%s3 + $0x30] sm:$0xf]
      %v5506 = vld [vmem:[%s3 + $0x34] sm:$0xf]
      %v5507 = vld [vmem:[%s3 + $0x38] sm:$0xf]
      %v5508 = vld [vmem:[%s3 + $0x3c] sm:$0xf]
      %v5509 = vld [vmem:[%s3 + $0x40] sm:$0xf]
      %v5510 = vld [vmem:[%s3 + $0x44] sm:$0xf]
      %v5511 = vld [vmem:[%s4] sm:$0x1]
      %v5513 = vlaneseq
      %v5514 = vshrl.u32 %v5513, 7
      %v5515 = vsub.s32 0, %v5514
      %v5516 = vrot.slane %v5511, %v5515
      %v5536 = vunpack.c.l.b16 %v5493
      %v5537 = vunpack.c.l.b16 %v5494
      %v5538 = vunpack.c.l.b16 %v5495
      %v5539 = vunpack.c.l.b16 %v5496
      %v5540 = vunpack.c.l.b16 %v5497
      %v5541 = vunpack.c.l.b16 %v5498
      %v5542 = vunpack.c.l.b16 %v5499
      %v5543 = vunpack.c.l.b16 %v5500
      %v5544 = vunpack.c.l.b16 %v5501
      %v5545 = vunpack.c.l.b16 %v5502
      %v5546 = vunpack.c.l.b16 %v5503
      %v5547 = vunpack.c.l.b16 %v5504
      %v5548 = vunpack.c.l.b16 %v5505
      %v5549 = vunpack.c.l.b16 %v5506
      %v5550 = vunpack.c.l.b16 %v5507
      %v5551 = vunpack.c.l.b16 %v5508
      %v5552 = vunpack.c.l.b16 %v5509
      %v5553 = vunpack.c.l.b16 %v5510
      %v5554 = vpack.c.b16 %v5537, %v5536
      %v5555 = vpack.c.b16 %v5539, %v5538
      %v5556 = vpack.c.b16 %v5541, %v5540
      %v5557 = vpack.c.b16 %v5543, %v5542
      %v5558 = vpack.c.b16 %v5545, %v5544
      %v5559 = vpack.c.b16 %v5547, %v5546
      %v5560 = vpack.c.b16 %v5549, %v5548
      %v5561 = vpack.c.b16 %v5551, %v5550
      %v5562 = vpack.c.b16 %v5553, %v5552
      %v5573 = vsel %vm378, %v5462, 0
      %v5576 = vsel %vm378, %v5464, 0
      %v5579 = vsel %vm378, %v5466, 0
      %v5582 = vsel %vm378, %v5468, 0
      %v5585 = vsel %vm378, %v5470, 0
      %v5588 = vsel %vm378, %v5472, 0
      %v5591 = vsel %vm378, %v5474, 0
      %v5594 = vsel %vm378, %v5476, 0
      %v5597 = vsel %vm378, %v5478, 0
      %v5600 = vsel %vm378, %v5480, 0
      %v5603 = vsel %vm378, %v5482, 0
      %v5606 = vsel %vm378, %v5484, 0
      %v5609 = vsel %vm378, %v5486, 0
      %v5612 = vsel %vm378, %v5488, 0
      %v5615 = vsel %vm378, %v5490, 0
      %v5618 = vsel %vm378, %v5492, 0
      %5620 = vmatprep.subr.bf16.mxu0 0
      %5621 = vmatpush1.bf16.msra.mxu0 %v5554
      %5622 = vmatprep.subr.bf16.mxu0 0
      %5623 = vmatpush1.bf16.msra.mxu0 %v5555
      %5624 = vmatprep.subr.bf16.mxu0 0
      %5625 = vmatpush1.bf16.msra.mxu0 %v5556
      %5626 = vmatprep.subr.bf16.mxu0 0
      %5627 = vmatpush1.bf16.msra.mxu0 %v5557
      %5628 = vmatprep.subr.bf16.mxu0 0
      %5629 = vmatpush1.bf16.msra.mxu0 %v5558
      %5630 = vmatprep.subr.bf16.mxu0 0
      %5631 = vmatpush1.bf16.msra.mxu0 %v5559
      %5632 = vmatprep.subr.bf16.mxu0 0
      %5633 = vmatpush1.bf16.msra.mxu0 %v5560
      %5634 = vmatprep.subr.bf16.mxu0 0
      %5635 = vmatpush1.bf16.msra.mxu0 %v5561
      %5636 = vmatprep.subr.bf16.mxu0 0
      %5637 = vmatpush1.bf16.msra.mxu0 %v5562
      %5638 = vmatprep.subr.bf16.mxu0 0
      %5639 = vmatpush1.bf16.msra.mxu0 0
      %5640 = vmatprep.subr.bf16.mxu0 0
      %5641 = vmatpush1.bf16.msra.mxu0 0
      %5642 = vmatprep.subr.bf16.mxu0 0
      %5643 = vmatpush1.bf16.msra.mxu0 0
      %5644 = vmatprep.subr.bf16.mxu0 0
      %5645 = vmatpush1.bf16.msra.mxu0 0
      %5646 = vmatprep.subr.bf16.mxu0 0
      %5647 = vmatpush1.bf16.msra.mxu0 0
      %5648 = vmatprep.subr.bf16.mxu0 0
      %5649 = vmatpush1.bf16.msra.mxu0 0
      %5650 = vmatprep.subr.bf16.mxu0 0
      %5651 = vmatpush1.bf16.msra.mxu0 0
      %5652 = vmatprep.mubr.bf16.mxu0 %v5573
      %5653 = vmatmul.mubr.bf16.gmra.mrb[0].mxu0 %v5461
      %v5654 = vpop.f32.mrb[0].mxu0
      %v5655 = vadd.f32 %v5516, %v5654
      %v5656 = vpop.f32.mrb[0].mxu0
      %v5657 = vpop.f32.mrb[0].mxu0
      %v5658 = vadd.f32 %v5516, %v5657
      %v5659 = vpop.f32.mrb[0].mxu0
      %5660 = vmatprep.mubr.bf16.mxu0 %v5576
      %5661 = vmatmul.mubr.bf16.gmra.mrb[0].mxu0 %v5463
      %v5662 = vpop.f32.mrb[0].mxu0
      %v5663 = vadd.f32 %v5516, %v5662
      %v5664 = vpop.f32.mrb[0].mxu0
      %v5665 = vpop.f32.mrb[0].mxu0
      %v5666 = vadd.f32 %v5516, %v5665
      %v5667 = vpop.f32.mrb[0].mxu0
      %5668 = vmatprep.mubr.bf16.mxu0 %v5579
      %5669 = vmatmul.mubr.bf16.gmra.mrb[0].mxu0 %v5465
      %v5670 = vpop.f32.mrb[0].mxu0
      %v5671 = vadd.f32 %v5516, %v5670
      %v5672 = vpop.f32.mrb[0].mxu0
      %v5673 = vpop.f32.mrb[0].mxu0
      %v5674 = vadd.f32 %v5516, %v5673
      %v5675 = vpop.f32.mrb[0].mxu0
      %5676 = vmatprep.mubr.bf16.mxu0 %v5582
      %5677 = vmatmul.mubr.bf16.gmra.mrb[0].mxu0 %v5467
      %v5678 = vpop.f32.mrb[0].mxu0
      %v5679 = vadd.f32 %v5516, %v5678
      %v5680 = vpop.f32.mrb[0].mxu0
      %v5681 = vpop.f32.mrb[0].mxu0
      %v5682 = vadd.f32 %v5516, %v5681
      %v5683 = vpop.f32.mrb[0].mxu0
      %5684 = vmatprep.mubr.bf16.mxu0 %v5585
      %5685 = vmatmul.mubr.bf16.gmra.mrb[0].mxu0 %v5469
      %v5686 = vpop.f32.mrb[0].mxu0
      %v5687 = vadd.f32 %v5516, %v5686
      %v5688 = vpop.f32.mrb[0].mxu0
      %v5689 = vpop.f32.mrb[0].mxu0
      %v5690 = vadd.f32 %v5516, %v5689
      %v5691 = vpop.f32.mrb[0].mxu0
      %5692 = vmatprep.mubr.bf16.mxu0 %v5588
      %5693 = vmatmul.mubr.bf16.gmra.mrb[0].mxu0 %v5471
      %v5694 = vpop.f32.mrb[0].mxu0
      %v5695 = vadd.f32 %v5516, %v5694
      %v5696 = vpop.f32.mrb[0].mxu0
      %v5697 = vpop.f32.mrb[0].mxu0
      %v5698 = vadd.f32 %v5516, %v5697
      %v5699 = vpop.f32.mrb[0].mxu0
      %5700 = vmatprep.mubr.bf16.mxu0 %v5591
      %5701 = vmatmul.mubr.bf16.gmra.mrb[0].mxu0 %v5473
      %v5702 = vpop.f32.mrb[0].mxu0
      %v5703 = vadd.f32 %v5516, %v5702
      %v5704 = vpop.f32.mrb[0].mxu0
      %v5705 = vpop.f32.mrb[0].mxu0
      %v5706 = vadd.f32 %v5516, %v5705
      %v5707 = vpop.f32.mrb[0].mxu0
      %5708 = vmatprep.mubr.bf16.mxu0 %v5594
      %5709 = vmatmul.mubr.bf16.gmra.mrb[0].mxu0 %v5475
      %v5710 = vpop.f32.mrb[0].mxu0
      %v5711 = vadd.f32 %v5516, %v5710
      %v5712 = vpop.f32.mrb[0].mxu0
      %v5713 = vpop.f32.mrb[0].mxu0
      %v5714 = vadd.f32 %v5516, %v5713
      %v5715 = vpop.f32.mrb[0].mxu0
      %5716 = vmatprep.mubr.bf16.mxu0 %v5597
      %5717 = vmatmul.mubr.bf16.gmra.mrb[0].mxu0 %v5477
      %v5718 = vpop.f32.mrb[0].mxu0
      %v5719 = vadd.f32 %v5516, %v5718
      %v5720 = vpop.f32.mrb[0].mxu0
      %v5721 = vpop.f32.mrb[0].mxu0
      %v5722 = vadd.f32 %v5516, %v5721
      %v5723 = vpop.f32.mrb[0].mxu0
      %5724 = vmatprep.mubr.bf16.mxu0 %v5600
      %5725 = vmatmul.mubr.bf16.gmra.mrb[0].mxu0 %v5479
      %v5726 = vpop.f32.mrb[0].mxu0
      %v5727 = vadd.f32 %v5516, %v5726
      %v5728 = vpop.f32.mrb[0].mxu0
      %v5729 = vpop.f32.mrb[0].mxu0
      %v5730 = vadd.f32 %v5516, %v5729
      %v5731 = vpop.f32.mrb[0].mxu0
      %5732 = vmatprep.mubr.bf16.mxu0 %v5603
      %5733 = vmatmul.mubr.bf16.gmra.mrb[0].mxu0 %v5481
      %v5734 = vpop.f32.mrb[0].mxu0
      %v5735 = vadd.f32 %v5516, %v5734
      %v5736 = vpop.f32.mrb[0].mxu0
      %v5737 = vpop.f32.mrb[0].mxu0
      %v5738 = vadd.f32 %v5516, %v5737
      %v5739 = vpop.f32.mrb[0].mxu0
      %5740 = vmatprep.mubr.bf16.mxu0 %v5606
      %5741 = vmatmul.mubr.bf16.gmra.mrb[0].mxu0 %v5483
      %v5742 = vpop.f32.mrb[0].mxu0
      %v5743 = vadd.f32 %v5516, %v5742
      %v5744 = vpop.f32.mrb[0].mxu0
      %v5745 = vpop.f32.mrb[0].mxu0
      %v5746 = vadd.f32 %v5516, %v5745
      %v5747 = vpop.f32.mrb[0].mxu0
      %5748 = vmatprep.mubr.bf16.mxu0 %v5609
      %5749 = vmatmul.mubr.bf16.gmra.mrb[0].mxu0 %v5485
      %v5750 = vpop.f32.mrb[0].mxu0
      %v5751 = vadd.f32 %v5516, %v5750
      %v5752 = vpop.f32.mrb[0].mxu0
      %v5753 = vpop.f32.mrb[0].mxu0
      %v5754 = vadd.f32 %v5516, %v5753
      %v5755 = vpop.f32.mrb[0].mxu0
      %5756 = vmatprep.mubr.bf16.mxu0 %v5612
      %5757 = vmatmul.mubr.bf16.gmra.mrb[0].mxu0 %v5487
      %v5758 = vpop.f32.mrb[0].mxu0
      %v5759 = vadd.f32 %v5516, %v5758
      %v5760 = vpop.f32.mrb[0].mxu0
      %v5761 = vpop.f32.mrb[0].mxu0
      %v5762 = vadd.f32 %v5516, %v5761
      %v5763 = vpop.f32.mrb[0].mxu0
      %5764 = vmatprep.mubr.bf16.mxu0 %v5615
      %5765 = vmatmul.mubr.bf16.gmra.mrb[0].mxu0 %v5489
      %v5766 = vpop.f32.mrb[0].mxu0
      %v5767 = vadd.f32 %v5516, %v5766
      %v5768 = vpop.f32.mrb[0].mxu0
      %v5769 = vpop.f32.mrb[0].mxu0
      %v5770 = vadd.f32 %v5516, %v5769
      %v5771 = vpop.f32.mrb[0].mxu0
      %5772 = vmatprep.mubr.bf16.mxu0 %v5618
      %5773 = vmatmul.mubr.bf16.gmra.mrb[0].mxu0 %v5491
      %v5774 = vpop.f32.mrb[0].mxu0
      %v5775 = vadd.f32 %v5516, %v5774
      %v5776 = vpop.f32.mrb[0].mxu0
      %v5777 = vpop.f32.mrb[0].mxu0
      %v5778 = vadd.f32 %v5516, %v5777
      %v5779 = vpop.f32.mrb[0].mxu0
      %5780 = vdwg.mxu0
      %v5781 = vmax.f32 %v5655, 0.0
      %v5782 = vmax.f32 %v5658, 0.0
      %v5783 = vmax.f32 %v5663, 0.0
      %v5784 = vmax.f32 %v5666, 0.0
      %v5785 = vmax.f32 %v5671, 0.0
      %v5786 = vmax.f32 %v5674, 0.0
      %v5787 = vmax.f32 %v5679, 0.0
      %v5788 = vmax.f32 %v5682, 0.0
      %v5789 = vmax.f32 %v5687, 0.0
      %v5790 = vmax.f32 %v5690, 0.0
      %v5791 = vmax.f32 %v5695, 0.0
      %v5792 = vmax.f32 %v5698, 0.0
      %v5793 = vmax.f32 %v5703, 0.0
      %v5794 = vmax.f32 %v5706, 0.0
      %v5795 = vmax.f32 %v5711, 0.0
      %v5796 = vmax.f32 %v5714, 0.0
      %v5797 = vmax.f32 %v5719, 0.0
      %v5798 = vmax.f32 %v5722, 0.0
      %v5799 = vmax.f32 %v5727, 0.0
      %v5800 = vmax.f32 %v5730, 0.0
      %v5801 = vmax.f32 %v5735, 0.0
      %v5802 = vmax.f32 %v5738, 0.0
      %v5803 = vmax.f32 %v5743, 0.0
      %v5804 = vmax.f32 %v5746, 0.0
      %v5805 = vmax.f32 %v5751, 0.0
      %v5806 = vmax.f32 %v5754, 0.0
      %v5807 = vmax.f32 %v5759, 0.0
      %v5808 = vmax.f32 %v5762, 0.0
      %v5809 = vmax.f32 %v5767, 0.0
      %v5810 = vmax.f32 %v5770, 0.0
      %v5811 = vmax.f32 %v5775, 0.0
      %v5812 = vmax.f32 %v5778, 0.0
      %v5813 = vpack.c.bf16 %v5782, %v5781
      %v5814 = vpack.c.bf16 %v5784, %v5783
      %v5815 = vpack.c.bf16 %v5786, %v5785
      %v5816 = vpack.c.bf16 %v5788, %v5787
      %v5817 = vpack.c.bf16 %v5790, %v5789
      %v5818 = vpack.c.bf16 %v5792, %v5791
      %v5819 = vpack.c.bf16 %v5794, %v5793
      %v5820 = vpack.c.bf16 %v5796, %v5795
      %v5821 = vpack.c.bf16 %v5798, %v5797
      %v5822 = vpack.c.bf16 %v5800, %v5799
      %v5823 = vpack.c.bf16 %v5802, %v5801
      %v5824 = vpack.c.bf16 %v5804, %v5803
      %v5825 = vpack.c.bf16 %v5806, %v5805
      %v5826 = vpack.c.bf16 %v5808, %v5807
      %v5827 = vpack.c.bf16 %v5810, %v5809
      %v5828 = vpack.c.bf16 %v5812, %v5811
      %5829 = vst.msk [vmem:[%s511 + $0x8] sm:$0xff] %vm496, %v5813
      %5830 = vst.msk [vmem:[%s511 + $0x20] sm:$0xff] %vm496, %v5814
      %5831 = vst.msk [vmem:[%s511 + $0x38] sm:$0xff] %vm496, %v5815
      %5832 = vst.msk [vmem:[%s511 + $0x50] sm:$0xff] %vm496, %v5816
      %5833 = vst.msk [vmem:[%s511 + $0x68] sm:$0xff] %vm496, %v5817
      %5834 = vst.msk [vmem:[%s511 + $0x80] sm:$0xff] %vm496, %v5818
      %5835 = vst.msk [vmem:[%s511 + $0x98] sm:$0xff] %vm496, %v5819
      %5836 = vst.msk [vmem:[%s511 + $0xb0] sm:$0xff] %vm496, %v5820
      %5837 = vst.msk [vmem:[%s511 + $0xc8] sm:$0xff] %vm496, %v5821
      %5838 = vst.msk [vmem:[%s511 + $0xe0] sm:$0xff] %vm496, %v5822
      %5839 = vst.msk [vmem:[%s511 + $0xf8] sm:$0xff] %vm496, %v5823
      %5840 = vst.msk [vmem:[%s511 + $0x110] sm:$0xff] %vm496, %v5824
      %5841 = vst.msk [vmem:[%s511 + $0x128] sm:$0xff] %vm496, %v5825
      %5842 = vst.msk [vmem:[%s511 + $0x140] sm:$0xff] %vm496, %v5826
      %5843 = vst.msk [vmem:[%s511 + $0x158] sm:$0xff] %vm496, %v5827
      %5844 = vst.msk [vmem:[%s511 + $0x170] sm:$0xff] %vm496, %v5828
      // Predicated region
      $region65: #{jcnn_forward.1} parent=55 // pred_check
        %p5845 = pneg %p370
      $region66: #{jcnn_forward.1} parent=55 // pred_check_branch
        %5847 = sbr.rel (%p5845) target = $region68
      $region67: #{jcnn_forward.1} parent=55 // pred_region
        %5848 = vst.msk [vmem:[%s511 + $0x8] sm:$0xff] %vm496, 0
        %5849 = vst.msk [vmem:[%s511 + $0x20] sm:$0xff] %vm496, 0
        %5850 = vst.msk [vmem:[%s511 + $0x38] sm:$0xff] %vm496, 0
        %5851 = vst.msk [vmem:[%s511 + $0x50] sm:$0xff] %vm496, 0
      $region68: #{jcnn_forward.1} parent=55 // pred_fallthru
        _
      // Predicated region
      $region69: #{jcnn_forward.1} parent=55 // pred_check
        %p5852 = pneg %p371
      $region70: #{jcnn_forward.1} parent=55 // pred_check_branch
        %5854 = sbr.rel (%p5852) target = $region72
      $region71: #{jcnn_forward.1} parent=55 // pred_region
        %s5855 = scalar_lea.vmem [#allocation3], 312
        %5856 = vst.msk [vmem:[%s5855 + $0x8] sm:$0xff] %vm496, 0
        %5857 = vst.msk [vmem:[%s5855 + $0x20] sm:$0xff] %vm496, 0
        %5858 = vst.msk [vmem:[%s5855 + $0x38] sm:$0xff] %vm496, 0
        %5859 = vst.msk [vmem:[%s5855 + $0x50] sm:$0xff] %vm496, 0
      $region72: #{jcnn_forward.1} parent=55 // pred_fallthru
        _
      %v5860 = vld [vmem:[#allocation3] sm:$0x80]
      %v5861 = vld [vmem:[#allocation3 + $0x8] sm:$0xff]
      %v5862 = vld [vmem:[#allocation3 + $0x18] sm:$0x80]
      %v5863 = vld [vmem:[#allocation3 + $0x20] sm:$0xff]
      %v5864 = vld [vmem:[#allocation3 + $0x30] sm:$0x80]
      %v5865 = vld [vmem:[#allocation3 + $0x38] sm:$0xff]
      %v5866 = vld [vmem:[#allocation3 + $0x48] sm:$0x80]
      %v5867 = vld [vmem:[#allocation3 + $0x50] sm:$0xff]
      %v5868 = vld [vmem:[#allocation3 + $0x60] sm:$0x80]
      %v5869 = vld [vmem:[#allocation3 + $0x68] sm:$0xff]
      %v5870 = vld [vmem:[#allocation3 + $0x78] sm:$0x80]
      %v5871 = vld [vmem:[#allocation3 + $0x80] sm:$0xff]
      %v5872 = vld [vmem:[#allocation3 + $0x90] sm:$0x80]
      %v5873 = vld [vmem:[#allocation3 + $0x98] sm:$0xff]
      %v5874 = vld [vmem:[#allocation3 + $0xa8] sm:$0x80]
      %v5875 = vld [vmem:[#allocation3 + $0xb0] sm:$0xff]
      %v5876 = vld [vmem:[#allocation3 + $0xc0] sm:$0x80]
      %v5877 = vld [vmem:[#allocation3 + $0xc8] sm:$0xff]
      %v5878 = vld [vmem:[#allocation3 + $0xd8] sm:$0x80]
      %v5879 = vld [vmem:[#allocation3 + $0xe0] sm:$0xff]
      %v5880 = vld [vmem:[#allocation3 + $0xf0] sm:$0x80]
      %v5881 = vld [vmem:[#allocation3 + $0xf8] sm:$0xff]
      %v5882 = vld [vmem:[#allocation3 + $0x108] sm:$0x80]
      %v5883 = vld [vmem:[#allocation3 + $0x110] sm:$0xff]
      %v5884 = vld [vmem:[#allocation3 + $0x120] sm:$0x80]
      %v5885 = vld [vmem:[#allocation3 + $0x128] sm:$0xff]
      %v5886 = vld [vmem:[#allocation3 + $0x138] sm:$0x80]
      %v5887 = vld [vmem:[#allocation3 + $0x140] sm:$0xff]
      %v5888 = vld [vmem:[#allocation3 + $0x150] sm:$0x80]
      %v5889 = vld [vmem:[#allocation3 + $0x158] sm:$0xff]
      %v5890 = vld [vmem:[#allocation3 + $0x168] sm:$0x80]
      %v5891 = vld [vmem:[#allocation3 + $0x170] sm:$0xff]
      %v5893 = vshrl.u32 %v5860, 16
      %v5895 = vrot.slane %v5893, 7
      %v5897 = vshrl.u32 %v5861, 16
      %v5899 = vrot.slane %v5897, 7
      %v5900 = vshll.u32 %v5861, 16
      %v5902 = vor.u32 %v5899, %v5900
      %v5903 = vsel %vm381, %v5895, %v5902
      %v5905 = vshrl.u32 %v5862, 16
      %v5907 = vrot.slane %v5905, 7
      %v5909 = vshrl.u32 %v5863, 16
      %v5911 = vrot.slane %v5909, 7
      %v5912 = vshll.u32 %v5863, 16
      %v5914 = vor.u32 %v5911, %v5912
      %v5915 = vsel %vm381, %v5907, %v5914
      %v5917 = vshrl.u32 %v5864, 16
      %v5919 = vrot.slane %v5917, 7
      %v5921 = vshrl.u32 %v5865, 16
      %v5923 = vrot.slane %v5921, 7
      %v5924 = vshll.u32 %v5865, 16
      %v5926 = vor.u32 %v5923, %v5924
      %v5927 = vsel %vm381, %v5919, %v5926
      %v5929 = vshrl.u32 %v5866, 16
      %v5931 = vrot.slane %v5929, 7
      %v5933 = vshrl.u32 %v5867, 16
      %v5935 = vrot.slane %v5933, 7
      %v5936 = vshll.u32 %v5867, 16
      %v5938 = vor.u32 %v5935, %v5936
      %v5939 = vsel %vm381, %v5931, %v5938
      %v5941 = vshrl.u32 %v5868, 16
      %v5943 = vrot.slane %v5941, 7
      %v5945 = vshrl.u32 %v5869, 16
      %v5947 = vrot.slane %v5945, 7
      %v5948 = vshll.u32 %v5869, 16
      %v5950 = vor.u32 %v5947, %v5948
      %v5951 = vsel %vm381, %v5943, %v5950
      %v5953 = vshrl.u32 %v5870, 16
      %v5955 = vrot.slane %v5953, 7
      %v5957 = vshrl.u32 %v5871, 16
      %v5959 = vrot.slane %v5957, 7
      %v5960 = vshll.u32 %v5871, 16
      %v5962 = vor.u32 %v5959, %v5960
      %v5963 = vsel %vm381, %v5955, %v5962
      %v5965 = vshrl.u32 %v5872, 16
      %v5967 = vrot.slane %v5965, 7
      %v5969 = vshrl.u32 %v5873, 16
      %v5971 = vrot.slane %v5969, 7
      %v5972 = vshll.u32 %v5873, 16
      %v5974 = vor.u32 %v5971, %v5972
      %v5975 = vsel %vm381, %v5967, %v5974
      %v5977 = vshrl.u32 %v5874, 16
      %v5979 = vrot.slane %v5977, 7
      %v5981 = vshrl.u32 %v5875, 16
      %v5983 = vrot.slane %v5981, 7
      %v5984 = vshll.u32 %v5875, 16
      %v5986 = vor.u32 %v5983, %v5984
      %v5987 = vsel %vm381, %v5979, %v5986
      %v5989 = vshrl.u32 %v5876, 16
      %v5991 = vrot.slane %v5989, 7
      %v5993 = vshrl.u32 %v5877, 16
      %v5995 = vrot.slane %v5993, 7
      %v5996 = vshll.u32 %v5877, 16
      %v5998 = vor.u32 %v5995, %v5996
      %v5999 = vsel %vm381, %v5991, %v5998
      %v6001 = vshrl.u32 %v5878, 16
      %v6003 = vrot.slane %v6001, 7
      %v6005 = vshrl.u32 %v5879, 16
      %v6007 = vrot.slane %v6005, 7
      %v6008 = vshll.u32 %v5879, 16
      %v6010 = vor.u32 %v6007, %v6008
      %v6011 = vsel %vm381, %v6003, %v6010
      %v6013 = vshrl.u32 %v5880, 16
      %v6015 = vrot.slane %v6013, 7
      %v6017 = vshrl.u32 %v5881, 16
      %v6019 = vrot.slane %v6017, 7
      %v6020 = vshll.u32 %v5881, 16
      %v6022 = vor.u32 %v6019, %v6020
      %v6023 = vsel %vm381, %v6015, %v6022
      %v6025 = vshrl.u32 %v5882, 16
      %v6027 = vrot.slane %v6025, 7
      %v6029 = vshrl.u32 %v5883, 16
      %v6031 = vrot.slane %v6029, 7
      %v6032 = vshll.u32 %v5883, 16
      %v6034 = vor.u32 %v6031, %v6032
      %v6035 = vsel %vm381, %v6027, %v6034
      %v6037 = vshrl.u32 %v5884, 16
      %v6039 = vrot.slane %v6037, 7
      %v6041 = vshrl.u32 %v5885, 16
      %v6043 = vrot.slane %v6041, 7
      %v6044 = vshll.u32 %v5885, 16
      %v6046 = vor.u32 %v6043, %v6044
      %v6047 = vsel %vm381, %v6039, %v6046
      %v6049 = vshrl.u32 %v5886, 16
      %v6051 = vrot.slane %v6049, 7
      %v6053 = vshrl.u32 %v5887, 16
      %v6055 = vrot.slane %v6053, 7
      %v6056 = vshll.u32 %v5887, 16
      %v6058 = vor.u32 %v6055, %v6056
      %v6059 = vsel %vm381, %v6051, %v6058
      %v6061 = vshrl.u32 %v5888, 16
      %v6063 = vrot.slane %v6061, 7
      %v6065 = vshrl.u32 %v5889, 16
      %v6067 = vrot.slane %v6065, 7
      %v6068 = vshll.u32 %v5889, 16
      %v6070 = vor.u32 %v6067, %v6068
      %v6071 = vsel %vm381, %v6063, %v6070
      %v6073 = vshrl.u32 %v5890, 16
      %v6075 = vrot.slane %v6073, 7
      %v6077 = vshrl.u32 %v5891, 16
      %v6079 = vrot.slane %v6077, 7
      %v6080 = vshll.u32 %v5891, 16
      %v6082 = vor.u32 %v6079, %v6080
      %v6083 = vsel %vm381, %v6075, %v6082
      %v6084 = vld [vmem:[#allocation3 + $0x10] sm:$0x1]
      %v6085 = vld [vmem:[#allocation3 + $0x28] sm:$0x1]
      %v6086 = vld [vmem:[#allocation3 + $0x40] sm:$0x1]
      %v6087 = vld [vmem:[#allocation3 + $0x58] sm:$0x1]
      %v6088 = vld [vmem:[#allocation3 + $0x70] sm:$0x1]
      %v6089 = vld [vmem:[#allocation3 + $0x88] sm:$0x1]
      %v6090 = vld [vmem:[#allocation3 + $0xa0] sm:$0x1]
      %v6091 = vld [vmem:[#allocation3 + $0xb8] sm:$0x1]
      %v6092 = vld [vmem:[#allocation3 + $0xd0] sm:$0x1]
      %v6093 = vld [vmem:[#allocation3 + $0xe8] sm:$0x1]
      %v6094 = vld [vmem:[#allocation3 + $0x100] sm:$0x1]
      %v6095 = vld [vmem:[#allocation3 + $0x118] sm:$0x1]
      %v6096 = vld [vmem:[#allocation3 + $0x130] sm:$0x1]
      %v6097 = vld [vmem:[#allocation3 + $0x148] sm:$0x1]
      %v6098 = vld [vmem:[#allocation3 + $0x160] sm:$0x1]
      %v6099 = vld [vmem:[#allocation3 + $0x178] sm:$0x1]
      %v6100 = vrot.slane %v5900, 1
      %v6101 = vor.u32 %v5897, %v6100
      %v6103 = vshll.u32 %v6084, 16
      %v6105 = vrot.slane %v6103, 1
      %v6106 = vsel %vm4062, %v6101, %v6105
      %v6107 = vrot.slane %v5912, 1
      %v6108 = vor.u32 %v5909, %v6107
      %v6110 = vshll.u32 %v6085, 16
      %v6112 = vrot.slane %v6110, 1
      %v6113 = vsel %vm4062, %v6108, %v6112
      %v6114 = vrot.slane %v5924, 1
      %v6115 = vor.u32 %v5921, %v6114
      %v6117 = vshll.u32 %v6086, 16
      %v6119 = vrot.slane %v6117, 1
      %v6120 = vsel %vm4062, %v6115, %v6119
      %v6121 = vrot.slane %v5936, 1
      %v6122 = vor.u32 %v5933, %v6121
      %v6124 = vshll.u32 %v6087, 16
      %v6126 = vrot.slane %v6124, 1
      %v6127 = vsel %vm4062, %v6122, %v6126
      %v6128 = vrot.slane %v5948, 1
      %v6129 = vor.u32 %v5945, %v6128
      %v6131 = vshll.u32 %v6088, 16
      %v6133 = vrot.slane %v6131, 1
      %v6134 = vsel %vm4062, %v6129, %v6133
      %v6135 = vrot.slane %v5960, 1
      %v6136 = vor.u32 %v5957, %v6135
      %v6138 = vshll.u32 %v6089, 16
      %v6140 = vrot.slane %v6138, 1
      %v6141 = vsel %vm4062, %v6136, %v6140
      %v6142 = vrot.slane %v5972, 1
      %v6143 = vor.u32 %v5969, %v6142
      %v6145 = vshll.u32 %v6090, 16
      %v6147 = vrot.slane %v6145, 1
      %v6148 = vsel %vm4062, %v6143, %v6147
      %v6149 = vrot.slane %v5984, 1
      %v6150 = vor.u32 %v5981, %v6149
      %v6152 = vshll.u32 %v6091, 16
      %v6154 = vrot.slane %v6152, 1
      %v6155 = vsel %vm4062, %v6150, %v6154
      %v6156 = vrot.slane %v5996, 1
      %v6157 = vor.u32 %v5993, %v6156
      %v6159 = vshll.u32 %v6092, 16
      %v6161 = vrot.slane %v6159, 1
      %v6162 = vsel %vm4062, %v6157, %v6161
      %v6163 = vrot.slane %v6008, 1
      %v6164 = vor.u32 %v6005, %v6163
      %v6166 = vshll.u32 %v6093, 16
      %v6168 = vrot.slane %v6166, 1
      %v6169 = vsel %vm4062, %v6164, %v6168
      %v6170 = vrot.slane %v6020, 1
      %v6171 = vor.u32 %v6017, %v6170
      %v6173 = vshll.u32 %v6094, 16
      %v6175 = vrot.slane %v6173, 1
      %v6176 = vsel %vm4062, %v6171, %v6175
      %v6177 = vrot.slane %v6032, 1
      %v6178 = vor.u32 %v6029, %v6177
      %v6180 = vshll.u32 %v6095, 16
      %v6182 = vrot.slane %v6180, 1
      %v6183 = vsel %vm4062, %v6178, %v6182
      %v6184 = vrot.slane %v6044, 1
      %v6185 = vor.u32 %v6041, %v6184
      %v6187 = vshll.u32 %v6096, 16
      %v6189 = vrot.slane %v6187, 1
      %v6190 = vsel %vm4062, %v6185, %v6189
      %v6191 = vrot.slane %v6056, 1
      %v6192 = vor.u32 %v6053, %v6191
      %v6194 = vshll.u32 %v6097, 16
      %v6196 = vrot.slane %v6194, 1
      %v6197 = vsel %vm4062, %v6192, %v6196
      %v6198 = vrot.slane %v6068, 1
      %v6199 = vor.u32 %v6065, %v6198
      %v6201 = vshll.u32 %v6098, 16
      %v6203 = vrot.slane %v6201, 1
      %v6204 = vsel %vm4062, %v6199, %v6203
      %v6205 = vrot.slane %v6080, 1
      %v6206 = vor.u32 %v6077, %v6205
      %v6208 = vshll.u32 %v6099, 16
      %v6210 = vrot.slane %v6208, 1
      %v6211 = vsel %vm4062, %v6206, %v6210
      %v6212 = vld [vmem:[%s511] sm:$0x80]
      %v6213 = vld [vmem:[%s511 + $0x8] sm:$0xff]
      %v6214 = vld [vmem:[%s511 + $0x18] sm:$0x80]
      %v6215 = vld [vmem:[%s511 + $0x20] sm:$0xff]
      %v6216 = vld [vmem:[%s511 + $0x30] sm:$0x80]
      %v6217 = vld [vmem:[%s511 + $0x38] sm:$0xff]
      %v6218 = vld [vmem:[%s511 + $0x48] sm:$0x80]
      %v6219 = vld [vmem:[%s511 + $0x50] sm:$0xff]
      %v6220 = vld [vmem:[%s511 + $0x60] sm:$0x80]
      %v6221 = vld [vmem:[%s511 + $0x68] sm:$0xff]
      %v6222 = vld [vmem:[%s511 + $0x78] sm:$0x80]
      %v6223 = vld [vmem:[%s511 + $0x80] sm:$0xff]
      %v6224 = vld [vmem:[%s511 + $0x90] sm:$0x80]
      %v6225 = vld [vmem:[%s511 + $0x98] sm:$0xff]
      %v6226 = vld [vmem:[%s511 + $0xa8] sm:$0x80]
      %v6227 = vld [vmem:[%s511 + $0xb0] sm:$0xff]
      %v6228 = vld [vmem:[%s511 + $0xc0] sm:$0x80]
      %v6229 = vld [vmem:[%s511 + $0xc8] sm:$0xff]
      %v6230 = vld [vmem:[%s511 + $0xd8] sm:$0x80]
      %v6231 = vld [vmem:[%s511 + $0xe0] sm:$0xff]
      %v6232 = vld [vmem:[%s511 + $0xf0] sm:$0x80]
      %v6233 = vld [vmem:[%s511 + $0xf8] sm:$0xff]
      %v6234 = vld [vmem:[%s511 + $0x108] sm:$0x80]
      %v6235 = vld [vmem:[%s511 + $0x110] sm:$0xff]
      %v6236 = vld [vmem:[%s511 + $0x120] sm:$0x80]
      %v6237 = vld [vmem:[%s511 + $0x128] sm:$0xff]
      %v6238 = vld [vmem:[%s511 + $0x138] sm:$0x80]
      %v6239 = vld [vmem:[%s511 + $0x140] sm:$0xff]
      %v6240 = vld [vmem:[%s511 + $0x150] sm:$0x80]
      %v6241 = vld [vmem:[%s511 + $0x158] sm:$0xff]
      %v6242 = vld [vmem:[%s511 + $0x168] sm:$0x80]
      %v6243 = vld [vmem:[%s511 + $0x170] sm:$0xff]
      %v6245 = vshrl.u32 %v6212, 16
      %v6247 = vrot.slane %v6245, 7
      %v6249 = vshrl.u32 %v6213, 16
      %v6251 = vrot.slane %v6249, 7
      %v6252 = vshll.u32 %v6213, 16
      %v6254 = vor.u32 %v6251, %v6252
      %v6255 = vsel %vm381, %v6247, %v6254
      %v6257 = vshrl.u32 %v6214, 16
      %v6259 = vrot.slane %v6257, 7
      %v6261 = vshrl.u32 %v6215, 16
      %v6263 = vrot.slane %v6261, 7
      %v6264 = vshll.u32 %v6215, 16
      %v6266 = vor.u32 %v6263, %v6264
      %v6267 = vsel %vm381, %v6259, %v6266
      %v6269 = vshrl.u32 %v6216, 16
      %v6271 = vrot.slane %v6269, 7
      %v6273 = vshrl.u32 %v6217, 16
      %v6275 = vrot.slane %v6273, 7
      %v6276 = vshll.u32 %v6217, 16
      %v6278 = vor.u32 %v6275, %v6276
      %v6279 = vsel %vm381, %v6271, %v6278
      %v6281 = vshrl.u32 %v6218, 16
      %v6283 = vrot.slane %v6281, 7
      %v6285 = vshrl.u32 %v6219, 16
      %v6287 = vrot.slane %v6285, 7
      %v6288 = vshll.u32 %v6219, 16
      %v6290 = vor.u32 %v6287, %v6288
      %v6291 = vsel %vm381, %v6283, %v6290
      %v6293 = vshrl.u32 %v6220, 16
      %v6295 = vrot.slane %v6293, 7
      %v6297 = vshrl.u32 %v6221, 16
      %v6299 = vrot.slane %v6297, 7
      %v6300 = vshll.u32 %v6221, 16
      %v6302 = vor.u32 %v6299, %v6300
      %v6303 = vsel %vm381, %v6295, %v6302
      %v6305 = vshrl.u32 %v6222, 16
      %v6307 = vrot.slane %v6305, 7
      %v6309 = vshrl.u32 %v6223, 16
      %v6311 = vrot.slane %v6309, 7
      %v6312 = vshll.u32 %v6223, 16
      %v6314 = vor.u32 %v6311, %v6312
      %v6315 = vsel %vm381, %v6307, %v6314
      %v6317 = vshrl.u32 %v6224, 16
      %v6319 = vrot.slane %v6317, 7
      %v6321 = vshrl.u32 %v6225, 16
      %v6323 = vrot.slane %v6321, 7
      %v6324 = vshll.u32 %v6225, 16
      %v6326 = vor.u32 %v6323, %v6324
      %v6327 = vsel %vm381, %v6319, %v6326
      %v6329 = vshrl.u32 %v6226, 16
      %v6331 = vrot.slane %v6329, 7
      %v6333 = vshrl.u32 %v6227, 16
      %v6335 = vrot.slane %v6333, 7
      %v6336 = vshll.u32 %v6227, 16
      %v6338 = vor.u32 %v6335, %v6336
      %v6339 = vsel %vm381, %v6331, %v6338
      %v6341 = vshrl.u32 %v6228, 16
      %v6343 = vrot.slane %v6341, 7
      %v6345 = vshrl.u32 %v6229, 16
      %v6347 = vrot.slane %v6345, 7
      %v6348 = vshll.u32 %v6229, 16
      %v6350 = vor.u32 %v6347, %v6348
      %v6351 = vsel %vm381, %v6343, %v6350
      %v6353 = vshrl.u32 %v6230, 16
      %v6355 = vrot.slane %v6353, 7
      %v6357 = vshrl.u32 %v6231, 16
      %v6359 = vrot.slane %v6357, 7
      %v6360 = vshll.u32 %v6231, 16
      %v6362 = vor.u32 %v6359, %v6360
      %v6363 = vsel %vm381, %v6355, %v6362
      %v6365 = vshrl.u32 %v6232, 16
      %v6367 = vrot.slane %v6365, 7
      %v6369 = vshrl.u32 %v6233, 16
      %v6371 = vrot.slane %v6369, 7
      %v6372 = vshll.u32 %v6233, 16
      %v6374 = vor.u32 %v6371, %v6372
      %v6375 = vsel %vm381, %v6367, %v6374
      %v6377 = vshrl.u32 %v6234, 16
      %v6379 = vrot.slane %v6377, 7
      %v6381 = vshrl.u32 %v6235, 16
      %v6383 = vrot.slane %v6381, 7
      %v6384 = vshll.u32 %v6235, 16
      %v6386 = vor.u32 %v6383, %v6384
      %v6387 = vsel %vm381, %v6379, %v6386
      %v6389 = vshrl.u32 %v6236, 16
      %v6391 = vrot.slane %v6389, 7
      %v6393 = vshrl.u32 %v6237, 16
      %v6395 = vrot.slane %v6393, 7
      %v6396 = vshll.u32 %v6237, 16
      %v6398 = vor.u32 %v6395, %v6396
      %v6399 = vsel %vm381, %v6391, %v6398
      %v6401 = vshrl.u32 %v6238, 16
      %v6403 = vrot.slane %v6401, 7
      %v6405 = vshrl.u32 %v6239, 16
      %v6407 = vrot.slane %v6405, 7
      %v6408 = vshll.u32 %v6239, 16
      %v6410 = vor.u32 %v6407, %v6408
      %v6411 = vsel %vm381, %v6403, %v6410
      %v6413 = vshrl.u32 %v6240, 16
      %v6415 = vrot.slane %v6413, 7
      %v6417 = vshrl.u32 %v6241, 16
      %v6419 = vrot.slane %v6417, 7
      %v6420 = vshll.u32 %v6241, 16
      %v6422 = vor.u32 %v6419, %v6420
      %v6423 = vsel %vm381, %v6415, %v6422
      %v6425 = vshrl.u32 %v6242, 16
      %v6427 = vrot.slane %v6425, 7
      %v6429 = vshrl.u32 %v6243, 16
      %v6431 = vrot.slane %v6429, 7
      %v6432 = vshll.u32 %v6243, 16
      %v6434 = vor.u32 %v6431, %v6432
      %v6435 = vsel %vm381, %v6427, %v6434
      %v6436 = vld [vmem:[%s511 + $0x10] sm:$0x1]
      %v6437 = vld [vmem:[%s511 + $0x28] sm:$0x1]
      %v6438 = vld [vmem:[%s511 + $0x40] sm:$0x1]
      %v6439 = vld [vmem:[%s511 + $0x58] sm:$0x1]
      %v6440 = vld [vmem:[%s511 + $0x70] sm:$0x1]
      %v6441 = vld [vmem:[%s511 + $0x88] sm:$0x1]
      %v6442 = vld [vmem:[%s511 + $0xa0] sm:$0x1]
      %v6443 = vld [vmem:[%s511 + $0xb8] sm:$0x1]
      %v6444 = vld [vmem:[%s511 + $0xd0] sm:$0x1]
      %v6445 = vld [vmem:[%s511 + $0xe8] sm:$0x1]
      %v6446 = vld [vmem:[%s511 + $0x100] sm:$0x1]
      %v6447 = vld [vmem:[%s511 + $0x118] sm:$0x1]
      %v6448 = vld [vmem:[%s511 + $0x130] sm:$0x1]
      %v6449 = vld [vmem:[%s511 + $0x148] sm:$0x1]
      %v6450 = vld [vmem:[%s511 + $0x160] sm:$0x1]
      %v6451 = vld [vmem:[%s511 + $0x178] sm:$0x1]
      %v6452 = vrot.slane %v6252, 1
      %v6453 = vor.u32 %v6249, %v6452
      %v6455 = vshll.u32 %v6436, 16
      %v6457 = vrot.slane %v6455, 1
      %v6458 = vsel %vm4062, %v6453, %v6457
      %v6459 = vrot.slane %v6264, 1
      %v6460 = vor.u32 %v6261, %v6459
      %v6462 = vshll.u32 %v6437, 16
      %v6464 = vrot.slane %v6462, 1
      %v6465 = vsel %vm4062, %v6460, %v6464
      %v6466 = vrot.slane %v6276, 1
      %v6467 = vor.u32 %v6273, %v6466
      %v6469 = vshll.u32 %v6438, 16
      %v6471 = vrot.slane %v6469, 1
      %v6472 = vsel %vm4062, %v6467, %v6471
      %v6473 = vrot.slane %v6288, 1
      %v6474 = vor.u32 %v6285, %v6473
      %v6476 = vshll.u32 %v6439, 16
      %v6478 = vrot.slane %v6476, 1
      %v6479 = vsel %vm4062, %v6474, %v6478
      %v6480 = vrot.slane %v6300, 1
      %v6481 = vor.u32 %v6297, %v6480
      %v6483 = vshll.u32 %v6440, 16
      %v6485 = vrot.slane %v6483, 1
      %v6486 = vsel %vm4062, %v6481, %v6485
      %v6487 = vrot.slane %v6312, 1
      %v6488 = vor.u32 %v6309, %v6487
      %v6490 = vshll.u32 %v6441, 16
      %v6492 = vrot.slane %v6490, 1
      %v6493 = vsel %vm4062, %v6488, %v6492
      %v6494 = vrot.slane %v6324, 1
      %v6495 = vor.u32 %v6321, %v6494
      %v6497 = vshll.u32 %v6442, 16
      %v6499 = vrot.slane %v6497, 1
      %v6500 = vsel %vm4062, %v6495, %v6499
      %v6501 = vrot.slane %v6336, 1
      %v6502 = vor.u32 %v6333, %v6501
      %v6504 = vshll.u32 %v6443, 16
      %v6506 = vrot.slane %v6504, 1
      %v6507 = vsel %vm4062, %v6502, %v6506
      %v6508 = vrot.slane %v6348, 1
      %v6509 = vor.u32 %v6345, %v6508
      %v6511 = vshll.u32 %v6444, 16
      %v6513 = vrot.slane %v6511, 1
      %v6514 = vsel %vm4062, %v6509, %v6513
      %v6515 = vrot.slane %v6360, 1
      %v6516 = vor.u32 %v6357, %v6515
      %v6518 = vshll.u32 %v6445, 16
      %v6520 = vrot.slane %v6518, 1
      %v6521 = vsel %vm4062, %v6516, %v6520
      %v6522 = vrot.slane %v6372, 1
      %v6523 = vor.u32 %v6369, %v6522
      %v6525 = vshll.u32 %v6446, 16
      %v6527 = vrot.slane %v6525, 1
      %v6528 = vsel %vm4062, %v6523, %v6527
      %v6529 = vrot.slane %v6384, 1
      %v6530 = vor.u32 %v6381, %v6529
      %v6532 = vshll.u32 %v6447, 16
      %v6534 = vrot.slane %v6532, 1
      %v6535 = vsel %vm4062, %v6530, %v6534
      %v6536 = vrot.slane %v6396, 1
      %v6537 = vor.u32 %v6393, %v6536
      %v6539 = vshll.u32 %v6448, 16
      %v6541 = vrot.slane %v6539, 1
      %v6542 = vsel %vm4062, %v6537, %v6541
      %v6543 = vrot.slane %v6408, 1
      %v6544 = vor.u32 %v6405, %v6543
      %v6546 = vshll.u32 %v6449, 16
      %v6548 = vrot.slane %v6546, 1
      %v6549 = vsel %vm4062, %v6544, %v6548
      %v6550 = vrot.slane %v6420, 1
      %v6551 = vor.u32 %v6417, %v6550
      %v6553 = vshll.u32 %v6450, 16
      %v6555 = vrot.slane %v6553, 1
      %v6556 = vsel %vm4062, %v6551, %v6555
      %v6557 = vrot.slane %v6432, 1
      %v6558 = vor.u32 %v6429, %v6557
      %v6560 = vshll.u32 %v6451, 16
      %v6562 = vrot.slane %v6560, 1
      %v6563 = vsel %vm4062, %v6558, %v6562
      %s6564 = scalar_lea.vmem [#allocation3], 48
      %v6565 = vld [vmem:[%s6564] sm:$0x80]
      %v6566 = vld [vmem:[%s6564 + $0x8] sm:$0xff]
      %v6567 = vld [vmem:[%s6564 + $0x18] sm:$0x80]
      %v6568 = vld [vmem:[%s6564 + $0x20] sm:$0xff]
      %v6569 = vld [vmem:[%s6564 + $0x30] sm:$0x80]
      %v6570 = vld [vmem:[%s6564 + $0x38] sm:$0xff]
      %v6571 = vld [vmem:[%s6564 + $0x48] sm:$0x80]
      %v6572 = vld [vmem:[%s6564 + $0x50] sm:$0xff]
      %v6573 = vld [vmem:[%s6564 + $0x60] sm:$0x80]
      %v6574 = vld [vmem:[%s6564 + $0x68] sm:$0xff]
      %v6575 = vld [vmem:[%s6564 + $0x78] sm:$0x80]
      %v6576 = vld [vmem:[%s6564 + $0x80] sm:$0xff]
      %v6577 = vld [vmem:[%s6564 + $0x90] sm:$0x80]
      %v6578 = vld [vmem:[%s6564 + $0x98] sm:$0xff]
      %v6579 = vld [vmem:[%s6564 + $0xa8] sm:$0x80]
      %v6580 = vld [vmem:[%s6564 + $0xb0] sm:$0xff]
      %v6581 = vld [vmem:[%s6564 + $0xc0] sm:$0x80]
      %v6582 = vld [vmem:[%s6564 + $0xc8] sm:$0xff]
      %v6583 = vld [vmem:[%s6564 + $0xd8] sm:$0x80]
      %v6584 = vld [vmem:[%s6564 + $0xe0] sm:$0xff]
      %v6585 = vld [vmem:[%s6564 + $0xf0] sm:$0x80]
      %v6586 = vld [vmem:[%s6564 + $0xf8] sm:$0xff]
      %v6587 = vld [vmem:[%s6564 + $0x108] sm:$0x80]
      %v6588 = vld [vmem:[%s6564 + $0x110] sm:$0xff]
      %v6589 = vld [vmem:[%s6564 + $0x120] sm:$0x80]
      %v6590 = vld [vmem:[%s6564 + $0x128] sm:$0xff]
      %v6591 = vld [vmem:[%s6564 + $0x138] sm:$0x80]
      %v6592 = vld [vmem:[%s6564 + $0x140] sm:$0xff]
      %v6593 = vld [vmem:[%s6564 + $0x150] sm:$0x80]
      %v6594 = vld [vmem:[%s6564 + $0x158] sm:$0xff]
      %v6595 = vld [vmem:[%s6564 + $0x168] sm:$0x80]
      %v6596 = vld [vmem:[%s6564 + $0x170] sm:$0xff]
      %v6598 = vshrl.u32 %v6565, 16
      %v6600 = vrot.slane %v6598, 7
      %v6602 = vshrl.u32 %v6566, 16
      %v6604 = vrot.slane %v6602, 7
      %v6605 = vshll.u32 %v6566, 16
      %v6607 = vor.u32 %v6604, %v6605
      %v6608 = vsel %vm381, %v6600, %v6607
      %v6610 = vshrl.u32 %v6567, 16
      %v6612 = vrot.slane %v6610, 7
      %v6614 = vshrl.u32 %v6568, 16
      %v6616 = vrot.slane %v6614, 7
      %v6617 = vshll.u32 %v6568, 16
      %v6619 = vor.u32 %v6616, %v6617
      %v6620 = vsel %vm381, %v6612, %v6619
      %v6622 = vshrl.u32 %v6569, 16
      %v6624 = vrot.slane %v6622, 7
      %v6626 = vshrl.u32 %v6570, 16
      %v6628 = vrot.slane %v6626, 7
      %v6629 = vshll.u32 %v6570, 16
      %v6631 = vor.u32 %v6628, %v6629
      %v6632 = vsel %vm381, %v6624, %v6631
      %v6634 = vshrl.u32 %v6571, 16
      %v6636 = vrot.slane %v6634, 7
      %v6638 = vshrl.u32 %v6572, 16
      %v6640 = vrot.slane %v6638, 7
      %v6641 = vshll.u32 %v6572, 16
      %v6643 = vor.u32 %v6640, %v6641
      %v6644 = vsel %vm381, %v6636, %v6643
      %v6646 = vshrl.u32 %v6573, 16
      %v6648 = vrot.slane %v6646, 7
      %v6650 = vshrl.u32 %v6574, 16
      %v6652 = vrot.slane %v6650, 7
      %v6653 = vshll.u32 %v6574, 16
      %v6655 = vor.u32 %v6652, %v6653
      %v6656 = vsel %vm381, %v6648, %v6655
      %v6658 = vshrl.u32 %v6575, 16
      %v6660 = vrot.slane %v6658, 7
      %v6662 = vshrl.u32 %v6576, 16
      %v6664 = vrot.slane %v6662, 7
      %v6665 = vshll.u32 %v6576, 16
      %v6667 = vor.u32 %v6664, %v6665
      %v6668 = vsel %vm381, %v6660, %v6667
      %v6670 = vshrl.u32 %v6577, 16
      %v6672 = vrot.slane %v6670, 7
      %v6674 = vshrl.u32 %v6578, 16
      %v6676 = vrot.slane %v6674, 7
      %v6677 = vshll.u32 %v6578, 16
      %v6679 = vor.u32 %v6676, %v6677
      %v6680 = vsel %vm381, %v6672, %v6679
      %v6682 = vshrl.u32 %v6579, 16
      %v6684 = vrot.slane %v6682, 7
      %v6686 = vshrl.u32 %v6580, 16
      %v6688 = vrot.slane %v6686, 7
      %v6689 = vshll.u32 %v6580, 16
      %v6691 = vor.u32 %v6688, %v6689
      %v6692 = vsel %vm381, %v6684, %v6691
      %v6694 = vshrl.u32 %v6581, 16
      %v6696 = vrot.slane %v6694, 7
      %v6698 = vshrl.u32 %v6582, 16
      %v6700 = vrot.slane %v6698, 7
      %v6701 = vshll.u32 %v6582, 16
      %v6703 = vor.u32 %v6700, %v6701
      %v6704 = vsel %vm381, %v6696, %v6703
      %v6706 = vshrl.u32 %v6583, 16
      %v6708 = vrot.slane %v6706, 7
      %v6710 = vshrl.u32 %v6584, 16
      %v6712 = vrot.slane %v6710, 7
      %v6713 = vshll.u32 %v6584, 16
      %v6715 = vor.u32 %v6712, %v6713
      %v6716 = vsel %vm381, %v6708, %v6715
      %v6718 = vshrl.u32 %v6585, 16
      %v6720 = vrot.slane %v6718, 7
      %v6722 = vshrl.u32 %v6586, 16
      %v6724 = vrot.slane %v6722, 7
      %v6725 = vshll.u32 %v6586, 16
      %v6727 = vor.u32 %v6724, %v6725
      %v6728 = vsel %vm381, %v6720, %v6727
      %v6730 = vshrl.u32 %v6587, 16
      %v6732 = vrot.slane %v6730, 7
      %v6734 = vshrl.u32 %v6588, 16
      %v6736 = vrot.slane %v6734, 7
      %v6737 = vshll.u32 %v6588, 16
      %v6739 = vor.u32 %v6736, %v6737
      %v6740 = vsel %vm381, %v6732, %v6739
      %v6742 = vshrl.u32 %v6589, 16
      %v6744 = vrot.slane %v6742, 7
      %v6746 = vshrl.u32 %v6590, 16
      %v6748 = vrot.slane %v6746, 7
      %v6749 = vshll.u32 %v6590, 16
      %v6751 = vor.u32 %v6748, %v6749
      %v6752 = vsel %vm381, %v6744, %v6751
      %v6754 = vshrl.u32 %v6591, 16
      %v6756 = vrot.slane %v6754, 7
      %v6758 = vshrl.u32 %v6592, 16
      %v6760 = vrot.slane %v6758, 7
      %v6761 = vshll.u32 %v6592, 16
      %v6763 = vor.u32 %v6760, %v6761
      %v6764 = vsel %vm381, %v6756, %v6763
      %v6766 = vshrl.u32 %v6593, 16
      %v6768 = vrot.slane %v6766, 7
      %v6770 = vshrl.u32 %v6594, 16
      %v6772 = vrot.slane %v6770, 7
      %v6773 = vshll.u32 %v6594, 16
      %v6775 = vor.u32 %v6772, %v6773
      %v6776 = vsel %vm381, %v6768, %v6775
      %v6778 = vshrl.u32 %v6595, 16
      %v6780 = vrot.slane %v6778, 7
      %v6782 = vshrl.u32 %v6596, 16
      %v6784 = vrot.slane %v6782, 7
      %v6785 = vshll.u32 %v6596, 16
      %v6787 = vor.u32 %v6784, %v6785
      %v6788 = vsel %vm381, %v6780, %v6787
      %v6789 = vld [vmem:[%s6564 + $0x10] sm:$0x1]
      %v6790 = vld [vmem:[%s6564 + $0x28] sm:$0x1]
      %v6791 = vld [vmem:[%s6564 + $0x40] sm:$0x1]
      %v6792 = vld [vmem:[%s6564 + $0x58] sm:$0x1]
      %v6793 = vld [vmem:[%s6564 + $0x70] sm:$0x1]
      %v6794 = vld [vmem:[%s6564 + $0x88] sm:$0x1]
      %v6795 = vld [vmem:[%s6564 + $0xa0] sm:$0x1]
      %v6796 = vld [vmem:[%s6564 + $0xb8] sm:$0x1]
      %v6797 = vld [vmem:[%s6564 + $0xd0] sm:$0x1]
      %v6798 = vld [vmem:[%s6564 + $0xe8] sm:$0x1]
      %v6799 = vld [vmem:[%s6564 + $0x100] sm:$0x1]
      %v6800 = vld [vmem:[%s6564 + $0x118] sm:$0x1]
      %v6801 = vld [vmem:[%s6564 + $0x130] sm:$0x1]
      %v6802 = vld [vmem:[%s6564 + $0x148] sm:$0x1]
      %v6803 = vld [vmem:[%s6564 + $0x160] sm:$0x1]
      %v6804 = vld [vmem:[%s6564 + $0x178] sm:$0x1]
      %v6805 = vrot.slane %v6605, 1
      %v6806 = vor.u32 %v6602, %v6805
      %v6808 = vshll.u32 %v6789, 16
      %v6810 = vrot.slane %v6808, 1
      %v6811 = vsel %vm4062, %v6806, %v6810
      %v6812 = vrot.slane %v6617, 1
      %v6813 = vor.u32 %v6614, %v6812
      %v6815 = vshll.u32 %v6790, 16
      %v6817 = vrot.slane %v6815, 1
      %v6818 = vsel %vm4062, %v6813, %v6817
      %v6819 = vrot.slane %v6629, 1
      %v6820 = vor.u32 %v6626, %v6819
      %v6822 = vshll.u32 %v6791, 16
      %v6824 = vrot.slane %v6822, 1
      %v6825 = vsel %vm4062, %v6820, %v6824
      %v6826 = vrot.slane %v6641, 1
      %v6827 = vor.u32 %v6638, %v6826
      %v6829 = vshll.u32 %v6792, 16
      %v6831 = vrot.slane %v6829, 1
      %v6832 = vsel %vm4062, %v6827, %v6831
      %v6833 = vrot.slane %v6653, 1
      %v6834 = vor.u32 %v6650, %v6833
      %v6836 = vshll.u32 %v6793, 16
      %v6838 = vrot.slane %v6836, 1
      %v6839 = vsel %vm4062, %v6834, %v6838
      %v6840 = vrot.slane %v6665, 1
      %v6841 = vor.u32 %v6662, %v6840
      %v6843 = vshll.u32 %v6794, 16
      %v6845 = vrot.slane %v6843, 1
      %v6846 = vsel %vm4062, %v6841, %v6845
      %v6847 = vrot.slane %v6677, 1
      %v6848 = vor.u32 %v6674, %v6847
      %v6850 = vshll.u32 %v6795, 16
      %v6852 = vrot.slane %v6850, 1
      %v6853 = vsel %vm4062, %v6848, %v6852
      %v6854 = vrot.slane %v6689, 1
      %v6855 = vor.u32 %v6686, %v6854
      %v6857 = vshll.u32 %v6796, 16
      %v6859 = vrot.slane %v6857, 1
      %v6860 = vsel %vm4062, %v6855, %v6859
      %v6861 = vrot.slane %v6701, 1
      %v6862 = vor.u32 %v6698, %v6861
      %v6864 = vshll.u32 %v6797, 16
      %v6866 = vrot.slane %v6864, 1
      %v6867 = vsel %vm4062, %v6862, %v6866
      %v6868 = vrot.slane %v6713, 1
      %v6869 = vor.u32 %v6710, %v6868
      %v6871 = vshll.u32 %v6798, 16
      %v6873 = vrot.slane %v6871, 1
      %v6874 = vsel %vm4062, %v6869, %v6873
      %v6875 = vrot.slane %v6725, 1
      %v6876 = vor.u32 %v6722, %v6875
      %v6878 = vshll.u32 %v6799, 16
      %v6880 = vrot.slane %v6878, 1
      %v6881 = vsel %vm4062, %v6876, %v6880
      %v6882 = vrot.slane %v6737, 1
      %v6883 = vor.u32 %v6734, %v6882
      %v6885 = vshll.u32 %v6800, 16
      %v6887 = vrot.slane %v6885, 1
      %v6888 = vsel %vm4062, %v6883, %v6887
      %v6889 = vrot.slane %v6749, 1
      %v6890 = vor.u32 %v6746, %v6889
      %v6892 = vshll.u32 %v6801, 16
      %v6894 = vrot.slane %v6892, 1
      %v6895 = vsel %vm4062, %v6890, %v6894
      %v6896 = vrot.slane %v6761, 1
      %v6897 = vor.u32 %v6758, %v6896
      %v6899 = vshll.u32 %v6802, 16
      %v6901 = vrot.slane %v6899, 1
      %v6902 = vsel %vm4062, %v6897, %v6901
      %v6903 = vrot.slane %v6773, 1
      %v6904 = vor.u32 %v6770, %v6903
      %v6906 = vshll.u32 %v6803, 16
      %v6908 = vrot.slane %v6906, 1
      %v6909 = vsel %vm4062, %v6904, %v6908
      %v6910 = vrot.slane %v6785, 1
      %v6911 = vor.u32 %v6782, %v6910
      %v6913 = vshll.u32 %v6804, 16
      %v6915 = vrot.slane %v6913, 1
      %v6916 = vsel %vm4062, %v6911, %v6915
      %6949 = vrot.lane.b32.xlu0 %v5861, 32
      %v6950 = vpop.permute.xlu0 %6949
      %6951 = vrot.lane.b32.xlu0 %v5863, 32
      %v6952 = vpop.permute.xlu0 %6951
      %6953 = vrot.lane.b32.xlu0 %v5865, 32
      %v6954 = vpop.permute.xlu0 %6953
      %6955 = vrot.lane.b32.xlu0 %v5867, 32
      %v6956 = vpop.permute.xlu0 %6955
      %6957 = vrot.lane.b32.xlu0 %v5869, 32
      %v6958 = vpop.permute.xlu0 %6957
      %6959 = vrot.lane.b32.xlu0 %v5871, 32
      %v6960 = vpop.permute.xlu0 %6959
      %6961 = vrot.lane.b32.xlu0 %v5873, 32
      %v6962 = vpop.permute.xlu0 %6961
      %6963 = vrot.lane.b32.xlu0 %v5875, 32
      %v6964 = vpop.permute.xlu0 %6963
      %6965 = vrot.lane.b32.xlu0 %v5877, 32
      %v6966 = vpop.permute.xlu0 %6965
      %6967 = vrot.lane.b32.xlu0 %v5879, 32
      %v6968 = vpop.permute.xlu0 %6967
      %6969 = vrot.lane.b32.xlu0 %v5881, 32
      %v6970 = vpop.permute.xlu0 %6969
      %6971 = vrot.lane.b32.xlu0 %v5883, 32
      %v6972 = vpop.permute.xlu0 %6971
      %6973 = vrot.lane.b32.xlu0 %v5885, 32
      %v6974 = vpop.permute.xlu0 %6973
      %6975 = vrot.lane.b32.xlu0 %v5887, 32
      %v6976 = vpop.permute.xlu0 %6975
      %6977 = vrot.lane.b32.xlu0 %v5889, 32
      %v6978 = vpop.permute.xlu0 %6977
      %6979 = vrot.lane.b32.xlu0 %v5891, 32
      %v6980 = vpop.permute.xlu0 %6979
      %6981 = vrot.lane.b32.xlu0 %v6106, 64
      %v6982 = vpop.permute.xlu0 %6981
      %6983 = vrot.lane.b32.xlu0 %v6113, 64
      %v6984 = vpop.permute.xlu0 %6983
      %6985 = vrot.lane.b32.xlu0 %v6120, 64
      %v6986 = vpop.permute.xlu0 %6985
      %6987 = vrot.lane.b32.xlu0 %v6127, 64
      %v6988 = vpop.permute.xlu0 %6987
      %6989 = vrot.lane.b32.xlu0 %v6134, 64
      %v6990 = vpop.permute.xlu0 %6989
      %6991 = vrot.lane.b32.xlu0 %v6141, 64
      %v6992 = vpop.permute.xlu0 %6991
      %6993 = vrot.lane.b32.xlu0 %v6148, 64
      %v6994 = vpop.permute.xlu0 %6993
      %6995 = vrot.lane.b32.xlu0 %v6155, 64
      %v6996 = vpop.permute.xlu0 %6995
      %6997 = vrot.lane.b32.xlu0 %v6162, 64
      %v6998 = vpop.permute.xlu0 %6997
      %6999 = vrot.lane.b32.xlu0 %v6169, 64
      %v7000 = vpop.permute.xlu0 %6999
      %7001 = vrot.lane.b32.xlu0 %v6176, 64
      %v7002 = vpop.permute.xlu0 %7001
      %7003 = vrot.lane.b32.xlu0 %v6183, 64
      %v7004 = vpop.permute.xlu0 %7003
      %7005 = vrot.lane.b32.xlu0 %v6190, 64
      %v7006 = vpop.permute.xlu0 %7005
      %7007 = vrot.lane.b32.xlu0 %v6197, 64
      %v7008 = vpop.permute.xlu0 %7007
      %7009 = vrot.lane.b32.xlu0 %v6204, 64
      %v7010 = vpop.permute.xlu0 %7009
      %7011 = vrot.lane.b32.xlu0 %v6211, 64
      %v7012 = vpop.permute.xlu0 %7011
      %7013 = vrot.lane.b32.xlu0 %v6255, 96
      %v7014 = vpop.permute.xlu0 %7013
      %7015 = vrot.lane.b32.xlu0 %v6267, 96
      %v7016 = vpop.permute.xlu0 %7015
      %7017 = vrot.lane.b32.xlu0 %v6279, 96
      %v7018 = vpop.permute.xlu0 %7017
      %7019 = vrot.lane.b32.xlu0 %v6291, 96
      %v7020 = vpop.permute.xlu0 %7019
      %7021 = vrot.lane.b32.xlu0 %v6303, 96
      %v7022 = vpop.permute.xlu0 %7021
      %7023 = vrot.lane.b32.xlu0 %v6315, 96
      %v7024 = vpop.permute.xlu0 %7023
      %7025 = vrot.lane.b32.xlu0 %v6327, 96
      %v7026 = vpop.permute.xlu0 %7025
      %7027 = vrot.lane.b32.xlu0 %v6339, 96
      %v7028 = vpop.permute.xlu0 %7027
      %7029 = vrot.lane.b32.xlu0 %v6351, 96
      %v7030 = vpop.permute.xlu0 %7029
      %7031 = vrot.lane.b32.xlu0 %v6363, 96
      %v7032 = vpop.permute.xlu0 %7031
      %7033 = vrot.lane.b32.xlu0 %v6375, 96
      %v7034 = vpop.permute.xlu0 %7033
      %7035 = vrot.lane.b32.xlu0 %v6387, 96
      %v7036 = vpop.permute.xlu0 %7035
      %7037 = vrot.lane.b32.xlu0 %v6399, 96
      %v7038 = vpop.permute.xlu0 %7037
      %7039 = vrot.lane.b32.xlu0 %v6411, 96
      %v7040 = vpop.permute.xlu0 %7039
      %7041 = vrot.lane.b32.xlu0 %v6423, 96
      %v7042 = vpop.permute.xlu0 %7041
      %7043 = vrot.lane.b32.xlu0 %v6435, 96
      %v7044 = vpop.permute.xlu0 %7043
      %7045 = vrot.lane.b32.xlu0 %v6458, 32
      %v7046 = vpop.permute.xlu0 %7045
      %7047 = vrot.lane.b32.xlu0 %v6465, 32
      %v7048 = vpop.permute.xlu0 %7047
      %7049 = vrot.lane.b32.xlu0 %v6472, 32
      %v7050 = vpop.permute.xlu0 %7049
      %7051 = vrot.lane.b32.xlu0 %v6479, 32
      %v7052 = vpop.permute.xlu0 %7051
      %7053 = vrot.lane.b32.xlu0 %v6486, 32
      %v7054 = vpop.permute.xlu0 %7053
      %7055 = vrot.lane.b32.xlu0 %v6493, 32
      %v7056 = vpop.permute.xlu0 %7055
      %7057 = vrot.lane.b32.xlu0 %v6500, 32
      %v7058 = vpop.permute.xlu0 %7057
      %7059 = vrot.lane.b32.xlu0 %v6507, 32
      %v7060 = vpop.permute.xlu0 %7059
      %7061 = vrot.lane.b32.xlu0 %v6514, 32
      %v7062 = vpop.permute.xlu0 %7061
      %7063 = vrot.lane.b32.xlu0 %v6521, 32
      %v7064 = vpop.permute.xlu0 %7063
      %7065 = vrot.lane.b32.xlu0 %v6528, 32
      %v7066 = vpop.permute.xlu0 %7065
      %7067 = vrot.lane.b32.xlu0 %v6535, 32
      %v7068 = vpop.permute.xlu0 %7067
      %7069 = vrot.lane.b32.xlu0 %v6542, 32
      %v7070 = vpop.permute.xlu0 %7069
      %7071 = vrot.lane.b32.xlu0 %v6549, 32
      %v7072 = vpop.permute.xlu0 %7071
      %7073 = vrot.lane.b32.xlu0 %v6556, 32
      %v7074 = vpop.permute.xlu0 %7073
      %7075 = vrot.lane.b32.xlu0 %v6563, 32
      %v7076 = vpop.permute.xlu0 %7075
      %7077 = vrot.lane.b32.xlu0 %v6608, 64
      %v7078 = vpop.permute.xlu0 %7077
      %7079 = vrot.lane.b32.xlu0 %v6620, 64
      %v7080 = vpop.permute.xlu0 %7079
      %7081 = vrot.lane.b32.xlu0 %v6632, 64
      %v7082 = vpop.permute.xlu0 %7081
      %7083 = vrot.lane.b32.xlu0 %v6644, 64
      %v7084 = vpop.permute.xlu0 %7083
      %7085 = vrot.lane.b32.xlu0 %v6656, 64
      %v7086 = vpop.permute.xlu0 %7085
      %7087 = vrot.lane.b32.xlu0 %v6668, 64
      %v7088 = vpop.permute.xlu0 %7087
      %7089 = vrot.lane.b32.xlu0 %v6680, 64
      %v7090 = vpop.permute.xlu0 %7089
      %7091 = vrot.lane.b32.xlu0 %v6692, 64
      %v7092 = vpop.permute.xlu0 %7091
      %7093 = vrot.lane.b32.xlu0 %v6704, 64
      %v7094 = vpop.permute.xlu0 %7093
      %7095 = vrot.lane.b32.xlu0 %v6716, 64
      %v7096 = vpop.permute.xlu0 %7095
      %7097 = vrot.lane.b32.xlu0 %v6728, 64
      %v7098 = vpop.permute.xlu0 %7097
      %7099 = vrot.lane.b32.xlu0 %v6740, 64
      %v7100 = vpop.permute.xlu0 %7099
      %7101 = vrot.lane.b32.xlu0 %v6752, 64
      %v7102 = vpop.permute.xlu0 %7101
      %7103 = vrot.lane.b32.xlu0 %v6764, 64
      %v7104 = vpop.permute.xlu0 %7103
      %7105 = vrot.lane.b32.xlu0 %v6776, 64
      %v7106 = vpop.permute.xlu0 %7105
      %7107 = vrot.lane.b32.xlu0 %v6788, 64
      %v7108 = vpop.permute.xlu0 %7107
      %7125 = vrot.lane.b32.xlu0 %v6566, 96
      %v7126 = vpop.permute.xlu0 %7125
      %7127 = vrot.lane.b32.xlu0 %v6568, 96
      %v7128 = vpop.permute.xlu0 %7127
      %7129 = vrot.lane.b32.xlu0 %v6570, 96
      %v7130 = vpop.permute.xlu0 %7129
      %7131 = vrot.lane.b32.xlu0 %v6572, 96
      %v7132 = vpop.permute.xlu0 %7131
      %7133 = vrot.lane.b32.xlu0 %v6574, 96
      %v7134 = vpop.permute.xlu0 %7133
      %7135 = vrot.lane.b32.xlu0 %v6576, 96
      %v7136 = vpop.permute.xlu0 %7135
      %7137 = vrot.lane.b32.xlu0 %v6578, 96
      %v7138 = vpop.permute.xlu0 %7137
      %7139 = vrot.lane.b32.xlu0 %v6580, 96
      %v7140 = vpop.permute.xlu0 %7139
      %7141 = vrot.lane.b32.xlu0 %v6582, 96
      %v7142 = vpop.permute.xlu0 %7141
      %7143 = vrot.lane.b32.xlu0 %v6584, 96
      %v7144 = vpop.permute.xlu0 %7143
      %7145 = vrot.lane.b32.xlu0 %v6586, 96
      %v7146 = vpop.permute.xlu0 %7145
      %7147 = vrot.lane.b32.xlu0 %v6588, 96
      %v7148 = vpop.permute.xlu0 %7147
      %7149 = vrot.lane.b32.xlu0 %v6590, 96
      %v7150 = vpop.permute.xlu0 %7149
      %7151 = vrot.lane.b32.xlu0 %v6592, 96
      %v7152 = vpop.permute.xlu0 %7151
      %7153 = vrot.lane.b32.xlu0 %v6594, 96
      %v7154 = vpop.permute.xlu0 %7153
      %7155 = vrot.lane.b32.xlu0 %v6596, 96
      %v7156 = vpop.permute.xlu0 %7155
      %v7159 = vsel %vm496, %v5903, %v6950
      %v7162 = vsel %vm496, %v5915, %v6952
      %v7165 = vsel %vm496, %v5927, %v6954
      %v7168 = vsel %vm496, %v5939, %v6956
      %v7171 = vsel %vm496, %v5951, %v6958
      %v7174 = vsel %vm496, %v5963, %v6960
      %v7177 = vsel %vm496, %v5975, %v6962
      %v7180 = vsel %vm496, %v5987, %v6964
      %v7183 = vsel %vm496, %v5999, %v6966
      %v7186 = vsel %vm496, %v6011, %v6968
      %v7189 = vsel %vm496, %v6023, %v6970
      %v7192 = vsel %vm496, %v6035, %v6972
      %v7195 = vsel %vm496, %v6047, %v6974
      %v7198 = vsel %vm496, %v6059, %v6976
      %v7201 = vsel %vm496, %v6071, %v6978
      %v7204 = vsel %vm496, %v6083, %v6980
      %v7206 = vsel %vm5281, %v7159, %v6982
      %v7208 = vsel %vm5281, %v7162, %v6984
      %v7210 = vsel %vm5281, %v7165, %v6986
      %v7212 = vsel %vm5281, %v7168, %v6988
      %v7214 = vsel %vm5281, %v7171, %v6990
      %v7216 = vsel %vm5281, %v7174, %v6992
      %v7218 = vsel %vm5281, %v7177, %v6994
      %v7220 = vsel %vm5281, %v7180, %v6996
      %v7222 = vsel %vm5281, %v7183, %v6998
      %v7224 = vsel %vm5281, %v7186, %v7000
      %v7226 = vsel %vm5281, %v7189, %v7002
      %v7228 = vsel %vm5281, %v7192, %v7004
      %v7230 = vsel %vm5281, %v7195, %v7006
      %v7232 = vsel %vm5281, %v7198, %v7008
      %v7234 = vsel %vm5281, %v7201, %v7010
      %v7236 = vsel %vm5281, %v7204, %v7012
      %v7238 = vsel %vm5347, %v7206, %v7014
      %v7241 = vsel %vm5347, %v7208, %v7016
      %v7244 = vsel %vm5347, %v7210, %v7018
      %v7247 = vsel %vm5347, %v7212, %v7020
      %v7250 = vsel %vm5347, %v7214, %v7022
      %v7253 = vsel %vm5347, %v7216, %v7024
      %v7256 = vsel %vm5347, %v7218, %v7026
      %v7259 = vsel %vm5347, %v7220, %v7028
      %v7262 = vsel %vm5347, %v7222, %v7030
      %v7265 = vsel %vm5347, %v7224, %v7032
      %v7268 = vsel %vm5347, %v7226, %v7034
      %v7271 = vsel %vm5347, %v7228, %v7036
      %v7274 = vsel %vm5347, %v7230, %v7038
      %v7277 = vsel %vm5347, %v7232, %v7040
      %v7280 = vsel %vm5347, %v7234, %v7042
      %v7283 = vsel %vm5347, %v7236, %v7044
      %v7286 = vsel %vm496, %v6213, %v7046
      %v7288 = vsel %vm496, %v6215, %v7048
      %v7290 = vsel %vm496, %v6217, %v7050
      %v7292 = vsel %vm496, %v6219, %v7052
      %v7294 = vsel %vm496, %v6221, %v7054
      %v7296 = vsel %vm496, %v6223, %v7056
      %v7298 = vsel %vm496, %v6225, %v7058
      %v7300 = vsel %vm496, %v6227, %v7060
      %v7302 = vsel %vm496, %v6229, %v7062
      %v7304 = vsel %vm496, %v6231, %v7064
      %v7306 = vsel %vm496, %v6233, %v7066
      %v7308 = vsel %vm496, %v6235, %v7068
      %v7310 = vsel %vm496, %v6237, %v7070
      %v7312 = vsel %vm496, %v6239, %v7072
      %v7314 = vsel %vm496, %v6241, %v7074
      %v7316 = vsel %vm496, %v6243, %v7076
      %v7318 = vsel %vm5281, %v7286, %v7078
      %v7320 = vsel %vm5281, %v7288, %v7080
      %v7322 = vsel %vm5281, %v7290, %v7082
      %v7324 = vsel %vm5281, %v7292, %v7084
      %v7326 = vsel %vm5281, %v7294, %v7086
      %v7328 = vsel %vm5281, %v7296, %v7088
      %v7330 = vsel %vm5281, %v7298, %v7090
      %v7332 = vsel %vm5281, %v7300, %v7092
      %v7334 = vsel %vm5281, %v7302, %v7094
      %v7336 = vsel %vm5281, %v7304, %v7096
      %v7338 = vsel %vm5281, %v7306, %v7098
      %v7340 = vsel %vm5281, %v7308, %v7100
      %v7342 = vsel %vm5281, %v7310, %v7102
      %v7344 = vsel %vm5281, %v7312, %v7104
      %v7346 = vsel %vm5281, %v7314, %v7106
      %v7348 = vsel %vm5281, %v7316, %v7108
      %v7350 = vsel %vm5347, %v7318, %v7126
      %v7353 = vsel %vm5347, %v7320, %v7128
      %v7356 = vsel %vm5347, %v7322, %v7130
      %v7359 = vsel %vm5347, %v7324, %v7132
      %v7362 = vsel %vm5347, %v7326, %v7134
      %v7365 = vsel %vm5347, %v7328, %v7136
      %v7368 = vsel %vm5347, %v7330, %v7138
      %v7371 = vsel %vm5347, %v7332, %v7140
      %v7374 = vsel %vm5347, %v7334, %v7142
      %v7377 = vsel %vm5347, %v7336, %v7144
      %v7380 = vsel %vm5347, %v7338, %v7146
      %v7383 = vsel %vm5347, %v7340, %v7148
      %v7386 = vsel %vm5347, %v7342, %v7150
      %v7389 = vsel %vm5347, %v7344, %v7152
      %v7392 = vsel %vm5347, %v7346, %v7154
      %v7395 = vsel %vm5347, %v7348, %v7156
      %7397 = vst [vmem:[#allocation6] sm:$0xff] %v7238
      %7398 = vst [vmem:[#allocation6 + $0x8] sm:$0xff] %v7350
      %7399 = vst.msk [vmem:[#allocation6 + $0x10] sm:$0xff] %vm496, %v6811
      %7400 = vst [vmem:[#allocation6 + $0x18] sm:$0xff] %v7241
      %7401 = vst [vmem:[#allocation6 + $0x20] sm:$0xff] %v7353
      %7402 = vst.msk [vmem:[#allocation6 + $0x28] sm:$0xff] %vm496, %v6818
      %7403 = vst [vmem:[#allocation6 + $0x30] sm:$0xff] %v7244
      %7404 = vst [vmem:[#allocation6 + $0x38] sm:$0xff] %v7356
      %7405 = vst.msk [vmem:[#allocation6 + $0x40] sm:$0xff] %vm496, %v6825
      %7406 = vst [vmem:[#allocation6 + $0x48] sm:$0xff] %v7247
      %7407 = vst [vmem:[#allocation6 + $0x50] sm:$0xff] %v7359
      %7408 = vst.msk [vmem:[#allocation6 + $0x58] sm:$0xff] %vm496, %v6832
      %7409 = vst [vmem:[#allocation6 + $0x60] sm:$0xff] %v7250
      %7410 = vst [vmem:[#allocation6 + $0x68] sm:$0xff] %v7362
      %7411 = vst.msk [vmem:[#allocation6 + $0x70] sm:$0xff] %vm496, %v6839
      %7412 = vst [vmem:[#allocation6 + $0x78] sm:$0xff] %v7253
      %7413 = vst [vmem:[#allocation6 + $0x80] sm:$0xff] %v7365
      %7414 = vst.msk [vmem:[#allocation6 + $0x88] sm:$0xff] %vm496, %v6846
      %7415 = vst [vmem:[#allocation6 + $0x90] sm:$0xff] %v7256
      %7416 = vst [vmem:[#allocation6 + $0x98] sm:$0xff] %v7368
      %7417 = vst.msk [vmem:[#allocation6 + $0xa0] sm:$0xff] %vm496, %v6853
      %7418 = vst [vmem:[#allocation6 + $0xa8] sm:$0xff] %v7259
      %7419 = vst [vmem:[#allocation6 + $0xb0] sm:$0xff] %v7371
      %7420 = vst.msk [vmem:[#allocation6 + $0xb8] sm:$0xff] %vm496, %v6860
      %7421 = vst [vmem:[#allocation6 + $0xc0] sm:$0xff] %v7262
      %7422 = vst [vmem:[#allocation6 + $0xc8] sm:$0xff] %v7374
      %7423 = vst.msk [vmem:[#allocation6 + $0xd0] sm:$0xff] %vm496, %v6867
      %7424 = vst [vmem:[#allocation6 + $0xd8] sm:$0xff] %v7265
      %7425 = vst [vmem:[#allocation6 + $0xe0] sm:$0xff] %v7377
      %7426 = vst.msk [vmem:[#allocation6 + $0xe8] sm:$0xff] %vm496, %v6874
      %7427 = vst [vmem:[#allocation6 + $0xf0] sm:$0xff] %v7268
      %7428 = vst [vmem:[#allocation6 + $0xf8] sm:$0xff] %v7380
      %7429 = vst.msk [vmem:[#allocation6 + $0x100] sm:$0xff] %vm496, %v6881
      %7430 = vst [vmem:[#allocation6 + $0x108] sm:$0xff] %v7271
      %7431 = vst [vmem:[#allocation6 + $0x110] sm:$0xff] %v7383
      %7432 = vst.msk [vmem:[#allocation6 + $0x118] sm:$0xff] %vm496, %v6888
      %7433 = vst [vmem:[#allocation6 + $0x120] sm:$0xff] %v7274
      %7434 = vst [vmem:[#allocation6 + $0x128] sm:$0xff] %v7386
      %7435 = vst.msk [vmem:[#allocation6 + $0x130] sm:$0xff] %vm496, %v6895
      %7436 = vst [vmem:[#allocation6 + $0x138] sm:$0xff] %v7277
      %7437 = vst [vmem:[#allocation6 + $0x140] sm:$0xff] %v7389
      %7438 = vst.msk [vmem:[#allocation6 + $0x148] sm:$0xff] %vm496, %v6902
      %7439 = vst [vmem:[#allocation6 + $0x150] sm:$0xff] %v7280
      %7440 = vst [vmem:[#allocation6 + $0x158] sm:$0xff] %v7392
      %7441 = vst.msk [vmem:[#allocation6 + $0x160] sm:$0xff] %vm496, %v6909
      %7442 = vst [vmem:[#allocation6 + $0x168] sm:$0xff] %v7283
      %7443 = vst [vmem:[#allocation6 + $0x170] sm:$0xff] %v7395
      %7444 = vst.msk [vmem:[#allocation6 + $0x178] sm:$0xff] %vm496, %v6916
      %v7445 = vld [vmem:[#allocation6] sm:$0xff]
      %v7446 = vld [vmem:[#allocation6 + $0x8] sm:$0xff]
      %v7447 = vld [vmem:[#allocation6 + $0x10] sm:$0xff]
      %v7448 = vld [vmem:[#allocation6 + $0x18] sm:$0xff]
      %v7449 = vld [vmem:[#allocation6 + $0x20] sm:$0xff]
      %v7450 = vld [vmem:[#allocation6 + $0x28] sm:$0xff]
      %v7451 = vld [vmem:[#allocation6 + $0x30] sm:$0xff]
      %v7452 = vld [vmem:[#allocation6 + $0x38] sm:$0xff]
      %v7453 = vld [vmem:[#allocation6 + $0x40] sm:$0xff]
      %v7454 = vld [vmem:[#allocation6 + $0x48] sm:$0xff]
      %v7455 = vld [vmem:[#allocation6 + $0x50] sm:$0xff]
      %v7456 = vld [vmem:[#allocation6 + $0x58] sm:$0xff]
      %v7457 = vld [vmem:[#allocation6 + $0x60] sm:$0xff]
      %v7458 = vld [vmem:[#allocation6 + $0x68] sm:$0xff]
      %v7459 = vld [vmem:[#allocation6 + $0x70] sm:$0xff]
      %v7460 = vld [vmem:[#allocation6 + $0x78] sm:$0xff]
      %v7461 = vld [vmem:[#allocation6 + $0x80] sm:$0xff]
      %v7462 = vld [vmem:[#allocation6 + $0x88] sm:$0xff]
      %v7463 = vld [vmem:[#allocation6 + $0x90] sm:$0xff]
      %v7464 = vld [vmem:[#allocation6 + $0x98] sm:$0xff]
      %v7465 = vld [vmem:[#allocation6 + $0xa0] sm:$0xff]
      %v7466 = vld [vmem:[#allocation6 + $0xa8] sm:$0xff]
      %v7467 = vld [vmem:[#allocation6 + $0xb0] sm:$0xff]
      %v7468 = vld [vmem:[#allocation6 + $0xb8] sm:$0xff]
      %v7469 = vld [vmem:[#allocation6 + $0xc0] sm:$0xff]
      %v7470 = vld [vmem:[#allocation6 + $0xc8] sm:$0xff]
      %v7471 = vld [vmem:[#allocation6 + $0xd0] sm:$0xff]
      %v7472 = vld [vmem:[#allocation6 + $0xd8] sm:$0xff]
      %v7473 = vld [vmem:[#allocation6 + $0xe0] sm:$0xff]
      %v7474 = vld [vmem:[#allocation6 + $0xe8] sm:$0xff]
      %v7475 = vld [vmem:[#allocation6 + $0xf0] sm:$0xff]
      %v7476 = vld [vmem:[#allocation6 + $0xf8] sm:$0xff]
      %v7477 = vld [vmem:[#allocation6 + $0x100] sm:$0xff]
      %v7478 = vld [vmem:[#allocation6 + $0x108] sm:$0xff]
      %v7479 = vld [vmem:[#allocation6 + $0x110] sm:$0xff]
      %v7480 = vld [vmem:[#allocation6 + $0x118] sm:$0xff]
      %v7481 = vld [vmem:[#allocation6 + $0x120] sm:$0xff]
      %v7482 = vld [vmem:[#allocation6 + $0x128] sm:$0xff]
      %v7483 = vld [vmem:[#allocation6 + $0x130] sm:$0xff]
      %v7484 = vld [vmem:[#allocation6 + $0x138] sm:$0xff]
      %v7485 = vld [vmem:[#allocation6 + $0x140] sm:$0xff]
      %v7486 = vld [vmem:[#allocation6 + $0x148] sm:$0xff]
      %v7487 = vld [vmem:[#allocation6 + $0x150] sm:$0xff]
      %v7488 = vld [vmem:[#allocation6 + $0x158] sm:$0xff]
      %v7489 = vld [vmem:[#allocation6 + $0x160] sm:$0xff]
      %v7490 = vld [vmem:[#allocation6 + $0x168] sm:$0xff]
      %v7491 = vld [vmem:[#allocation6 + $0x170] sm:$0xff]
      %v7492 = vld [vmem:[#allocation6 + $0x178] sm:$0xff]
      %v7493 = vld [vmem:[%s5] sm:$0xf]
      %v7494 = vld [vmem:[%s5 + $0x4] sm:$0xf]
      %v7495 = vld [vmem:[%s5 + $0x8] sm:$0xf]
      %v7496 = vld [vmem:[%s5 + $0xc] sm:$0xf]
      %v7497 = vld [vmem:[%s5 + $0x10] sm:$0xf]
      %v7498 = vld [vmem:[%s5 + $0x14] sm:$0xf]
      %v7499 = vld [vmem:[%s5 + $0x18] sm:$0xf]
      %v7500 = vld [vmem:[%s5 + $0x1c] sm:$0xf]
      %v7501 = vld [vmem:[%s5 + $0x20] sm:$0xf]
      %v7502 = vld [vmem:[%s5 + $0x24] sm:$0xf]
      %v7503 = vld [vmem:[%s5 + $0x28] sm:$0xf]
      %v7504 = vld [vmem:[%s5 + $0x2c] sm:$0xf]
      %v7505 = vld [vmem:[%s5 + $0x30] sm:$0xf]
      %v7506 = vld [vmem:[%s5 + $0x34] sm:$0xf]
      %v7507 = vld [vmem:[%s5 + $0x38] sm:$0xf]
      %v7508 = vld [vmem:[%s5 + $0x3c] sm:$0xf]
      %v7509 = vld [vmem:[%s5 + $0x40] sm:$0xf]
      %v7510 = vld [vmem:[%s5 + $0x44] sm:$0xf]
      %v7511 = vld [vmem:[%s5 + $0x48] sm:$0xf]
      %v7512 = vld [vmem:[%s5 + $0x4c] sm:$0xf]
      %v7513 = vld [vmem:[%s5 + $0x50] sm:$0xf]
      %v7514 = vld [vmem:[%s5 + $0x54] sm:$0xf]
      %v7515 = vld [vmem:[%s5 + $0x58] sm:$0xf]
      %v7516 = vld [vmem:[%s5 + $0x5c] sm:$0xf]
      %v7517 = vld [vmem:[%s5 + $0x60] sm:$0xf]
      %v7518 = vld [vmem:[%s5 + $0x64] sm:$0xf]
      %v7519 = vld [vmem:[%s5 + $0x68] sm:$0xf]
      %v7520 = vld [vmem:[%s5 + $0x6c] sm:$0xf]
      %v7521 = vld [vmem:[%s5 + $0x70] sm:$0xf]
      %v7522 = vld [vmem:[%s5 + $0x74] sm:$0xf]
      %v7523 = vld [vmem:[%s5 + $0x78] sm:$0xf]
      %v7524 = vld [vmem:[%s5 + $0x7c] sm:$0xf]
      %v7525 = vld [vmem:[%s5 + $0x80] sm:$0xf]
      %v7526 = vld [vmem:[%s5 + $0x84] sm:$0xf]
      %v7527 = vld [vmem:[%s5 + $0x88] sm:$0xf]
      %v7528 = vld [vmem:[%s5 + $0x8c] sm:$0xf]
      %v7529 = vld [vmem:[%s6] sm:$0x1]
      %v7531 = vlaneseq
      %v7532 = vshrl.u32 %v7531, 7
      %v7533 = vsub.s32 0, %v7532
      %v7534 = vrot.slane %v7529, %v7533
      %v7572 = vunpack.c.l.b16 %v7493
      %v7573 = vunpack.c.l.b16 %v7494
      %v7574 = vunpack.c.l.b16 %v7495
      %v7575 = vunpack.c.l.b16 %v7496
      %v7576 = vunpack.c.l.b16 %v7497
      %v7577 = vunpack.c.l.b16 %v7498
      %v7578 = vunpack.c.l.b16 %v7499
      %v7579 = vunpack.c.l.b16 %v7500
      %v7580 = vunpack.c.l.b16 %v7501
      %v7581 = vunpack.c.l.b16 %v7502
      %v7582 = vunpack.c.l.b16 %v7503
      %v7583 = vunpack.c.l.b16 %v7504
      %v7584 = vunpack.c.l.b16 %v7505
      %v7585 = vunpack.c.l.b16 %v7506
      %v7586 = vunpack.c.l.b16 %v7507
      %v7587 = vunpack.c.l.b16 %v7508
      %v7588 = vunpack.c.l.b16 %v7509
      %v7589 = vunpack.c.l.b16 %v7510
      %v7590 = vunpack.c.l.b16 %v7511
      %v7591 = vunpack.c.l.b16 %v7512
      %v7592 = vunpack.c.l.b16 %v7513
      %v7593 = vunpack.c.l.b16 %v7514
      %v7594 = vunpack.c.l.b16 %v7515
      %v7595 = vunpack.c.l.b16 %v7516
      %v7596 = vunpack.c.l.b16 %v7517
      %v7597 = vunpack.c.l.b16 %v7518
      %v7598 = vunpack.c.l.b16 %v7519
      %v7599 = vunpack.c.l.b16 %v7520
      %v7600 = vunpack.c.l.b16 %v7521
      %v7601 = vunpack.c.l.b16 %v7522
      %v7602 = vunpack.c.l.b16 %v7523
      %v7603 = vunpack.c.l.b16 %v7524
      %v7604 = vunpack.c.l.b16 %v7525
      %v7605 = vunpack.c.l.b16 %v7526
      %v7606 = vunpack.c.l.b16 %v7527
      %v7607 = vunpack.c.l.b16 %v7528
      %v7608 = vpack.c.b16 %v7573, %v7572
      %v7609 = vpack.c.b16 %v7575, %v7574
      %v7610 = vpack.c.b16 %v7577, %v7576
      %v7611 = vpack.c.b16 %v7579, %v7578
      %v7612 = vpack.c.b16 %v7581, %v7580
      %v7613 = vpack.c.b16 %v7583, %v7582
      %v7614 = vpack.c.b16 %v7585, %v7584
      %v7615 = vpack.c.b16 %v7587, %v7586
      %v7616 = vpack.c.b16 %v7589, %v7588
      %v7617 = vpack.c.b16 %v7591, %v7590
      %v7618 = vpack.c.b16 %v7593, %v7592
      %v7619 = vpack.c.b16 %v7595, %v7594
      %v7620 = vpack.c.b16 %v7597, %v7596
      %v7621 = vpack.c.b16 %v7599, %v7598
      %v7622 = vpack.c.b16 %v7601, %v7600
      %v7623 = vpack.c.b16 %v7603, %v7602
      %v7624 = vpack.c.b16 %v7605, %v7604
      %v7625 = vpack.c.b16 %v7607, %v7606
      %v7645 = vsel %vm496, %v7447, 0
      %v7648 = vsel %vm496, %v7450, 0
      %v7651 = vsel %vm496, %v7453, 0
      %v7654 = vsel %vm496, %v7456, 0
      %v7657 = vsel %vm496, %v7459, 0
      %v7660 = vsel %vm496, %v7462, 0
      %v7663 = vsel %vm496, %v7465, 0
      %v7666 = vsel %vm496, %v7468, 0
      %v7669 = vsel %vm496, %v7471, 0
      %v7672 = vsel %vm496, %v7474, 0
      %v7675 = vsel %vm496, %v7477, 0
      %v7678 = vsel %vm496, %v7480, 0
      %v7681 = vsel %vm496, %v7483, 0
      %v7684 = vsel %vm496, %v7486, 0
      %v7687 = vsel %vm496, %v7489, 0
      %v7690 = vsel %vm496, %v7492, 0
      %7692 = vmatprep.subr.bf16.mxu0 0
      %7693 = vmatpush1.bf16.msra.mxu0 %v7608
      %7694 = vmatprep.subr.bf16.mxu0 0
      %7695 = vmatpush1.bf16.msra.mxu0 %v7609
      %7696 = vmatprep.subr.bf16.mxu0 0
      %7697 = vmatpush1.bf16.msra.mxu0 %v7610
      %7698 = vmatprep.subr.bf16.mxu0 0
      %7699 = vmatpush1.bf16.msra.mxu0 %v7611
      %7700 = vmatprep.subr.bf16.mxu0 0
      %7701 = vmatpush1.bf16.msra.mxu0 %v7612
      %7702 = vmatprep.subr.bf16.mxu0 0
      %7703 = vmatpush1.bf16.msra.mxu0 %v7613
      %7704 = vmatprep.subr.bf16.mxu0 0
      %7705 = vmatpush1.bf16.msra.mxu0 %v7614
      %7706 = vmatprep.subr.bf16.mxu0 0
      %7707 = vmatpush1.bf16.msra.mxu0 %v7615
      %7708 = vmatprep.subr.bf16.mxu0 0
      %7709 = vmatpush1.bf16.msra.mxu0 %v7616
      %7710 = vmatprep.subr.bf16.mxu0 0
      %7711 = vmatpush1.bf16.msra.mxu0 %v7617
      %7712 = vmatprep.subr.bf16.mxu0 0
      %7713 = vmatpush1.bf16.msra.mxu0 %v7618
      %7714 = vmatprep.subr.bf16.mxu0 0
      %7715 = vmatpush1.bf16.msra.mxu0 %v7619
      %7716 = vmatprep.subr.bf16.mxu0 0
      %7717 = vmatpush1.bf16.msra.mxu0 %v7620
      %7718 = vmatprep.subr.bf16.mxu0 0
      %7719 = vmatpush1.bf16.msra.mxu0 %v7621
      %7720 = vmatprep.subr.bf16.mxu0 0
      %7721 = vmatpush1.bf16.msra.mxu0 %v7622
      %7722 = vmatprep.subr.bf16.mxu0 0
      %7723 = vmatpush1.bf16.msra.mxu0 %v7623
      %7724 = vmatprep.mubr.bf16.mxu0 %v7446
      %7725 = vmatmul.mubr.bf16.gmra.mrb[0].mxu0 %v7445
      %v7726 = vpop.f32.mrb[0].mxu0
      %v7727 = vadd.f32 %v7534, %v7726
      %v7728 = vpop.f32.mrb[0].mxu0
      %v7729 = vpop.f32.mrb[0].mxu0
      %v7730 = vadd.f32 %v7534, %v7729
      %v7731 = vpop.f32.mrb[0].mxu0
      %7732 = vmatprep.mubr.bf16.mxu0 %v7449
      %7733 = vmatmul.mubr.bf16.gmra.mrb[0].mxu0 %v7448
      %v7734 = vpop.f32.mrb[0].mxu0
      %v7735 = vadd.f32 %v7534, %v7734
      %v7736 = vpop.f32.mrb[0].mxu0
      %v7737 = vpop.f32.mrb[0].mxu0
      %v7738 = vadd.f32 %v7534, %v7737
      %v7739 = vpop.f32.mrb[0].mxu0
      %7740 = vmatprep.mubr.bf16.mxu0 %v7452
      %7741 = vmatmul.mubr.bf16.gmra.mrb[0].mxu0 %v7451
      %v7742 = vpop.f32.mrb[0].mxu0
      %v7743 = vadd.f32 %v7534, %v7742
      %v7744 = vpop.f32.mrb[0].mxu0
      %v7745 = vpop.f32.mrb[0].mxu0
      %v7746 = vadd.f32 %v7534, %v7745
      %v7747 = vpop.f32.mrb[0].mxu0
      %7748 = vmatprep.mubr.bf16.mxu0 %v7455
      %7749 = vmatmul.mubr.bf16.gmra.mrb[0].mxu0 %v7454
      %v7750 = vpop.f32.mrb[0].mxu0
      %v7751 = vadd.f32 %v7534, %v7750
      %v7752 = vpop.f32.mrb[0].mxu0
      %v7753 = vpop.f32.mrb[0].mxu0
      %v7754 = vadd.f32 %v7534, %v7753
      %v7755 = vpop.f32.mrb[0].mxu0
      %7756 = vmatprep.mubr.bf16.mxu0 %v7458
      %7757 = vmatmul.mubr.bf16.gmra.mrb[0].mxu0 %v7457
      %v7758 = vpop.f32.mrb[0].mxu0
      %v7759 = vadd.f32 %v7534, %v7758
      %v7760 = vpop.f32.mrb[0].mxu0
      %v7761 = vpop.f32.mrb[0].mxu0
      %v7762 = vadd.f32 %v7534, %v7761
      %v7763 = vpop.f32.mrb[0].mxu0
      %7764 = vmatprep.mubr.bf16.mxu0 %v7461
      %7765 = vmatmul.mubr.bf16.gmra.mrb[0].mxu0 %v7460
      %v7766 = vpop.f32.mrb[0].mxu0
      %v7767 = vadd.f32 %v7534, %v7766
      %v7768 = vpop.f32.mrb[0].mxu0
      %v7769 = vpop.f32.mrb[0].mxu0
      %v7770 = vadd.f32 %v7534, %v7769
      %v7771 = vpop.f32.mrb[0].mxu0
      %7772 = vmatprep.mubr.bf16.mxu0 %v7464
      %7773 = vmatmul.mubr.bf16.gmra.mrb[0].mxu0 %v7463
      %v7774 = vpop.f32.mrb[0].mxu0
      %v7775 = vadd.f32 %v7534, %v7774
      %v7776 = vpop.f32.mrb[0].mxu0
      %v7777 = vpop.f32.mrb[0].mxu0
      %v7778 = vadd.f32 %v7534, %v7777
      %v7779 = vpop.f32.mrb[0].mxu0
      %7780 = vmatprep.mubr.bf16.mxu0 %v7467
      %7781 = vmatmul.mubr.bf16.gmra.mrb[0].mxu0 %v7466
      %v7782 = vpop.f32.mrb[0].mxu0
      %v7783 = vadd.f32 %v7534, %v7782
      %v7784 = vpop.f32.mrb[0].mxu0
      %v7785 = vpop.f32.mrb[0].mxu0
      %v7786 = vadd.f32 %v7534, %v7785
      %v7787 = vpop.f32.mrb[0].mxu0
      %7788 = vmatprep.mubr.bf16.mxu0 %v7470
      %7789 = vmatmul.mubr.bf16.gmra.mrb[0].mxu0 %v7469
      %v7790 = vpop.f32.mrb[0].mxu0
      %v7791 = vadd.f32 %v7534, %v7790
      %v7792 = vpop.f32.mrb[0].mxu0
      %v7793 = vpop.f32.mrb[0].mxu0
      %v7794 = vadd.f32 %v7534, %v7793
      %v7795 = vpop.f32.mrb[0].mxu0
      %7796 = vmatprep.mubr.bf16.mxu0 %v7473
      %7797 = vmatmul.mubr.bf16.gmra.mrb[0].mxu0 %v7472
      %v7798 = vpop.f32.mrb[0].mxu0
      %v7799 = vadd.f32 %v7534, %v7798
      %v7800 = vpop.f32.mrb[0].mxu0
      %v7801 = vpop.f32.mrb[0].mxu0
      %v7802 = vadd.f32 %v7534, %v7801
      %v7803 = vpop.f32.mrb[0].mxu0
      %7804 = vmatprep.mubr.bf16.mxu0 %v7476
      %7805 = vmatmul.mubr.bf16.gmra.mrb[0].mxu0 %v7475
      %v7806 = vpop.f32.mrb[0].mxu0
      %v7807 = vadd.f32 %v7534, %v7806
      %v7808 = vpop.f32.mrb[0].mxu0
      %v7809 = vpop.f32.mrb[0].mxu0
      %v7810 = vadd.f32 %v7534, %v7809
      %v7811 = vpop.f32.mrb[0].mxu0
      %7812 = vmatprep.mubr.bf16.mxu0 %v7479
      %7813 = vmatmul.mubr.bf16.gmra.mrb[0].mxu0 %v7478
      %v7814 = vpop.f32.mrb[0].mxu0
      %v7815 = vadd.f32 %v7534, %v7814
      %v7816 = vpop.f32.mrb[0].mxu0
      %v7817 = vpop.f32.mrb[0].mxu0
      %v7818 = vadd.f32 %v7534, %v7817
      %v7819 = vpop.f32.mrb[0].mxu0
      %7820 = vmatprep.mubr.bf16.mxu0 %v7482
      %7821 = vmatmul.mubr.bf16.gmra.mrb[0].mxu0 %v7481
      %v7822 = vpop.f32.mrb[0].mxu0
      %v7823 = vadd.f32 %v7534, %v7822
      %v7824 = vpop.f32.mrb[0].mxu0
      %v7825 = vpop.f32.mrb[0].mxu0
      %v7826 = vadd.f32 %v7534, %v7825
      %v7827 = vpop.f32.mrb[0].mxu0
      %7828 = vmatprep.mubr.bf16.mxu0 %v7485
      %7829 = vmatmul.mubr.bf16.gmra.mrb[0].mxu0 %v7484
      %v7830 = vpop.f32.mrb[0].mxu0
      %v7831 = vadd.f32 %v7534, %v7830
      %v7832 = vpop.f32.mrb[0].mxu0
      %v7833 = vpop.f32.mrb[0].mxu0
      %v7834 = vadd.f32 %v7534, %v7833
      %v7835 = vpop.f32.mrb[0].mxu0
      %7836 = vmatprep.mubr.bf16.mxu0 %v7488
      %7837 = vmatmul.mubr.bf16.gmra.mrb[0].mxu0 %v7487
      %v7838 = vpop.f32.mrb[0].mxu0
      %v7839 = vadd.f32 %v7534, %v7838
      %v7840 = vpop.f32.mrb[0].mxu0
      %v7841 = vpop.f32.mrb[0].mxu0
      %v7842 = vadd.f32 %v7534, %v7841
      %v7843 = vpop.f32.mrb[0].mxu0
      %7844 = vmatprep.mubr.bf16.mxu0 %v7491
      %7845 = vmatmul.mubr.bf16.gmra.mrb[0].mxu0 %v7490
      %v7846 = vpop.f32.mrb[0].mxu0
      %v7847 = vadd.f32 %v7534, %v7846
      %v7848 = vpop.f32.mrb[0].mxu0
      %v7849 = vpop.f32.mrb[0].mxu0
      %v7850 = vadd.f32 %v7534, %v7849
      %v7851 = vpop.f32.mrb[0].mxu0
      %7852 = vdwg.mxu0
      %7853 = vmatprep.subr.bf16.mxu0 0
      %7854 = vmatpush1.bf16.msra.mxu0 %v7624
      %7855 = vmatprep.subr.bf16.mxu0 0
      %7856 = vmatpush1.bf16.msra.mxu0 %v7625
      %7857 = vmatprep.subr.bf16.mxu0 0
      %7858 = vmatpush1.bf16.msra.mxu0 0
      %7859 = vmatprep.subr.bf16.mxu0 0
      %7860 = vmatpush1.bf16.msra.mxu0 0
      %7861 = vmatprep.subr.bf16.mxu0 0
      %7862 = vmatpush1.bf16.msra.mxu0 0
      %7863 = vmatprep.subr.bf16.mxu0 0
      %7864 = vmatpush1.bf16.msra.mxu0 0
      %7865 = vmatprep.subr.bf16.mxu0 0
      %7866 = vmatpush1.bf16.msra.mxu0 0
      %7867 = vmatprep.subr.bf16.mxu0 0
      %7868 = vmatpush1.bf16.msra.mxu0 0
      %7869 = vmatprep.subr.bf16.mxu0 0
      %7870 = vmatpush1.bf16.msra.mxu0 0
      %7871 = vmatprep.subr.bf16.mxu0 0
      %7872 = vmatpush1.bf16.msra.mxu0 0
      %7873 = vmatprep.subr.bf16.mxu0 0
      %7874 = vmatpush1.bf16.msra.mxu0 0
      %7875 = vmatprep.subr.bf16.mxu0 0
      %7876 = vmatpush1.bf16.msra.mxu0 0
      %7877 = vmatprep.subr.bf16.mxu0 0
      %7878 = vmatpush1.bf16.msra.mxu0 0
      %7879 = vmatprep.subr.bf16.mxu0 0
      %7880 = vmatpush1.bf16.msra.mxu0 0
      %7881 = vmatprep.subr.bf16.mxu0 0
      %7882 = vmatpush1.bf16.msra.mxu0 0
      %7883 = vmatprep.subr.bf16.mxu0 0
      %7884 = vmatpush1.bf16.msra.mxu0 0
      %7885 = vmatprep.mubr.bf16.mxu0 0
      %7886 = vmatmul.mubr.bf16.gmra.mrb[0].mxu0 %v7645
      %v7887 = vpop.f32.mrb[0].mxu0
      %v7888 = vadd.f32 %v7727, %v7887
      %v7889 = vpop.f32.mrb[0].mxu0
      %v7890 = vpop.f32.mrb[0].mxu0
      %v7891 = vadd.f32 %v7730, %v7890
      %v7892 = vpop.f32.mrb[0].mxu0
      %7893 = vmatprep.mubr.bf16.mxu0 0
      %7894 = vmatmul.mubr.bf16.gmra.mrb[0].mxu0 %v7648
      %v7895 = vpop.f32.mrb[0].mxu0
      %v7896 = vadd.f32 %v7735, %v7895
      %v7897 = vpop.f32.mrb[0].mxu0
      %v7898 = vpop.f32.mrb[0].mxu0
      %v7899 = vadd.f32 %v7738, %v7898
      %v7900 = vpop.f32.mrb[0].mxu0
      %7901 = vmatprep.mubr.bf16.mxu0 0
      %7902 = vmatmul.mubr.bf16.gmra.mrb[0].mxu0 %v7651
      %v7903 = vpop.f32.mrb[0].mxu0
      %v7904 = vadd.f32 %v7743, %v7903
      %v7905 = vpop.f32.mrb[0].mxu0
      %v7906 = vpop.f32.mrb[0].mxu0
      %v7907 = vadd.f32 %v7746, %v7906
      %v7908 = vpop.f32.mrb[0].mxu0
      %7909 = vmatprep.mubr.bf16.mxu0 0
      %7910 = vmatmul.mubr.bf16.gmra.mrb[0].mxu0 %v7654
      %v7911 = vpop.f32.mrb[0].mxu0
      %v7912 = vadd.f32 %v7751, %v7911
      %v7913 = vpop.f32.mrb[0].mxu0
      %v7914 = vpop.f32.mrb[0].mxu0
      %v7915 = vadd.f32 %v7754, %v7914
      %v7916 = vpop.f32.mrb[0].mxu0
      %7917 = vmatprep.mubr.bf16.mxu0 0
      %7918 = vmatmul.mubr.bf16.gmra.mrb[0].mxu0 %v7657
      %v7919 = vpop.f32.mrb[0].mxu0
      %v7920 = vadd.f32 %v7759, %v7919
      %v7921 = vpop.f32.mrb[0].mxu0
      %v7922 = vpop.f32.mrb[0].mxu0
      %v7923 = vadd.f32 %v7762, %v7922
      %v7924 = vpop.f32.mrb[0].mxu0
      %7925 = vmatprep.mubr.bf16.mxu0 0
      %7926 = vmatmul.mubr.bf16.gmra.mrb[0].mxu0 %v7660
      %v7927 = vpop.f32.mrb[0].mxu0
      %v7928 = vadd.f32 %v7767, %v7927
      %v7929 = vpop.f32.mrb[0].mxu0
      %v7930 = vpop.f32.mrb[0].mxu0
      %v7931 = vadd.f32 %v7770, %v7930
      %v7932 = vpop.f32.mrb[0].mxu0
      %7933 = vmatprep.mubr.bf16.mxu0 0
      %7934 = vmatmul.mubr.bf16.gmra.mrb[0].mxu0 %v7663
      %v7935 = vpop.f32.mrb[0].mxu0
      %v7936 = vadd.f32 %v7775, %v7935
      %v7937 = vpop.f32.mrb[0].mxu0
      %v7938 = vpop.f32.mrb[0].mxu0
      %v7939 = vadd.f32 %v7778, %v7938
      %v7940 = vpop.f32.mrb[0].mxu0
      %7941 = vmatprep.mubr.bf16.mxu0 0
      %7942 = vmatmul.mubr.bf16.gmra.mrb[0].mxu0 %v7666
      %v7943 = vpop.f32.mrb[0].mxu0
      %v7944 = vadd.f32 %v7783, %v7943
      %v7945 = vpop.f32.mrb[0].mxu0
      %v7946 = vpop.f32.mrb[0].mxu0
      %v7947 = vadd.f32 %v7786, %v7946
      %v7948 = vpop.f32.mrb[0].mxu0
      %7949 = vmatprep.mubr.bf16.mxu0 0
      %7950 = vmatmul.mubr.bf16.gmra.mrb[0].mxu0 %v7669
      %v7951 = vpop.f32.mrb[0].mxu0
      %v7952 = vadd.f32 %v7791, %v7951
      %v7953 = vpop.f32.mrb[0].mxu0
      %v7954 = vpop.f32.mrb[0].mxu0
      %v7955 = vadd.f32 %v7794, %v7954
      %v7956 = vpop.f32.mrb[0].mxu0
      %7957 = vmatprep.mubr.bf16.mxu0 0
      %7958 = vmatmul.mubr.bf16.gmra.mrb[0].mxu0 %v7672
      %v7959 = vpop.f32.mrb[0].mxu0
      %v7960 = vadd.f32 %v7799, %v7959
      %v7961 = vpop.f32.mrb[0].mxu0
      %v7962 = vpop.f32.mrb[0].mxu0
      %v7963 = vadd.f32 %v7802, %v7962
      %v7964 = vpop.f32.mrb[0].mxu0
      %7965 = vmatprep.mubr.bf16.mxu0 0
      %7966 = vmatmul.mubr.bf16.gmra.mrb[0].mxu0 %v7675
      %v7967 = vpop.f32.mrb[0].mxu0
      %v7968 = vadd.f32 %v7807, %v7967
      %v7969 = vpop.f32.mrb[0].mxu0
      %v7970 = vpop.f32.mrb[0].mxu0
      %v7971 = vadd.f32 %v7810, %v7970
      %v7972 = vpop.f32.mrb[0].mxu0
      %7973 = vmatprep.mubr.bf16.mxu0 0
      %7974 = vmatmul.mubr.bf16.gmra.mrb[0].mxu0 %v7678
      %v7975 = vpop.f32.mrb[0].mxu0
      %v7976 = vadd.f32 %v7815, %v7975
      %v7977 = vpop.f32.mrb[0].mxu0
      %v7978 = vpop.f32.mrb[0].mxu0
      %v7979 = vadd.f32 %v7818, %v7978
      %v7980 = vpop.f32.mrb[0].mxu0
      %7981 = vmatprep.mubr.bf16.mxu0 0
      %7982 = vmatmul.mubr.bf16.gmra.mrb[0].mxu0 %v7681
      %v7983 = vpop.f32.mrb[0].mxu0
      %v7984 = vadd.f32 %v7823, %v7983
      %v7985 = vpop.f32.mrb[0].mxu0
      %v7986 = vpop.f32.mrb[0].mxu0
      %v7987 = vadd.f32 %v7826, %v7986
      %v7988 = vpop.f32.mrb[0].mxu0
      %7989 = vmatprep.mubr.bf16.mxu0 0
      %7990 = vmatmul.mubr.bf16.gmra.mrb[0].mxu0 %v7684
      %v7991 = vpop.f32.mrb[0].mxu0
      %v7992 = vadd.f32 %v7831, %v7991
      %v7993 = vpop.f32.mrb[0].mxu0
      %v7994 = vpop.f32.mrb[0].mxu0
      %v7995 = vadd.f32 %v7834, %v7994
      %v7996 = vpop.f32.mrb[0].mxu0
      %7997 = vmatprep.mubr.bf16.mxu0 0
      %7998 = vmatmul.mubr.bf16.gmra.mrb[0].mxu0 %v7687
      %v7999 = vpop.f32.mrb[0].mxu0
      %v8000 = vadd.f32 %v7839, %v7999
      %v8001 = vpop.f32.mrb[0].mxu0
      %v8002 = vpop.f32.mrb[0].mxu0
      %v8003 = vadd.f32 %v7842, %v8002
      %v8004 = vpop.f32.mrb[0].mxu0
      %8005 = vmatprep.mubr.bf16.mxu0 0
      %8006 = vmatmul.mubr.bf16.gmra.mrb[0].mxu0 %v7690
      %v8007 = vpop.f32.mrb[0].mxu0
      %v8008 = vadd.f32 %v7847, %v8007
      %v8009 = vpop.f32.mrb[0].mxu0
      %v8010 = vpop.f32.mrb[0].mxu0
      %v8011 = vadd.f32 %v7850, %v8010
      %v8012 = vpop.f32.mrb[0].mxu0
      %8013 = vdwg.mxu0
      %v8014 = vmax.f32 %v7888, 0.0
      %v8015 = vmax.f32 %v7891, 0.0
      %v8016 = vmax.f32 %v7896, 0.0
      %v8017 = vmax.f32 %v7899, 0.0
      %v8018 = vmax.f32 %v7904, 0.0
      %v8019 = vmax.f32 %v7907, 0.0
      %v8020 = vmax.f32 %v7912, 0.0
      %v8021 = vmax.f32 %v7915, 0.0
      %v8022 = vmax.f32 %v7920, 0.0
      %v8023 = vmax.f32 %v7923, 0.0
      %v8024 = vmax.f32 %v7928, 0.0
      %v8025 = vmax.f32 %v7931, 0.0
      %v8026 = vmax.f32 %v7936, 0.0
      %v8027 = vmax.f32 %v7939, 0.0
      %v8028 = vmax.f32 %v7944, 0.0
      %v8029 = vmax.f32 %v7947, 0.0
      %v8030 = vmax.f32 %v7952, 0.0
      %v8031 = vmax.f32 %v7955, 0.0
      %v8032 = vmax.f32 %v7960, 0.0
      %v8033 = vmax.f32 %v7963, 0.0
      %v8034 = vmax.f32 %v7968, 0.0
      %v8035 = vmax.f32 %v7971, 0.0
      %v8036 = vmax.f32 %v7976, 0.0
      %v8037 = vmax.f32 %v7979, 0.0
      %v8038 = vmax.f32 %v7984, 0.0
      %v8039 = vmax.f32 %v7987, 0.0
      %v8040 = vmax.f32 %v7992, 0.0
      %v8041 = vmax.f32 %v7995, 0.0
      %v8042 = vmax.f32 %v8000, 0.0
      %v8043 = vmax.f32 %v8003, 0.0
      %v8044 = vmax.f32 %v8008, 0.0
      %v8045 = vmax.f32 %v8011, 0.0
      %v8046 = vpack.c.bf16 %v8015, %v8014
      %v8047 = vpack.c.bf16 %v8017, %v8016
      %v8048 = vpack.c.bf16 %v8019, %v8018
      %v8049 = vpack.c.bf16 %v8021, %v8020
      %v8050 = vpack.c.bf16 %v8023, %v8022
      %v8051 = vpack.c.bf16 %v8025, %v8024
      %v8052 = vpack.c.bf16 %v8027, %v8026
      %v8053 = vpack.c.bf16 %v8029, %v8028
      %v8054 = vpack.c.bf16 %v8031, %v8030
      %v8055 = vpack.c.bf16 %v8033, %v8032
      %v8056 = vpack.c.bf16 %v8035, %v8034
      %v8057 = vpack.c.bf16 %v8037, %v8036
      %v8058 = vpack.c.bf16 %v8039, %v8038
      %v8059 = vpack.c.bf16 %v8041, %v8040
      %v8060 = vpack.c.bf16 %v8043, %v8042
      %v8061 = vpack.c.bf16 %v8045, %v8044
      %8062 = vst.msk [vmem:[%s511 + $0x8] sm:$0xff] %vm496, %v8046
      %8063 = vst.msk [vmem:[%s511 + $0x20] sm:$0xff] %vm496, %v8047
      %8064 = vst.msk [vmem:[%s511 + $0x38] sm:$0xff] %vm496, %v8048
      %8065 = vst.msk [vmem:[%s511 + $0x50] sm:$0xff] %vm496, %v8049
      %8066 = vst.msk [vmem:[%s511 + $0x68] sm:$0xff] %vm496, %v8050
      %8067 = vst.msk [vmem:[%s511 + $0x80] sm:$0xff] %vm496, %v8051
      %8068 = vst.msk [vmem:[%s511 + $0x98] sm:$0xff] %vm496, %v8052
      %8069 = vst.msk [vmem:[%s511 + $0xb0] sm:$0xff] %vm496, %v8053
      %8070 = vst.msk [vmem:[%s511 + $0xc8] sm:$0xff] %vm496, %v8054
      %8071 = vst.msk [vmem:[%s511 + $0xe0] sm:$0xff] %vm496, %v8055
      %8072 = vst.msk [vmem:[%s511 + $0xf8] sm:$0xff] %vm496, %v8056
      %8073 = vst.msk [vmem:[%s511 + $0x110] sm:$0xff] %vm496, %v8057
      %8074 = vst.msk [vmem:[%s511 + $0x128] sm:$0xff] %vm496, %v8058
      %8075 = vst.msk [vmem:[%s511 + $0x140] sm:$0xff] %vm496, %v8059
      %8076 = vst.msk [vmem:[%s511 + $0x158] sm:$0xff] %vm496, %v8060
      %8077 = vst.msk [vmem:[%s511 + $0x170] sm:$0xff] %vm496, %v8061
      // Predicated region
      $region73: #{jcnn_forward.1} parent=55 // pred_check
        %p8078 = pneg %p370
      $region74: #{jcnn_forward.1} parent=55 // pred_check_branch
        %8080 = sbr.rel (%p8078) target = $region76
      $region75: #{jcnn_forward.1} parent=55 // pred_region
        %8081 = vst.msk [vmem:[%s511 + $0x8] sm:$0xff] %vm496, 0
        %8082 = vst.msk [vmem:[%s511 + $0x20] sm:$0xff] %vm496, 0
        %8083 = vst.msk [vmem:[%s511 + $0x38] sm:$0xff] %vm496, 0
        %8084 = vst.msk [vmem:[%s511 + $0x50] sm:$0xff] %vm496, 0
      $region76: #{jcnn_forward.1} parent=55 // pred_fallthru
        _
      // Predicated region
      $region77: #{jcnn_forward.1} parent=55 // pred_check
        %p8085 = pneg %p371
      $region78: #{jcnn_forward.1} parent=55 // pred_check_branch
        %8087 = sbr.rel (%p8085) target = $region80
      $region79: #{jcnn_forward.1} parent=55 // pred_region
        %s8088 = scalar_lea.vmem [#allocation3], 312
        %8089 = vst.msk [vmem:[%s8088 + $0x8] sm:$0xff] %vm496, 0
        %8090 = vst.msk [vmem:[%s8088 + $0x20] sm:$0xff] %vm496, 0
        %8091 = vst.msk [vmem:[%s8088 + $0x38] sm:$0xff] %vm496, 0
        %8092 = vst.msk [vmem:[%s8088 + $0x50] sm:$0xff] %vm496, 0
      $region80: #{jcnn_forward.1} parent=55 // pred_fallthru
        _
      %s8093 = scalar_lea.vmem [#allocation3], 96
      %v8094 = vld [vmem:[%s8093] sm:$0x80]
      %v8095 = vld [vmem:[%s8093 + $0x8] sm:$0xff]
      %v8096 = vld [vmem:[%s8093 + $0x18] sm:$0x80]
      %v8097 = vld [vmem:[%s8093 + $0x20] sm:$0xff]
      %v8098 = vld [vmem:[%s8093 + $0x30] sm:$0x80]
      %v8099 = vld [vmem:[%s8093 + $0x38] sm:$0xff]
      %v8100 = vld [vmem:[%s8093 + $0x48] sm:$0x80]
      %v8101 = vld [vmem:[%s8093 + $0x50] sm:$0xff]
      %v8102 = vld [vmem:[%s8093 + $0x60] sm:$0x80]
      %v8103 = vld [vmem:[%s8093 + $0x68] sm:$0xff]
      %v8104 = vld [vmem:[%s8093 + $0x78] sm:$0x80]
      %v8105 = vld [vmem:[%s8093 + $0x80] sm:$0xff]
      %v8106 = vld [vmem:[%s8093 + $0x90] sm:$0x80]
      %v8107 = vld [vmem:[%s8093 + $0x98] sm:$0xff]
      %v8108 = vld [vmem:[%s8093 + $0xa8] sm:$0x80]
      %v8109 = vld [vmem:[%s8093 + $0xb0] sm:$0xff]
      %v8111 = vshrl.u32 %v8094, 16
      %v8113 = vrot.slane %v8111, 7
      %v8115 = vshrl.u32 %v8095, 16
      %v8117 = vrot.slane %v8115, 7
      %v8118 = vshll.u32 %v8095, 16
      %v8120 = vor.u32 %v8117, %v8118
      %v8121 = vsel %vm381, %v8113, %v8120
      %v8123 = vshrl.u32 %v8096, 16
      %v8125 = vrot.slane %v8123, 7
      %v8127 = vshrl.u32 %v8097, 16
      %v8129 = vrot.slane %v8127, 7
      %v8130 = vshll.u32 %v8097, 16
      %v8132 = vor.u32 %v8129, %v8130
      %v8133 = vsel %vm381, %v8125, %v8132
      %v8135 = vshrl.u32 %v8098, 16
      %v8137 = vrot.slane %v8135, 7
      %v8139 = vshrl.u32 %v8099, 16
      %v8141 = vrot.slane %v8139, 7
      %v8142 = vshll.u32 %v8099, 16
      %v8144 = vor.u32 %v8141, %v8142
      %v8145 = vsel %vm381, %v8137, %v8144
      %v8147 = vshrl.u32 %v8100, 16
      %v8149 = vrot.slane %v8147, 7
      %v8151 = vshrl.u32 %v8101, 16
      %v8153 = vrot.slane %v8151, 7
      %v8154 = vshll.u32 %v8101, 16
      %v8156 = vor.u32 %v8153, %v8154
      %v8157 = vsel %vm381, %v8149, %v8156
      %v8159 = vshrl.u32 %v8102, 16
      %v8161 = vrot.slane %v8159, 7
      %v8163 = vshrl.u32 %v8103, 16
      %v8165 = vrot.slane %v8163, 7
      %v8166 = vshll.u32 %v8103, 16
      %v8168 = vor.u32 %v8165, %v8166
      %v8169 = vsel %vm381, %v8161, %v8168
      %v8171 = vshrl.u32 %v8104, 16
      %v8173 = vrot.slane %v8171, 7
      %v8175 = vshrl.u32 %v8105, 16
      %v8177 = vrot.slane %v8175, 7
      %v8178 = vshll.u32 %v8105, 16
      %v8180 = vor.u32 %v8177, %v8178
      %v8181 = vsel %vm381, %v8173, %v8180
      %v8183 = vshrl.u32 %v8106, 16
      %v8185 = vrot.slane %v8183, 7
      %v8187 = vshrl.u32 %v8107, 16
      %v8189 = vrot.slane %v8187, 7
      %v8190 = vshll.u32 %v8107, 16
      %v8192 = vor.u32 %v8189, %v8190
      %v8193 = vsel %vm381, %v8185, %v8192
      %v8195 = vshrl.u32 %v8108, 16
      %v8197 = vrot.slane %v8195, 7
      %v8199 = vshrl.u32 %v8109, 16
      %v8201 = vrot.slane %v8199, 7
      %v8202 = vshll.u32 %v8109, 16
      %v8204 = vor.u32 %v8201, %v8202
      %v8205 = vsel %vm381, %v8197, %v8204
      %v8206 = vld [vmem:[%s8093 + $0x10] sm:$0x1]
      %v8207 = vld [vmem:[%s8093 + $0x28] sm:$0x1]
      %v8208 = vld [vmem:[%s8093 + $0x40] sm:$0x1]
      %v8209 = vld [vmem:[%s8093 + $0x58] sm:$0x1]
      %v8210 = vld [vmem:[%s8093 + $0x70] sm:$0x1]
      %v8211 = vld [vmem:[%s8093 + $0x88] sm:$0x1]
      %v8212 = vld [vmem:[%s8093 + $0xa0] sm:$0x1]
      %v8213 = vld [vmem:[%s8093 + $0xb8] sm:$0x1]
      %v8214 = vrot.slane %v8118, 1
      %v8215 = vor.u32 %v8115, %v8214
      %v8217 = vshll.u32 %v8206, 16
      %v8219 = vrot.slane %v8217, 1
      %v8220 = vsel %vm4062, %v8215, %v8219
      %v8221 = vrot.slane %v8130, 1
      %v8222 = vor.u32 %v8127, %v8221
      %v8224 = vshll.u32 %v8207, 16
      %v8226 = vrot.slane %v8224, 1
      %v8227 = vsel %vm4062, %v8222, %v8226
      %v8228 = vrot.slane %v8142, 1
      %v8229 = vor.u32 %v8139, %v8228
      %v8231 = vshll.u32 %v8208, 16
      %v8233 = vrot.slane %v8231, 1
      %v8234 = vsel %vm4062, %v8229, %v8233
      %v8235 = vrot.slane %v8154, 1
      %v8236 = vor.u32 %v8151, %v8235
      %v8238 = vshll.u32 %v8209, 16
      %v8240 = vrot.slane %v8238, 1
      %v8241 = vsel %vm4062, %v8236, %v8240
      %v8242 = vrot.slane %v8166, 1
      %v8243 = vor.u32 %v8163, %v8242
      %v8245 = vshll.u32 %v8210, 16
      %v8247 = vrot.slane %v8245, 1
      %v8248 = vsel %vm4062, %v8243, %v8247
      %v8249 = vrot.slane %v8178, 1
      %v8250 = vor.u32 %v8175, %v8249
      %v8252 = vshll.u32 %v8211, 16
      %v8254 = vrot.slane %v8252, 1
      %v8255 = vsel %vm4062, %v8250, %v8254
      %v8256 = vrot.slane %v8190, 1
      %v8257 = vor.u32 %v8187, %v8256
      %v8259 = vshll.u32 %v8212, 16
      %v8261 = vrot.slane %v8259, 1
      %v8262 = vsel %vm4062, %v8257, %v8261
      %v8263 = vrot.slane %v8202, 1
      %v8264 = vor.u32 %v8199, %v8263
      %v8266 = vshll.u32 %v8213, 16
      %v8268 = vrot.slane %v8266, 1
      %v8269 = vsel %vm4062, %v8264, %v8268
      %s8270 = scalar_lea.vmem [#allocation3], 120
      %v8271 = vld [vmem:[%s8270] sm:$0x80]
      %v8272 = vld [vmem:[%s8270 + $0x8] sm:$0xff]
      %v8273 = vld [vmem:[%s8270 + $0x18] sm:$0x80]
      %v8274 = vld [vmem:[%s8270 + $0x20] sm:$0xff]
      %v8275 = vld [vmem:[%s8270 + $0x30] sm:$0x80]
      %v8276 = vld [vmem:[%s8270 + $0x38] sm:$0xff]
      %v8277 = vld [vmem:[%s8270 + $0x48] sm:$0x80]
      %v8278 = vld [vmem:[%s8270 + $0x50] sm:$0xff]
      %v8279 = vld [vmem:[%s8270 + $0x60] sm:$0x80]
      %v8280 = vld [vmem:[%s8270 + $0x68] sm:$0xff]
      %v8281 = vld [vmem:[%s8270 + $0x78] sm:$0x80]
      %v8282 = vld [vmem:[%s8270 + $0x80] sm:$0xff]
      %v8283 = vld [vmem:[%s8270 + $0x90] sm:$0x80]
      %v8284 = vld [vmem:[%s8270 + $0x98] sm:$0xff]
      %v8285 = vld [vmem:[%s8270 + $0xa8] sm:$0x80]
      %v8286 = vld [vmem:[%s8270 + $0xb0] sm:$0xff]
      %v8288 = vshrl.u32 %v8271, 16
      %v8290 = vrot.slane %v8288, 7
      %v8292 = vshrl.u32 %v8272, 16
      %v8294 = vrot.slane %v8292, 7
      %v8295 = vshll.u32 %v8272, 16
      %v8297 = vor.u32 %v8294, %v8295
      %v8298 = vsel %vm381, %v8290, %v8297
      %v8300 = vshrl.u32 %v8273, 16
      %v8302 = vrot.slane %v8300, 7
      %v8304 = vshrl.u32 %v8274, 16
      %v8306 = vrot.slane %v8304, 7
      %v8307 = vshll.u32 %v8274, 16
      %v8309 = vor.u32 %v8306, %v8307
      %v8310 = vsel %vm381, %v8302, %v8309
      %v8312 = vshrl.u32 %v8275, 16
      %v8314 = vrot.slane %v8312, 7
      %v8316 = vshrl.u32 %v8276, 16
      %v8318 = vrot.slane %v8316, 7
      %v8319 = vshll.u32 %v8276, 16
      %v8321 = vor.u32 %v8318, %v8319
      %v8322 = vsel %vm381, %v8314, %v8321
      %v8324 = vshrl.u32 %v8277, 16
      %v8326 = vrot.slane %v8324, 7
      %v8328 = vshrl.u32 %v8278, 16
      %v8330 = vrot.slane %v8328, 7
      %v8331 = vshll.u32 %v8278, 16
      %v8333 = vor.u32 %v8330, %v8331
      %v8334 = vsel %vm381, %v8326, %v8333
      %v8336 = vshrl.u32 %v8279, 16
      %v8338 = vrot.slane %v8336, 7
      %v8340 = vshrl.u32 %v8280, 16
      %v8342 = vrot.slane %v8340, 7
      %v8343 = vshll.u32 %v8280, 16
      %v8345 = vor.u32 %v8342, %v8343
      %v8346 = vsel %vm381, %v8338, %v8345
      %v8348 = vshrl.u32 %v8281, 16
      %v8350 = vrot.slane %v8348, 7
      %v8352 = vshrl.u32 %v8282, 16
      %v8354 = vrot.slane %v8352, 7
      %v8355 = vshll.u32 %v8282, 16
      %v8357 = vor.u32 %v8354, %v8355
      %v8358 = vsel %vm381, %v8350, %v8357
      %v8360 = vshrl.u32 %v8283, 16
      %v8362 = vrot.slane %v8360, 7
      %v8364 = vshrl.u32 %v8284, 16
      %v8366 = vrot.slane %v8364, 7
      %v8367 = vshll.u32 %v8284, 16
      %v8369 = vor.u32 %v8366, %v8367
      %v8370 = vsel %vm381, %v8362, %v8369
      %v8372 = vshrl.u32 %v8285, 16
      %v8374 = vrot.slane %v8372, 7
      %v8376 = vshrl.u32 %v8286, 16
      %v8378 = vrot.slane %v8376, 7
      %v8379 = vshll.u32 %v8286, 16
      %v8381 = vor.u32 %v8378, %v8379
      %v8382 = vsel %vm381, %v8374, %v8381
      %v8383 = vld [vmem:[%s8270 + $0x10] sm:$0x1]
      %v8384 = vld [vmem:[%s8270 + $0x28] sm:$0x1]
      %v8385 = vld [vmem:[%s8270 + $0x40] sm:$0x1]
      %v8386 = vld [vmem:[%s8270 + $0x58] sm:$0x1]
      %v8387 = vld [vmem:[%s8270 + $0x70] sm:$0x1]
      %v8388 = vld [vmem:[%s8270 + $0x88] sm:$0x1]
      %v8389 = vld [vmem:[%s8270 + $0xa0] sm:$0x1]
      %v8390 = vld [vmem:[%s8270 + $0xb8] sm:$0x1]
      %v8391 = vrot.slane %v8295, 1
      %v8392 = vor.u32 %v8292, %v8391
      %v8394 = vshll.u32 %v8383, 16
      %v8396 = vrot.slane %v8394, 1
      %v8397 = vsel %vm4062, %v8392, %v8396
      %v8398 = vrot.slane %v8307, 1
      %v8399 = vor.u32 %v8304, %v8398
      %v8401 = vshll.u32 %v8384, 16
      %v8403 = vrot.slane %v8401, 1
      %v8404 = vsel %vm4062, %v8399, %v8403
      %v8405 = vrot.slane %v8319, 1
      %v8406 = vor.u32 %v8316, %v8405
      %v8408 = vshll.u32 %v8385, 16
      %v8410 = vrot.slane %v8408, 1
      %v8411 = vsel %vm4062, %v8406, %v8410
      %v8412 = vrot.slane %v8331, 1
      %v8413 = vor.u32 %v8328, %v8412
      %v8415 = vshll.u32 %v8386, 16
      %v8417 = vrot.slane %v8415, 1
      %v8418 = vsel %vm4062, %v8413, %v8417
      %v8419 = vrot.slane %v8343, 1
      %v8420 = vor.u32 %v8340, %v8419
      %v8422 = vshll.u32 %v8387, 16
      %v8424 = vrot.slane %v8422, 1
      %v8425 = vsel %vm4062, %v8420, %v8424
      %v8426 = vrot.slane %v8355, 1
      %v8427 = vor.u32 %v8352, %v8426
      %v8429 = vshll.u32 %v8388, 16
      %v8431 = vrot.slane %v8429, 1
      %v8432 = vsel %vm4062, %v8427, %v8431
      %v8433 = vrot.slane %v8367, 1
      %v8434 = vor.u32 %v8364, %v8433
      %v8436 = vshll.u32 %v8389, 16
      %v8438 = vrot.slane %v8436, 1
      %v8439 = vsel %vm4062, %v8434, %v8438
      %v8440 = vrot.slane %v8379, 1
      %v8441 = vor.u32 %v8376, %v8440
      %v8443 = vshll.u32 %v8390, 16
      %v8445 = vrot.slane %v8443, 1
      %v8446 = vsel %vm4062, %v8441, %v8445
      %s8447 = scalar_lea.vmem [#allocation3], 144
      %v8448 = vld [vmem:[%s8447] sm:$0x80]
      %v8449 = vld [vmem:[%s8447 + $0x8] sm:$0xff]
      %v8450 = vld [vmem:[%s8447 + $0x18] sm:$0x80]
      %v8451 = vld [vmem:[%s8447 + $0x20] sm:$0xff]
      %v8452 = vld [vmem:[%s8447 + $0x30] sm:$0x80]
      %v8453 = vld [vmem:[%s8447 + $0x38] sm:$0xff]
      %v8454 = vld [vmem:[%s8447 + $0x48] sm:$0x80]
      %v8455 = vld [vmem:[%s8447 + $0x50] sm:$0xff]
      %v8456 = vld [vmem:[%s8447 + $0x60] sm:$0x80]
      %v8457 = vld [vmem:[%s8447 + $0x68] sm:$0xff]
      %v8458 = vld [vmem:[%s8447 + $0x78] sm:$0x80]
      %v8459 = vld [vmem:[%s8447 + $0x80] sm:$0xff]
      %v8460 = vld [vmem:[%s8447 + $0x90] sm:$0x80]
      %v8461 = vld [vmem:[%s8447 + $0x98] sm:$0xff]
      %v8462 = vld [vmem:[%s8447 + $0xa8] sm:$0x80]
      %v8463 = vld [vmem:[%s8447 + $0xb0] sm:$0xff]
      %v8465 = vshrl.u32 %v8448, 16
      %v8467 = vrot.slane %v8465, 7
      %v8469 = vshrl.u32 %v8449, 16
      %v8471 = vrot.slane %v8469, 7
      %v8472 = vshll.u32 %v8449, 16
      %v8474 = vor.u32 %v8471, %v8472
      %v8475 = vsel %vm381, %v8467, %v8474
      %v8477 = vshrl.u32 %v8450, 16
      %v8479 = vrot.slane %v8477, 7
      %v8481 = vshrl.u32 %v8451, 16
      %v8483 = vrot.slane %v8481, 7
      %v8484 = vshll.u32 %v8451, 16
      %v8486 = vor.u32 %v8483, %v8484
      %v8487 = vsel %vm381, %v8479, %v8486
      %v8489 = vshrl.u32 %v8452, 16
      %v8491 = vrot.slane %v8489, 7
      %v8493 = vshrl.u32 %v8453, 16
      %v8495 = vrot.slane %v8493, 7
      %v8496 = vshll.u32 %v8453, 16
      %v8498 = vor.u32 %v8495, %v8496
      %v8499 = vsel %vm381, %v8491, %v8498
      %v8501 = vshrl.u32 %v8454, 16
      %v8503 = vrot.slane %v8501, 7
      %v8505 = vshrl.u32 %v8455, 16
      %v8507 = vrot.slane %v8505, 7
      %v8508 = vshll.u32 %v8455, 16
      %v8510 = vor.u32 %v8507, %v8508
      %v8511 = vsel %vm381, %v8503, %v8510
      %v8513 = vshrl.u32 %v8456, 16
      %v8515 = vrot.slane %v8513, 7
      %v8517 = vshrl.u32 %v8457, 16
      %v8519 = vrot.slane %v8517, 7
      %v8520 = vshll.u32 %v8457, 16
      %v8522 = vor.u32 %v8519, %v8520
      %v8523 = vsel %vm381, %v8515, %v8522
      %v8525 = vshrl.u32 %v8458, 16
      %v8527 = vrot.slane %v8525, 7
      %v8529 = vshrl.u32 %v8459, 16
      %v8531 = vrot.slane %v8529, 7
      %v8532 = vshll.u32 %v8459, 16
      %v8534 = vor.u32 %v8531, %v8532
      %v8535 = vsel %vm381, %v8527, %v8534
      %v8537 = vshrl.u32 %v8460, 16
      %v8539 = vrot.slane %v8537, 7
      %v8541 = vshrl.u32 %v8461, 16
      %v8543 = vrot.slane %v8541, 7
      %v8544 = vshll.u32 %v8461, 16
      %v8546 = vor.u32 %v8543, %v8544
      %v8547 = vsel %vm381, %v8539, %v8546
      %v8549 = vshrl.u32 %v8462, 16
      %v8551 = vrot.slane %v8549, 7
      %v8553 = vshrl.u32 %v8463, 16
      %v8555 = vrot.slane %v8553, 7
      %v8556 = vshll.u32 %v8463, 16
      %v8558 = vor.u32 %v8555, %v8556
      %v8559 = vsel %vm381, %v8551, %v8558
      %v8560 = vld [vmem:[%s8447 + $0x10] sm:$0x1]
      %v8561 = vld [vmem:[%s8447 + $0x28] sm:$0x1]
      %v8562 = vld [vmem:[%s8447 + $0x40] sm:$0x1]
      %v8563 = vld [vmem:[%s8447 + $0x58] sm:$0x1]
      %v8564 = vld [vmem:[%s8447 + $0x70] sm:$0x1]
      %v8565 = vld [vmem:[%s8447 + $0x88] sm:$0x1]
      %v8566 = vld [vmem:[%s8447 + $0xa0] sm:$0x1]
      %v8567 = vld [vmem:[%s8447 + $0xb8] sm:$0x1]
      %v8568 = vrot.slane %v8472, 1
      %v8569 = vor.u32 %v8469, %v8568
      %v8571 = vshll.u32 %v8560, 16
      %v8573 = vrot.slane %v8571, 1
      %v8574 = vsel %vm4062, %v8569, %v8573
      %v8575 = vrot.slane %v8484, 1
      %v8576 = vor.u32 %v8481, %v8575
      %v8578 = vshll.u32 %v8561, 16
      %v8580 = vrot.slane %v8578, 1
      %v8581 = vsel %vm4062, %v8576, %v8580
      %v8582 = vrot.slane %v8496, 1
      %v8583 = vor.u32 %v8493, %v8582
      %v8585 = vshll.u32 %v8562, 16
      %v8587 = vrot.slane %v8585, 1
      %v8588 = vsel %vm4062, %v8583, %v8587
      %v8589 = vrot.slane %v8508, 1
      %v8590 = vor.u32 %v8505, %v8589
      %v8592 = vshll.u32 %v8563, 16
      %v8594 = vrot.slane %v8592, 1
      %v8595 = vsel %vm4062, %v8590, %v8594
      %v8596 = vrot.slane %v8520, 1
      %v8597 = vor.u32 %v8517, %v8596
      %v8599 = vshll.u32 %v8564, 16
      %v8601 = vrot.slane %v8599, 1
      %v8602 = vsel %vm4062, %v8597, %v8601
      %v8603 = vrot.slane %v8532, 1
      %v8604 = vor.u32 %v8529, %v8603
      %v8606 = vshll.u32 %v8565, 16
      %v8608 = vrot.slane %v8606, 1
      %v8609 = vsel %vm4062, %v8604, %v8608
      %v8610 = vrot.slane %v8544, 1
      %v8611 = vor.u32 %v8541, %v8610
      %v8613 = vshll.u32 %v8566, 16
      %v8615 = vrot.slane %v8613, 1
      %v8616 = vsel %vm4062, %v8611, %v8615
      %v8617 = vrot.slane %v8556, 1
      %v8618 = vor.u32 %v8553, %v8617
      %v8620 = vshll.u32 %v8567, 16
      %v8622 = vrot.slane %v8620, 1
      %v8623 = vsel %vm4062, %v8618, %v8622
      %8640 = vrot.lane.b32.xlu0 %v8095, 32
      %v8641 = vpop.permute.xlu0 %8640
      %8642 = vrot.lane.b32.xlu0 %v8097, 32
      %v8643 = vpop.permute.xlu0 %8642
      %8644 = vrot.lane.b32.xlu0 %v8099, 32
      %v8645 = vpop.permute.xlu0 %8644
      %8646 = vrot.lane.b32.xlu0 %v8101, 32
      %v8647 = vpop.permute.xlu0 %8646
      %8648 = vrot.lane.b32.xlu0 %v8103, 32
      %v8649 = vpop.permute.xlu0 %8648
      %8650 = vrot.lane.b32.xlu0 %v8105, 32
      %v8651 = vpop.permute.xlu0 %8650
      %8652 = vrot.lane.b32.xlu0 %v8107, 32
      %v8653 = vpop.permute.xlu0 %8652
      %8654 = vrot.lane.b32.xlu0 %v8109, 32
      %v8655 = vpop.permute.xlu0 %8654
      %8656 = vrot.lane.b32.xlu0 %v8220, 64
      %v8657 = vpop.permute.xlu0 %8656
      %8658 = vrot.lane.b32.xlu0 %v8227, 64
      %v8659 = vpop.permute.xlu0 %8658
      %8660 = vrot.lane.b32.xlu0 %v8234, 64
      %v8661 = vpop.permute.xlu0 %8660
      %8662 = vrot.lane.b32.xlu0 %v8241, 64
      %v8663 = vpop.permute.xlu0 %8662
      %8664 = vrot.lane.b32.xlu0 %v8248, 64
      %v8665 = vpop.permute.xlu0 %8664
      %8666 = vrot.lane.b32.xlu0 %v8255, 64
      %v8667 = vpop.permute.xlu0 %8666
      %8668 = vrot.lane.b32.xlu0 %v8262, 64
      %v8669 = vpop.permute.xlu0 %8668
      %8670 = vrot.lane.b32.xlu0 %v8269, 64
      %v8671 = vpop.permute.xlu0 %8670
      %8672 = vrot.lane.b32.xlu0 %v8298, 96
      %v8673 = vpop.permute.xlu0 %8672
      %8674 = vrot.lane.b32.xlu0 %v8310, 96
      %v8675 = vpop.permute.xlu0 %8674
      %8676 = vrot.lane.b32.xlu0 %v8322, 96
      %v8677 = vpop.permute.xlu0 %8676
      %8678 = vrot.lane.b32.xlu0 %v8334, 96
      %v8679 = vpop.permute.xlu0 %8678
      %8680 = vrot.lane.b32.xlu0 %v8346, 96
      %v8681 = vpop.permute.xlu0 %8680
      %8682 = vrot.lane.b32.xlu0 %v8358, 96
      %v8683 = vpop.permute.xlu0 %8682
      %8684 = vrot.lane.b32.xlu0 %v8370, 96
      %v8685 = vpop.permute.xlu0 %8684
      %8686 = vrot.lane.b32.xlu0 %v8382, 96
      %v8687 = vpop.permute.xlu0 %8686
      %8688 = vrot.lane.b32.xlu0 %v8397, 32
      %v8689 = vpop.permute.xlu0 %8688
      %8690 = vrot.lane.b32.xlu0 %v8404, 32
      %v8691 = vpop.permute.xlu0 %8690
      %8692 = vrot.lane.b32.xlu0 %v8411, 32
      %v8693 = vpop.permute.xlu0 %8692
      %8694 = vrot.lane.b32.xlu0 %v8418, 32
      %v8695 = vpop.permute.xlu0 %8694
      %8696 = vrot.lane.b32.xlu0 %v8425, 32
      %v8697 = vpop.permute.xlu0 %8696
      %8698 = vrot.lane.b32.xlu0 %v8432, 32
      %v8699 = vpop.permute.xlu0 %8698
      %8700 = vrot.lane.b32.xlu0 %v8439, 32
      %v8701 = vpop.permute.xlu0 %8700
      %8702 = vrot.lane.b32.xlu0 %v8446, 32
      %v8703 = vpop.permute.xlu0 %8702
      %8704 = vrot.lane.b32.xlu0 %v8475, 64
      %v8705 = vpop.permute.xlu0 %8704
      %8706 = vrot.lane.b32.xlu0 %v8487, 64
      %v8707 = vpop.permute.xlu0 %8706
      %8708 = vrot.lane.b32.xlu0 %v8499, 64
      %v8709 = vpop.permute.xlu0 %8708
      %8710 = vrot.lane.b32.xlu0 %v8511, 64
      %v8711 = vpop.permute.xlu0 %8710
      %8712 = vrot.lane.b32.xlu0 %v8523, 64
      %v8713 = vpop.permute.xlu0 %8712
      %8714 = vrot.lane.b32.xlu0 %v8535, 64
      %v8715 = vpop.permute.xlu0 %8714
      %8716 = vrot.lane.b32.xlu0 %v8547, 64
      %v8717 = vpop.permute.xlu0 %8716
      %8718 = vrot.lane.b32.xlu0 %v8559, 64
      %v8719 = vpop.permute.xlu0 %8718
      %8728 = vrot.lane.b32.xlu0 %v8449, 96
      %v8729 = vpop.permute.xlu0 %8728
      %8730 = vrot.lane.b32.xlu0 %v8451, 96
      %v8731 = vpop.permute.xlu0 %8730
      %8732 = vrot.lane.b32.xlu0 %v8453, 96
      %v8733 = vpop.permute.xlu0 %8732
      %8734 = vrot.lane.b32.xlu0 %v8455, 96
      %v8735 = vpop.permute.xlu0 %8734
      %8736 = vrot.lane.b32.xlu0 %v8457, 96
      %v8737 = vpop.permute.xlu0 %8736
      %8738 = vrot.lane.b32.xlu0 %v8459, 96
      %v8739 = vpop.permute.xlu0 %8738
      %8740 = vrot.lane.b32.xlu0 %v8461, 96
      %v8741 = vpop.permute.xlu0 %8740
      %8742 = vrot.lane.b32.xlu0 %v8463, 96
      %v8743 = vpop.permute.xlu0 %8742
      %v8746 = vsel %vm496, %v8121, %v8641
      %v8749 = vsel %vm496, %v8133, %v8643
      %v8752 = vsel %vm496, %v8145, %v8645
      %v8755 = vsel %vm496, %v8157, %v8647
      %v8758 = vsel %vm496, %v8169, %v8649
      %v8761 = vsel %vm496, %v8181, %v8651
      %v8764 = vsel %vm496, %v8193, %v8653
      %v8767 = vsel %vm496, %v8205, %v8655
      %v8769 = vsel %vm5281, %v8746, %v8657
      %v8771 = vsel %vm5281, %v8749, %v8659
      %v8773 = vsel %vm5281, %v8752, %v8661
      %v8775 = vsel %vm5281, %v8755, %v8663
      %v8777 = vsel %vm5281, %v8758, %v8665
      %v8779 = vsel %vm5281, %v8761, %v8667
      %v8781 = vsel %vm5281, %v8764, %v8669
      %v8783 = vsel %vm5281, %v8767, %v8671
      %v8785 = vsel %vm5347, %v8769, %v8673
      %v8788 = vsel %vm5347, %v8771, %v8675
      %v8791 = vsel %vm5347, %v8773, %v8677
      %v8794 = vsel %vm5347, %v8775, %v8679
      %v8797 = vsel %vm5347, %v8777, %v8681
      %v8800 = vsel %vm5347, %v8779, %v8683
      %v8803 = vsel %vm5347, %v8781, %v8685
      %v8806 = vsel %vm5347, %v8783, %v8687
      %v8809 = vsel %vm496, %v8272, %v8689
      %v8811 = vsel %vm496, %v8274, %v8691
      %v8813 = vsel %vm496, %v8276, %v8693
      %v8815 = vsel %vm496, %v8278, %v8695
      %v8817 = vsel %vm496, %v8280, %v8697
      %v8819 = vsel %vm496, %v8282, %v8699
      %v8821 = vsel %vm496, %v8284, %v8701
      %v8823 = vsel %vm496, %v8286, %v8703
      %v8825 = vsel %vm5281, %v8809, %v8705
      %v8827 = vsel %vm5281, %v8811, %v8707
      %v8829 = vsel %vm5281, %v8813, %v8709
      %v8831 = vsel %vm5281, %v8815, %v8711
      %v8833 = vsel %vm5281, %v8817, %v8713
      %v8835 = vsel %vm5281, %v8819, %v8715
      %v8837 = vsel %vm5281, %v8821, %v8717
      %v8839 = vsel %vm5281, %v8823, %v8719
      %v8841 = vsel %vm5347, %v8825, %v8729
      %v8844 = vsel %vm5347, %v8827, %v8731
      %v8847 = vsel %vm5347, %v8829, %v8733
      %v8850 = vsel %vm5347, %v8831, %v8735
      %v8853 = vsel %vm5347, %v8833, %v8737
      %v8856 = vsel %vm5347, %v8835, %v8739
      %v8859 = vsel %vm5347, %v8837, %v8741
      %v8862 = vsel %vm5347, %v8839, %v8743
      %8864 = vst [vmem:[#allocation6] sm:$0xff] %v8785
      %8865 = vst [vmem:[#allocation6 + $0x8] sm:$0xff] %v8841
      %8866 = vst.msk [vmem:[#allocation6 + $0x10] sm:$0xff] %vm496, %v8574
      %8867 = vst [vmem:[#allocation6 + $0x18] sm:$0xff] %v8788
      %8868 = vst [vmem:[#allocation6 + $0x20] sm:$0xff] %v8844
      %8869 = vst.msk [vmem:[#allocation6 + $0x28] sm:$0xff] %vm496, %v8581
      %8870 = vst [vmem:[#allocation6 + $0x30] sm:$0xff] %v8791
      %8871 = vst [vmem:[#allocation6 + $0x38] sm:$0xff] %v8847
      %8872 = vst.msk [vmem:[#allocation6 + $0x40] sm:$0xff] %vm496, %v8588
      %8873 = vst [vmem:[#allocation6 + $0x48] sm:$0xff] %v8794
      %8874 = vst [vmem:[#allocation6 + $0x50] sm:$0xff] %v8850
      %8875 = vst.msk [vmem:[#allocation6 + $0x58] sm:$0xff] %vm496, %v8595
      %8876 = vst [vmem:[#allocation6 + $0x60] sm:$0xff] %v8797
      %8877 = vst [vmem:[#allocation6 + $0x68] sm:$0xff] %v8853
      %8878 = vst.msk [vmem:[#allocation6 + $0x70] sm:$0xff] %vm496, %v8602
      %8879 = vst [vmem:[#allocation6 + $0x78] sm:$0xff] %v8800
      %8880 = vst [vmem:[#allocation6 + $0x80] sm:$0xff] %v8856
      %8881 = vst.msk [vmem:[#allocation6 + $0x88] sm:$0xff] %vm496, %v8609
      %8882 = vst [vmem:[#allocation6 + $0x90] sm:$0xff] %v8803
      %8883 = vst [vmem:[#allocation6 + $0x98] sm:$0xff] %v8859
      %8884 = vst.msk [vmem:[#allocation6 + $0xa0] sm:$0xff] %vm496, %v8616
      %8885 = vst [vmem:[#allocation6 + $0xa8] sm:$0xff] %v8806
      %8886 = vst [vmem:[#allocation6 + $0xb0] sm:$0xff] %v8862
      %8887 = vst.msk [vmem:[#allocation6 + $0xb8] sm:$0xff] %vm496, %v8623
      %v8888 = vld [vmem:[#allocation6] sm:$0xff]
      %v8889 = vld [vmem:[#allocation6 + $0x8] sm:$0xff]
      %v8890 = vld [vmem:[#allocation6 + $0x10] sm:$0xff]
      %v8891 = vld [vmem:[#allocation6 + $0x18] sm:$0xff]
      %v8892 = vld [vmem:[#allocation6 + $0x20] sm:$0xff]
      %v8893 = vld [vmem:[#allocation6 + $0x28] sm:$0xff]
      %v8894 = vld [vmem:[#allocation6 + $0x30] sm:$0xff]
      %v8895 = vld [vmem:[#allocation6 + $0x38] sm:$0xff]
      %v8896 = vld [vmem:[#allocation6 + $0x40] sm:$0xff]
      %v8897 = vld [vmem:[#allocation6 + $0x48] sm:$0xff]
      %v8898 = vld [vmem:[#allocation6 + $0x50] sm:$0xff]
      %v8899 = vld [vmem:[#allocation6 + $0x58] sm:$0xff]
      %v8900 = vld [vmem:[#allocation6 + $0x60] sm:$0xff]
      %v8901 = vld [vmem:[#allocation6 + $0x68] sm:$0xff]
      %v8902 = vld [vmem:[#allocation6 + $0x70] sm:$0xff]
      %v8903 = vld [vmem:[#allocation6 + $0x78] sm:$0xff]
      %v8904 = vld [vmem:[#allocation6 + $0x80] sm:$0xff]
      %v8905 = vld [vmem:[#allocation6 + $0x88] sm:$0xff]
      %v8906 = vld [vmem:[#allocation6 + $0x90] sm:$0xff]
      %v8907 = vld [vmem:[#allocation6 + $0x98] sm:$0xff]
      %v8908 = vld [vmem:[#allocation6 + $0xa0] sm:$0xff]
      %v8909 = vld [vmem:[#allocation6 + $0xa8] sm:$0xff]
      %v8910 = vld [vmem:[#allocation6 + $0xb0] sm:$0xff]
      %v8911 = vld [vmem:[#allocation6 + $0xb8] sm:$0xff]
      %v8912 = vld [vmem:[%s7] sm:$0xf]
      %v8913 = vld [vmem:[%s7 + $0x4] sm:$0xf]
      %v8914 = vld [vmem:[%s7 + $0x8] sm:$0xf]
      %v8915 = vld [vmem:[%s7 + $0xc] sm:$0xf]
      %v8916 = vld [vmem:[%s7 + $0x10] sm:$0xf]
      %v8917 = vld [vmem:[%s7 + $0x14] sm:$0xf]
      %v8918 = vld [vmem:[%s7 + $0x18] sm:$0xf]
      %v8919 = vld [vmem:[%s7 + $0x1c] sm:$0xf]
      %v8920 = vld [vmem:[%s7 + $0x20] sm:$0xf]
      %v8921 = vld [vmem:[%s7 + $0x24] sm:$0xf]
      %v8922 = vld [vmem:[%s7 + $0x28] sm:$0xf]
      %v8923 = vld [vmem:[%s7 + $0x2c] sm:$0xf]
      %v8924 = vld [vmem:[%s7 + $0x30] sm:$0xf]
      %v8925 = vld [vmem:[%s7 + $0x34] sm:$0xf]
      %v8926 = vld [vmem:[%s7 + $0x38] sm:$0xf]
      %v8927 = vld [vmem:[%s7 + $0x3c] sm:$0xf]
      %v8928 = vld [vmem:[%s7 + $0x40] sm:$0xf]
      %v8929 = vld [vmem:[%s7 + $0x44] sm:$0xf]
      %v8930 = vld [vmem:[%s7 + $0x48] sm:$0xf]
      %v8931 = vld [vmem:[%s7 + $0x4c] sm:$0xf]
      %v8932 = vld [vmem:[%s7 + $0x50] sm:$0xf]
      %v8933 = vld [vmem:[%s7 + $0x54] sm:$0xf]
      %v8934 = vld [vmem:[%s7 + $0x58] sm:$0xf]
      %v8935 = vld [vmem:[%s7 + $0x5c] sm:$0xf]
      %v8936 = vld [vmem:[%s7 + $0x60] sm:$0xf]
      %v8937 = vld [vmem:[%s7 + $0x64] sm:$0xf]
      %v8938 = vld [vmem:[%s7 + $0x68] sm:$0xf]
      %v8939 = vld [vmem:[%s7 + $0x6c] sm:$0xf]
      %v8940 = vld [vmem:[%s7 + $0x70] sm:$0xf]
      %v8941 = vld [vmem:[%s7 + $0x74] sm:$0xf]
      %v8942 = vld [vmem:[%s7 + $0x78] sm:$0xf]
      %v8943 = vld [vmem:[%s7 + $0x7c] sm:$0xf]
      %v8944 = vld [vmem:[%s7 + $0x80] sm:$0xf]
      %v8945 = vld [vmem:[%s7 + $0x84] sm:$0xf]
      %v8946 = vld [vmem:[%s7 + $0x88] sm:$0xf]
      %v8947 = vld [vmem:[%s7 + $0x8c] sm:$0xf]
      %v8948 = vld [vmem:[%s8] sm:$0x1]
      %v8950 = vlaneseq
      %v8951 = vshrl.u32 %v8950, 7
      %v8952 = vsub.s32 0, %v8951
      %v8953 = vrot.slane %v8948, %v8952
      %v8991 = vunpack.c.l.b16 %v8912
      %v8992 = vunpack.c.l.b16 %v8913
      %v8993 = vunpack.c.l.b16 %v8914
      %v8994 = vunpack.c.l.b16 %v8915
      %v8995 = vunpack.c.l.b16 %v8916
      %v8996 = vunpack.c.l.b16 %v8917
      %v8997 = vunpack.c.l.b16 %v8918
      %v8998 = vunpack.c.l.b16 %v8919
      %v8999 = vunpack.c.l.b16 %v8920
      %v9000 = vunpack.c.l.b16 %v8921
      %v9001 = vunpack.c.l.b16 %v8922
      %v9002 = vunpack.c.l.b16 %v8923
      %v9003 = vunpack.c.l.b16 %v8924
      %v9004 = vunpack.c.l.b16 %v8925
      %v9005 = vunpack.c.l.b16 %v8926
      %v9006 = vunpack.c.l.b16 %v8927
      %v9007 = vunpack.c.l.b16 %v8928
      %v9008 = vunpack.c.l.b16 %v8929
      %v9009 = vunpack.c.l.b16 %v8930
      %v9010 = vunpack.c.l.b16 %v8931
      %v9011 = vunpack.c.l.b16 %v8932
      %v9012 = vunpack.c.l.b16 %v8933
      %v9013 = vunpack.c.l.b16 %v8934
      %v9014 = vunpack.c.l.b16 %v8935
      %v9015 = vunpack.c.l.b16 %v8936
      %v9016 = vunpack.c.l.b16 %v8937
      %v9017 = vunpack.c.l.b16 %v8938
      %v9018 = vunpack.c.l.b16 %v8939
      %v9019 = vunpack.c.l.b16 %v8940
      %v9020 = vunpack.c.l.b16 %v8941
      %v9021 = vunpack.c.l.b16 %v8942
      %v9022 = vunpack.c.l.b16 %v8943
      %v9023 = vunpack.c.l.b16 %v8944
      %v9024 = vunpack.c.l.b16 %v8945
      %v9025 = vunpack.c.l.b16 %v8946
      %v9026 = vunpack.c.l.b16 %v8947
      %v9027 = vpack.c.b16 %v8992, %v8991
      %v9028 = vpack.c.b16 %v8994, %v8993
      %v9029 = vpack.c.b16 %v8996, %v8995
      %v9030 = vpack.c.b16 %v8998, %v8997
      %v9031 = vpack.c.b16 %v9000, %v8999
      %v9032 = vpack.c.b16 %v9002, %v9001
      %v9033 = vpack.c.b16 %v9004, %v9003
      %v9034 = vpack.c.b16 %v9006, %v9005
      %v9035 = vpack.c.b16 %v9008, %v9007
      %v9036 = vpack.c.b16 %v9010, %v9009
      %v9037 = vpack.c.b16 %v9012, %v9011
      %v9038 = vpack.c.b16 %v9014, %v9013
      %v9039 = vpack.c.b16 %v9016, %v9015
      %v9040 = vpack.c.b16 %v9018, %v9017
      %v9041 = vpack.c.b16 %v9020, %v9019
      %v9042 = vpack.c.b16 %v9022, %v9021
      %v9043 = vpack.c.b16 %v9024, %v9023
      %v9044 = vpack.c.b16 %v9026, %v9025
      %v9064 = vsel %vm496, %v8890, 0
      %v9067 = vsel %vm496, %v8893, 0
      %v9070 = vsel %vm496, %v8896, 0
      %v9073 = vsel %vm496, %v8899, 0
      %v9076 = vsel %vm496, %v8902, 0
      %v9079 = vsel %vm496, %v8905, 0
      %v9082 = vsel %vm496, %v8908, 0
      %v9085 = vsel %vm496, %v8911, 0
      %9087 = vmatprep.subr.bf16.mxu0 0
      %9088 = vmatpush1.bf16.msra.mxu0 %v9027
      %9089 = vmatprep.subr.bf16.mxu0 0
      %9090 = vmatpush1.bf16.msra.mxu0 %v9028
      %9091 = vmatprep.subr.bf16.mxu0 0
      %9092 = vmatpush1.bf16.msra.mxu0 %v9029
      %9093 = vmatprep.subr.bf16.mxu0 0
      %9094 = vmatpush1.bf16.msra.mxu0 %v9030
      %9095 = vmatprep.subr.bf16.mxu0 0
      %9096 = vmatpush1.bf16.msra.mxu0 %v9031
      %9097 = vmatprep.subr.bf16.mxu0 0
      %9098 = vmatpush1.bf16.msra.mxu0 %v9032
      %9099 = vmatprep.subr.bf16.mxu0 0
      %9100 = vmatpush1.bf16.msra.mxu0 %v9033
      %9101 = vmatprep.subr.bf16.mxu0 0
      %9102 = vmatpush1.bf16.msra.mxu0 %v9034
      %9103 = vmatprep.subr.bf16.mxu0 0
      %9104 = vmatpush1.bf16.msra.mxu0 %v9035
      %9105 = vmatprep.subr.bf16.mxu0 0
      %9106 = vmatpush1.bf16.msra.mxu0 %v9036
      %9107 = vmatprep.subr.bf16.mxu0 0
      %9108 = vmatpush1.bf16.msra.mxu0 %v9037
      %9109 = vmatprep.subr.bf16.mxu0 0
      %9110 = vmatpush1.bf16.msra.mxu0 %v9038
      %9111 = vmatprep.subr.bf16.mxu0 0
      %9112 = vmatpush1.bf16.msra.mxu0 %v9039
      %9113 = vmatprep.subr.bf16.mxu0 0
      %9114 = vmatpush1.bf16.msra.mxu0 %v9040
      %9115 = vmatprep.subr.bf16.mxu0 0
      %9116 = vmatpush1.bf16.msra.mxu0 %v9041
      %9117 = vmatprep.subr.bf16.mxu0 0
      %9118 = vmatpush1.bf16.msra.mxu0 %v9042
      %9119 = vmatprep.mubr.bf16.mxu0 %v8889
      %9120 = vmatmul.mubr.bf16.gmra.mrb[0].mxu0 %v8888
      %v9121 = vpop.f32.mrb[0].mxu0
      %v9122 = vadd.f32 %v8953, %v9121
      %v9123 = vpop.f32.mrb[0].mxu0
      %v9124 = vpop.f32.mrb[0].mxu0
      %v9125 = vadd.f32 %v8953, %v9124
      %v9126 = vpop.f32.mrb[0].mxu0
      %9127 = vmatprep.mubr.bf16.mxu0 %v8892
      %9128 = vmatmul.mubr.bf16.gmra.mrb[0].mxu0 %v8891
      %v9129 = vpop.f32.mrb[0].mxu0
      %v9130 = vadd.f32 %v8953, %v9129
      %v9131 = vpop.f32.mrb[0].mxu0
      %v9132 = vpop.f32.mrb[0].mxu0
      %v9133 = vadd.f32 %v8953, %v9132
      %v9134 = vpop.f32.mrb[0].mxu0
      %9135 = vmatprep.mubr.bf16.mxu0 %v8895
      %9136 = vmatmul.mubr.bf16.gmra.mrb[0].mxu0 %v8894
      %v9137 = vpop.f32.mrb[0].mxu0
      %v9138 = vadd.f32 %v8953, %v9137
      %v9139 = vpop.f32.mrb[0].mxu0
      %v9140 = vpop.f32.mrb[0].mxu0
      %v9141 = vadd.f32 %v8953, %v9140
      %v9142 = vpop.f32.mrb[0].mxu0
      %9143 = vmatprep.mubr.bf16.mxu0 %v8898
      %9144 = vmatmul.mubr.bf16.gmra.mrb[0].mxu0 %v8897
      %v9145 = vpop.f32.mrb[0].mxu0
      %v9146 = vadd.f32 %v8953, %v9145
      %v9147 = vpop.f32.mrb[0].mxu0
      %v9148 = vpop.f32.mrb[0].mxu0
      %v9149 = vadd.f32 %v8953, %v9148
      %v9150 = vpop.f32.mrb[0].mxu0
      %9151 = vmatprep.mubr.bf16.mxu0 %v8901
      %9152 = vmatmul.mubr.bf16.gmra.mrb[0].mxu0 %v8900
      %v9153 = vpop.f32.mrb[0].mxu0
      %v9154 = vadd.f32 %v8953, %v9153
      %v9155 = vpop.f32.mrb[0].mxu0
      %v9156 = vpop.f32.mrb[0].mxu0
      %v9157 = vadd.f32 %v8953, %v9156
      %v9158 = vpop.f32.mrb[0].mxu0
      %9159 = vmatprep.mubr.bf16.mxu0 %v8904
      %9160 = vmatmul.mubr.bf16.gmra.mrb[0].mxu0 %v8903
      %v9161 = vpop.f32.mrb[0].mxu0
      %v9162 = vadd.f32 %v8953, %v9161
      %v9163 = vpop.f32.mrb[0].mxu0
      %v9164 = vpop.f32.mrb[0].mxu0
      %v9165 = vadd.f32 %v8953, %v9164
      %v9166 = vpop.f32.mrb[0].mxu0
      %9167 = vmatprep.mubr.bf16.mxu0 %v8907
      %9168 = vmatmul.mubr.bf16.gmra.mrb[0].mxu0 %v8906
      %v9169 = vpop.f32.mrb[0].mxu0
      %v9170 = vadd.f32 %v8953, %v9169
      %v9171 = vpop.f32.mrb[0].mxu0
      %v9172 = vpop.f32.mrb[0].mxu0
      %v9173 = vadd.f32 %v8953, %v9172
      %v9174 = vpop.f32.mrb[0].mxu0
      %9175 = vmatprep.mubr.bf16.mxu0 %v8910
      %9176 = vmatmul.mubr.bf16.gmra.mrb[0].mxu0 %v8909
      %v9177 = vpop.f32.mrb[0].mxu0
      %v9178 = vadd.f32 %v8953, %v9177
      %v9179 = vpop.f32.mrb[0].mxu0
      %v9180 = vpop.f32.mrb[0].mxu0
      %v9181 = vadd.f32 %v8953, %v9180
      %v9182 = vpop.f32.mrb[0].mxu0
      %9183 = vdwg.mxu0
      %9184 = vmatprep.subr.bf16.mxu0 0
      %9185 = vmatpush1.bf16.msra.mxu0 %v9043
      %9186 = vmatprep.subr.bf16.mxu0 0
      %9187 = vmatpush1.bf16.msra.mxu0 %v9044
      %9188 = vmatprep.subr.bf16.mxu0 0
      %9189 = vmatpush1.bf16.msra.mxu0 0
      %9190 = vmatprep.subr.bf16.mxu0 0
      %9191 = vmatpush1.bf16.msra.mxu0 0
      %9192 = vmatprep.subr.bf16.mxu0 0
      %9193 = vmatpush1.bf16.msra.mxu0 0
      %9194 = vmatprep.subr.bf16.mxu0 0
      %9195 = vmatpush1.bf16.msra.mxu0 0
      %9196 = vmatprep.subr.bf16.mxu0 0
      %9197 = vmatpush1.bf16.msra.mxu0 0
      %9198 = vmatprep.subr.bf16.mxu0 0
      %9199 = vmatpush1.bf16.msra.mxu0 0
      %9200 = vmatprep.subr.bf16.mxu0 0
      %9201 = vmatpush1.bf16.msra.mxu0 0
      %9202 = vmatprep.subr.bf16.mxu0 0
      %9203 = vmatpush1.bf16.msra.mxu0 0
      %9204 = vmatprep.subr.bf16.mxu0 0
      %9205 = vmatpush1.bf16.msra.mxu0 0
      %9206 = vmatprep.subr.bf16.mxu0 0
      %9207 = vmatpush1.bf16.msra.mxu0 0
      %9208 = vmatprep.subr.bf16.mxu0 0
      %9209 = vmatpush1.bf16.msra.mxu0 0
      %9210 = vmatprep.subr.bf16.mxu0 0
      %9211 = vmatpush1.bf16.msra.mxu0 0
      %9212 = vmatprep.subr.bf16.mxu0 0
      %9213 = vmatpush1.bf16.msra.mxu0 0
      %9214 = vmatprep.subr.bf16.mxu0 0
      %9215 = vmatpush1.bf16.msra.mxu0 0
      %9216 = vmatprep.mubr.bf16.mxu0 0
      %9217 = vmatmul.mubr.bf16.gmra.mrb[0].mxu0 %v9064
      %v9218 = vpop.f32.mrb[0].mxu0
      %v9219 = vadd.f32 %v9122, %v9218
      %v9220 = vpop.f32.mrb[0].mxu0
      %v9221 = vpop.f32.mrb[0].mxu0
      %v9222 = vadd.f32 %v9125, %v9221
      %v9223 = vpop.f32.mrb[0].mxu0
      %9224 = vmatprep.mubr.bf16.mxu0 0
      %9225 = vmatmul.mubr.bf16.gmra.mrb[0].mxu0 %v9067
      %v9226 = vpop.f32.mrb[0].mxu0
      %v9227 = vadd.f32 %v9130, %v9226
      %v9228 = vpop.f32.mrb[0].mxu0
      %v9229 = vpop.f32.mrb[0].mxu0
      %v9230 = vadd.f32 %v9133, %v9229
      %v9231 = vpop.f32.mrb[0].mxu0
      %9232 = vmatprep.mubr.bf16.mxu0 0
      %9233 = vmatmul.mubr.bf16.gmra.mrb[0].mxu0 %v9070
      %v9234 = vpop.f32.mrb[0].mxu0
      %v9235 = vadd.f32 %v9138, %v9234
      %v9236 = vpop.f32.mrb[0].mxu0
      %v9237 = vpop.f32.mrb[0].mxu0
      %v9238 = vadd.f32 %v9141, %v9237
      %v9239 = vpop.f32.mrb[0].mxu0
      %9240 = vmatprep.mubr.bf16.mxu0 0
      %9241 = vmatmul.mubr.bf16.gmra.mrb[0].mxu0 %v9073
      %v9242 = vpop.f32.mrb[0].mxu0
      %v9243 = vadd.f32 %v9146, %v9242
      %v9244 = vpop.f32.mrb[0].mxu0
      %v9245 = vpop.f32.mrb[0].mxu0
      %v9246 = vadd.f32 %v9149, %v9245
      %v9247 = vpop.f32.mrb[0].mxu0
      %9248 = vmatprep.mubr.bf16.mxu0 0
      %9249 = vmatmul.mubr.bf16.gmra.mrb[0].mxu0 %v9076
      %v9250 = vpop.f32.mrb[0].mxu0
      %v9251 = vadd.f32 %v9154, %v9250
      %v9252 = vpop.f32.mrb[0].mxu0
      %v9253 = vpop.f32.mrb[0].mxu0
      %v9254 = vadd.f32 %v9157, %v9253
      %v9255 = vpop.f32.mrb[0].mxu0
      %9256 = vmatprep.mubr.bf16.mxu0 0
      %9257 = vmatmul.mubr.bf16.gmra.mrb[0].mxu0 %v9079
      %v9258 = vpop.f32.mrb[0].mxu0
      %v9259 = vadd.f32 %v9162, %v9258
      %v9260 = vpop.f32.mrb[0].mxu0
      %v9261 = vpop.f32.mrb[0].mxu0
      %v9262 = vadd.f32 %v9165, %v9261
      %v9263 = vpop.f32.mrb[0].mxu0
      %9264 = vmatprep.mubr.bf16.mxu0 0
      %9265 = vmatmul.mubr.bf16.gmra.mrb[0].mxu0 %v9082
      %v9266 = vpop.f32.mrb[0].mxu0
      %v9267 = vadd.f32 %v9170, %v9266
      %v9268 = vpop.f32.mrb[0].mxu0
      %v9269 = vpop.f32.mrb[0].mxu0
      %v9270 = vadd.f32 %v9173, %v9269
      %v9271 = vpop.f32.mrb[0].mxu0
      %9272 = vmatprep.mubr.bf16.mxu0 0
      %9273 = vmatmul.mubr.bf16.gmra.mrb[0].mxu0 %v9085
      %v9274 = vpop.f32.mrb[0].mxu0
      %v9275 = vadd.f32 %v9178, %v9274
      %v9276 = vpop.f32.mrb[0].mxu0
      %v9277 = vpop.f32.mrb[0].mxu0
      %v9278 = vadd.f32 %v9181, %v9277
      %v9279 = vpop.f32.mrb[0].mxu0
      %9280 = vdwg.mxu0
      %9281 = vst [vmem:[%s368] sm:$0xff] %v9219
      %9282 = vst [vmem:[%s368 + $0x8] sm:$0xff] %v9222
      %9283 = vst [vmem:[%s368 + $0x10] sm:$0xff] %v9227
      %9284 = vst [vmem:[%s368 + $0x18] sm:$0xff] %v9230
      %9285 = vst [vmem:[%s368 + $0x20] sm:$0xff] %v9235
      %9286 = vst [vmem:[%s368 + $0x28] sm:$0xff] %v9238
      %9287 = vst [vmem:[%s368 + $0x30] sm:$0xff] %v9243
      %9288 = vst [vmem:[%s368 + $0x38] sm:$0xff] %v9246
      %9289 = vst [vmem:[%s368 + $0x40] sm:$0xff] %v9251
      %9290 = vst [vmem:[%s368 + $0x48] sm:$0xff] %v9254
      %9291 = vst [vmem:[%s368 + $0x50] sm:$0xff] %v9259
      %9292 = vst [vmem:[%s368 + $0x58] sm:$0xff] %v9262
      %9293 = vst [vmem:[%s368 + $0x60] sm:$0xff] %v9267
      %9294 = vst [vmem:[%s368 + $0x68] sm:$0xff] %v9270
      %9295 = vst [vmem:[%s368 + $0x70] sm:$0xff] %v9275
      %9296 = vst [vmem:[%s368 + $0x78] sm:$0xff] %v9278
      %p9297 = scmp.lt.s32.totalorder %s24, 1
      %s9298 = scalar_select %p9297, %s24, 1
      %p9299 = scmp.lt.s32.totalorder %s25, 1
      %s9300 = scalar_select %p9299, %s25, 1
      %s9301 = smul.addr %s9300, 16
      %s9302 = smul.addr %s9298, 32
      %s9303 = sadd.s32 %s9301, %s9302
      %s9304 = smul.addr %s9303, 8
      %s9305 = scalar_lea.vmem %s9, %s9304
      // Predicated region
      $region81: #{jcnn_forward.1} parent=55 // pred_check
        %p9306 = pneg %p248
      $region82: #{jcnn_forward.1} parent=55 // pred_check_branch
        %9308 = sbr.rel (%p9306) target = $region84
      $region83: #{jcnn_forward.1} parent=55 // pred_region
        _
      $region84: #{jcnn_forward.1} parent=55 // pred_fallthru
        _
    $region56: #{jcnn_forward.1} parent=5 // pred_fallthru
      _
    %p9309 = scmp.le.s32.totalorder 2, %s15
    // Predicated region
    $region85: #{jcnn_forward.1} parent=5 // pred_check
      %p9310 = pneg %p9309
    $region86: #{jcnn_forward.1} parent=5 // pred_check_branch
      %9312 = sbr.rel (%p9310) target = $region88
    $region87: #{jcnn_forward.1} parent=5 // pred_region
      %s9313 = ssub.s32 %s15, 2
      // Predicated region
      $region89: #{jcnn_forward.1} parent=87 // pred_check
        %p9314 = pneg %p254
      $region90: #{jcnn_forward.1} parent=87 // pred_check_branch
        %9316 = sbr.rel (%p9314) target = $region92
      $region91: #{jcnn_forward.1} parent=87 // pred_region
        %p9317 = scmp.lt.s32.totalorder %s26, 1
        %s9318 = scalar_select %p9317, %s26, 1
        %p9319 = scmp.lt.s32.totalorder %s27, 1
        %s9320 = scalar_select %p9319, %s27, 1
        %s9321 = smul.addr %s9320, 16
        %s9322 = smul.addr %s9318, 32
        %s9323 = sadd.s32 %s9321, %s9322
        %s9324 = smul.addr %s9323, 8
        %s9325 = scalar_lea.vmem %s9, %s9324
      $region92: #{jcnn_forward.1} parent=87 // pred_fallthru
        _
    $region88: #{jcnn_forward.1} parent=5 // pred_fallthru
      _
  $region6: #{jcnn_forward.1} parent=0 // loop_footer
    %s19 = sadd.s32 1, %s15
  $region7: #{jcnn_forward.1} parent=0 // loop_footer_branch
    %14 = sbr.rel target = $region3
  $region8: #{jcnn_forward.1} parent=0 // loop_exit
    _

</llo_original>
